<compile_context>
chip_gen: v7x
topology: tpu7x:2x2x1
jax: 0.10.0
libtpu: 0.0.40
codegen_flags: <defaults>
</compile_context>

<pallas_src>
import jax
import jax.numpy as jnp
from jax.experimental import pallas as pl
from jax.experimental.pallas import tpu as pltpu

M_PAD = 8  # f32 sublane tile — all batch-major matmuls are padded to this row count


def _round_up(n, m):
    return ((n + m - 1) // m) * m


# ----------------------------------------------------------------------------
# Pallas kernels
# ----------------------------------------------------------------------------
def _initializer_kernel(
        # batch data
        x_ref, it_ref, ps_ref,
        # fused encoder projections
        xe_w, xe_b, ie_w, ie_b, se_w, se_b,
        # intention decoder head (512 -> 256 -> 128 -> int_pad)
        iw1, ib1, iw2, ib2, iw3, ib3,
        # similarity decoder head (512 -> 256 -> 128 -> sim_pad)
        sw1, sb1, sw2, sb2, sw3, sb3,
        # scale decoder head, W1 row-split into [ego_scale ; social]
        cw1a, cw1b, cb1, cw2, cb2, cw3, cb3,
        # mean decoder head, W1 row-split into [ego_mean ; social]
        mw1a, mw1b, mb1, mw2, mb2, mw3, mb3,
        # scale_encoder (tiny f32 MLP 1 -> 4 -> 16 -> 32)
        ew1, eb1, ew2, eb2, ew3, eb3,
        # var decoder, W1 row-split into [ego_var ; social ; scale_feature]
        vw1a, vw1b, vw1c, vb1, vw2, vb2, vw3, vb3,
        # outputs
        int_out, sim_out, scale_out, mean_out, var_out):
    def dot(a, w_ref):
        return jnp.dot(a.astype(jnp.bfloat16), w_ref[...],
                       preferred_element_type=jnp.float32)

    # --- fused encoder projections; results stay resident in VMEM/vregs ---
    x_emb = dot(x_ref[...], xe_w) + xe_b[...]                  # (m, 1024)
    intention_total = dot(it_ref[...], ie_w) + ie_b[...]       # (m, 512)
    similarity_total = dot(ps_ref[...], se_w) + se_b[...]      # (m, 512)

    social = x_emb[:, 0:256]
    ego_var = x_emb[:, 256:512]
    ego_mean = x_emb[:, 512:768]
    ego_scale = x_emb[:, 768:1024]

    def tail(h1, w2, b2, w3, b3):
        h2 = jnp.maximum(dot(h1, w2) + b2[...], 0.0)
        return dot(h2, w3) + b3[...]

    # intention decoder
    h = jnp.maximum(dot(intention_total, iw1) + ib1[...], 0.0)
    int_out[...] = tail(h, iw2, ib2, iw3, ib3)

    # similarity decoder
    h = jnp.maximum(dot(similarity_total, sw1) + sb1[...], 0.0)
    sim_out[...] = tail(h, sw2, sb2, sw3, sb3)

    # scale decoder: input = cat(ego_scale, social) realized via the row-split W1
    h = jnp.maximum(dot(ego_scale, cw1a) + dot(social, cw1b) + cb1[...], 0.0)
    gs_full = tail(h, cw2, cb2, cw3, cb3)          # (m, 128); column 0 = guess_scale
    scale_out[...] = gs_full

    # mean decoder: input = cat(ego_mean, social)
    h = jnp.maximum(dot(ego_mean, mw1a) + dot(social, mw1b) + mb1[...], 0.0)
    mean_out[...] = tail(h, mw2, mb2, mw3, mb3)

    # scale_encoder on guess_scale — never leaves VMEM (tiny f32 matmuls)
    gs = gs_full[:, 0:1]                                                      # (m, 1)
    f = jnp.maximum(jnp.dot(gs, ew1[...], preferred_element_type=jnp.float32)
                    + eb1[...], 0.0)
    f = jnp.maximum(jnp.dot(f, ew2[...], preferred_element_type=jnp.float32)
                    + eb2[...], 0.0)
    feat = jnp.dot(f, ew3[...], preferred_element_type=jnp.float32) + eb3[...]  # (m, 32)

    # var decoder: input = cat(ego_var, social, feat) via the 3-way row-split W1
    h = jnp.maximum(dot(ego_var, vw1a) + dot(social, vw1b) + dot(feat, vw1c)
                    + vb1[...], 0.0)
    h = jnp.maximum(dot(h, vw2) + vb2[...], 0.0)
    var_out[...] = dot(h, vw3) + vb3[...]


def _mode_kernel(g_ref, pw, pb,
                 cw1, cb1, cw2, cb2, cw3, cb3,
                 qw1, qb1, qw2, qb2, qw3, qb3,
                 conc_out, prob_out):
    def dot(a, w_ref):
        return jnp.dot(a.astype(jnp.bfloat16), w_ref[...],
                       preferred_element_type=jnp.float32)

    # TODO(synk): m2m_refine_attn_layer (mode_transformer) is not part of the
    #             provided source; replaced by a per-mode linear projection.
    mode = dot(g_ref[...], pw) + pb[...]                       # (n_modes, 128)

    h = jnp.maximum(dot(mode, cw1) + cb1[...], 0.0)
    h = jnp.maximum(dot(h, cw2) + cb2[...], 0.0)
    conc_out[...] = dot(h, cw3) + cb3[...]

    h = jnp.maximum(dot(mode, qw1) + qb1[...], 0.0)
    h = jnp.maximum(dot(h, qw2) + qb2[...], 0.0)
    prob_out[...] = dot(h, qw3) + qb3[...]


# ----------------------------------------------------------------------------
# Grid-less pallas_call wrapper: full arrays resident in VMEM (no double-buffer)
# ----------------------------------------------------------------------------
def _vmem_call(kernel, data_args, weight_args, out_shapes,
               vmem_limit_bytes=32 * 1024 * 1024):
    args = tuple(data_args) + tuple(weight_args)
    m = int(data_args[0].shape[0])
    flops = 2 * m * sum(int(w.shape[0]) * int(w.shape[1])
                        for w in weight_args
                        if w.ndim == 2 and int(w.shape[0]) > 1)
    bytes_accessed = sum(int(a.size) * a.dtype.itemsize for a in args)
    bytes_accessed += sum(int(s[0]) * int(s[1]) * 4 for s in out_shapes)

    vmem_spec = pl.BlockSpec(memory_space=pltpu.MemorySpace.VMEM)
    return pl.pallas_call(
        kernel,
        in_specs=[vmem_spec] * len(args),
        out_specs=tuple(vmem_spec for _ in out_shapes),
        out_shape=tuple(jax.ShapeDtypeStruct(s, jnp.float32) for s in out_shapes),
        compiler_params=pltpu.CompilerParams(vmem_limit_bytes=vmem_limit_bytes),
        cost_estimate=pl.CostEstimate(flops=flops, transcendentals=0,
                                      bytes_accessed=bytes_accessed),
    )(*args)


# ----------------------------------------------------------------------------
# Future-vector solver — plain jnp (tiny elementwise math, left to XLA/VPU fusion)
# ----------------------------------------------------------------------------
def solve_b_batch(a, c, d):
    eps = 1e-8
    a_norm = jnp.maximum(jnp.linalg.norm(a, axis=-1, keepdims=True), eps)
    c_norm = jnp.maximum(jnp.linalg.norm(c, axis=-1, keepdims=True), eps)
    b_norm = jnp.sqrt(c_norm ** 2 + d ** 2) / a_norm
    b_dir = jnp.cross(a, c)
    b_dir = b_dir / jnp.maximum(jnp.linalg.norm(b_dir, axis=-1, keepdims=True), eps)
    return b_norm * b_dir


def future_vectors_recursive(x3, intention, similarity):
    """calculate_future_vectors_recursive (vectorized): x3/intention (..., T, 3), similarity (..., T, 1)."""
    a_all = x3[..., :-1, :]
    c_all = intention[..., 1:, :]
    d_all = similarity[..., 1:, :]
    b_all = solve_b_batch(a_all, c_all, d_all)
    return jnp.concatenate([x3[..., 0:1, :], b_all], axis=-2)


# ----------------------------------------------------------------------------
# Deterministic parameter init (weights bf16, biases f32)
# ----------------------------------------------------------------------------
def _init_linear(key, din, dout, dtype=jnp.bfloat16):
    kw, kb = jax.random.split(key)
    w = (jax.random.normal(kw, (din, dout), jnp.float32) * (float(din) ** -0.5)).astype(dtype)
    b = jax.random.normal(kb, (1, dout), jnp.float32) * 0.01
    return w, b


def init_params(key, t_h, d_h, t_f, d_f, k_pred):
    hist6, hist3 = t_h * d_h, t_h * 3
    out_var = t_f * d_f * k_pred
    out_int = t_f * 3 * k_pred
    out_sim = t_f * 1 * k_pred
    out_mean = t_f * d_f
    int_pad = _round_up(out_int, 128)
    sim_pad = _round_up(out_sim, 128)
    mean_pad = _round_up(out_mean, 128)
    var_pad = _round_up(out_var, 128)
    conc_pad = _round_up(t_f, 128)

    keys = iter(jax.random.split(key, 40))

    # Fused encoder projections (stubs for the external sub-encoders).
    # TODO(synk): social_* transformer encoders, st_encoder's Conv1d+GRU and the
    #             intention/similarity encoders are defined outside the provided
    #             module source; each is modeled as a linear embedding projection,
    #             fused per shared input (x / intention / past_similarity).
    def concat_lin(din, n):
        ws, bs = zip(*[_init_linear(next(keys), din, 256) for _ in range(n)])
        return jnp.concatenate(ws, axis=1), jnp.concatenate(bs, axis=1)

    xe_w, xe_b = concat_lin(hist6, 4)   # [social | ego_var | ego_mean | ego_scale]
    ie_w, ie_b = concat_lin(hist3, 2)   # intention_total = [ego_intention | intention_social]
    se_w, se_b = concat_lin(hist3, 2)   # similarity_total = [ego_similarity | similarity_social]

    def mlp3(din, d1, d2, dout, dout_pad=None, dtype=jnp.bfloat16):
        w1, b1 = _init_linear(next(keys), din, d1, dtype)
        w2, b2 = _init_linear(next(keys), d1, d2, dtype)
        w3, b3 = _init_linear(next(keys), d2, dout, dtype)
        if dout_pad is not None and dout_pad > dout:
            w3 = jnp.pad(w3, ((0, 0), (0, dout_pad - dout)))
            b3 = jnp.pad(b3, ((0, 0), (0, dout_pad - dout)))
        return (w1, b1, w2, b2, w3, b3)

    iw1, ib1, iw2, ib2, iw3, ib3 = mlp3(512, 256, 128, out_int, int_pad)
    sw1, sb1, sw2, sb2, sw3, sb3 = mlp3(512, 256, 128, out_sim, sim_pad)
    cw1, cb1, cw2, cb2, cw3, cb3 = mlp3(512, 256, 128, 1, 128)
    mw1, mb1, mw2, mb2, mw3, mb3 = mlp3(512, 256, 128, out_mean, mean_pad)
    ew1, eb1, ew2, eb2, ew3, eb3 = mlp3(1, 4, 16, 32, dtype=jnp.float32)
    vw1, vb1, vw2, vb2, vw3, vb3 = mlp3(512 + 32, 1024, 1024, out_var, var_pad)

    main_args = (
        xe_w, xe_b, ie_w, ie_b, se_w, se_b,
        iw1, ib1, iw2, ib2, iw3, ib3,
        sw1, sb1, sw2, sb2, sw3, sb3,
        cw1[:256], cw1[256:], cb1, cw2, cb2, cw3, cb3,
        mw1[:256], mw1[256:], mb1, mw2, mb2, mw3, mb3,
        ew1, eb1, ew2, eb2, ew3, eb3,
        vw1[:256], vw1[256:512], vw1[512:], vb1, vw2, vb2, vw3, vb3,
    )

    # mode feature projection + to_conc / to_prob, fused into the second kernel.
    pw, pb = _init_linear(next(keys), t_f * 3, 128)
    qcw1, qcb1, qcw2, qcb2, qcw3, qcb3 = mlp3(128, 64, 32, t_f, conc_pad)
    qpw1, qpb1, qpw2, qpb2, qpw3, qpb3 = mlp3(128, 64, 32, 1, 128)
    mode_args = (pw, pb,
                 qcw1, qcb1, qcw2, qcb2, qcw3, qcb3,
                 qpw1, qpb1, qpw2, qpb2, qpw3, qpb3)

    return {"main_args": main_args, "mode_args": mode_args}


# ----------------------------------------------------------------------------
# Forward pass
# ----------------------------------------------------------------------------
def vec_int_initializer_forward(params, x, intention, past_similarity, mask,
                                *, t_f, d_f, k_pred):
    B = x.shape[0]
    out_var = t_f * d_f * k_pred
    out_int = t_f * 3 * k_pred
    out_sim = t_f * 1 * k_pred
    out_mean = t_f * d_f
    int_pad = _round_up(out_int, 128)
    sim_pad = _round_up(out_sim, 128)
    mean_pad = _round_up(out_mean, 128)
    var_pad = _round_up(out_var, 128)
    conc_pad = _round_up(t_f, 128)

    # TODO(synk): mask only feeds the external transformer sub-encoders (not in
    #             the provided source); transform kept for interface parity, unused.
    if mask is not None:
        _ = jnp.where(mask == 0, -jnp.inf,
                      jnp.where(mask == 1, 0.0, mask.astype(jnp.float32)))

    # Pad batch rows to the 8-row sublane tile (pad rows are sliced off afterwards).
    m = _round_up(max(B, M_PAD), M_PAD)

    def pad_rows(a, rows):
        a2 = a.reshape(a.shape[0], -1)
        return jnp.pad(a2, ((0, rows - a2.shape[0]), (0, 0)))

    x_flat = pad_rows(x, m)                   # (m, t_h*6)
    int_flat = pad_rows(intention, m)         # (m, t_h*3)
    sim_flat = pad_rows(past_similarity, m)   # (m, t_h*3)

    # --- one fused pallas_call: encoders -> 4 heads -> scale_encoder -> var_decoder ---
    int_o, sim_o, scale_o, mean_o, var_o = _vmem_call(
        _initializer_kernel,
        (x_flat, int_flat, sim_flat),
        params["main_args"],
        ((m, int_pad), (m, sim_pad), (m, 128), (m, mean_pad), (m, var_pad)),
    )

    guess_intention = int_o[:B, :out_int].reshape(B, k_pred, t_f, 3)
    guess_similarity = sim_o[:B, :out_sim].reshape(B, k_pred, t_f, 1)
    guess_scale = scale_o[:B, :1]                                  # (B, 1)
    guess_mean = mean_o[:B, :out_mean].reshape(B, t_f, d_f)
    guess_var = var_o[:B, :out_var].reshape(B, k_pred, t_f, d_f)

    sample_3d = jnp.concatenate([guess_var, jnp.zeros_like(guess_var[..., :1])], axis=-1)
    goal_var = future_vectors_recursive(sample_3d, guess_intention, guess_similarity)

    # --- second fused pallas_call: mode projection + to_conc + to_prob ---
    n_modes = B * k_pred
    m2 = _round_up(max(n_modes, M_PAD), M_PAD)
    goal_flat = jnp.pad(goal_var.reshape(n_modes, t_f * 3),
                        ((0, m2 - n_modes), (0, 0)))
    conc_o, prob_o = _vmem_call(
        _mode_kernel,
        (goal_flat,),
        params["mode_args"],
        ((m2, conc_pad), (m2, 128)),
    )

    conc = conc_o[:n_modes, :t_f].reshape(B, k_pred, t_f)[..., None]
    conc = 1.0 / (jax.nn.elu(conc) + 1.0 + 0.02)
    prob = jax.nn.softmax(prob_o[:n_modes, 0].reshape(B, k_pred), axis=-1)
    best_mode = jnp.argmax(prob, axis=-1)

    best_intention = jnp.take_along_axis(
        guess_intention, best_mode[:, None, None, None], axis=1)[:, 0]
    best_similarity = jnp.take_along_axis(
        guess_similarity, best_mode[:, None, None, None], axis=1)[:, 0]

    guess_mean_3d = jnp.concatenate(
        [guess_mean, jnp.zeros_like(guess_mean[..., :1])], axis=-1)
    goal_mean = future_vectors_recursive(guess_mean_3d, best_intention, best_similarity)

    return {
        "guess_var": guess_var,
        "guess_mean": guess_mean,
        "guess_scale": guess_scale,
        "guess_intention": guess_intention,
        "guess_similarity": guess_similarity,
        "goal_var": goal_var[..., :2],
        "goal_mean": goal_mean[..., :2],
        "conc": conc,
        "prob": prob,
    }


# ----------------------------------------------------------------------------
# Main
# ----------------------------------------------------------------------------
if __name__ == "__main__":
    # Small-but-consistent hyperparameters (module defaults are 8/6/40/2/20).
    T_H, D_H, T_F, D_F, K_PRED = 8, 6, 8, 2, 4
    B = 2

    params = init_params(jax.random.PRNGKey(0), T_H, D_H, T_F, D_F, K_PRED)

    kx, ki, ks = jax.random.split(jax.random.PRNGKey(0), 3)
    x = jax.random.normal(kx, (B, T_H, D_H), jnp.float32)
    intention = jax.random.normal(ki, (B, T_H, 3), jnp.float32)
    past_similarity = jax.random.normal(ks, (B, T_H, 3), jnp.float32)
    mask = jnp.ones((B, 1, 1), jnp.float32)

    out = vec_int_initializer_forward(
        params, x, intention, past_similarity, mask, t_f=T_F, d_f=D_F, k_pred=K_PRED)
    out = jax.tree_util.tree_map(jax.block_until_ready, out)

    # sanity on shapes and values
    assert out["guess_var"].shape == (B, K_PRED, T_F, 2)
    assert out["guess_mean"].shape == (B, T_F, 2)
    assert out["guess_scale"].shape == (B, 1)
    assert out["guess_intention"].shape == (B, K_PRED, T_F, 3)
    assert out["guess_similarity"].shape == (B, K_PRED, T_F, 1)
    assert out["goal_var"].shape == (B, K_PRED, T_F, 2)
    assert out["goal_mean"].shape == (B, T_F, 2)
    assert out["conc"].shape == (B, K_PRED, T_F, 1)
    assert out["prob"].shape == (B, K_PRED)
    assert bool(jnp.isfinite(out["prob"]).all())
    assert bool(jnp.isfinite(out["conc"]).all())
    assert bool(jnp.isfinite(out["goal_var"]).all())
    assert bool(jnp.isfinite(out["goal_mean"]).all())

    print("KERNEL_OK")
</pallas_src>

<mosaic_0001>
module attributes {stable_mosaic.version = 11 : i64} {
  func.func @_initializer_kernel(%arg0: memref<8x48xf32, #tpu.memory_space<vmem>>, %arg1: memref<8x24xf32, #tpu.memory_space<vmem>>, %arg2: memref<8x24xf32, #tpu.memory_space<vmem>>, %arg3: memref<48x1024xbf16, #tpu.memory_space<vmem>>, %arg4: memref<1x1024xf32, #tpu.memory_space<vmem>>, %arg5: memref<24x512xbf16, #tpu.memory_space<vmem>>, %arg6: memref<1x512xf32, #tpu.memory_space<vmem>>, %arg7: memref<24x512xbf16, #tpu.memory_space<vmem>>, %arg8: memref<1x512xf32, #tpu.memory_space<vmem>>, %arg9: memref<512x256xbf16, #tpu.memory_space<vmem>>, %arg10: memref<1x256xf32, #tpu.memory_space<vmem>>, %arg11: memref<256x128xbf16, #tpu.memory_space<vmem>>, %arg12: memref<1x128xf32, #tpu.memory_space<vmem>>, %arg13: memref<128x128xbf16, #tpu.memory_space<vmem>>, %arg14: memref<1x128xf32, #tpu.memory_space<vmem>>, %arg15: memref<512x256xbf16, #tpu.memory_space<vmem>>, %arg16: memref<1x256xf32, #tpu.memory_space<vmem>>, %arg17: memref<256x128xbf16, #tpu.memory_space<vmem>>, %arg18: memref<1x128xf32, #tpu.memory_space<vmem>>, %arg19: memref<128x128xbf16, #tpu.memory_space<vmem>>, %arg20: memref<1x128xf32, #tpu.memory_space<vmem>>, %arg21: memref<256x256xbf16, #tpu.memory_space<vmem>>, %arg22: memref<256x256xbf16, #tpu.memory_space<vmem>>, %arg23: memref<1x256xf32, #tpu.memory_space<vmem>>, %arg24: memref<256x128xbf16, #tpu.memory_space<vmem>>, %arg25: memref<1x128xf32, #tpu.memory_space<vmem>>, %arg26: memref<128x128xbf16, #tpu.memory_space<vmem>>, %arg27: memref<1x128xf32, #tpu.memory_space<vmem>>, %arg28: memref<256x256xbf16, #tpu.memory_space<vmem>>, %arg29: memref<256x256xbf16, #tpu.memory_space<vmem>>, %arg30: memref<1x256xf32, #tpu.memory_space<vmem>>, %arg31: memref<256x128xbf16, #tpu.memory_space<vmem>>, %arg32: memref<1x128xf32, #tpu.memory_space<vmem>>, %arg33: memref<128x128xbf16, #tpu.memory_space<vmem>>, %arg34: memref<1x128xf32, #tpu.memory_space<vmem>>, %arg35: memref<1x4xf32, #tpu.memory_space<vmem>>, %arg36: memref<1x4xf32, #tpu.memory_space<vmem>>, %arg37: memref<4x16xf32, #tpu.memory_space<vmem>>, %arg38: memref<1x16xf32, #tpu.memory_space<vmem>>, %arg39: memref<16x32xf32, #tpu.memory_space<vmem>>, %arg40: memref<1x32xf32, #tpu.memory_space<vmem>>, %arg41: memref<256x1024xbf16, #tpu.memory_space<vmem>>, %arg42: memref<256x1024xbf16, #tpu.memory_space<vmem>>, %arg43: memref<32x1024xbf16, #tpu.memory_space<vmem>>, %arg44: memref<1x1024xf32, #tpu.memory_space<vmem>>, %arg45: memref<1024x1024xbf16, #tpu.memory_space<vmem>>, %arg46: memref<1x1024xf32, #tpu.memory_space<vmem>>, %arg47: memref<1024x128xbf16, #tpu.memory_space<vmem>>, %arg48: memref<1x128xf32, #tpu.memory_space<vmem>>, %arg49: memref<8x128xf32, #tpu.memory_space<vmem>>, %arg50: memref<8x128xf32, #tpu.memory_space<vmem>>, %arg51: memref<8x128xf32, #tpu.memory_space<vmem>>, %arg52: memref<8x128xf32, #tpu.memory_space<vmem>>, %arg53: memref<8x128xf32, #tpu.memory_space<vmem>>) attributes {dimension_semantics = [], scalar_prefetch = 0 : i64, scratch_operands = 0 : i64, tpu.core_type = #tpu.core_type<tc>} {
    %c0 = arith.constant 0 : index
    %c0_0 = arith.constant 0 : index
    %0 = vector.load %arg0[%c0, %c0_0] : memref<8x48xf32, #tpu.memory_space<vmem>>, vector<8x48xf32>
    %1 = arith.truncf %0 : vector<8x48xf32> to vector<8x48xbf16>
    %c0_1 = arith.constant 0 : index
    %c0_2 = arith.constant 0 : index
    %2 = vector.load %arg3[%c0_1, %c0_2] : memref<48x1024xbf16, #tpu.memory_space<vmem>>, vector<48x1024xbf16>
    %cst = arith.constant dense<0.000000e+00> : vector<8x1024xf32>
    %3 = tpu.matmul %1, %2, %cst {dimension_numbers = #tpu.dot_dimension_numbers<[1], [0], [0], [1], [0, 0, 1, 1], [], []>} : vector<8x48xbf16>, vector<48x1024xbf16>, vector<8x1024xf32> -> vector<8x1024xf32>
    %c0_3 = arith.constant 0 : index
    %c0_4 = arith.constant 0 : index
    %4 = vector.load %arg4[%c0_3, %c0_4] : memref<1x1024xf32, #tpu.memory_space<vmem>>, vector<1x1024xf32>
    %5 = vector.broadcast %4 : vector<1x1024xf32> to vector<8x1024xf32>
    %6 = arith.addf %3, %5 : vector<8x1024xf32>
    %c0_5 = arith.constant 0 : index
    %c0_6 = arith.constant 0 : index
    %7 = vector.load %arg1[%c0_5, %c0_6] : memref<8x24xf32, #tpu.memory_space<vmem>>, vector<8x24xf32>
    %8 = arith.truncf %7 : vector<8x24xf32> to vector<8x24xbf16>
    %c0_7 = arith.constant 0 : index
    %c0_8 = arith.constant 0 : index
    %9 = vector.load %arg5[%c0_7, %c0_8] : memref<24x512xbf16, #tpu.memory_space<vmem>>, vector<24x512xbf16>
    %cst_9 = arith.constant dense<0.000000e+00> : vector<8x512xf32>
    %10 = tpu.matmul %8, %9, %cst_9 {dimension_numbers = #tpu.dot_dimension_numbers<[1], [0], [0], [1], [0, 0, 1, 1], [], []>} : vector<8x24xbf16>, vector<24x512xbf16>, vector<8x512xf32> -> vector<8x512xf32>
    %c0_10 = arith.constant 0 : index
    %c0_11 = arith.constant 0 : index
    %11 = vector.load %arg6[%c0_10, %c0_11] : memref<1x512xf32, #tpu.memory_space<vmem>>, vector<1x512xf32>
    %12 = vector.broadcast %11 : vector<1x512xf32> to vector<8x512xf32>
    %13 = arith.addf %10, %12 : vector<8x512xf32>
    %c0_12 = arith.constant 0 : index
    %c0_13 = arith.constant 0 : index
    %14 = vector.load %arg2[%c0_12, %c0_13] : memref<8x24xf32, #tpu.memory_space<vmem>>, vector<8x24xf32>
    %15 = arith.truncf %14 : vector<8x24xf32> to vector<8x24xbf16>
    %c0_14 = arith.constant 0 : index
    %c0_15 = arith.constant 0 : index
    %16 = vector.load %arg7[%c0_14, %c0_15] : memref<24x512xbf16, #tpu.memory_space<vmem>>, vector<24x512xbf16>
    %cst_16 = arith.constant dense<0.000000e+00> : vector<8x512xf32>
    %17 = tpu.matmul %15, %16, %cst_16 {dimension_numbers = #tpu.dot_dimension_numbers<[1], [0], [0], [1], [0, 0, 1, 1], [], []>} : vector<8x24xbf16>, vector<24x512xbf16>, vector<8x512xf32> -> vector<8x512xf32>
    %c0_17 = arith.constant 0 : index
    %c0_18 = arith.constant 0 : index
    %18 = vector.load %arg8[%c0_17, %c0_18] : memref<1x512xf32, #tpu.memory_space<vmem>>, vector<1x512xf32>
    %19 = vector.broadcast %18 : vector<1x512xf32> to vector<8x512xf32>
    %20 = arith.addf %17, %19 : vector<8x512xf32>
    %21 = vector.extract_strided_slice %6 {offsets = [0, 0], sizes = [8, 256], strides = [1, 1]} : vector<8x1024xf32> to vector<8x256xf32>
    %22 = vector.extract_strided_slice %6 {offsets = [0, 256], sizes = [8, 256], strides = [1, 1]} : vector<8x1024xf32> to vector<8x256xf32>
    %23 = vector.extract_strided_slice %6 {offsets = [0, 512], sizes = [8, 256], strides = [1, 1]} : vector<8x1024xf32> to vector<8x256xf32>
    %24 = vector.extract_strided_slice %6 {offsets = [0, 768], sizes = [8, 256], strides = [1, 1]} : vector<8x1024xf32> to vector<8x256xf32>
    %25 = arith.truncf %13 : vector<8x512xf32> to vector<8x512xbf16>
    %c0_19 = arith.constant 0 : index
    %c0_20 = arith.constant 0 : index
    %26 = vector.load %arg9[%c0_19, %c0_20] : memref<512x256xbf16, #tpu.memory_space<vmem>>, vector<512x256xbf16>
    %cst_21 = arith.constant dense<0.000000e+00> : vector<8x256xf32>
    %27 = tpu.matmul %25, %26, %cst_21 {dimension_numbers = #tpu.dot_dimension_numbers<[1], [0], [0], [1], [0, 0, 1, 1], [], []>} : vector<8x512xbf16>, vector<512x256xbf16>, vector<8x256xf32> -> vector<8x256xf32>
    %c0_22 = arith.constant 0 : index
    %c0_23 = arith.constant 0 : index
    %28 = vector.load %arg10[%c0_22, %c0_23] : memref<1x256xf32, #tpu.memory_space<vmem>>, vector<1x256xf32>
    %29 = vector.broadcast %28 : vector<1x256xf32> to vector<8x256xf32>
    %30 = arith.addf %27, %29 : vector<8x256xf32>
    %cst_24 = arith.constant 0.000000e+00 : f32
    %31 = vector.broadcast %cst_24 : f32 to vector<8x256xf32>
    %32 = arith.maximumf %30, %31 : vector<8x256xf32>
    %33 = arith.truncf %32 : vector<8x256xf32> to vector<8x256xbf16>
    %c0_25 = arith.constant 0 : index
    %c0_26 = arith.constant 0 : index
    %34 = vector.load %arg11[%c0_25, %c0_26] : memref<256x128xbf16, #tpu.memory_space<vmem>>, vector<256x128xbf16>
    %cst_27 = arith.constant dense<0.000000e+00> : vector<8x128xf32>
    %35 = tpu.matmul %33, %34, %cst_27 {dimension_numbers = #tpu.dot_dimension_numbers<[1], [0], [0], [1], [0, 0, 1, 1], [], []>} : vector<8x256xbf16>, vector<256x128xbf16>, vector<8x128xf32> -> vector<8x128xf32>
    %c0_28 = arith.constant 0 : index
    %c0_29 = arith.constant 0 : index
    %36 = vector.load %arg12[%c0_28, %c0_29] : memref<1x128xf32, #tpu.memory_space<vmem>>, vector<1x128xf32>
    %37 = vector.broadcast %36 : vector<1x128xf32> to vector<8x128xf32>
    %38 = arith.addf %35, %37 : vector<8x128xf32>
    %cst_30 = arith.constant 0.000000e+00 : f32
    %39 = vector.broadcast %cst_30 : f32 to vector<8x128xf32>
    %40 = arith.maximumf %38, %39 : vector<8x128xf32>
    %41 = arith.truncf %40 : vector<8x128xf32> to vector<8x128xbf16>
    %c0_31 = arith.constant 0 : index
    %c0_32 = arith.constant 0 : index
    %42 = vector.load %arg13[%c0_31, %c0_32] : memref<128x128xbf16, #tpu.memory_space<vmem>>, vector<128x128xbf16>
    %cst_33 = arith.constant dense<0.000000e+00> : vector<8x128xf32>
    %43 = tpu.matmul %41, %42, %cst_33 {dimension_numbers = #tpu.dot_dimension_numbers<[1], [0], [0], [1], [0, 0, 1, 1], [], []>} : vector<8x128xbf16>, vector<128x128xbf16>, vector<8x128xf32> -> vector<8x128xf32>
    %c0_34 = arith.constant 0 : index
    %c0_35 = arith.constant 0 : index
    %44 = vector.load %arg14[%c0_34, %c0_35] : memref<1x128xf32, #tpu.memory_space<vmem>>, vector<1x128xf32>
    %45 = vector.broadcast %44 : vector<1x128xf32> to vector<8x128xf32>
    %46 = arith.addf %43, %45 : vector<8x128xf32>
    %c0_36 = arith.constant 0 : index
    %c0_37 = arith.constant 0 : index
    %47 = vector.load %arg49[%c0_36, %c0_37] : memref<8x128xf32, #tpu.memory_space<vmem>>, vector<8x128xf32>
    tpu.vector_store %arg49[%c0_36, %c0_37], %46 {strides = array<i32>} : memref<8x128xf32, #tpu.memory_space<vmem>>, vector<8x128xf32>,
    %48 = arith.truncf %20 : vector<8x512xf32> to vector<8x512xbf16>
    %c0_38 = arith.constant 0 : index
    %c0_39 = arith.constant 0 : index
    %49 = vector.load %arg15[%c0_38, %c0_39] : memref<512x256xbf16, #tpu.memory_space<vmem>>, vector<512x256xbf16>
    %cst_40 = arith.constant dense<0.000000e+00> : vector<8x256xf32>
    %50 = tpu.matmul %48, %49, %cst_40 {dimension_numbers = #tpu.dot_dimension_numbers<[1], [0], [0], [1], [0, 0, 1, 1], [], []>} : vector<8x512xbf16>, vector<512x256xbf16>, vector<8x256xf32> -> vector<8x256xf32>
    %c0_41 = arith.constant 0 : index
    %c0_42 = arith.constant 0 : index
    %51 = vector.load %arg16[%c0_41, %c0_42] : memref<1x256xf32, #tpu.memory_space<vmem>>, vector<1x256xf32>
    %52 = vector.broadcast %51 : vector<1x256xf32> to vector<8x256xf32>
    %53 = arith.addf %50, %52 : vector<8x256xf32>
    %cst_43 = arith.constant 0.000000e+00 : f32
    %54 = vector.broadcast %cst_43 : f32 to vector<8x256xf32>
    %55 = arith.maximumf %53, %54 : vector<8x256xf32>
    %56 = arith.truncf %55 : vector<8x256xf32> to vector<8x256xbf16>
    %c0_44 = arith.constant 0 : index
    %c0_45 = arith.constant 0 : index
    %57 = vector.load %arg17[%c0_44, %c0_45] : memref<256x128xbf16, #tpu.memory_space<vmem>>, vector<256x128xbf16>
    %cst_46 = arith.constant dense<0.000000e+00> : vector<8x128xf32>
    %58 = tpu.matmul %56, %57, %cst_46 {dimension_numbers = #tpu.dot_dimension_numbers<[1], [0], [0], [1], [0, 0, 1, 1], [], []>} : vector<8x256xbf16>, vector<256x128xbf16>, vector<8x128xf32> -> vector<8x128xf32>
    %c0_47 = arith.constant 0 : index
    %c0_48 = arith.constant 0 : index
    %59 = vector.load %arg18[%c0_47, %c0_48] : memref<1x128xf32, #tpu.memory_space<vmem>>, vector<1x128xf32>
    %60 = vector.broadcast %59 : vector<1x128xf32> to vector<8x128xf32>
    %61 = arith.addf %58, %60 : vector<8x128xf32>
    %cst_49 = arith.constant 0.000000e+00 : f32
    %62 = vector.broadcast %cst_49 : f32 to vector<8x128xf32>
    %63 = arith.maximumf %61, %62 : vector<8x128xf32>
    %64 = arith.truncf %63 : vector<8x128xf32> to vector<8x128xbf16>
    %c0_50 = arith.constant 0 : index
    %c0_51 = arith.constant 0 : index
    %65 = vector.load %arg19[%c0_50, %c0_51] : memref<128x128xbf16, #tpu.memory_space<vmem>>, vector<128x128xbf16>
    %cst_52 = arith.constant dense<0.000000e+00> : vector<8x128xf32>
    %66 = tpu.matmul %64, %65, %cst_52 {dimension_numbers = #tpu.dot_dimension_numbers<[1], [0], [0], [1], [0, 0, 1, 1], [], []>} : vector<8x128xbf16>, vector<128x128xbf16>, vector<8x128xf32> -> vector<8x128xf32>
    %c0_53 = arith.constant 0 : index
    %c0_54 = arith.constant 0 : index
    %67 = vector.load %arg20[%c0_53, %c0_54] : memref<1x128xf32, #tpu.memory_space<vmem>>, vector<1x128xf32>
    %68 = vector.broadcast %67 : vector<1x128xf32> to vector<8x128xf32>
    %69 = arith.addf %66, %68 : vector<8x128xf32>
    %c0_55 = arith.constant 0 : index
    %c0_56 = arith.constant 0 : index
    %70 = vector.load %arg50[%c0_55, %c0_56] : memref<8x128xf32, #tpu.memory_space<vmem>>, vector<8x128xf32>
    tpu.vector_store %arg50[%c0_55, %c0_56], %69 {strides = array<i32>} : memref<8x128xf32, #tpu.memory_space<vmem>>, vector<8x128xf32>,
    %71 = arith.truncf %24 : vector<8x256xf32> to vector<8x256xbf16>
    %c0_57 = arith.constant 0 : index
    %c0_58 = arith.constant 0 : index
    %72 = vector.load %arg21[%c0_57, %c0_58] : memref<256x256xbf16, #tpu.memory_space<vmem>>, vector<256x256xbf16>
    %cst_59 = arith.constant dense<0.000000e+00> : vector<8x256xf32>
    %73 = tpu.matmul %71, %72, %cst_59 {dimension_numbers = #tpu.dot_dimension_numbers<[1], [0], [0], [1], [0, 0, 1, 1], [], []>} : vector<8x256xbf16>, vector<256x256xbf16>, vector<8x256xf32> -> vector<8x256xf32>
    %74 = arith.truncf %21 : vector<8x256xf32> to vector<8x256xbf16>
    %c0_60 = arith.constant 0 : index
    %c0_61 = arith.constant 0 : index
    %75 = vector.load %arg22[%c0_60, %c0_61] : memref<256x256xbf16, #tpu.memory_space<vmem>>, vector<256x256xbf16>
    %cst_62 = arith.constant dense<0.000000e+00> : vector<8x256xf32>
    %76 = tpu.matmul %74, %75, %cst_62 {dimension_numbers = #tpu.dot_dimension_numbers<[1], [0], [0], [1], [0, 0, 1, 1], [], []>} : vector<8x256xbf16>, vector<256x256xbf16>, vector<8x256xf32> -> vector<8x256xf32>
    %77 = arith.addf %73, %76 : vector<8x256xf32>
    %c0_63 = arith.constant 0 : index
    %c0_64 = arith.constant 0 : index
    %78 = vector.load %arg23[%c0_63, %c0_64] : memref<1x256xf32, #tpu.memory_space<vmem>>, vector<1x256xf32>
    %79 = vector.broadcast %78 : vector<1x256xf32> to vector<8x256xf32>
    %80 = arith.addf %77, %79 : vector<8x256xf32>
    %cst_65 = arith.constant 0.000000e+00 : f32
    %81 = vector.broadcast %cst_65 : f32 to vector<8x256xf32>
    %82 = arith.maximumf %80, %81 : vector<8x256xf32>
    %83 = arith.truncf %82 : vector<8x256xf32> to vector<8x256xbf16>
    %c0_66 = arith.constant 0 : index
    %c0_67 = arith.constant 0 : index
    %84 = vector.load %arg24[%c0_66, %c0_67] : memref<256x128xbf16, #tpu.memory_space<vmem>>, vector<256x128xbf16>
    %cst_68 = arith.constant dense<0.000000e+00> : vector<8x128xf32>
    %85 = tpu.matmul %83, %84, %cst_68 {dimension_numbers = #tpu.dot_dimension_numbers<[1], [0], [0], [1], [0, 0, 1, 1], [], []>} : vector<8x256xbf16>, vector<256x128xbf16>, vector<8x128xf32> -> vector<8x128xf32>
    %c0_69 = arith.constant 0 : index
    %c0_70 = arith.constant 0 : index
    %86 = vector.load %arg25[%c0_69, %c0_70] : memref<1x128xf32, #tpu.memory_space<vmem>>, vector<1x128xf32>
    %87 = vector.broadcast %86 : vector<1x128xf32> to vector<8x128xf32>
    %88 = arith.addf %85, %87 : vector<8x128xf32>
    %cst_71 = arith.constant 0.000000e+00 : f32
    %89 = vector.broadcast %cst_71 : f32 to vector<8x128xf32>
    %90 = arith.maximumf %88, %89 : vector<8x128xf32>
    %91 = arith.truncf %90 : vector<8x128xf32> to vector<8x128xbf16>
    %c0_72 = arith.constant 0 : index
    %c0_73 = arith.constant 0 : index
    %92 = vector.load %arg26[%c0_72, %c0_73] : memref<128x128xbf16, #tpu.memory_space<vmem>>, vector<128x128xbf16>
    %cst_74 = arith.constant dense<0.000000e+00> : vector<8x128xf32>
    %93 = tpu.matmul %91, %92, %cst_74 {dimension_numbers = #tpu.dot_dimension_numbers<[1], [0], [0], [1], [0, 0, 1, 1], [], []>} : vector<8x128xbf16>, vector<128x128xbf16>, vector<8x128xf32> -> vector<8x128xf32>
    %c0_75 = arith.constant 0 : index
    %c0_76 = arith.constant 0 : index
    %94 = vector.load %arg27[%c0_75, %c0_76] : memref<1x128xf32, #tpu.memory_space<vmem>>, vector<1x128xf32>
    %95 = vector.broadcast %94 : vector<1x128xf32> to vector<8x128xf32>
    %96 = arith.addf %93, %95 : vector<8x128xf32>
    %c0_77 = arith.constant 0 : index
    %c0_78 = arith.constant 0 : index
    %97 = vector.load %arg51[%c0_77, %c0_78] : memref<8x128xf32, #tpu.memory_space<vmem>>, vector<8x128xf32>
    tpu.vector_store %arg51[%c0_77, %c0_78], %96 {strides = array<i32>} : memref<8x128xf32, #tpu.memory_space<vmem>>, vector<8x128xf32>,
    %98 = arith.truncf %23 : vector<8x256xf32> to vector<8x256xbf16>
    %c0_79 = arith.constant 0 : index
    %c0_80 = arith.constant 0 : index
    %99 = vector.load %arg28[%c0_79, %c0_80] : memref<256x256xbf16, #tpu.memory_space<vmem>>, vector<256x256xbf16>
    %cst_81 = arith.constant dense<0.000000e+00> : vector<8x256xf32>
    %100 = tpu.matmul %98, %99, %cst_81 {dimension_numbers = #tpu.dot_dimension_numbers<[1], [0], [0], [1], [0, 0, 1, 1], [], []>} : vector<8x256xbf16>, vector<256x256xbf16>, vector<8x256xf32> -> vector<8x256xf32>
    %101 = arith.truncf %21 : vector<8x256xf32> to vector<8x256xbf16>
    %c0_82 = arith.constant 0 : index
    %c0_83 = arith.constant 0 : index
    %102 = vector.load %arg29[%c0_82, %c0_83] : memref<256x256xbf16, #tpu.memory_space<vmem>>, vector<256x256xbf16>
    %cst_84 = arith.constant dense<0.000000e+00> : vector<8x256xf32>
    %103 = tpu.matmul %101, %102, %cst_84 {dimension_numbers = #tpu.dot_dimension_numbers<[1], [0], [0], [1], [0, 0, 1, 1], [], []>} : vector<8x256xbf16>, vector<256x256xbf16>, vector<8x256xf32> -> vector<8x256xf32>
    %104 = arith.addf %100, %103 : vector<8x256xf32>
    %c0_85 = arith.constant 0 : index
    %c0_86 = arith.constant 0 : index
    %105 = vector.load %arg30[%c0_85, %c0_86] : memref<1x256xf32, #tpu.memory_space<vmem>>, vector<1x256xf32>
    %106 = vector.broadcast %105 : vector<1x256xf32> to vector<8x256xf32>
    %107 = arith.addf %104, %106 : vector<8x256xf32>
    %cst_87 = arith.constant 0.000000e+00 : f32
    %108 = vector.broadcast %cst_87 : f32 to vector<8x256xf32>
    %109 = arith.maximumf %107, %108 : vector<8x256xf32>
    %110 = arith.truncf %109 : vector<8x256xf32> to vector<8x256xbf16>
    %c0_88 = arith.constant 0 : index
    %c0_89 = arith.constant 0 : index
    %111 = vector.load %arg31[%c0_88, %c0_89] : memref<256x128xbf16, #tpu.memory_space<vmem>>, vector<256x128xbf16>
    %cst_90 = arith.constant dense<0.000000e+00> : vector<8x128xf32>
    %112 = tpu.matmul %110, %111, %cst_90 {dimension_numbers = #tpu.dot_dimension_numbers<[1], [0], [0], [1], [0, 0, 1, 1], [], []>} : vector<8x256xbf16>, vector<256x128xbf16>, vector<8x128xf32> -> vector<8x128xf32>
    %c0_91 = arith.constant 0 : index
    %c0_92 = arith.constant 0 : index
    %113 = vector.load %arg32[%c0_91, %c0_92] : memref<1x128xf32, #tpu.memory_space<vmem>>, vector<1x128xf32>
    %114 = vector.broadcast %113 : vector<1x128xf32> to vector<8x128xf32>
    %115 = arith.addf %112, %114 : vector<8x128xf32>
    %cst_93 = arith.constant 0.000000e+00 : f32
    %116 = vector.broadcast %cst_93 : f32 to vector<8x128xf32>
    %117 = arith.maximumf %115, %116 : vector<8x128xf32>
    %118 = arith.truncf %117 : vector<8x128xf32> to vector<8x128xbf16>
    %c0_94 = arith.constant 0 : index
    %c0_95 = arith.constant 0 : index
    %119 = vector.load %arg33[%c0_94, %c0_95] : memref<128x128xbf16, #tpu.memory_space<vmem>>, vector<128x128xbf16>
    %cst_96 = arith.constant dense<0.000000e+00> : vector<8x128xf32>
    %120 = tpu.matmul %118, %119, %cst_96 {dimension_numbers = #tpu.dot_dimension_numbers<[1], [0], [0], [1], [0, 0, 1, 1], [], []>} : vector<8x128xbf16>, vector<128x128xbf16>, vector<8x128xf32> -> vector<8x128xf32>
    %c0_97 = arith.constant 0 : index
    %c0_98 = arith.constant 0 : index
    %121 = vector.load %arg34[%c0_97, %c0_98] : memref<1x128xf32, #tpu.memory_space<vmem>>, vector<1x128xf32>
    %122 = vector.broadcast %121 : vector<1x128xf32> to vector<8x128xf32>
    %123 = arith.addf %120, %122 : vector<8x128xf32>
    %c0_99 = arith.constant 0 : index
    %c0_100 = arith.constant 0 : index
    %124 = vector.load %arg52[%c0_99, %c0_100] : memref<8x128xf32, #tpu.memory_space<vmem>>, vector<8x128xf32>
    tpu.vector_store %arg52[%c0_99, %c0_100], %123 {strides = array<i32>} : memref<8x128xf32, #tpu.memory_space<vmem>>, vector<8x128xf32>,
    %125 = vector.extract_strided_slice %96 {offsets = [0, 0], sizes = [8, 1], strides = [1, 1]} : vector<8x128xf32> to vector<8x1xf32>
    %c0_101 = arith.constant 0 : index
    %c0_102 = arith.constant 0 : index
    %126 = vector.load %arg35[%c0_101, %c0_102] : memref<1x4xf32, #tpu.memory_space<vmem>>, vector<1x4xf32>
    %cst_103 = arith.constant dense<0.000000e+00> : vector<8x4xf32>
    %127 = tpu.matmul %125, %126, %cst_103 {dimension_numbers = #tpu.dot_dimension_numbers<[1], [0], [0], [1], [0, 0, 1, 1], [], []>} : vector<8x1xf32>, vector<1x4xf32>, vector<8x4xf32> -> vector<8x4xf32>
    %c0_104 = arith.constant 0 : index
    %c0_105 = arith.constant 0 : index
    %128 = vector.load %arg36[%c0_104, %c0_105] : memref<1x4xf32, #tpu.memory_space<vmem>>, vector<1x4xf32>
    %129 = vector.broadcast %128 : vector<1x4xf32> to vector<8x4xf32>
    %130 = arith.addf %127, %129 : vector<8x4xf32>
    %cst_106 = arith.constant 0.000000e+00 : f32
    %131 = vector.broadcast %cst_106 : f32 to vector<8x4xf32>
    %132 = arith.maximumf %130, %131 : vector<8x4xf32>
    %c0_107 = arith.constant 0 : index
    %c0_108 = arith.constant 0 : index
    %133 = vector.load %arg37[%c0_107, %c0_108] : memref<4x16xf32, #tpu.memory_space<vmem>>, vector<4x16xf32>
    %cst_109 = arith.constant dense<0.000000e+00> : vector<8x16xf32>
    %134 = tpu.matmul %132, %133, %cst_109 {dimension_numbers = #tpu.dot_dimension_numbers<[1], [0], [0], [1], [0, 0, 1, 1], [], []>} : vector<8x4xf32>, vector<4x16xf32>, vector<8x16xf32> -> vector<8x16xf32>
    %c0_110 = arith.constant 0 : index
    %c0_111 = arith.constant 0 : index
    %135 = vector.load %arg38[%c0_110, %c0_111] : memref<1x16xf32, #tpu.memory_space<vmem>>, vector<1x16xf32>
    %136 = vector.broadcast %135 : vector<1x16xf32> to vector<8x16xf32>
    %137 = arith.addf %134, %136 : vector<8x16xf32>
    %cst_112 = arith.constant 0.000000e+00 : f32
    %138 = vector.broadcast %cst_112 : f32 to vector<8x16xf32>
    %139 = arith.maximumf %137, %138 : vector<8x16xf32>
    %c0_113 = arith.constant 0 : index
    %c0_114 = arith.constant 0 : index
    %140 = vector.load %arg39[%c0_113, %c0_114] : memref<16x32xf32, #tpu.memory_space<vmem>>, vector<16x32xf32>
    %cst_115 = arith.constant dense<0.000000e+00> : vector<8x32xf32>
    %141 = tpu.matmul %139, %140, %cst_115 {dimension_numbers = #tpu.dot_dimension_numbers<[1], [0], [0], [1], [0, 0, 1, 1], [], []>} : vector<8x16xf32>, vector<16x32xf32>, vector<8x32xf32> -> vector<8x32xf32>
    %c0_116 = arith.constant 0 : index
    %c0_117 = arith.constant 0 : index
    %142 = vector.load %arg40[%c0_116, %c0_117] : memref<1x32xf32, #tpu.memory_space<vmem>>, vector<1x32xf32>
    %143 = vector.broadcast %142 : vector<1x32xf32> to vector<8x32xf32>
    %144 = arith.addf %141, %143 : vector<8x32xf32>
    %145 = arith.truncf %22 : vector<8x256xf32> to vector<8x256xbf16>
    %c0_118 = arith.constant 0 : index
    %c0_119 = arith.constant 0 : index
    %146 = vector.load %arg41[%c0_118, %c0_119] : memref<256x1024xbf16, #tpu.memory_space<vmem>>, vector<256x1024xbf16>
    %cst_120 = arith.constant dense<0.000000e+00> : vector<8x1024xf32>
    %147 = tpu.matmul %145, %146, %cst_120 {dimension_numbers = #tpu.dot_dimension_numbers<[1], [0], [0], [1], [0, 0, 1, 1], [], []>} : vector<8x256xbf16>, vector<256x1024xbf16>, vector<8x1024xf32> -> vector<8x1024xf32>
    %148 = arith.truncf %21 : vector<8x256xf32> to vector<8x256xbf16>
    %c0_121 = arith.constant 0 : index
    %c0_122 = arith.constant 0 : index
    %149 = vector.load %arg42[%c0_121, %c0_122] : memref<256x1024xbf16, #tpu.memory_space<vmem>>, vector<256x1024xbf16>
    %cst_123 = arith.constant dense<0.000000e+00> : vector<8x1024xf32>
    %150 = tpu.matmul %148, %149, %cst_123 {dimension_numbers = #tpu.dot_dimension_numbers<[1], [0], [0], [1], [0, 0, 1, 1], [], []>} : vector<8x256xbf16>, vector<256x1024xbf16>, vector<8x1024xf32> -> vector<8x1024xf32>
    %151 = arith.addf %147, %150 : vector<8x1024xf32>
    %152 = arith.truncf %144 : vector<8x32xf32> to vector<8x32xbf16>
    %c0_124 = arith.constant 0 : index
    %c0_125 = arith.constant 0 : index
    %153 = vector.load %arg43[%c0_124, %c0_125] : memref<32x1024xbf16, #tpu.memory_space<vmem>>, vector<32x1024xbf16>
    %cst_126 = arith.constant dense<0.000000e+00> : vector<8x1024xf32>
    %154 = tpu.matmul %152, %153, %cst_126 {dimension_numbers = #tpu.dot_dimension_numbers<[1], [0], [0], [1], [0, 0, 1, 1], [], []>} : vector<8x32xbf16>, vector<32x1024xbf16>, vector<8x1024xf32> -> vector<8x1024xf32>
    %155 = arith.addf %151, %154 : vector<8x1024xf32>
    %c0_127 = arith.constant 0 : index
    %c0_128 = arith.constant 0 : index
    %156 = vector.load %arg44[%c0_127, %c0_128] : memref<1x1024xf32, #tpu.memory_space<vmem>>, vector<1x1024xf32>
    %157 = vector.broadcast %156 : vector<1x1024xf32> to vector<8x1024xf32>
    %158 = arith.addf %155, %157 : vector<8x1024xf32>
    %cst_129 = arith.constant 0.000000e+00 : f32
    %159 = vector.broadcast %cst_129 : f32 to vector<8x1024xf32>
    %160 = arith.maximumf %158, %159 : vector<8x1024xf32>
    %161 = arith.truncf %160 : vector<8x1024xf32> to vector<8x1024xbf16>
    %c0_130 = arith.constant 0 : index
    %c0_131 = arith.constant 0 : index
    %162 = vector.load %arg45[%c0_130, %c0_131] : memref<1024x1024xbf16, #tpu.memory_space<vmem>>, vector<1024x1024xbf16>
    %cst_132 = arith.constant dense<0.000000e+00> : vector<8x1024xf32>
    %163 = tpu.matmul %161, %162, %cst_132 {dimension_numbers = #tpu.dot_dimension_numbers<[1], [0], [0], [1], [0, 0, 1, 1], [], []>} : vector<8x1024xbf16>, vector<1024x1024xbf16>, vector<8x1024xf32> -> vector<8x1024xf32>
    %c0_133 = arith.constant 0 : index
    %c0_134 = arith.constant 0 : index
    %164 = vector.load %arg46[%c0_133, %c0_134] : memref<1x1024xf32, #tpu.memory_space<vmem>>, vector<1x1024xf32>
    %165 = vector.broadcast %164 : vector<1x1024xf32> to vector<8x1024xf32>
    %166 = arith.addf %163, %165 : vector<8x1024xf32>
    %cst_135 = arith.constant 0.000000e+00 : f32
    %167 = vector.broadcast %cst_135 : f32 to vector<8x1024xf32>
    %168 = arith.maximumf %166, %167 : vector<8x1024xf32>
    %169 = arith.truncf %168 : vector<8x1024xf32> to vector<8x1024xbf16>
    %c0_136 = arith.constant 0 : index
    %c0_137 = arith.constant 0 : index
    %170 = vector.load %arg47[%c0_136, %c0_137] : memref<1024x128xbf16, #tpu.memory_space<vmem>>, vector<1024x128xbf16>
    %cst_138 = arith.constant dense<0.000000e+00> : vector<8x128xf32>
    %171 = tpu.matmul %169, %170, %cst_138 {dimension_numbers = #tpu.dot_dimension_numbers<[1], [0], [0], [1], [0, 0, 1, 1], [], []>} : vector<8x1024xbf16>, vector<1024x128xbf16>, vector<8x128xf32> -> vector<8x128xf32>
    %c0_139 = arith.constant 0 : index
    %c0_140 = arith.constant 0 : index
    %172 = vector.load %arg48[%c0_139, %c0_140] : memref<1x128xf32, #tpu.memory_space<vmem>>, vector<1x128xf32>
    %173 = vector.broadcast %172 : vector<1x128xf32> to vector<8x128xf32>
    %174 = arith.addf %171, %173 : vector<8x128xf32>
    %c0_141 = arith.constant 0 : index
    %c0_142 = arith.constant 0 : index
    %175 = vector.load %arg53[%c0_141, %c0_142] : memref<8x128xf32, #tpu.memory_space<vmem>>, vector<8x128xf32>
    tpu.vector_store %arg53[%c0_141, %c0_142], %174 {strides = array<i32>} : memref<8x128xf32, #tpu.memory_space<vmem>>, vector<8x128xf32>,
    return
  }
}

</mosaic_0001>

<llo_original>
// kernel: tpu_custom_call.1
$region0: #{tpu_custom_call.1}
  #allocation0 [shape = 'u32[]', space=smem, size = 0x4, offset = 0x4, fixed_abs, tag = 'smem constant byte address 0x4 - core index']
  #allocation1 [shape = 'u32[144,128]{1,0:T(1,128)}', space=vmem, size = 0x12000, scoped, tag = 'internal scratch']
  %s0 = inlined_call_operand.smem [shape: u32[54], index: -1, kind: input, shape index: {}]
  %s1 = sld [smem:[%s0]]
  %s2 = scalar_lea.smem %s0, 1
  %s3 = sld [smem:[%s2]]
  %s4 = scalar_lea.smem %s0, 2
  %s5 = sld [smem:[%s4]]
  %s6 = scalar_lea.smem %s0, 3
  %s7 = sld [smem:[%s6]]
  %s8 = scalar_lea.smem %s0, 4
  %s9 = sld [smem:[%s8]]
  %s10 = scalar_lea.smem %s0, 5
  %s11 = sld [smem:[%s10]]
  %s12 = scalar_lea.smem %s0, 6
  %s13 = sld [smem:[%s12]]
  %s14 = scalar_lea.smem %s0, 7
  %s15 = sld [smem:[%s14]]
  %s16 = scalar_lea.smem %s0, 8
  %s17 = sld [smem:[%s16]]
  %s18 = scalar_lea.smem %s0, 9
  %s19 = sld [smem:[%s18]]
  %s20 = scalar_lea.smem %s0, 10
  %s21 = sld [smem:[%s20]]
  %s22 = scalar_lea.smem %s0, 11
  %s23 = sld [smem:[%s22]]
  %s24 = scalar_lea.smem %s0, 12
  %s25 = sld [smem:[%s24]]
  %s26 = scalar_lea.smem %s0, 13
  %s27 = sld [smem:[%s26]]
  %s28 = scalar_lea.smem %s0, 14
  %s29 = sld [smem:[%s28]]
  %s30 = scalar_lea.smem %s0, 15
  %s31 = sld [smem:[%s30]]
  %s32 = scalar_lea.smem %s0, 16
  %s33 = sld [smem:[%s32]]
  %s34 = scalar_lea.smem %s0, 17
  %s35 = sld [smem:[%s34]]
  %s36 = scalar_lea.smem %s0, 18
  %s37 = sld [smem:[%s36]]
  %s38 = scalar_lea.smem %s0, 19
  %s39 = sld [smem:[%s38]]
  %s40 = scalar_lea.smem %s0, 20
  %s41 = sld [smem:[%s40]]
  %s42 = scalar_lea.smem %s0, 21
  %s43 = sld [smem:[%s42]]
  %s44 = scalar_lea.smem %s0, 22
  %s45 = sld [smem:[%s44]]
  %s46 = scalar_lea.smem %s0, 23
  %s47 = sld [smem:[%s46]]
  %s48 = scalar_lea.smem %s0, 24
  %s49 = sld [smem:[%s48]]
  %s50 = scalar_lea.smem %s0, 25
  %s51 = sld [smem:[%s50]]
  %s52 = scalar_lea.smem %s0, 26
  %s53 = sld [smem:[%s52]]
  %s54 = scalar_lea.smem %s0, 27
  %s55 = sld [smem:[%s54]]
  %s56 = scalar_lea.smem %s0, 28
  %s57 = sld [smem:[%s56]]
  %s58 = scalar_lea.smem %s0, 29
  %s59 = sld [smem:[%s58]]
  %s60 = scalar_lea.smem %s0, 30
  %s61 = sld [smem:[%s60]]
  %s62 = scalar_lea.smem %s0, 31
  %s63 = sld [smem:[%s62]]
  %s64 = scalar_lea.smem %s0, 32
  %s65 = sld [smem:[%s64]]
  %s66 = scalar_lea.smem %s0, 33
  %s67 = sld [smem:[%s66]]
  %s68 = scalar_lea.smem %s0, 34
  %s69 = sld [smem:[%s68]]
  %s70 = scalar_lea.smem %s0, 35
  %s71 = sld [smem:[%s70]]
  %s72 = scalar_lea.smem %s0, 36
  %s73 = sld [smem:[%s72]]
  %s74 = scalar_lea.smem %s0, 37
  %s75 = sld [smem:[%s74]]
  %s76 = scalar_lea.smem %s0, 38
  %s77 = sld [smem:[%s76]]
  %s78 = scalar_lea.smem %s0, 39
  %s79 = sld [smem:[%s78]]
  %s80 = scalar_lea.smem %s0, 40
  %s81 = sld [smem:[%s80]]
  %s82 = scalar_lea.smem %s0, 41
  %s83 = sld [smem:[%s82]]
  %s84 = scalar_lea.smem %s0, 42
  %s85 = sld [smem:[%s84]]
  %s86 = scalar_lea.smem %s0, 43
  %s87 = sld [smem:[%s86]]
  %s88 = scalar_lea.smem %s0, 44
  %s89 = sld [smem:[%s88]]
  %s90 = scalar_lea.smem %s0, 45
  %s91 = sld [smem:[%s90]]
  %s92 = scalar_lea.smem %s0, 46
  %s93 = sld [smem:[%s92]]
  %s94 = scalar_lea.smem %s0, 47
  %s95 = sld [smem:[%s94]]
  %s96 = scalar_lea.smem %s0, 48
  %s97 = sld [smem:[%s96]]
  %s98 = scalar_lea.smem %s0, 49
  %s99 = sld [smem:[%s98]]
  %s100 = scalar_lea.smem %s0, 50
  %s101 = sld [smem:[%s100]]
  %s102 = scalar_lea.smem %s0, 51
  %s103 = sld [smem:[%s102]]
  %s104 = scalar_lea.smem %s0, 52
  %s105 = sld [smem:[%s104]]
  %s106 = scalar_lea.smem %s0, 53
  %s107 = sld [smem:[%s106]]
  %108 = xla_tuple %s99, %s101, %s103, %s105, %s107
  %s109 = sld [smem:[#allocation0]]
  $region434: #{tpu_custom_call.1} parent=0
    _
  %s111 = ssub.s32 1, %s109
  %s112 = scalar_select 0, %s111, %s109
  $region1: #{tpu_custom_call.1} parent=0
    #allocation2 [shape = 'u8[4096]{0}', space=vmem, size = 0x1000, scoped, tag = 'input window, operand 0, single buffered']
    #allocation3 [shape = 's32[1]{0}', space=sflag, size = 0x4, scoped, tag = 'scoped memory for tpu_custom_call.1']
    #allocation4 [shape = 's32[1]{0}', space=sflag, size = 0x4, scoped, tag = 'scoped memory for tpu_custom_call.1']
    #allocation5 [shape = 'u8[4096]{0}', space=vmem, size = 0x1000, scoped, tag = 'input window, operand 1, single buffered']
    #allocation6 [shape = 's32[1]{0}', space=sflag, size = 0x4, scoped, tag = 'scoped memory for tpu_custom_call.1']
    #allocation7 [shape = 'u8[4096]{0}', space=vmem, size = 0x1000, scoped, tag = 'input window, operand 2, single buffered']
    #allocation8 [shape = 'u8[98304]{0}', space=vmem, size = 0x18000, scoped, tag = 'input window, operand 3, single buffered']
    #allocation9 [shape = 's32[1]{0}', space=sflag, size = 0x4, scoped, tag = 'scoped memory for tpu_custom_call.1']
    #allocation10 [shape = 'u8[4096]{0}', space=vmem, size = 0x1000, scoped, tag = 'input window, operand 4, single buffered']
    #allocation11 [shape = 'u8[24576]{0}', space=vmem, size = 0x6000, scoped, tag = 'input window, operand 5, single buffered']
    #allocation12 [shape = 's32[1]{0}', space=sflag, size = 0x4, scoped, tag = 'scoped memory for tpu_custom_call.1']
    #allocation13 [shape = 'u8[2048]{0}', space=vmem, size = 0x800, scoped, tag = 'input window, operand 6, single buffered']
    #allocation14 [shape = 'u8[24576]{0}', space=vmem, size = 0x6000, scoped, tag = 'input window, operand 7, single buffered']
    #allocation15 [shape = 's32[1]{0}', space=sflag, size = 0x4, scoped, tag = 'scoped memory for tpu_custom_call.1']
    #allocation16 [shape = 'u8[2048]{0}', space=vmem, size = 0x800, scoped, tag = 'input window, operand 8, single buffered']
    #allocation17 [shape = 'u8[262144]{0}', space=vmem, size = 0x40000, scoped, tag = 'input window, operand 9, single buffered']
    #allocation18 [shape = 's32[1]{0}', space=sflag, size = 0x4, scoped, tag = 'scoped memory for tpu_custom_call.1']
    #allocation19 [shape = 'u8[1024]{0}', space=vmem, size = 0x400, scoped, tag = 'input window, operand 10, single buffered']
    #allocation20 [shape = 'u8[65536]{0}', space=vmem, size = 0x10000, scoped, tag = 'input window, operand 11, single buffered']
    #allocation21 [shape = 's32[1]{0}', space=sflag, size = 0x4, scoped, tag = 'scoped memory for tpu_custom_call.1']
    #allocation22 [shape = 'u8[512]{0}', space=vmem, size = 0x400, scoped, tag = 'input window, operand 12, single buffered']
    #allocation23 [shape = 'u8[32768]{0}', space=vmem, size = 0x8000, scoped, tag = 'input window, operand 13, single buffered']
    #allocation24 [shape = 's32[1]{0}', space=sflag, size = 0x4, scoped, tag = 'scoped memory for tpu_custom_call.1']
    #allocation25 [shape = 'u8[512]{0}', space=vmem, size = 0x400, scoped, tag = 'input window, operand 14, single buffered']
    #allocation26 [shape = 'u8[262144]{0}', space=vmem, size = 0x40000, scoped, tag = 'input window, operand 15, single buffered']
    #allocation27 [shape = 's32[1]{0}', space=sflag, size = 0x4, scoped, tag = 'scoped memory for tpu_custom_call.1']
    #allocation28 [shape = 'u8[1024]{0}', space=vmem, size = 0x400, scoped, tag = 'input window, operand 16, single buffered']
    #allocation29 [shape = 'u8[65536]{0}', space=vmem, size = 0x10000, scoped, tag = 'input window, operand 17, single buffered']
    #allocation30 [shape = 's32[1]{0}', space=sflag, size = 0x4, scoped, tag = 'scoped memory for tpu_custom_call.1']
    #allocation31 [shape = 'u8[512]{0}', space=vmem, size = 0x400, scoped, tag = 'input window, operand 18, single buffered']
    #allocation32 [shape = 'u8[32768]{0}', space=vmem, size = 0x8000, scoped, tag = 'input window, operand 19, single buffered']
    #allocation33 [shape = 's32[1]{0}', space=sflag, size = 0x4, scoped, tag = 'scoped memory for tpu_custom_call.1']
    #allocation34 [shape = 'u8[512]{0}', space=vmem, size = 0x400, scoped, tag = 'input window, operand 20, single buffered']
    #allocation35 [shape = 'u8[131072]{0}', space=vmem, size = 0x20000, scoped, tag = 'input window, operand 21, single buffered']
    #allocation36 [shape = 's32[1]{0}', space=sflag, size = 0x4, scoped, tag = 'scoped memory for tpu_custom_call.1']
    #allocation37 [shape = 'u8[131072]{0}', space=vmem, size = 0x20000, scoped, tag = 'input window, operand 22, single buffered']
    #allocation38 [shape = 'u8[1024]{0}', space=vmem, size = 0x400, scoped, tag = 'input window, operand 23, single buffered']
    #allocation39 [shape = 's32[1]{0}', space=sflag, size = 0x4, scoped, tag = 'scoped memory for tpu_custom_call.1']
    #allocation40 [shape = 'u8[65536]{0}', space=vmem, size = 0x10000, scoped, tag = 'input window, operand 24, single buffered']
    #allocation41 [shape = 'u8[512]{0}', space=vmem, size = 0x400, scoped, tag = 'input window, operand 25, single buffered']
    #allocation42 [shape = 's32[1]{0}', space=sflag, size = 0x4, scoped, tag = 'scoped memory for tpu_custom_call.1']
    #allocation43 [shape = 'u8[32768]{0}', space=vmem, size = 0x8000, scoped, tag = 'input window, operand 26, single buffered']
    #allocation44 [shape = 'u8[512]{0}', space=vmem, size = 0x400, scoped, tag = 'input window, operand 27, single buffered']
    #allocation45 [shape = 's32[1]{0}', space=sflag, size = 0x4, scoped, tag = 'scoped memory for tpu_custom_call.1']
    #allocation46 [shape = 'u8[131072]{0}', space=vmem, size = 0x20000, scoped, tag = 'input window, operand 28, single buffered']
    #allocation47 [shape = 'u8[131072]{0}', space=vmem, size = 0x20000, scoped, tag = 'input window, operand 29, single buffered']
    #allocation48 [shape = 's32[1]{0}', space=sflag, size = 0x4, scoped, tag = 'scoped memory for tpu_custom_call.1']
    #allocation49 [shape = 'u8[1024]{0}', space=vmem, size = 0x400, scoped, tag = 'input window, operand 30, single buffered']
    #allocation50 [shape = 'u8[65536]{0}', space=vmem, size = 0x10000, scoped, tag = 'input window, operand 31, single buffered']
    #allocation51 [shape = 's32[1]{0}', space=sflag, size = 0x4, scoped, tag = 'scoped memory for tpu_custom_call.1']
    #allocation52 [shape = 'u8[512]{0}', space=vmem, size = 0x400, scoped, tag = 'input window, operand 32, single buffered']
    #allocation53 [shape = 'u8[32768]{0}', space=vmem, size = 0x8000, scoped, tag = 'input window, operand 33, single buffered']
    #allocation54 [shape = 's32[1]{0}', space=sflag, size = 0x4, scoped, tag = 'scoped memory for tpu_custom_call.1']
    #allocation55 [shape = 'u8[512]{0}', space=vmem, size = 0x400, scoped, tag = 'input window, operand 34, single buffered']
    #allocation56 [shape = 'u8[512]{0}', space=vmem, size = 0x400, scoped, tag = 'input window, operand 35, single buffered']
    #allocation57 [shape = 's32[1]{0}', space=sflag, size = 0x4, scoped, tag = 'scoped memory for tpu_custom_call.1']
    #allocation58 [shape = 'u8[512]{0}', space=vmem, size = 0x400, scoped, tag = 'input window, operand 36, single buffered']
    #allocation59 [shape = 'u8[2048]{0}', space=vmem, size = 0x800, scoped, tag = 'input window, operand 37, single buffered']
    #allocation60 [shape = 's32[1]{0}', space=sflag, size = 0x4, scoped, tag = 'scoped memory for tpu_custom_call.1']
    #allocation61 [shape = 'u8[512]{0}', space=vmem, size = 0x400, scoped, tag = 'input window, operand 38, single buffered']
    #allocation62 [shape = 'u8[8192]{0}', space=vmem, size = 0x2000, scoped, tag = 'input window, operand 39, single buffered']
    #allocation63 [shape = 's32[1]{0}', space=sflag, size = 0x4, scoped, tag = 'scoped memory for tpu_custom_call.1']
    #allocation64 [shape = 'u8[512]{0}', space=vmem, size = 0x400, scoped, tag = 'input window, operand 40, single buffered']
    #allocation65 [shape = 'u8[524288]{0}', space=vmem, size = 0x80000, scoped, tag = 'input window, operand 41, single buffered']
    #allocation66 [shape = 's32[1]{0}', space=sflag, size = 0x4, scoped, tag = 'scoped memory for tpu_custom_call.1']
    #allocation67 [shape = 'u8[524288]{0}', space=vmem, size = 0x80000, scoped, tag = 'input window, operand 42, single buffered']
    #allocation68 [shape = 'u8[65536]{0}', space=vmem, size = 0x10000, scoped, tag = 'input window, operand 43, single buffered']
    #allocation69 [shape = 's32[1]{0}', space=sflag, size = 0x4, scoped, tag = 'scoped memory for tpu_custom_call.1']
    #allocation70 [shape = 'u8[4096]{0}', space=vmem, size = 0x1000, scoped, tag = 'input window, operand 44, single buffered']
    #allocation71 [shape = 'u8[2097152]{0}', space=vmem, size = 0x200000, scoped, tag = 'input window, operand 45, single buffered']
    #allocation72 [shape = 's32[1]{0}', space=sflag, size = 0x4, scoped, tag = 'scoped memory for tpu_custom_call.1']
    #allocation73 [shape = 'u8[4096]{0}', space=vmem, size = 0x1000, scoped, tag = 'input window, operand 46, single buffered']
    #allocation74 [shape = 'u8[262144]{0}', space=vmem, size = 0x40000, scoped, tag = 'input window, operand 47, single buffered']
    #allocation75 [shape = 's32[1]{0}', space=sflag, size = 0x4, scoped, tag = 'scoped memory for tpu_custom_call.1']
    #allocation76 [shape = 'u8[512]{0}', space=vmem, size = 0x400, scoped, tag = 'input window, operand 48, single buffered']
    #allocation77 [shape = 'u8[4096]{0}', space=vmem, size = 0x1000, scoped, tag = 'output window, operand 0, single buffered']
    #allocation78 [shape = 'u8[4096]{0}', space=vmem, size = 0x1000, scoped, tag = 'output window, operand 1, single buffered']
    #allocation79 [shape = 's32[1]{0}', space=sflag, size = 0x4, scoped, tag = 'scoped memory for tpu_custom_call.1']
    #allocation80 [shape = 'u8[4096]{0}', space=vmem, size = 0x1000, scoped, tag = 'output window, operand 2, single buffered']
    #allocation81 [shape = 'u8[4096]{0}', space=vmem, size = 0x1000, scoped, tag = 'output window, operand 3, single buffered']
    #allocation82 [shape = 's32[1]{0}', space=sflag, size = 0x4, scoped, tag = 'scoped memory for tpu_custom_call.1']
    #allocation83 [shape = 'u8[4096]{0}', space=vmem, size = 0x1000, scoped, tag = 'output window, operand 4, single buffered']
    %113 = vsyncpa [#allocation3], 0
    %114 = vsyncpa [#allocation6], 0
    %115 = vsyncpa [#allocation9], 0
    %116 = vsyncpa [#allocation12], 0
    %117 = vsyncpa [#allocation15], 0
    %118 = vsyncpa [#allocation18], 0
    %119 = vsyncpa [#allocation21], 0
    %120 = vsyncpa [#allocation24], 0
    %121 = vsyncpa [#allocation27], 0
    %122 = vsyncpa [#allocation30], 0
    %123 = vsyncpa [#allocation33], 0
    %124 = vsyncpa [#allocation36], 0
    %125 = vsyncpa [#allocation39], 0
    %126 = vsyncpa [#allocation42], 0
    %127 = vsyncpa [#allocation45], 0
    %128 = vsyncpa [#allocation48], 0
    %129 = vsyncpa [#allocation51], 0
    %130 = vsyncpa [#allocation54], 0
    %131 = vsyncpa [#allocation57], 0
    %132 = vsyncpa [#allocation60], 0
    %133 = vsyncpa [#allocation63], 0
    %134 = vsyncpa [#allocation66], 0
    %135 = vsyncpa [#allocation69], 0
    %136 = vsyncpa [#allocation72], 0
    %137 = vsyncpa [#allocation75], 0
    %138 = vsyncpa [#allocation4], 0
    %139 = vsyncpa [#allocation79], 0
    %140 = vsyncpa [#allocation82], 0
    // Predicated region
    $region2: #{tpu_custom_call.1} parent=1 // pred_check
      _
    $region3: #{tpu_custom_call.1} parent=1 // pred_check_branch
      %142 = sbr.rel (0) target = $region5
    $region4: #{tpu_custom_call.1} parent=1 // pred_region
      %s144 = ssub.s32 128, 128
      %145 = vsyncadd [#allocation3], %s144
      %s147 = sshll.u32 [#allocation2], 4
      %s148 = int_to_ptr.vmem [resolvable:$true] %s147
      %150 = dma.hbm_to_vmem [thread:$0]  %s1, 128, %s148, [#allocation3]
    $region5: #{tpu_custom_call.1} parent=1 // pred_fallthru
      _
    // Predicated region
    $region6: #{tpu_custom_call.1} parent=1 // pred_check
      _
    $region7: #{tpu_custom_call.1} parent=1 // pred_check_branch
      %152 = sbr.rel (0) target = $region9
    $region8: #{tpu_custom_call.1} parent=1 // pred_region
      %s154 = ssub.s32 128, 128
      %155 = vsyncadd [#allocation6], %s154
      %s157 = sshll.u32 [#allocation5], 4
      %s158 = int_to_ptr.vmem [resolvable:$true] %s157
      %160 = dma.hbm_to_vmem [thread:$0]  %s3, 128, %s158, [#allocation6]
    $region9: #{tpu_custom_call.1} parent=1 // pred_fallthru
      _
    // Predicated region
    $region10: #{tpu_custom_call.1} parent=1 // pred_check
      _
    $region11: #{tpu_custom_call.1} parent=1 // pred_check_branch
      %162 = sbr.rel (0) target = $region13
    $region12: #{tpu_custom_call.1} parent=1 // pred_region
      %s164 = ssub.s32 128, 128
      %165 = vsyncadd [#allocation6], %s164
      %s167 = sshll.u32 [#allocation7], 4
      %s168 = int_to_ptr.vmem [resolvable:$true] %s167
      %170 = dma.hbm_to_vmem [thread:$0]  %s5, 128, %s168, [#allocation6]
    $region13: #{tpu_custom_call.1} parent=1 // pred_fallthru
      _
    // Predicated region
    $region14: #{tpu_custom_call.1} parent=1 // pred_check
      _
    $region15: #{tpu_custom_call.1} parent=1 // pred_check_branch
      %172 = sbr.rel (0) target = $region17
    $region16: #{tpu_custom_call.1} parent=1 // pred_region
      %s174 = ssub.s32 3072, 3072
      %175 = vsyncadd [#allocation9], %s174
      %s176 = sshll.u32 [#allocation8], 4
      %s177 = int_to_ptr.vmem [resolvable:$true] %s176
      %182 = dma.hbm_to_vmem [thread:$0]  %s7, 3072, %s177, [#allocation9], 512, 512, 32
    $region17: #{tpu_custom_call.1} parent=1 // pred_fallthru
      _
    // Predicated region
    $region18: #{tpu_custom_call.1} parent=1 // pred_check
      _
    $region19: #{tpu_custom_call.1} parent=1 // pred_check_branch
      %184 = sbr.rel (0) target = $region21
    $region20: #{tpu_custom_call.1} parent=1 // pred_region
      %s186 = ssub.s32 128, 128
      %187 = vsyncadd [#allocation9], %s186
      %s189 = sshll.u32 [#allocation10], 4
      %s190 = int_to_ptr.vmem [resolvable:$true] %s189
      %192 = dma.hbm_to_vmem [thread:$0]  %s9, 128, %s190, [#allocation9]
    $region21: #{tpu_custom_call.1} parent=1 // pred_fallthru
      _
    // Predicated region
    $region22: #{tpu_custom_call.1} parent=1 // pred_check
      _
    $region23: #{tpu_custom_call.1} parent=1 // pred_check_branch
      %194 = sbr.rel (0) target = $region25
    $region24: #{tpu_custom_call.1} parent=1 // pred_region
      %s196 = ssub.s32 768, 768
      %197 = vsyncadd [#allocation12], %s196
      %s198 = sshll.u32 [#allocation11], 4
      %s199 = int_to_ptr.vmem [resolvable:$true] %s198
      %204 = dma.hbm_to_vmem [thread:$0]  %s11, 768, %s199, [#allocation12], 256, 256, 16
    $region25: #{tpu_custom_call.1} parent=1 // pred_fallthru
      _
    // Predicated region
    $region26: #{tpu_custom_call.1} parent=1 // pred_check
      _
    $region27: #{tpu_custom_call.1} parent=1 // pred_check_branch
      %206 = sbr.rel (0) target = $region29
    $region28: #{tpu_custom_call.1} parent=1 // pred_region
      %s208 = ssub.s32 64, 64
      %209 = vsyncadd [#allocation12], %s208
      %s211 = sshll.u32 [#allocation13], 4
      %s212 = int_to_ptr.vmem [resolvable:$true] %s211
      %214 = dma.hbm_to_vmem [thread:$0]  %s13, 64, %s212, [#allocation12]
    $region29: #{tpu_custom_call.1} parent=1 // pred_fallthru
      _
    // Predicated region
    $region30: #{tpu_custom_call.1} parent=1 // pred_check
      _
    $region31: #{tpu_custom_call.1} parent=1 // pred_check_branch
      %216 = sbr.rel (0) target = $region33
    $region32: #{tpu_custom_call.1} parent=1 // pred_region
      %s218 = ssub.s32 768, 768
      %219 = vsyncadd [#allocation15], %s218
      %s220 = sshll.u32 [#allocation14], 4
      %s221 = int_to_ptr.vmem [resolvable:$true] %s220
      %226 = dma.hbm_to_vmem [thread:$0]  %s15, 768, %s221, [#allocation15], 256, 256, 16
    $region33: #{tpu_custom_call.1} parent=1 // pred_fallthru
      _
    // Predicated region
    $region34: #{tpu_custom_call.1} parent=1 // pred_check
      _
    $region35: #{tpu_custom_call.1} parent=1 // pred_check_branch
      %228 = sbr.rel (0) target = $region37
    $region36: #{tpu_custom_call.1} parent=1 // pred_region
      %s230 = ssub.s32 64, 64
      %231 = vsyncadd [#allocation15], %s230
      %s233 = sshll.u32 [#allocation16], 4
      %s234 = int_to_ptr.vmem [resolvable:$true] %s233
      %236 = dma.hbm_to_vmem [thread:$0]  %s17, 64, %s234, [#allocation15]
    $region37: #{tpu_custom_call.1} parent=1 // pred_fallthru
      _
    // Predicated region
    $region38: #{tpu_custom_call.1} parent=1 // pred_check
      _
    $region39: #{tpu_custom_call.1} parent=1 // pred_check_branch
      %238 = sbr.rel (0) target = $region41
    $region40: #{tpu_custom_call.1} parent=1 // pred_region
      %s240 = ssub.s32 8192, 8192
      %241 = vsyncadd [#allocation18], %s240
      %s242 = sshll.u32 [#allocation17], 4
      %s243 = int_to_ptr.vmem [resolvable:$true] %s242
      %248 = dma.hbm_to_vmem [thread:$0]  %s19, 8192, %s243, [#allocation18], 128, 128, 8
    $region41: #{tpu_custom_call.1} parent=1 // pred_fallthru
      _
    // Predicated region
    $region42: #{tpu_custom_call.1} parent=1 // pred_check
      _
    $region43: #{tpu_custom_call.1} parent=1 // pred_check_branch
      %250 = sbr.rel (0) target = $region45
    $region44: #{tpu_custom_call.1} parent=1 // pred_region
      %s252 = ssub.s32 32, 32
      %253 = vsyncadd [#allocation18], %s252
      %s255 = sshll.u32 [#allocation19], 4
      %s256 = int_to_ptr.vmem [resolvable:$true] %s255
      %258 = dma.hbm_to_vmem [thread:$0]  %s21, 32, %s256, [#allocation18]
    $region45: #{tpu_custom_call.1} parent=1 // pred_fallthru
      _
    // Predicated region
    $region46: #{tpu_custom_call.1} parent=1 // pred_check
      _
    $region47: #{tpu_custom_call.1} parent=1 // pred_check_branch
      %260 = sbr.rel (0) target = $region49
    $region48: #{tpu_custom_call.1} parent=1 // pred_region
      %s262 = ssub.s32 2048, 2048
      %263 = vsyncadd [#allocation21], %s262
      %s264 = sshll.u32 [#allocation20], 4
      %s265 = int_to_ptr.vmem [resolvable:$true] %s264
      %270 = dma.hbm_to_vmem [thread:$0]  %s23, 2048, %s265, [#allocation21], 64, 64, 4
    $region49: #{tpu_custom_call.1} parent=1 // pred_fallthru
      _
    // Predicated region
    $region50: #{tpu_custom_call.1} parent=1 // pred_check
      _
    $region51: #{tpu_custom_call.1} parent=1 // pred_check_branch
      %272 = sbr.rel (0) target = $region53
    $region52: #{tpu_custom_call.1} parent=1 // pred_region
      %s274 = ssub.s32 16, 16
      %275 = vsyncadd [#allocation21], %s274
      %s277 = sshll.u32 [#allocation22], 4
      %s278 = int_to_ptr.vmem [resolvable:$true] %s277
      %280 = dma.hbm_to_vmem [thread:$0]  %s25, 16, %s278, [#allocation21]
    $region53: #{tpu_custom_call.1} parent=1 // pred_fallthru
      _
    // Predicated region
    $region54: #{tpu_custom_call.1} parent=1 // pred_check
      _
    $region55: #{tpu_custom_call.1} parent=1 // pred_check_branch
      %282 = sbr.rel (0) target = $region57
    $region56: #{tpu_custom_call.1} parent=1 // pred_region
      %s284 = ssub.s32 1024, 1024
      %285 = vsyncadd [#allocation24], %s284
      %s286 = sshll.u32 [#allocation23], 4
      %s287 = int_to_ptr.vmem [resolvable:$true] %s286
      %292 = dma.hbm_to_vmem [thread:$0]  %s27, 1024, %s287, [#allocation24], 64, 64, 4
    $region57: #{tpu_custom_call.1} parent=1 // pred_fallthru
      _
    // Predicated region
    $region58: #{tpu_custom_call.1} parent=1 // pred_check
      _
    $region59: #{tpu_custom_call.1} parent=1 // pred_check_branch
      %294 = sbr.rel (0) target = $region61
    $region60: #{tpu_custom_call.1} parent=1 // pred_region
      %s296 = ssub.s32 16, 16
      %297 = vsyncadd [#allocation24], %s296
      %s299 = sshll.u32 [#allocation25], 4
      %s300 = int_to_ptr.vmem [resolvable:$true] %s299
      %302 = dma.hbm_to_vmem [thread:$0]  %s29, 16, %s300, [#allocation24]
    $region61: #{tpu_custom_call.1} parent=1 // pred_fallthru
      _
    // Predicated region
    $region62: #{tpu_custom_call.1} parent=1 // pred_check
      _
    $region63: #{tpu_custom_call.1} parent=1 // pred_check_branch
      %304 = sbr.rel (0) target = $region65
    $region64: #{tpu_custom_call.1} parent=1 // pred_region
      %s306 = ssub.s32 8192, 8192
      %307 = vsyncadd [#allocation27], %s306
      %s308 = sshll.u32 [#allocation26], 4
      %s309 = int_to_ptr.vmem [resolvable:$true] %s308
      %314 = dma.hbm_to_vmem [thread:$0]  %s31, 8192, %s309, [#allocation27], 128, 128, 8
    $region65: #{tpu_custom_call.1} parent=1 // pred_fallthru
      _
    // Predicated region
    $region66: #{tpu_custom_call.1} parent=1 // pred_check
      _
    $region67: #{tpu_custom_call.1} parent=1 // pred_check_branch
      %316 = sbr.rel (0) target = $region69
    $region68: #{tpu_custom_call.1} parent=1 // pred_region
      %s318 = ssub.s32 32, 32
      %319 = vsyncadd [#allocation27], %s318
      %s321 = sshll.u32 [#allocation28], 4
      %s322 = int_to_ptr.vmem [resolvable:$true] %s321
      %324 = dma.hbm_to_vmem [thread:$0]  %s33, 32, %s322, [#allocation27]
    $region69: #{tpu_custom_call.1} parent=1 // pred_fallthru
      _
    // Predicated region
    $region70: #{tpu_custom_call.1} parent=1 // pred_check
      _
    $region71: #{tpu_custom_call.1} parent=1 // pred_check_branch
      %326 = sbr.rel (0) target = $region73
    $region72: #{tpu_custom_call.1} parent=1 // pred_region
      %s328 = ssub.s32 2048, 2048
      %329 = vsyncadd [#allocation30], %s328
      %s330 = sshll.u32 [#allocation29], 4
      %s331 = int_to_ptr.vmem [resolvable:$true] %s330
      %336 = dma.hbm_to_vmem [thread:$0]  %s35, 2048, %s331, [#allocation30], 64, 64, 4
    $region73: #{tpu_custom_call.1} parent=1 // pred_fallthru
      _
    // Predicated region
    $region74: #{tpu_custom_call.1} parent=1 // pred_check
      _
    $region75: #{tpu_custom_call.1} parent=1 // pred_check_branch
      %338 = sbr.rel (0) target = $region77
    $region76: #{tpu_custom_call.1} parent=1 // pred_region
      %s340 = ssub.s32 16, 16
      %341 = vsyncadd [#allocation30], %s340
      %s343 = sshll.u32 [#allocation31], 4
      %s344 = int_to_ptr.vmem [resolvable:$true] %s343
      %346 = dma.hbm_to_vmem [thread:$0]  %s37, 16, %s344, [#allocation30]
    $region77: #{tpu_custom_call.1} parent=1 // pred_fallthru
      _
    // Predicated region
    $region78: #{tpu_custom_call.1} parent=1 // pred_check
      _
    $region79: #{tpu_custom_call.1} parent=1 // pred_check_branch
      %348 = sbr.rel (0) target = $region81
    $region80: #{tpu_custom_call.1} parent=1 // pred_region
      %s350 = ssub.s32 1024, 1024
      %351 = vsyncadd [#allocation33], %s350
      %s352 = sshll.u32 [#allocation32], 4
      %s353 = int_to_ptr.vmem [resolvable:$true] %s352
      %358 = dma.hbm_to_vmem [thread:$0]  %s39, 1024, %s353, [#allocation33], 64, 64, 4
    $region81: #{tpu_custom_call.1} parent=1 // pred_fallthru
      _
    // Predicated region
    $region82: #{tpu_custom_call.1} parent=1 // pred_check
      _
    $region83: #{tpu_custom_call.1} parent=1 // pred_check_branch
      %360 = sbr.rel (0) target = $region85
    $region84: #{tpu_custom_call.1} parent=1 // pred_region
      %s362 = ssub.s32 16, 16
      %363 = vsyncadd [#allocation33], %s362
      %s365 = sshll.u32 [#allocation34], 4
      %s366 = int_to_ptr.vmem [resolvable:$true] %s365
      %368 = dma.hbm_to_vmem [thread:$0]  %s41, 16, %s366, [#allocation33]
    $region85: #{tpu_custom_call.1} parent=1 // pred_fallthru
      _
    // Predicated region
    $region86: #{tpu_custom_call.1} parent=1 // pred_check
      _
    $region87: #{tpu_custom_call.1} parent=1 // pred_check_branch
      %370 = sbr.rel (0) target = $region89
    $region88: #{tpu_custom_call.1} parent=1 // pred_region
      %s372 = ssub.s32 4096, 4096
      %373 = vsyncadd [#allocation36], %s372
      %s374 = sshll.u32 [#allocation35], 4
      %s375 = int_to_ptr.vmem [resolvable:$true] %s374
      %380 = dma.hbm_to_vmem [thread:$0]  %s43, 4096, %s375, [#allocation36], 128, 128, 8
    $region89: #{tpu_custom_call.1} parent=1 // pred_fallthru
      _
    // Predicated region
    $region90: #{tpu_custom_call.1} parent=1 // pred_check
      _
    $region91: #{tpu_custom_call.1} parent=1 // pred_check_branch
      %382 = sbr.rel (0) target = $region93
    $region92: #{tpu_custom_call.1} parent=1 // pred_region
      %s384 = ssub.s32 4096, 4096
      %385 = vsyncadd [#allocation36], %s384
      %s386 = sshll.u32 [#allocation37], 4
      %s387 = int_to_ptr.vmem [resolvable:$true] %s386
      %392 = dma.hbm_to_vmem [thread:$0]  %s45, 4096, %s387, [#allocation36], 128, 128, 8
    $region93: #{tpu_custom_call.1} parent=1 // pred_fallthru
      _
    // Predicated region
    $region94: #{tpu_custom_call.1} parent=1 // pred_check
      _
    $region95: #{tpu_custom_call.1} parent=1 // pred_check_branch
      %394 = sbr.rel (0) target = $region97
    $region96: #{tpu_custom_call.1} parent=1 // pred_region
      %s396 = ssub.s32 32, 32
      %397 = vsyncadd [#allocation39], %s396
      %s399 = sshll.u32 [#allocation38], 4
      %s400 = int_to_ptr.vmem [resolvable:$true] %s399
      %402 = dma.hbm_to_vmem [thread:$0]  %s47, 32, %s400, [#allocation39]
    $region97: #{tpu_custom_call.1} parent=1 // pred_fallthru
      _
    // Predicated region
    $region98: #{tpu_custom_call.1} parent=1 // pred_check
      _
    $region99: #{tpu_custom_call.1} parent=1 // pred_check_branch
      %404 = sbr.rel (0) target = $region101
    $region100: #{tpu_custom_call.1} parent=1 // pred_region
      %s406 = ssub.s32 2048, 2048
      %407 = vsyncadd [#allocation39], %s406
      %s408 = sshll.u32 [#allocation40], 4
      %s409 = int_to_ptr.vmem [resolvable:$true] %s408
      %414 = dma.hbm_to_vmem [thread:$0]  %s49, 2048, %s409, [#allocation39], 64, 64, 4
    $region101: #{tpu_custom_call.1} parent=1 // pred_fallthru
      _
    // Predicated region
    $region102: #{tpu_custom_call.1} parent=1 // pred_check
      _
    $region103: #{tpu_custom_call.1} parent=1 // pred_check_branch
      %416 = sbr.rel (0) target = $region105
    $region104: #{tpu_custom_call.1} parent=1 // pred_region
      %s418 = ssub.s32 16, 16
      %419 = vsyncadd [#allocation42], %s418
      %s421 = sshll.u32 [#allocation41], 4
      %s422 = int_to_ptr.vmem [resolvable:$true] %s421
      %424 = dma.hbm_to_vmem [thread:$0]  %s51, 16, %s422, [#allocation42]
    $region105: #{tpu_custom_call.1} parent=1 // pred_fallthru
      _
    // Predicated region
    $region106: #{tpu_custom_call.1} parent=1 // pred_check
      _
    $region107: #{tpu_custom_call.1} parent=1 // pred_check_branch
      %426 = sbr.rel (0) target = $region109
    $region108: #{tpu_custom_call.1} parent=1 // pred_region
      %s428 = ssub.s32 1024, 1024
      %429 = vsyncadd [#allocation42], %s428
      %s430 = sshll.u32 [#allocation43], 4
      %s431 = int_to_ptr.vmem [resolvable:$true] %s430
      %436 = dma.hbm_to_vmem [thread:$0]  %s53, 1024, %s431, [#allocation42], 64, 64, 4
    $region109: #{tpu_custom_call.1} parent=1 // pred_fallthru
      _
    // Predicated region
    $region110: #{tpu_custom_call.1} parent=1 // pred_check
      _
    $region111: #{tpu_custom_call.1} parent=1 // pred_check_branch
      %438 = sbr.rel (0) target = $region113
    $region112: #{tpu_custom_call.1} parent=1 // pred_region
      %s440 = ssub.s32 16, 16
      %441 = vsyncadd [#allocation45], %s440
      %s443 = sshll.u32 [#allocation44], 4
      %s444 = int_to_ptr.vmem [resolvable:$true] %s443
      %446 = dma.hbm_to_vmem [thread:$0]  %s55, 16, %s444, [#allocation45]
    $region113: #{tpu_custom_call.1} parent=1 // pred_fallthru
      _
    // Predicated region
    $region114: #{tpu_custom_call.1} parent=1 // pred_check
      _
    $region115: #{tpu_custom_call.1} parent=1 // pred_check_branch
      %448 = sbr.rel (0) target = $region117
    $region116: #{tpu_custom_call.1} parent=1 // pred_region
      %s450 = ssub.s32 4096, 4096
      %451 = vsyncadd [#allocation45], %s450
      %s452 = sshll.u32 [#allocation46], 4
      %s453 = int_to_ptr.vmem [resolvable:$true] %s452
      %458 = dma.hbm_to_vmem [thread:$0]  %s57, 4096, %s453, [#allocation45], 128, 128, 8
    $region117: #{tpu_custom_call.1} parent=1 // pred_fallthru
      _
    // Predicated region
    $region118: #{tpu_custom_call.1} parent=1 // pred_check
      _
    $region119: #{tpu_custom_call.1} parent=1 // pred_check_branch
      %460 = sbr.rel (0) target = $region121
    $region120: #{tpu_custom_call.1} parent=1 // pred_region
      %s462 = ssub.s32 4096, 4096
      %463 = vsyncadd [#allocation48], %s462
      %s464 = sshll.u32 [#allocation47], 4
      %s465 = int_to_ptr.vmem [resolvable:$true] %s464
      %470 = dma.hbm_to_vmem [thread:$0]  %s59, 4096, %s465, [#allocation48], 128, 128, 8
    $region121: #{tpu_custom_call.1} parent=1 // pred_fallthru
      _
    // Predicated region
    $region122: #{tpu_custom_call.1} parent=1 // pred_check
      _
    $region123: #{tpu_custom_call.1} parent=1 // pred_check_branch
      %472 = sbr.rel (0) target = $region125
    $region124: #{tpu_custom_call.1} parent=1 // pred_region
      %s474 = ssub.s32 32, 32
      %475 = vsyncadd [#allocation48], %s474
      %s477 = sshll.u32 [#allocation49], 4
      %s478 = int_to_ptr.vmem [resolvable:$true] %s477
      %480 = dma.hbm_to_vmem [thread:$0]  %s61, 32, %s478, [#allocation48]
    $region125: #{tpu_custom_call.1} parent=1 // pred_fallthru
      _
    // Predicated region
    $region126: #{tpu_custom_call.1} parent=1 // pred_check
      _
    $region127: #{tpu_custom_call.1} parent=1 // pred_check_branch
      %482 = sbr.rel (0) target = $region129
    $region128: #{tpu_custom_call.1} parent=1 // pred_region
      %s484 = ssub.s32 2048, 2048
      %485 = vsyncadd [#allocation51], %s484
      %s486 = sshll.u32 [#allocation50], 4
      %s487 = int_to_ptr.vmem [resolvable:$true] %s486
      %492 = dma.hbm_to_vmem [thread:$0]  %s63, 2048, %s487, [#allocation51], 64, 64, 4
    $region129: #{tpu_custom_call.1} parent=1 // pred_fallthru
      _
    // Predicated region
    $region130: #{tpu_custom_call.1} parent=1 // pred_check
      _
    $region131: #{tpu_custom_call.1} parent=1 // pred_check_branch
      %494 = sbr.rel (0) target = $region133
    $region132: #{tpu_custom_call.1} parent=1 // pred_region
      %s496 = ssub.s32 16, 16
      %497 = vsyncadd [#allocation51], %s496
      %s499 = sshll.u32 [#allocation52], 4
      %s500 = int_to_ptr.vmem [resolvable:$true] %s499
      %502 = dma.hbm_to_vmem [thread:$0]  %s65, 16, %s500, [#allocation51]
    $region133: #{tpu_custom_call.1} parent=1 // pred_fallthru
      _
    // Predicated region
    $region134: #{tpu_custom_call.1} parent=1 // pred_check
      _
    $region135: #{tpu_custom_call.1} parent=1 // pred_check_branch
      %504 = sbr.rel (0) target = $region137
    $region136: #{tpu_custom_call.1} parent=1 // pred_region
      %s506 = ssub.s32 1024, 1024
      %507 = vsyncadd [#allocation54], %s506
      %s508 = sshll.u32 [#allocation53], 4
      %s509 = int_to_ptr.vmem [resolvable:$true] %s508
      %514 = dma.hbm_to_vmem [thread:$0]  %s67, 1024, %s509, [#allocation54], 64, 64, 4
    $region137: #{tpu_custom_call.1} parent=1 // pred_fallthru
      _
    // Predicated region
    $region138: #{tpu_custom_call.1} parent=1 // pred_check
      _
    $region139: #{tpu_custom_call.1} parent=1 // pred_check_branch
      %516 = sbr.rel (0) target = $region141
    $region140: #{tpu_custom_call.1} parent=1 // pred_region
      %s518 = ssub.s32 16, 16
      %519 = vsyncadd [#allocation54], %s518
      %s521 = sshll.u32 [#allocation55], 4
      %s522 = int_to_ptr.vmem [resolvable:$true] %s521
      %524 = dma.hbm_to_vmem [thread:$0]  %s69, 16, %s522, [#allocation54]
    $region141: #{tpu_custom_call.1} parent=1 // pred_fallthru
      _
    // Predicated region
    $region142: #{tpu_custom_call.1} parent=1 // pred_check
      _
    $region143: #{tpu_custom_call.1} parent=1 // pred_check_branch
      %526 = sbr.rel (0) target = $region145
    $region144: #{tpu_custom_call.1} parent=1 // pred_region
      %s528 = ssub.s32 16, 16
      %529 = vsyncadd [#allocation57], %s528
      %s531 = sshll.u32 [#allocation56], 4
      %s532 = int_to_ptr.vmem [resolvable:$true] %s531
      %534 = dma.hbm_to_vmem [thread:$0]  %s71, 16, %s532, [#allocation57]
    $region145: #{tpu_custom_call.1} parent=1 // pred_fallthru
      _
    // Predicated region
    $region146: #{tpu_custom_call.1} parent=1 // pred_check
      _
    $region147: #{tpu_custom_call.1} parent=1 // pred_check_branch
      %536 = sbr.rel (0) target = $region149
    $region148: #{tpu_custom_call.1} parent=1 // pred_region
      %s538 = ssub.s32 16, 16
      %539 = vsyncadd [#allocation57], %s538
      %s541 = sshll.u32 [#allocation58], 4
      %s542 = int_to_ptr.vmem [resolvable:$true] %s541
      %544 = dma.hbm_to_vmem [thread:$0]  %s73, 16, %s542, [#allocation57]
    $region149: #{tpu_custom_call.1} parent=1 // pred_fallthru
      _
    // Predicated region
    $region150: #{tpu_custom_call.1} parent=1 // pred_check
      _
    $region151: #{tpu_custom_call.1} parent=1 // pred_check_branch
      %546 = sbr.rel (0) target = $region153
    $region152: #{tpu_custom_call.1} parent=1 // pred_region
      %s548 = ssub.s32 64, 64
      %549 = vsyncadd [#allocation60], %s548
      %s551 = sshll.u32 [#allocation59], 4
      %s552 = int_to_ptr.vmem [resolvable:$true] %s551
      %554 = dma.hbm_to_vmem [thread:$0]  %s75, 64, %s552, [#allocation60]
    $region153: #{tpu_custom_call.1} parent=1 // pred_fallthru
      _
    // Predicated region
    $region154: #{tpu_custom_call.1} parent=1 // pred_check
      _
    $region155: #{tpu_custom_call.1} parent=1 // pred_check_branch
      %556 = sbr.rel (0) target = $region157
    $region156: #{tpu_custom_call.1} parent=1 // pred_region
      %s558 = ssub.s32 16, 16
      %559 = vsyncadd [#allocation60], %s558
      %s561 = sshll.u32 [#allocation61], 4
      %s562 = int_to_ptr.vmem [resolvable:$true] %s561
      %564 = dma.hbm_to_vmem [thread:$0]  %s77, 16, %s562, [#allocation60]
    $region157: #{tpu_custom_call.1} parent=1 // pred_fallthru
      _
    // Predicated region
    $region158: #{tpu_custom_call.1} parent=1 // pred_check
      _
    $region159: #{tpu_custom_call.1} parent=1 // pred_check_branch
      %566 = sbr.rel (0) target = $region161
    $region160: #{tpu_custom_call.1} parent=1 // pred_region
      %s568 = ssub.s32 256, 256
      %569 = vsyncadd [#allocation63], %s568
      %s570 = sshll.u32 [#allocation62], 4
      %s571 = int_to_ptr.vmem [resolvable:$true] %s570
      %576 = dma.hbm_to_vmem [thread:$0]  %s79, 256, %s571, [#allocation63], 128, 128, 8
    $region161: #{tpu_custom_call.1} parent=1 // pred_fallthru
      _
    // Predicated region
    $region162: #{tpu_custom_call.1} parent=1 // pred_check
      _
    $region163: #{tpu_custom_call.1} parent=1 // pred_check_branch
      %578 = sbr.rel (0) target = $region165
    $region164: #{tpu_custom_call.1} parent=1 // pred_region
      %s580 = ssub.s32 16, 16
      %581 = vsyncadd [#allocation63], %s580
      %s583 = sshll.u32 [#allocation64], 4
      %s584 = int_to_ptr.vmem [resolvable:$true] %s583
      %586 = dma.hbm_to_vmem [thread:$0]  %s81, 16, %s584, [#allocation63]
    $region165: #{tpu_custom_call.1} parent=1 // pred_fallthru
      _
    // Predicated region
    $region166: #{tpu_custom_call.1} parent=1 // pred_check
      _
    $region167: #{tpu_custom_call.1} parent=1 // pred_check_branch
      %588 = sbr.rel (0) target = $region169
    $region168: #{tpu_custom_call.1} parent=1 // pred_region
      %s590 = ssub.s32 16384, 16384
      %591 = vsyncadd [#allocation66], %s590
      %s592 = sshll.u32 [#allocation65], 4
      %s593 = int_to_ptr.vmem [resolvable:$true] %s592
      %598 = dma.hbm_to_vmem [thread:$0]  %s83, 16384, %s593, [#allocation66], 512, 512, 32
    $region169: #{tpu_custom_call.1} parent=1 // pred_fallthru
      _
    // Predicated region
    $region170: #{tpu_custom_call.1} parent=1 // pred_check
      _
    $region171: #{tpu_custom_call.1} parent=1 // pred_check_branch
      %600 = sbr.rel (0) target = $region173
    $region172: #{tpu_custom_call.1} parent=1 // pred_region
      %s602 = ssub.s32 16384, 16384
      %603 = vsyncadd [#allocation66], %s602
      %s604 = sshll.u32 [#allocation67], 4
      %s605 = int_to_ptr.vmem [resolvable:$true] %s604
      %610 = dma.hbm_to_vmem [thread:$0]  %s85, 16384, %s605, [#allocation66], 512, 512, 32
    $region173: #{tpu_custom_call.1} parent=1 // pred_fallthru
      _
    // Predicated region
    $region174: #{tpu_custom_call.1} parent=1 // pred_check
      _
    $region175: #{tpu_custom_call.1} parent=1 // pred_check_branch
      %612 = sbr.rel (0) target = $region177
    $region176: #{tpu_custom_call.1} parent=1 // pred_region
      %s614 = ssub.s32 2048, 2048
      %615 = vsyncadd [#allocation69], %s614
      %s616 = sshll.u32 [#allocation68], 4
      %s617 = int_to_ptr.vmem [resolvable:$true] %s616
      %622 = dma.hbm_to_vmem [thread:$0]  %s87, 2048, %s617, [#allocation69], 512, 512, 32
    $region177: #{tpu_custom_call.1} parent=1 // pred_fallthru
      _
    // Predicated region
    $region178: #{tpu_custom_call.1} parent=1 // pred_check
      _
    $region179: #{tpu_custom_call.1} parent=1 // pred_check_branch
      %624 = sbr.rel (0) target = $region181
    $region180: #{tpu_custom_call.1} parent=1 // pred_region
      %s626 = ssub.s32 128, 128
      %627 = vsyncadd [#allocation69], %s626
      %s629 = sshll.u32 [#allocation70], 4
      %s630 = int_to_ptr.vmem [resolvable:$true] %s629
      %632 = dma.hbm_to_vmem [thread:$0]  %s89, 128, %s630, [#allocation69]
    $region181: #{tpu_custom_call.1} parent=1 // pred_fallthru
      _
    // Predicated region
    $region182: #{tpu_custom_call.1} parent=1 // pred_check
      _
    $region183: #{tpu_custom_call.1} parent=1 // pred_check_branch
      %634 = sbr.rel (0) target = $region185
    $region184: #{tpu_custom_call.1} parent=1 // pred_region
      %s636 = ssub.s32 65536, 65536
      %637 = vsyncadd [#allocation72], %s636
      %s638 = sshll.u32 [#allocation71], 4
      %s639 = int_to_ptr.vmem [resolvable:$true] %s638
      %644 = dma.hbm_to_vmem [thread:$0]  %s91, 65536, %s639, [#allocation72], 512, 512, 32
    $region185: #{tpu_custom_call.1} parent=1 // pred_fallthru
      _
    // Predicated region
    $region186: #{tpu_custom_call.1} parent=1 // pred_check
      _
    $region187: #{tpu_custom_call.1} parent=1 // pred_check_branch
      %646 = sbr.rel (0) target = $region189
    $region188: #{tpu_custom_call.1} parent=1 // pred_region
      %s648 = ssub.s32 128, 128
      %649 = vsyncadd [#allocation72], %s648
      %s651 = sshll.u32 [#allocation73], 4
      %s652 = int_to_ptr.vmem [resolvable:$true] %s651
      %654 = dma.hbm_to_vmem [thread:$0]  %s93, 128, %s652, [#allocation72]
    $region189: #{tpu_custom_call.1} parent=1 // pred_fallthru
      _
    // Predicated region
    $region190: #{tpu_custom_call.1} parent=1 // pred_check
      _
    $region191: #{tpu_custom_call.1} parent=1 // pred_check_branch
      %656 = sbr.rel (0) target = $region193
    $region192: #{tpu_custom_call.1} parent=1 // pred_region
      %s658 = ssub.s32 8192, 8192
      %659 = vsyncadd [#allocation75], %s658
      %s660 = sshll.u32 [#allocation74], 4
      %s661 = int_to_ptr.vmem [resolvable:$true] %s660
      %666 = dma.hbm_to_vmem [thread:$0]  %s95, 8192, %s661, [#allocation75], 64, 64, 4
    $region193: #{tpu_custom_call.1} parent=1 // pred_fallthru
      _
    // Predicated region
    $region194: #{tpu_custom_call.1} parent=1 // pred_check
      _
    $region195: #{tpu_custom_call.1} parent=1 // pred_check_branch
      %668 = sbr.rel (0) target = $region197
    $region196: #{tpu_custom_call.1} parent=1 // pred_region
      %s670 = ssub.s32 16, 16
      %671 = vsyncadd [#allocation75], %s670
      %s673 = sshll.u32 [#allocation76], 4
      %s674 = int_to_ptr.vmem [resolvable:$true] %s673
      %676 = dma.hbm_to_vmem [thread:$0]  %s97, 16, %s674, [#allocation75]
    $region197: #{tpu_custom_call.1} parent=1 // pred_fallthru
      _
    // Predicated region
    $region198: #{tpu_custom_call.1} parent=1 // pred_check
      _
    $region199: #{tpu_custom_call.1} parent=1 // pred_check_branch
      %678 = sbr.rel (0) target = $region201
    $region200: #{tpu_custom_call.1} parent=1 // pred_region
      %679 = dma.done [#allocation3], 128
    $region201: #{tpu_custom_call.1} parent=1 // pred_fallthru
      _
    // Predicated region
    $region202: #{tpu_custom_call.1} parent=1 // pred_check
      _
    $region203: #{tpu_custom_call.1} parent=1 // pred_check_branch
      %681 = sbr.rel (0) target = $region205
    $region204: #{tpu_custom_call.1} parent=1 // pred_region
      %682 = dma.done [#allocation6], 128
    $region205: #{tpu_custom_call.1} parent=1 // pred_fallthru
      _
    // Predicated region
    $region206: #{tpu_custom_call.1} parent=1 // pred_check
      _
    $region207: #{tpu_custom_call.1} parent=1 // pred_check_branch
      %684 = sbr.rel (0) target = $region209
    $region208: #{tpu_custom_call.1} parent=1 // pred_region
      %685 = dma.done [#allocation6], 128
    $region209: #{tpu_custom_call.1} parent=1 // pred_fallthru
      _
    // Predicated region
    $region210: #{tpu_custom_call.1} parent=1 // pred_check
      _
    $region211: #{tpu_custom_call.1} parent=1 // pred_check_branch
      %687 = sbr.rel (0) target = $region213
    $region212: #{tpu_custom_call.1} parent=1 // pred_region
      %688 = dma.done [#allocation9], 3072
    $region213: #{tpu_custom_call.1} parent=1 // pred_fallthru
      _
    // Predicated region
    $region214: #{tpu_custom_call.1} parent=1 // pred_check
      _
    $region215: #{tpu_custom_call.1} parent=1 // pred_check_branch
      %690 = sbr.rel (0) target = $region217
    $region216: #{tpu_custom_call.1} parent=1 // pred_region
      %691 = dma.done [#allocation9], 128
    $region217: #{tpu_custom_call.1} parent=1 // pred_fallthru
      _
    // Predicated region
    $region218: #{tpu_custom_call.1} parent=1 // pred_check
      _
    $region219: #{tpu_custom_call.1} parent=1 // pred_check_branch
      %693 = sbr.rel (0) target = $region221
    $region220: #{tpu_custom_call.1} parent=1 // pred_region
      %694 = dma.done [#allocation12], 768
    $region221: #{tpu_custom_call.1} parent=1 // pred_fallthru
      _
    // Predicated region
    $region222: #{tpu_custom_call.1} parent=1 // pred_check
      _
    $region223: #{tpu_custom_call.1} parent=1 // pred_check_branch
      %696 = sbr.rel (0) target = $region225
    $region224: #{tpu_custom_call.1} parent=1 // pred_region
      %697 = dma.done [#allocation12], 64
    $region225: #{tpu_custom_call.1} parent=1 // pred_fallthru
      _
    // Predicated region
    $region226: #{tpu_custom_call.1} parent=1 // pred_check
      _
    $region227: #{tpu_custom_call.1} parent=1 // pred_check_branch
      %699 = sbr.rel (0) target = $region229
    $region228: #{tpu_custom_call.1} parent=1 // pred_region
      %700 = dma.done [#allocation15], 768
    $region229: #{tpu_custom_call.1} parent=1 // pred_fallthru
      _
    // Predicated region
    $region230: #{tpu_custom_call.1} parent=1 // pred_check
      _
    $region231: #{tpu_custom_call.1} parent=1 // pred_check_branch
      %702 = sbr.rel (0) target = $region233
    $region232: #{tpu_custom_call.1} parent=1 // pred_region
      %703 = dma.done [#allocation15], 64
    $region233: #{tpu_custom_call.1} parent=1 // pred_fallthru
      _
    // Predicated region
    $region234: #{tpu_custom_call.1} parent=1 // pred_check
      _
    $region235: #{tpu_custom_call.1} parent=1 // pred_check_branch
      %705 = sbr.rel (0) target = $region237
    $region236: #{tpu_custom_call.1} parent=1 // pred_region
      %706 = dma.done [#allocation18], 8192
    $region237: #{tpu_custom_call.1} parent=1 // pred_fallthru
      _
    // Predicated region
    $region238: #{tpu_custom_call.1} parent=1 // pred_check
      _
    $region239: #{tpu_custom_call.1} parent=1 // pred_check_branch
      %708 = sbr.rel (0) target = $region241
    $region240: #{tpu_custom_call.1} parent=1 // pred_region
      %709 = dma.done [#allocation18], 32
    $region241: #{tpu_custom_call.1} parent=1 // pred_fallthru
      _
    // Predicated region
    $region242: #{tpu_custom_call.1} parent=1 // pred_check
      _
    $region243: #{tpu_custom_call.1} parent=1 // pred_check_branch
      %711 = sbr.rel (0) target = $region245
    $region244: #{tpu_custom_call.1} parent=1 // pred_region
      %712 = dma.done [#allocation21], 2048
    $region245: #{tpu_custom_call.1} parent=1 // pred_fallthru
      _
    // Predicated region
    $region246: #{tpu_custom_call.1} parent=1 // pred_check
      _
    $region247: #{tpu_custom_call.1} parent=1 // pred_check_branch
      %714 = sbr.rel (0) target = $region249
    $region248: #{tpu_custom_call.1} parent=1 // pred_region
      %715 = dma.done [#allocation21], 16
    $region249: #{tpu_custom_call.1} parent=1 // pred_fallthru
      _
    // Predicated region
    $region250: #{tpu_custom_call.1} parent=1 // pred_check
      _
    $region251: #{tpu_custom_call.1} parent=1 // pred_check_branch
      %717 = sbr.rel (0) target = $region253
    $region252: #{tpu_custom_call.1} parent=1 // pred_region
      %718 = dma.done [#allocation24], 1024
    $region253: #{tpu_custom_call.1} parent=1 // pred_fallthru
      _
    // Predicated region
    $region254: #{tpu_custom_call.1} parent=1 // pred_check
      _
    $region255: #{tpu_custom_call.1} parent=1 // pred_check_branch
      %720 = sbr.rel (0) target = $region257
    $region256: #{tpu_custom_call.1} parent=1 // pred_region
      %721 = dma.done [#allocation24], 16
    $region257: #{tpu_custom_call.1} parent=1 // pred_fallthru
      _
    // Predicated region
    $region258: #{tpu_custom_call.1} parent=1 // pred_check
      _
    $region259: #{tpu_custom_call.1} parent=1 // pred_check_branch
      %723 = sbr.rel (0) target = $region261
    $region260: #{tpu_custom_call.1} parent=1 // pred_region
      %724 = dma.done [#allocation27], 8192
    $region261: #{tpu_custom_call.1} parent=1 // pred_fallthru
      _
    // Predicated region
    $region262: #{tpu_custom_call.1} parent=1 // pred_check
      _
    $region263: #{tpu_custom_call.1} parent=1 // pred_check_branch
      %726 = sbr.rel (0) target = $region265
    $region264: #{tpu_custom_call.1} parent=1 // pred_region
      %727 = dma.done [#allocation27], 32
    $region265: #{tpu_custom_call.1} parent=1 // pred_fallthru
      _
    // Predicated region
    $region266: #{tpu_custom_call.1} parent=1 // pred_check
      _
    $region267: #{tpu_custom_call.1} parent=1 // pred_check_branch
      %729 = sbr.rel (0) target = $region269
    $region268: #{tpu_custom_call.1} parent=1 // pred_region
      %730 = dma.done [#allocation30], 2048
    $region269: #{tpu_custom_call.1} parent=1 // pred_fallthru
      _
    // Predicated region
    $region270: #{tpu_custom_call.1} parent=1 // pred_check
      _
    $region271: #{tpu_custom_call.1} parent=1 // pred_check_branch
      %732 = sbr.rel (0) target = $region273
    $region272: #{tpu_custom_call.1} parent=1 // pred_region
      %733 = dma.done [#allocation30], 16
    $region273: #{tpu_custom_call.1} parent=1 // pred_fallthru
      _
    // Predicated region
    $region274: #{tpu_custom_call.1} parent=1 // pred_check
      _
    $region275: #{tpu_custom_call.1} parent=1 // pred_check_branch
      %735 = sbr.rel (0) target = $region277
    $region276: #{tpu_custom_call.1} parent=1 // pred_region
      %736 = dma.done [#allocation33], 1024
    $region277: #{tpu_custom_call.1} parent=1 // pred_fallthru
      _
    // Predicated region
    $region278: #{tpu_custom_call.1} parent=1 // pred_check
      _
    $region279: #{tpu_custom_call.1} parent=1 // pred_check_branch
      %738 = sbr.rel (0) target = $region281
    $region280: #{tpu_custom_call.1} parent=1 // pred_region
      %739 = dma.done [#allocation33], 16
    $region281: #{tpu_custom_call.1} parent=1 // pred_fallthru
      _
    // Predicated region
    $region282: #{tpu_custom_call.1} parent=1 // pred_check
      _
    $region283: #{tpu_custom_call.1} parent=1 // pred_check_branch
      %741 = sbr.rel (0) target = $region285
    $region284: #{tpu_custom_call.1} parent=1 // pred_region
      %742 = dma.done [#allocation36], 4096
    $region285: #{tpu_custom_call.1} parent=1 // pred_fallthru
      _
    // Predicated region
    $region286: #{tpu_custom_call.1} parent=1 // pred_check
      _
    $region287: #{tpu_custom_call.1} parent=1 // pred_check_branch
      %744 = sbr.rel (0) target = $region289
    $region288: #{tpu_custom_call.1} parent=1 // pred_region
      %745 = dma.done [#allocation36], 4096
    $region289: #{tpu_custom_call.1} parent=1 // pred_fallthru
      _
    // Predicated region
    $region290: #{tpu_custom_call.1} parent=1 // pred_check
      _
    $region291: #{tpu_custom_call.1} parent=1 // pred_check_branch
      %747 = sbr.rel (0) target = $region293
    $region292: #{tpu_custom_call.1} parent=1 // pred_region
      %748 = dma.done [#allocation39], 32
    $region293: #{tpu_custom_call.1} parent=1 // pred_fallthru
      _
    // Predicated region
    $region294: #{tpu_custom_call.1} parent=1 // pred_check
      _
    $region295: #{tpu_custom_call.1} parent=1 // pred_check_branch
      %750 = sbr.rel (0) target = $region297
    $region296: #{tpu_custom_call.1} parent=1 // pred_region
      %751 = dma.done [#allocation39], 2048
    $region297: #{tpu_custom_call.1} parent=1 // pred_fallthru
      _
    // Predicated region
    $region298: #{tpu_custom_call.1} parent=1 // pred_check
      _
    $region299: #{tpu_custom_call.1} parent=1 // pred_check_branch
      %753 = sbr.rel (0) target = $region301
    $region300: #{tpu_custom_call.1} parent=1 // pred_region
      %754 = dma.done [#allocation42], 16
    $region301: #{tpu_custom_call.1} parent=1 // pred_fallthru
      _
    // Predicated region
    $region302: #{tpu_custom_call.1} parent=1 // pred_check
      _
    $region303: #{tpu_custom_call.1} parent=1 // pred_check_branch
      %756 = sbr.rel (0) target = $region305
    $region304: #{tpu_custom_call.1} parent=1 // pred_region
      %757 = dma.done [#allocation42], 1024
    $region305: #{tpu_custom_call.1} parent=1 // pred_fallthru
      _
    // Predicated region
    $region306: #{tpu_custom_call.1} parent=1 // pred_check
      _
    $region307: #{tpu_custom_call.1} parent=1 // pred_check_branch
      %759 = sbr.rel (0) target = $region309
    $region308: #{tpu_custom_call.1} parent=1 // pred_region
      %760 = dma.done [#allocation45], 16
    $region309: #{tpu_custom_call.1} parent=1 // pred_fallthru
      _
    // Predicated region
    $region310: #{tpu_custom_call.1} parent=1 // pred_check
      _
    $region311: #{tpu_custom_call.1} parent=1 // pred_check_branch
      %762 = sbr.rel (0) target = $region313
    $region312: #{tpu_custom_call.1} parent=1 // pred_region
      %763 = dma.done [#allocation45], 4096
    $region313: #{tpu_custom_call.1} parent=1 // pred_fallthru
      _
    // Predicated region
    $region314: #{tpu_custom_call.1} parent=1 // pred_check
      _
    $region315: #{tpu_custom_call.1} parent=1 // pred_check_branch
      %765 = sbr.rel (0) target = $region317
    $region316: #{tpu_custom_call.1} parent=1 // pred_region
      %766 = dma.done [#allocation48], 4096
    $region317: #{tpu_custom_call.1} parent=1 // pred_fallthru
      _
    // Predicated region
    $region318: #{tpu_custom_call.1} parent=1 // pred_check
      _
    $region319: #{tpu_custom_call.1} parent=1 // pred_check_branch
      %768 = sbr.rel (0) target = $region321
    $region320: #{tpu_custom_call.1} parent=1 // pred_region
      %769 = dma.done [#allocation48], 32
    $region321: #{tpu_custom_call.1} parent=1 // pred_fallthru
      _
    // Predicated region
    $region322: #{tpu_custom_call.1} parent=1 // pred_check
      _
    $region323: #{tpu_custom_call.1} parent=1 // pred_check_branch
      %771 = sbr.rel (0) target = $region325
    $region324: #{tpu_custom_call.1} parent=1 // pred_region
      %772 = dma.done [#allocation51], 2048
    $region325: #{tpu_custom_call.1} parent=1 // pred_fallthru
      _
    // Predicated region
    $region326: #{tpu_custom_call.1} parent=1 // pred_check
      _
    $region327: #{tpu_custom_call.1} parent=1 // pred_check_branch
      %774 = sbr.rel (0) target = $region329
    $region328: #{tpu_custom_call.1} parent=1 // pred_region
      %775 = dma.done [#allocation51], 16
    $region329: #{tpu_custom_call.1} parent=1 // pred_fallthru
      _
    // Predicated region
    $region330: #{tpu_custom_call.1} parent=1 // pred_check
      _
    $region331: #{tpu_custom_call.1} parent=1 // pred_check_branch
      %777 = sbr.rel (0) target = $region333
    $region332: #{tpu_custom_call.1} parent=1 // pred_region
      %778 = dma.done [#allocation54], 1024
    $region333: #{tpu_custom_call.1} parent=1 // pred_fallthru
      _
    // Predicated region
    $region334: #{tpu_custom_call.1} parent=1 // pred_check
      _
    $region335: #{tpu_custom_call.1} parent=1 // pred_check_branch
      %780 = sbr.rel (0) target = $region337
    $region336: #{tpu_custom_call.1} parent=1 // pred_region
      %781 = dma.done [#allocation54], 16
    $region337: #{tpu_custom_call.1} parent=1 // pred_fallthru
      _
    // Predicated region
    $region338: #{tpu_custom_call.1} parent=1 // pred_check
      _
    $region339: #{tpu_custom_call.1} parent=1 // pred_check_branch
      %783 = sbr.rel (0) target = $region341
    $region340: #{tpu_custom_call.1} parent=1 // pred_region
      %784 = dma.done [#allocation57], 16
    $region341: #{tpu_custom_call.1} parent=1 // pred_fallthru
      _
    // Predicated region
    $region342: #{tpu_custom_call.1} parent=1 // pred_check
      _
    $region343: #{tpu_custom_call.1} parent=1 // pred_check_branch
      %786 = sbr.rel (0) target = $region345
    $region344: #{tpu_custom_call.1} parent=1 // pred_region
      %787 = dma.done [#allocation57], 16
    $region345: #{tpu_custom_call.1} parent=1 // pred_fallthru
      _
    // Predicated region
    $region346: #{tpu_custom_call.1} parent=1 // pred_check
      _
    $region347: #{tpu_custom_call.1} parent=1 // pred_check_branch
      %789 = sbr.rel (0) target = $region349
    $region348: #{tpu_custom_call.1} parent=1 // pred_region
      %790 = dma.done [#allocation60], 64
    $region349: #{tpu_custom_call.1} parent=1 // pred_fallthru
      _
    // Predicated region
    $region350: #{tpu_custom_call.1} parent=1 // pred_check
      _
    $region351: #{tpu_custom_call.1} parent=1 // pred_check_branch
      %792 = sbr.rel (0) target = $region353
    $region352: #{tpu_custom_call.1} parent=1 // pred_region
      %793 = dma.done [#allocation60], 16
    $region353: #{tpu_custom_call.1} parent=1 // pred_fallthru
      _
    // Predicated region
    $region354: #{tpu_custom_call.1} parent=1 // pred_check
      _
    $region355: #{tpu_custom_call.1} parent=1 // pred_check_branch
      %795 = sbr.rel (0) target = $region357
    $region356: #{tpu_custom_call.1} parent=1 // pred_region
      %796 = dma.done [#allocation63], 256
    $region357: #{tpu_custom_call.1} parent=1 // pred_fallthru
      _
    // Predicated region
    $region358: #{tpu_custom_call.1} parent=1 // pred_check
      _
    $region359: #{tpu_custom_call.1} parent=1 // pred_check_branch
      %798 = sbr.rel (0) target = $region361
    $region360: #{tpu_custom_call.1} parent=1 // pred_region
      %799 = dma.done [#allocation63], 16
    $region361: #{tpu_custom_call.1} parent=1 // pred_fallthru
      _
    // Predicated region
    $region362: #{tpu_custom_call.1} parent=1 // pred_check
      _
    $region363: #{tpu_custom_call.1} parent=1 // pred_check_branch
      %801 = sbr.rel (0) target = $region365
    $region364: #{tpu_custom_call.1} parent=1 // pred_region
      %802 = dma.done [#allocation66], 16384
    $region365: #{tpu_custom_call.1} parent=1 // pred_fallthru
      _
    // Predicated region
    $region366: #{tpu_custom_call.1} parent=1 // pred_check
      _
    $region367: #{tpu_custom_call.1} parent=1 // pred_check_branch
      %804 = sbr.rel (0) target = $region369
    $region368: #{tpu_custom_call.1} parent=1 // pred_region
      %805 = dma.done [#allocation66], 16384
    $region369: #{tpu_custom_call.1} parent=1 // pred_fallthru
      _
    // Predicated region
    $region370: #{tpu_custom_call.1} parent=1 // pred_check
      _
    $region371: #{tpu_custom_call.1} parent=1 // pred_check_branch
      %807 = sbr.rel (0) target = $region373
    $region372: #{tpu_custom_call.1} parent=1 // pred_region
      %808 = dma.done [#allocation69], 2048
    $region373: #{tpu_custom_call.1} parent=1 // pred_fallthru
      _
    // Predicated region
    $region374: #{tpu_custom_call.1} parent=1 // pred_check
      _
    $region375: #{tpu_custom_call.1} parent=1 // pred_check_branch
      %810 = sbr.rel (0) target = $region377
    $region376: #{tpu_custom_call.1} parent=1 // pred_region
      %811 = dma.done [#allocation69], 128
    $region377: #{tpu_custom_call.1} parent=1 // pred_fallthru
      _
    // Predicated region
    $region378: #{tpu_custom_call.1} parent=1 // pred_check
      _
    $region379: #{tpu_custom_call.1} parent=1 // pred_check_branch
      %813 = sbr.rel (0) target = $region381
    $region380: #{tpu_custom_call.1} parent=1 // pred_region
      %814 = dma.done [#allocation72], 65536
    $region381: #{tpu_custom_call.1} parent=1 // pred_fallthru
      _
    // Predicated region
    $region382: #{tpu_custom_call.1} parent=1 // pred_check
      _
    $region383: #{tpu_custom_call.1} parent=1 // pred_check_branch
      %816 = sbr.rel (0) target = $region385
    $region384: #{tpu_custom_call.1} parent=1 // pred_region
      %817 = dma.done [#allocation72], 128
    $region385: #{tpu_custom_call.1} parent=1 // pred_fallthru
      _
    // Predicated region
    $region386: #{tpu_custom_call.1} parent=1 // pred_check
      _
    $region387: #{tpu_custom_call.1} parent=1 // pred_check_branch
      %819 = sbr.rel (0) target = $region389
    $region388: #{tpu_custom_call.1} parent=1 // pred_region
      %820 = dma.done [#allocation75], 8192
    $region389: #{tpu_custom_call.1} parent=1 // pred_fallthru
      _
    // Predicated region
    $region390: #{tpu_custom_call.1} parent=1 // pred_check
      _
    $region391: #{tpu_custom_call.1} parent=1 // pred_check_branch
      %822 = sbr.rel (0) target = $region393
    $region392: #{tpu_custom_call.1} parent=1 // pred_region
      %823 = dma.done [#allocation75], 16
    $region393: #{tpu_custom_call.1} parent=1 // pred_fallthru
      _
    %v825 = vld [vmem:[#allocation2] sm:$0xff]
    %v826 = vpack.c.bf16 %v825, %v825
    %v827 = vld [vmem:[#allocation8] sm:$0xff]
    %v828 = vld [vmem:[#allocation8 + $0x8] sm:$0xff]
    %v829 = vld [vmem:[#allocation8 + $0x10] sm:$0xff]
    %v830 = vld [vmem:[#allocation8 + $0x18] sm:$0xff]
    %v831 = vld [vmem:[#allocation8 + $0x20] sm:$0xff]
    %v832 = vld [vmem:[#allocation8 + $0x28] sm:$0xff]
    %v833 = vld [vmem:[#allocation8 + $0x30] sm:$0xff]
    %v834 = vld [vmem:[#allocation8 + $0x38] sm:$0xff]
    %v835 = vld [vmem:[#allocation8 + $0x40] sm:$0xff]
    %v836 = vld [vmem:[#allocation8 + $0x48] sm:$0xff]
    %v837 = vld [vmem:[#allocation8 + $0x50] sm:$0xff]
    %v838 = vld [vmem:[#allocation8 + $0x58] sm:$0xff]
    %v839 = vld [vmem:[#allocation8 + $0x60] sm:$0xff]
    %v840 = vld [vmem:[#allocation8 + $0x68] sm:$0xff]
    %v841 = vld [vmem:[#allocation8 + $0x70] sm:$0xff]
    %v842 = vld [vmem:[#allocation8 + $0x78] sm:$0xff]
    %v843 = vld [vmem:[#allocation8 + $0x80] sm:$0xff]
    %v844 = vld [vmem:[#allocation8 + $0x88] sm:$0xff]
    %v845 = vld [vmem:[#allocation8 + $0x90] sm:$0xff]
    %v846 = vld [vmem:[#allocation8 + $0x98] sm:$0xff]
    %v847 = vld [vmem:[#allocation8 + $0xa0] sm:$0xff]
    %v848 = vld [vmem:[#allocation8 + $0xa8] sm:$0xff]
    %v849 = vld [vmem:[#allocation8 + $0xb0] sm:$0xff]
    %v850 = vld [vmem:[#allocation8 + $0xb8] sm:$0xff]
    %v851 = vld [vmem:[#allocation10] sm:$0xff]
    %v853 = vlaneseq
    %v854 = vshrl.u32 %v853, 7
    %v855 = vsub.s32 0, %v854
    %v856 = vrot.slane %v851, %v855
    %v857 = vlaneseq
    %v858 = vshrl.u32 %v857, 7
    %v859 = vsub.s32 1, %v858
    %v860 = vrot.slane %v851, %v859
    %v861 = vlaneseq
    %v862 = vshrl.u32 %v861, 7
    %v863 = vsub.s32 2, %v862
    %v864 = vrot.slane %v851, %v863
    %v865 = vlaneseq
    %v866 = vshrl.u32 %v865, 7
    %v867 = vsub.s32 3, %v866
    %v868 = vrot.slane %v851, %v867
    %v869 = vlaneseq
    %v870 = vshrl.u32 %v869, 7
    %v871 = vsub.s32 4, %v870
    %v872 = vrot.slane %v851, %v871
    %v873 = vlaneseq
    %v874 = vshrl.u32 %v873, 7
    %v875 = vsub.s32 5, %v874
    %v876 = vrot.slane %v851, %v875
    %v877 = vlaneseq
    %v878 = vshrl.u32 %v877, 7
    %v879 = vsub.s32 6, %v878
    %v880 = vrot.slane %v851, %v879
    %v881 = vlaneseq
    %v882 = vshrl.u32 %v881, 7
    %v883 = vsub.s32 7, %v882
    %v884 = vrot.slane %v851, %v883
    %v917 = vunpack.c.l.b16 %v827
    %v918 = vunpack.c.h.b16 %v827
    %v919 = vunpack.c.l.b16 %v828
    %v920 = vunpack.c.h.b16 %v828
    %v921 = vunpack.c.l.b16 %v829
    %v922 = vunpack.c.h.b16 %v829
    %v923 = vunpack.c.l.b16 %v830
    %v924 = vunpack.c.h.b16 %v830
    %v925 = vunpack.c.l.b16 %v831
    %v926 = vunpack.c.h.b16 %v831
    %v927 = vunpack.c.l.b16 %v832
    %v928 = vunpack.c.h.b16 %v832
    %v929 = vunpack.c.l.b16 %v833
    %v930 = vunpack.c.h.b16 %v833
    %v931 = vunpack.c.l.b16 %v834
    %v932 = vunpack.c.h.b16 %v834
    %v933 = vunpack.c.l.b16 %v835
    %v934 = vunpack.c.h.b16 %v835
    %v935 = vunpack.c.l.b16 %v836
    %v936 = vunpack.c.h.b16 %v836
    %v937 = vunpack.c.l.b16 %v837
    %v938 = vunpack.c.h.b16 %v837
    %v939 = vunpack.c.l.b16 %v838
    %v940 = vunpack.c.h.b16 %v838
    %v941 = vunpack.c.l.b16 %v839
    %v942 = vunpack.c.h.b16 %v839
    %v943 = vunpack.c.l.b16 %v840
    %v944 = vunpack.c.h.b16 %v840
    %v945 = vunpack.c.l.b16 %v841
    %v946 = vunpack.c.h.b16 %v841
    %v947 = vunpack.c.l.b16 %v842
    %v948 = vunpack.c.h.b16 %v842
    %v949 = vunpack.c.l.b16 %v843
    %v950 = vunpack.c.h.b16 %v843
    %v951 = vunpack.c.l.b16 %v844
    %v952 = vunpack.c.h.b16 %v844
    %v953 = vunpack.c.l.b16 %v845
    %v954 = vunpack.c.h.b16 %v845
    %v955 = vunpack.c.l.b16 %v846
    %v956 = vunpack.c.h.b16 %v846
    %v957 = vunpack.c.l.b16 %v847
    %v958 = vunpack.c.h.b16 %v847
    %v959 = vunpack.c.l.b16 %v848
    %v960 = vunpack.c.h.b16 %v848
    %v961 = vunpack.c.l.b16 %v849
    %v962 = vunpack.c.h.b16 %v849
    %v963 = vunpack.c.l.b16 %v850
    %v964 = vunpack.c.h.b16 %v850
    %v965 = vpack.c.b16 %v925, %v917
    %v966 = vpack.c.b16 %v926, %v918
    %v967 = vpack.c.b16 %v927, %v919
    %v968 = vpack.c.b16 %v928, %v920
    %v969 = vpack.c.b16 %v929, %v921
    %v970 = vpack.c.b16 %v930, %v922
    %v971 = vpack.c.b16 %v931, %v923
    %v972 = vpack.c.b16 %v932, %v924
    %v973 = vpack.c.b16 %v941, %v933
    %v974 = vpack.c.b16 %v942, %v934
    %v975 = vpack.c.b16 %v943, %v935
    %v976 = vpack.c.b16 %v944, %v936
    %v977 = vpack.c.b16 %v945, %v937
    %v978 = vpack.c.b16 %v946, %v938
    %v979 = vpack.c.b16 %v947, %v939
    %v980 = vpack.c.b16 %v948, %v940
    %v981 = vpack.c.b16 %v957, %v949
    %v982 = vpack.c.b16 %v958, %v950
    %v983 = vpack.c.b16 %v959, %v951
    %v984 = vpack.c.b16 %v960, %v952
    %v985 = vpack.c.b16 %v961, %v953
    %v986 = vpack.c.b16 %v962, %v954
    %v987 = vpack.c.b16 %v963, %v955
    %v988 = vpack.c.b16 %v964, %v956
    %vm1013 = vcmask 392192
    %v1015 = vsel %vm1013, %v826, 0
    %1017 = vmatprep.subr.bf16.mxu0 %v966
    %1018 = vmatpush1.bf16.msra.mxu0 %v965
    %1019 = vmatprep.subr.bf16.mxu0 %v974
    %1020 = vmatpush1.bf16.msra.mxu0 %v973
    %1021 = vmatprep.subr.bf16.mxu0 %v982
    %1022 = vmatpush1.bf16.msra.mxu0 %v981
    %1023 = vmatprep.subr.bf16.mxu0 0
    %1024 = vmatpush1.bf16.msra.mxu0 0
    %1025 = vmatprep.subr.bf16.mxu0 0
    %1026 = vmatpush1.bf16.msra.mxu0 0
    %1027 = vmatprep.subr.bf16.mxu0 0
    %1028 = vmatpush1.bf16.msra.mxu0 0
    %1029 = vmatprep.subr.bf16.mxu0 0
    %1030 = vmatpush1.bf16.msra.mxu0 0
    %1031 = vmatprep.subr.bf16.mxu0 0
    %1032 = vmatpush1.bf16.msra.mxu0 0
    %1033 = vmatprep.subr.bf16.mxu0 0
    %1034 = vmatpush1.bf16.msra.mxu0 0
    %1035 = vmatprep.subr.bf16.mxu0 0
    %1036 = vmatpush1.bf16.msra.mxu0 0
    %1037 = vmatprep.subr.bf16.mxu0 0
    %1038 = vmatpush1.bf16.msra.mxu0 0
    %1039 = vmatprep.subr.bf16.mxu0 0
    %1040 = vmatpush1.bf16.msra.mxu0 0
    %1041 = vmatprep.subr.bf16.mxu0 0
    %1042 = vmatpush1.bf16.msra.mxu0 0
    %1043 = vmatprep.subr.bf16.mxu0 0
    %1044 = vmatpush1.bf16.msra.mxu0 0
    %1045 = vmatprep.subr.bf16.mxu0 0
    %1046 = vmatpush1.bf16.msra.mxu0 0
    %1047 = vmatprep.subr.bf16.mxu0 0
    %1048 = vmatpush1.bf16.msra.mxu0 0
    %1049 = vmatprep.mubr.bf16.mxu0 0
    %1050 = vmatmul.mubr.bf16.gmra.mrb[0].mxu0 %v1015
    %v1051 = vpop.f32.mrb[0].mxu0
    %v1052 = vadd.f32 %v856, %v1051
    %v1053 = vpop.f32.mrb[0].mxu0
    %v1054 = vadd.f32 %v860, %v1053
    %v1055 = vpop.f32.mrb[0].mxu0
    %v1056 = vpop.f32.mrb[0].mxu0
    %1057 = vdwg.mxu0
    %1058 = vmatprep.subr.bf16.mxu0 %v968
    %1059 = vmatpush1.bf16.msra.mxu0 %v967
    %1060 = vmatprep.subr.bf16.mxu0 %v976
    %1061 = vmatpush1.bf16.msra.mxu0 %v975
    %1062 = vmatprep.subr.bf16.mxu0 %v984
    %1063 = vmatpush1.bf16.msra.mxu0 %v983
    %1064 = vmatprep.subr.bf16.mxu0 0
    %1065 = vmatpush1.bf16.msra.mxu0 0
    %1066 = vmatprep.subr.bf16.mxu0 0
    %1067 = vmatpush1.bf16.msra.mxu0 0
    %1068 = vmatprep.subr.bf16.mxu0 0
    %1069 = vmatpush1.bf16.msra.mxu0 0
    %1070 = vmatprep.subr.bf16.mxu0 0
    %1071 = vmatpush1.bf16.msra.mxu0 0
    %1072 = vmatprep.subr.bf16.mxu0 0
    %1073 = vmatpush1.bf16.msra.mxu0 0
    %1074 = vmatprep.subr.bf16.mxu0 0
    %1075 = vmatpush1.bf16.msra.mxu0 0
    %1076 = vmatprep.subr.bf16.mxu0 0
    %1077 = vmatpush1.bf16.msra.mxu0 0
    %1078 = vmatprep.subr.bf16.mxu0 0
    %1079 = vmatpush1.bf16.msra.mxu0 0
    %1080 = vmatprep.subr.bf16.mxu0 0
    %1081 = vmatpush1.bf16.msra.mxu0 0
    %1082 = vmatprep.subr.bf16.mxu0 0
    %1083 = vmatpush1.bf16.msra.mxu0 0
    %1084 = vmatprep.subr.bf16.mxu0 0
    %1085 = vmatpush1.bf16.msra.mxu0 0
    %1086 = vmatprep.subr.bf16.mxu0 0
    %1087 = vmatpush1.bf16.msra.mxu0 0
    %1088 = vmatprep.subr.bf16.mxu0 0
    %1089 = vmatpush1.bf16.msra.mxu0 0
    %1090 = vmatprep.mubr.bf16.mxu0 0
    %1091 = vmatmul.mubr.bf16.gmra.mrb[0].mxu0 %v1015
    %v1092 = vpop.f32.mrb[0].mxu0
    %v1093 = vadd.f32 %v864, %v1092
    %v1094 = vpop.f32.mrb[0].mxu0
    %v1095 = vadd.f32 %v868, %v1094
    %v1096 = vpop.f32.mrb[0].mxu0
    %v1097 = vpop.f32.mrb[0].mxu0
    %1098 = vdwg.mxu0
    %1099 = vmatprep.subr.bf16.mxu0 %v970
    %1100 = vmatpush1.bf16.msra.mxu0 %v969
    %1101 = vmatprep.subr.bf16.mxu0 %v978
    %1102 = vmatpush1.bf16.msra.mxu0 %v977
    %1103 = vmatprep.subr.bf16.mxu0 %v986
    %1104 = vmatpush1.bf16.msra.mxu0 %v985
    %1105 = vmatprep.subr.bf16.mxu0 0
    %1106 = vmatpush1.bf16.msra.mxu0 0
    %1107 = vmatprep.subr.bf16.mxu0 0
    %1108 = vmatpush1.bf16.msra.mxu0 0
    %1109 = vmatprep.subr.bf16.mxu0 0
    %1110 = vmatpush1.bf16.msra.mxu0 0
    %1111 = vmatprep.subr.bf16.mxu0 0
    %1112 = vmatpush1.bf16.msra.mxu0 0
    %1113 = vmatprep.subr.bf16.mxu0 0
    %1114 = vmatpush1.bf16.msra.mxu0 0
    %1115 = vmatprep.subr.bf16.mxu0 0
    %1116 = vmatpush1.bf16.msra.mxu0 0
    %1117 = vmatprep.subr.bf16.mxu0 0
    %1118 = vmatpush1.bf16.msra.mxu0 0
    %1119 = vmatprep.subr.bf16.mxu0 0
    %1120 = vmatpush1.bf16.msra.mxu0 0
    %1121 = vmatprep.subr.bf16.mxu0 0
    %1122 = vmatpush1.bf16.msra.mxu0 0
    %1123 = vmatprep.subr.bf16.mxu0 0
    %1124 = vmatpush1.bf16.msra.mxu0 0
    %1125 = vmatprep.subr.bf16.mxu0 0
    %1126 = vmatpush1.bf16.msra.mxu0 0
    %1127 = vmatprep.subr.bf16.mxu0 0
    %1128 = vmatpush1.bf16.msra.mxu0 0
    %1129 = vmatprep.subr.bf16.mxu0 0
    %1130 = vmatpush1.bf16.msra.mxu0 0
    %1131 = vmatprep.mubr.bf16.mxu0 0
    %1132 = vmatmul.mubr.bf16.gmra.mrb[0].mxu0 %v1015
    %v1133 = vpop.f32.mrb[0].mxu0
    %v1134 = vadd.f32 %v872, %v1133
    %v1135 = vpop.f32.mrb[0].mxu0
    %v1136 = vadd.f32 %v876, %v1135
    %v1137 = vpop.f32.mrb[0].mxu0
    %v1138 = vpop.f32.mrb[0].mxu0
    %1139 = vdwg.mxu0
    %1140 = vmatprep.subr.bf16.mxu0 %v972
    %1141 = vmatpush1.bf16.msra.mxu0 %v971
    %1142 = vmatprep.subr.bf16.mxu0 %v980
    %1143 = vmatpush1.bf16.msra.mxu0 %v979
    %1144 = vmatprep.subr.bf16.mxu0 %v988
    %1145 = vmatpush1.bf16.msra.mxu0 %v987
    %1146 = vmatprep.subr.bf16.mxu0 0
    %1147 = vmatpush1.bf16.msra.mxu0 0
    %1148 = vmatprep.subr.bf16.mxu0 0
    %1149 = vmatpush1.bf16.msra.mxu0 0
    %1150 = vmatprep.subr.bf16.mxu0 0
    %1151 = vmatpush1.bf16.msra.mxu0 0
    %1152 = vmatprep.subr.bf16.mxu0 0
    %1153 = vmatpush1.bf16.msra.mxu0 0
    %1154 = vmatprep.subr.bf16.mxu0 0
    %1155 = vmatpush1.bf16.msra.mxu0 0
    %1156 = vmatprep.subr.bf16.mxu0 0
    %1157 = vmatpush1.bf16.msra.mxu0 0
    %1158 = vmatprep.subr.bf16.mxu0 0
    %1159 = vmatpush1.bf16.msra.mxu0 0
    %1160 = vmatprep.subr.bf16.mxu0 0
    %1161 = vmatpush1.bf16.msra.mxu0 0
    %1162 = vmatprep.subr.bf16.mxu0 0
    %1163 = vmatpush1.bf16.msra.mxu0 0
    %1164 = vmatprep.subr.bf16.mxu0 0
    %1165 = vmatpush1.bf16.msra.mxu0 0
    %1166 = vmatprep.subr.bf16.mxu0 0
    %1167 = vmatpush1.bf16.msra.mxu0 0
    %1168 = vmatprep.subr.bf16.mxu0 0
    %1169 = vmatpush1.bf16.msra.mxu0 0
    %1170 = vmatprep.subr.bf16.mxu0 0
    %1171 = vmatpush1.bf16.msra.mxu0 0
    %1172 = vmatprep.mubr.bf16.mxu0 0
    %1173 = vmatmul.mubr.bf16.gmra.mrb[0].mxu0 %v1015
    %v1174 = vpop.f32.mrb[0].mxu0
    %v1175 = vadd.f32 %v880, %v1174
    %v1176 = vpop.f32.mrb[0].mxu0
    %v1177 = vadd.f32 %v884, %v1176
    %v1178 = vpop.f32.mrb[0].mxu0
    %v1179 = vpop.f32.mrb[0].mxu0
    %1180 = vdwg.mxu0
    %v1181 = vld [vmem:[#allocation5] sm:$0xff]
    %v1182 = vpack.c.bf16 %v1181, %v1181
    %v1183 = vld [vmem:[#allocation11] sm:$0xff]
    %v1184 = vld [vmem:[#allocation11 + $0x8] sm:$0xff]
    %v1185 = vld [vmem:[#allocation11 + $0x10] sm:$0xff]
    %v1186 = vld [vmem:[#allocation11 + $0x18] sm:$0xff]
    %v1187 = vld [vmem:[#allocation11 + $0x20] sm:$0xff]
    %v1188 = vld [vmem:[#allocation11 + $0x28] sm:$0xff]
    %v1189 = vld [vmem:[#allocation13] sm:$0xf]
    %v1191 = vlaneseq
    %v1192 = vshrl.u32 %v1191, 7
    %v1193 = vsub.s32 0, %v1192
    %v1194 = vrot.slane %v1189, %v1193
    %v1195 = vlaneseq
    %v1196 = vshrl.u32 %v1195, 7
    %v1197 = vsub.s32 1, %v1196
    %v1198 = vrot.slane %v1189, %v1197
    %v1199 = vlaneseq
    %v1200 = vshrl.u32 %v1199, 7
    %v1201 = vsub.s32 2, %v1200
    %v1202 = vrot.slane %v1189, %v1201
    %v1203 = vlaneseq
    %v1204 = vshrl.u32 %v1203, 7
    %v1205 = vsub.s32 3, %v1204
    %v1206 = vrot.slane %v1189, %v1205
    %v1217 = vunpack.c.l.b16 %v1183
    %v1218 = vunpack.c.h.b16 %v1183
    %v1219 = vunpack.c.l.b16 %v1184
    %v1220 = vunpack.c.h.b16 %v1184
    %v1221 = vunpack.c.l.b16 %v1185
    %v1222 = vunpack.c.h.b16 %v1185
    %v1223 = vunpack.c.l.b16 %v1186
    %v1224 = vunpack.c.h.b16 %v1186
    %v1225 = vunpack.c.l.b16 %v1187
    %v1226 = vunpack.c.h.b16 %v1187
    %v1227 = vunpack.c.l.b16 %v1188
    %v1228 = vunpack.c.h.b16 %v1188
    %v1229 = vpack.c.b16 %v1221, %v1217
    %v1230 = vpack.c.b16 %v1222, %v1218
    %v1231 = vpack.c.b16 %v1223, %v1219
    %v1232 = vpack.c.b16 %v1224, %v1220
    %v1233 = vpack.c.b16 %v1225, %v1225
    %v1234 = vpack.c.b16 %v1226, %v1226
    %v1235 = vpack.c.b16 %v1227, %v1227
    %v1236 = vpack.c.b16 %v1228, %v1228
    %vm1241 = vcmask 195584
    %v1243 = vsel %vm1241, %v1182, 0
    %vm1245 = vcmask 1043456
    %v1247 = vsel %vm1245, %v1233, 0
    %v1250 = vsel %vm1245, %v1234, 0
    %v1253 = vsel %vm1245, %v1235, 0
    %v1256 = vsel %vm1245, %v1236, 0
    %1258 = vmatprep.subr.bf16.mxu0 %v1230
    %1259 = vmatpush1.bf16.msra.mxu0 %v1229
    %1260 = vmatprep.subr.bf16.mxu0 %v1250
    %1261 = vmatpush1.bf16.msra.mxu0 %v1247
    %1262 = vmatprep.subr.bf16.mxu0 0
    %1263 = vmatpush1.bf16.msra.mxu0 0
    %1264 = vmatprep.subr.bf16.mxu0 0
    %1265 = vmatpush1.bf16.msra.mxu0 0
    %1266 = vmatprep.subr.bf16.mxu0 0
    %1267 = vmatpush1.bf16.msra.mxu0 0
    %1268 = vmatprep.subr.bf16.mxu0 0
    %1269 = vmatpush1.bf16.msra.mxu0 0
    %1270 = vmatprep.subr.bf16.mxu0 0
    %1271 = vmatpush1.bf16.msra.mxu0 0
    %1272 = vmatprep.subr.bf16.mxu0 0
    %1273 = vmatpush1.bf16.msra.mxu0 0
    %1274 = vmatprep.subr.bf16.mxu0 0
    %1275 = vmatpush1.bf16.msra.mxu0 0
    %1276 = vmatprep.subr.bf16.mxu0 0
    %1277 = vmatpush1.bf16.msra.mxu0 0
    %1278 = vmatprep.subr.bf16.mxu0 0
    %1279 = vmatpush1.bf16.msra.mxu0 0
    %1280 = vmatprep.subr.bf16.mxu0 0
    %1281 = vmatpush1.bf16.msra.mxu0 0
    %1282 = vmatprep.subr.bf16.mxu0 0
    %1283 = vmatpush1.bf16.msra.mxu0 0
    %1284 = vmatprep.subr.bf16.mxu0 0
    %1285 = vmatpush1.bf16.msra.mxu0 0
    %1286 = vmatprep.subr.bf16.mxu0 0
    %1287 = vmatpush1.bf16.msra.mxu0 0
    %1288 = vmatprep.subr.bf16.mxu0 0
    %1289 = vmatpush1.bf16.msra.mxu0 0
    %1290 = vmatprep.mubr.bf16.mxu0 0
    %1291 = vmatmul.mubr.bf16.gmra.mrb[0].mxu0 %v1243
    %v1292 = vpop.f32.mrb[0].mxu0
    %v1293 = vadd.f32 %v1194, %v1292
    %v1294 = vpop.f32.mrb[0].mxu0
    %v1295 = vadd.f32 %v1198, %v1294
    %v1296 = vpop.f32.mrb[0].mxu0
    %v1297 = vpop.f32.mrb[0].mxu0
    %1298 = vdwg.mxu0
    %1299 = vmatprep.subr.bf16.mxu0 %v1232
    %1300 = vmatpush1.bf16.msra.mxu0 %v1231
    %1301 = vmatprep.subr.bf16.mxu0 %v1256
    %1302 = vmatpush1.bf16.msra.mxu0 %v1253
    %1303 = vmatprep.subr.bf16.mxu0 0
    %1304 = vmatpush1.bf16.msra.mxu0 0
    %1305 = vmatprep.subr.bf16.mxu0 0
    %1306 = vmatpush1.bf16.msra.mxu0 0
    %1307 = vmatprep.subr.bf16.mxu0 0
    %1308 = vmatpush1.bf16.msra.mxu0 0
    %1309 = vmatprep.subr.bf16.mxu0 0
    %1310 = vmatpush1.bf16.msra.mxu0 0
    %1311 = vmatprep.subr.bf16.mxu0 0
    %1312 = vmatpush1.bf16.msra.mxu0 0
    %1313 = vmatprep.subr.bf16.mxu0 0
    %1314 = vmatpush1.bf16.msra.mxu0 0
    %1315 = vmatprep.subr.bf16.mxu0 0
    %1316 = vmatpush1.bf16.msra.mxu0 0
    %1317 = vmatprep.subr.bf16.mxu0 0
    %1318 = vmatpush1.bf16.msra.mxu0 0
    %1319 = vmatprep.subr.bf16.mxu0 0
    %1320 = vmatpush1.bf16.msra.mxu0 0
    %1321 = vmatprep.subr.bf16.mxu0 0
    %1322 = vmatpush1.bf16.msra.mxu0 0
    %1323 = vmatprep.subr.bf16.mxu0 0
    %1324 = vmatpush1.bf16.msra.mxu0 0
    %1325 = vmatprep.subr.bf16.mxu0 0
    %1326 = vmatpush1.bf16.msra.mxu0 0
    %1327 = vmatprep.subr.bf16.mxu0 0
    %1328 = vmatpush1.bf16.msra.mxu0 0
    %1329 = vmatprep.subr.bf16.mxu0 0
    %1330 = vmatpush1.bf16.msra.mxu0 0
    %1331 = vmatprep.mubr.bf16.mxu0 0
    %1332 = vmatmul.mubr.bf16.gmra.mrb[0].mxu0 %v1243
    %v1333 = vpop.f32.mrb[0].mxu0
    %v1334 = vadd.f32 %v1202, %v1333
    %v1335 = vpop.f32.mrb[0].mxu0
    %v1336 = vadd.f32 %v1206, %v1335
    %v1337 = vpop.f32.mrb[0].mxu0
    %v1338 = vpop.f32.mrb[0].mxu0
    %1339 = vdwg.mxu0
    %v1340 = vld [vmem:[#allocation7] sm:$0xff]
    %v1341 = vpack.c.bf16 %v1340, %v1340
    %v1342 = vld [vmem:[#allocation14] sm:$0xff]
    %v1343 = vld [vmem:[#allocation14 + $0x8] sm:$0xff]
    %v1344 = vld [vmem:[#allocation14 + $0x10] sm:$0xff]
    %v1345 = vld [vmem:[#allocation14 + $0x18] sm:$0xff]
    %v1346 = vld [vmem:[#allocation14 + $0x20] sm:$0xff]
    %v1347 = vld [vmem:[#allocation14 + $0x28] sm:$0xff]
    %v1348 = vld [vmem:[#allocation16] sm:$0xf]
    %v1350 = vlaneseq
    %v1351 = vshrl.u32 %v1350, 7
    %v1352 = vsub.s32 0, %v1351
    %v1353 = vrot.slane %v1348, %v1352
    %v1354 = vlaneseq
    %v1355 = vshrl.u32 %v1354, 7
    %v1356 = vsub.s32 1, %v1355
    %v1357 = vrot.slane %v1348, %v1356
    %v1358 = vlaneseq
    %v1359 = vshrl.u32 %v1358, 7
    %v1360 = vsub.s32 2, %v1359
    %v1361 = vrot.slane %v1348, %v1360
    %v1362 = vlaneseq
    %v1363 = vshrl.u32 %v1362, 7
    %v1364 = vsub.s32 3, %v1363
    %v1365 = vrot.slane %v1348, %v1364
    %v1376 = vunpack.c.l.b16 %v1342
    %v1377 = vunpack.c.h.b16 %v1342
    %v1378 = vunpack.c.l.b16 %v1343
    %v1379 = vunpack.c.h.b16 %v1343
    %v1380 = vunpack.c.l.b16 %v1344
    %v1381 = vunpack.c.h.b16 %v1344
    %v1382 = vunpack.c.l.b16 %v1345
    %v1383 = vunpack.c.h.b16 %v1345
    %v1384 = vunpack.c.l.b16 %v1346
    %v1385 = vunpack.c.h.b16 %v1346
    %v1386 = vunpack.c.l.b16 %v1347
    %v1387 = vunpack.c.h.b16 %v1347
    %v1388 = vpack.c.b16 %v1380, %v1376
    %v1389 = vpack.c.b16 %v1381, %v1377
    %v1390 = vpack.c.b16 %v1382, %v1378
    %v1391 = vpack.c.b16 %v1383, %v1379
    %v1392 = vpack.c.b16 %v1384, %v1384
    %v1393 = vpack.c.b16 %v1385, %v1385
    %v1394 = vpack.c.b16 %v1386, %v1386
    %v1395 = vpack.c.b16 %v1387, %v1387
    %v1401 = vsel %vm1241, %v1341, 0
    %v1404 = vsel %vm1245, %v1392, 0
    %v1407 = vsel %vm1245, %v1393, 0
    %v1410 = vsel %vm1245, %v1394, 0
    %v1413 = vsel %vm1245, %v1395, 0
    %1415 = vmatprep.subr.bf16.mxu0 %v1389
    %1416 = vmatpush1.bf16.msra.mxu0 %v1388
    %1417 = vmatprep.subr.bf16.mxu0 %v1407
    %1418 = vmatpush1.bf16.msra.mxu0 %v1404
    %1419 = vmatprep.subr.bf16.mxu0 0
    %1420 = vmatpush1.bf16.msra.mxu0 0
    %1421 = vmatprep.subr.bf16.mxu0 0
    %1422 = vmatpush1.bf16.msra.mxu0 0
    %1423 = vmatprep.subr.bf16.mxu0 0
    %1424 = vmatpush1.bf16.msra.mxu0 0
    %1425 = vmatprep.subr.bf16.mxu0 0
    %1426 = vmatpush1.bf16.msra.mxu0 0
    %1427 = vmatprep.subr.bf16.mxu0 0
    %1428 = vmatpush1.bf16.msra.mxu0 0
    %1429 = vmatprep.subr.bf16.mxu0 0
    %1430 = vmatpush1.bf16.msra.mxu0 0
    %1431 = vmatprep.subr.bf16.mxu0 0
    %1432 = vmatpush1.bf16.msra.mxu0 0
    %1433 = vmatprep.subr.bf16.mxu0 0
    %1434 = vmatpush1.bf16.msra.mxu0 0
    %1435 = vmatprep.subr.bf16.mxu0 0
    %1436 = vmatpush1.bf16.msra.mxu0 0
    %1437 = vmatprep.subr.bf16.mxu0 0
    %1438 = vmatpush1.bf16.msra.mxu0 0
    %1439 = vmatprep.subr.bf16.mxu0 0
    %1440 = vmatpush1.bf16.msra.mxu0 0
    %1441 = vmatprep.subr.bf16.mxu0 0
    %1442 = vmatpush1.bf16.msra.mxu0 0
    %1443 = vmatprep.subr.bf16.mxu0 0
    %1444 = vmatpush1.bf16.msra.mxu0 0
    %1445 = vmatprep.subr.bf16.mxu0 0
    %1446 = vmatpush1.bf16.msra.mxu0 0
    %1447 = vmatprep.mubr.bf16.mxu0 0
    %1448 = vmatmul.mubr.bf16.gmra.mrb[0].mxu0 %v1401
    %v1449 = vpop.f32.mrb[0].mxu0
    %v1450 = vadd.f32 %v1353, %v1449
    %v1451 = vpop.f32.mrb[0].mxu0
    %v1452 = vadd.f32 %v1357, %v1451
    %v1453 = vpop.f32.mrb[0].mxu0
    %v1454 = vpop.f32.mrb[0].mxu0
    %1455 = vdwg.mxu0
    %1456 = vmatprep.subr.bf16.mxu0 %v1391
    %1457 = vmatpush1.bf16.msra.mxu0 %v1390
    %1458 = vmatprep.subr.bf16.mxu0 %v1413
    %1459 = vmatpush1.bf16.msra.mxu0 %v1410
    %1460 = vmatprep.subr.bf16.mxu0 0
    %1461 = vmatpush1.bf16.msra.mxu0 0
    %1462 = vmatprep.subr.bf16.mxu0 0
    %1463 = vmatpush1.bf16.msra.mxu0 0
    %1464 = vmatprep.subr.bf16.mxu0 0
    %1465 = vmatpush1.bf16.msra.mxu0 0
    %1466 = vmatprep.subr.bf16.mxu0 0
    %1467 = vmatpush1.bf16.msra.mxu0 0
    %1468 = vmatprep.subr.bf16.mxu0 0
    %1469 = vmatpush1.bf16.msra.mxu0 0
    %1470 = vmatprep.subr.bf16.mxu0 0
    %1471 = vmatpush1.bf16.msra.mxu0 0
    %1472 = vmatprep.subr.bf16.mxu0 0
    %1473 = vmatpush1.bf16.msra.mxu0 0
    %1474 = vmatprep.subr.bf16.mxu0 0
    %1475 = vmatpush1.bf16.msra.mxu0 0
    %1476 = vmatprep.subr.bf16.mxu0 0
    %1477 = vmatpush1.bf16.msra.mxu0 0
    %1478 = vmatprep.subr.bf16.mxu0 0
    %1479 = vmatpush1.bf16.msra.mxu0 0
    %1480 = vmatprep.subr.bf16.mxu0 0
    %1481 = vmatpush1.bf16.msra.mxu0 0
    %1482 = vmatprep.subr.bf16.mxu0 0
    %1483 = vmatpush1.bf16.msra.mxu0 0
    %1484 = vmatprep.subr.bf16.mxu0 0
    %1485 = vmatpush1.bf16.msra.mxu0 0
    %1486 = vmatprep.subr.bf16.mxu0 0
    %1487 = vmatpush1.bf16.msra.mxu0 0
    %1488 = vmatprep.mubr.bf16.mxu0 0
    %1489 = vmatmul.mubr.bf16.gmra.mrb[0].mxu0 %v1401
    %v1490 = vpop.f32.mrb[0].mxu0
    %v1491 = vadd.f32 %v1361, %v1490
    %v1492 = vpop.f32.mrb[0].mxu0
    %v1493 = vadd.f32 %v1365, %v1492
    %v1494 = vpop.f32.mrb[0].mxu0
    %v1495 = vpop.f32.mrb[0].mxu0
    %1496 = vdwg.mxu0
    %v1497 = vpack.c.bf16 %v1293, %v1293
    %v1498 = vpack.c.bf16 %v1295, %v1295
    %v1499 = vpack.c.bf16 %v1334, %v1334
    %v1500 = vpack.c.bf16 %v1336, %v1336
    %v1501 = vld [vmem:[#allocation17] sm:$0xff]
    %v1502 = vld [vmem:[#allocation17 + $0x8] sm:$0xff]
    %v1503 = vld [vmem:[#allocation17 + $0x10] sm:$0xff]
    %v1504 = vld [vmem:[#allocation17 + $0x18] sm:$0xff]
    %v1505 = vld [vmem:[#allocation17 + $0x20] sm:$0xff]
    %v1506 = vld [vmem:[#allocation17 + $0x28] sm:$0xff]
    %v1507 = vld [vmem:[#allocation17 + $0x30] sm:$0xff]
    %v1508 = vld [vmem:[#allocation17 + $0x38] sm:$0xff]
    %v1509 = vld [vmem:[#allocation17 + $0x40] sm:$0xff]
    %v1510 = vld [vmem:[#allocation17 + $0x48] sm:$0xff]
    %v1511 = vld [vmem:[#allocation17 + $0x50] sm:$0xff]
    %v1512 = vld [vmem:[#allocation17 + $0x58] sm:$0xff]
    %v1513 = vld [vmem:[#allocation17 + $0x60] sm:$0xff]
    %v1514 = vld [vmem:[#allocation17 + $0x68] sm:$0xff]
    %v1515 = vld [vmem:[#allocation17 + $0x70] sm:$0xff]
    %v1516 = vld [vmem:[#allocation17 + $0x78] sm:$0xff]
    %v1517 = vld [vmem:[#allocation17 + $0x80] sm:$0xff]
    %v1518 = vld [vmem:[#allocation17 + $0x88] sm:$0xff]
    %v1519 = vld [vmem:[#allocation17 + $0x90] sm:$0xff]
    %v1520 = vld [vmem:[#allocation17 + $0x98] sm:$0xff]
    %v1521 = vld [vmem:[#allocation17 + $0xa0] sm:$0xff]
    %v1522 = vld [vmem:[#allocation17 + $0xa8] sm:$0xff]
    %v1523 = vld [vmem:[#allocation17 + $0xb0] sm:$0xff]
    %v1524 = vld [vmem:[#allocation17 + $0xb8] sm:$0xff]
    %v1525 = vld [vmem:[#allocation17 + $0xc0] sm:$0xff]
    %v1526 = vld [vmem:[#allocation17 + $0xc8] sm:$0xff]
    %v1527 = vld [vmem:[#allocation17 + $0xd0] sm:$0xff]
    %v1528 = vld [vmem:[#allocation17 + $0xd8] sm:$0xff]
    %v1529 = vld [vmem:[#allocation17 + $0xe0] sm:$0xff]
    %v1530 = vld [vmem:[#allocation17 + $0xe8] sm:$0xff]
    %v1531 = vld [vmem:[#allocation17 + $0xf0] sm:$0xff]
    %v1532 = vld [vmem:[#allocation17 + $0xf8] sm:$0xff]
    %v1533 = vld [vmem:[#allocation17 + $0x100] sm:$0xff]
    %v1534 = vld [vmem:[#allocation17 + $0x108] sm:$0xff]
    %v1535 = vld [vmem:[#allocation17 + $0x110] sm:$0xff]
    %v1536 = vld [vmem:[#allocation17 + $0x118] sm:$0xff]
    %v1537 = vld [vmem:[#allocation17 + $0x120] sm:$0xff]
    %v1538 = vld [vmem:[#allocation17 + $0x128] sm:$0xff]
    %v1539 = vld [vmem:[#allocation17 + $0x130] sm:$0xff]
    %v1540 = vld [vmem:[#allocation17 + $0x138] sm:$0xff]
    %v1541 = vld [vmem:[#allocation17 + $0x140] sm:$0xff]
    %v1542 = vld [vmem:[#allocation17 + $0x148] sm:$0xff]
    %v1543 = vld [vmem:[#allocation17 + $0x150] sm:$0xff]
    %v1544 = vld [vmem:[#allocation17 + $0x158] sm:$0xff]
    %v1545 = vld [vmem:[#allocation17 + $0x160] sm:$0xff]
    %v1546 = vld [vmem:[#allocation17 + $0x168] sm:$0xff]
    %v1547 = vld [vmem:[#allocation17 + $0x170] sm:$0xff]
    %v1548 = vld [vmem:[#allocation17 + $0x178] sm:$0xff]
    %v1549 = vld [vmem:[#allocation17 + $0x180] sm:$0xff]
    %v1550 = vld [vmem:[#allocation17 + $0x188] sm:$0xff]
    %v1551 = vld [vmem:[#allocation17 + $0x190] sm:$0xff]
    %v1552 = vld [vmem:[#allocation17 + $0x198] sm:$0xff]
    %v1553 = vld [vmem:[#allocation17 + $0x1a0] sm:$0xff]
    %v1554 = vld [vmem:[#allocation17 + $0x1a8] sm:$0xff]
    %v1555 = vld [vmem:[#allocation17 + $0x1b0] sm:$0xff]
    %v1556 = vld [vmem:[#allocation17 + $0x1b8] sm:$0xff]
    %v1557 = vld [vmem:[#allocation17 + $0x1c0] sm:$0xff]
    %v1558 = vld [vmem:[#allocation17 + $0x1c8] sm:$0xff]
    %v1559 = vld [vmem:[#allocation17 + $0x1d0] sm:$0xff]
    %v1560 = vld [vmem:[#allocation17 + $0x1d8] sm:$0xff]
    %v1561 = vld [vmem:[#allocation17 + $0x1e0] sm:$0xff]
    %v1562 = vld [vmem:[#allocation17 + $0x1e8] sm:$0xff]
    %v1563 = vld [vmem:[#allocation17 + $0x1f0] sm:$0xff]
    %v1564 = vld [vmem:[#allocation17 + $0x1f8] sm:$0xff]
    %v1565 = vld [vmem:[#allocation19] sm:$0x3]
    %v1567 = vlaneseq
    %v1568 = vshrl.u32 %v1567, 7
    %v1569 = vsub.s32 0, %v1568
    %v1570 = vrot.slane %v1565, %v1569
    %v1571 = vlaneseq
    %v1572 = vshrl.u32 %v1571, 7
    %v1573 = vsub.s32 1, %v1572
    %v1574 = vrot.slane %v1565, %v1573
    %v1641 = vunpack.c.l.b16 %v1501
    %v1642 = vunpack.c.h.b16 %v1501
    %v1643 = vunpack.c.l.b16 %v1502
    %v1644 = vunpack.c.h.b16 %v1502
    %v1645 = vunpack.c.l.b16 %v1503
    %v1646 = vunpack.c.h.b16 %v1503
    %v1647 = vunpack.c.l.b16 %v1504
    %v1648 = vunpack.c.h.b16 %v1504
    %v1649 = vunpack.c.l.b16 %v1505
    %v1650 = vunpack.c.h.b16 %v1505
    %v1651 = vunpack.c.l.b16 %v1506
    %v1652 = vunpack.c.h.b16 %v1506
    %v1653 = vunpack.c.l.b16 %v1507
    %v1654 = vunpack.c.h.b16 %v1507
    %v1655 = vunpack.c.l.b16 %v1508
    %v1656 = vunpack.c.h.b16 %v1508
    %v1657 = vunpack.c.l.b16 %v1509
    %v1658 = vunpack.c.h.b16 %v1509
    %v1659 = vunpack.c.l.b16 %v1510
    %v1660 = vunpack.c.h.b16 %v1510
    %v1661 = vunpack.c.l.b16 %v1511
    %v1662 = vunpack.c.h.b16 %v1511
    %v1663 = vunpack.c.l.b16 %v1512
    %v1664 = vunpack.c.h.b16 %v1512
    %v1665 = vunpack.c.l.b16 %v1513
    %v1666 = vunpack.c.h.b16 %v1513
    %v1667 = vunpack.c.l.b16 %v1514
    %v1668 = vunpack.c.h.b16 %v1514
    %v1669 = vunpack.c.l.b16 %v1515
    %v1670 = vunpack.c.h.b16 %v1515
    %v1671 = vunpack.c.l.b16 %v1516
    %v1672 = vunpack.c.h.b16 %v1516
    %v1673 = vunpack.c.l.b16 %v1517
    %v1674 = vunpack.c.h.b16 %v1517
    %v1675 = vunpack.c.l.b16 %v1518
    %v1676 = vunpack.c.h.b16 %v1518
    %v1677 = vunpack.c.l.b16 %v1519
    %v1678 = vunpack.c.h.b16 %v1519
    %v1679 = vunpack.c.l.b16 %v1520
    %v1680 = vunpack.c.h.b16 %v1520
    %v1681 = vunpack.c.l.b16 %v1521
    %v1682 = vunpack.c.h.b16 %v1521
    %v1683 = vunpack.c.l.b16 %v1522
    %v1684 = vunpack.c.h.b16 %v1522
    %v1685 = vunpack.c.l.b16 %v1523
    %v1686 = vunpack.c.h.b16 %v1523
    %v1687 = vunpack.c.l.b16 %v1524
    %v1688 = vunpack.c.h.b16 %v1524
    %v1689 = vunpack.c.l.b16 %v1525
    %v1690 = vunpack.c.h.b16 %v1525
    %v1691 = vunpack.c.l.b16 %v1526
    %v1692 = vunpack.c.h.b16 %v1526
    %v1693 = vunpack.c.l.b16 %v1527
    %v1694 = vunpack.c.h.b16 %v1527
    %v1695 = vunpack.c.l.b16 %v1528
    %v1696 = vunpack.c.h.b16 %v1528
    %v1697 = vunpack.c.l.b16 %v1529
    %v1698 = vunpack.c.h.b16 %v1529
    %v1699 = vunpack.c.l.b16 %v1530
    %v1700 = vunpack.c.h.b16 %v1530
    %v1701 = vunpack.c.l.b16 %v1531
    %v1702 = vunpack.c.h.b16 %v1531
    %v1703 = vunpack.c.l.b16 %v1532
    %v1704 = vunpack.c.h.b16 %v1532
    %v1705 = vunpack.c.l.b16 %v1533
    %v1706 = vunpack.c.h.b16 %v1533
    %v1707 = vunpack.c.l.b16 %v1534
    %v1708 = vunpack.c.h.b16 %v1534
    %v1709 = vunpack.c.l.b16 %v1535
    %v1710 = vunpack.c.h.b16 %v1535
    %v1711 = vunpack.c.l.b16 %v1536
    %v1712 = vunpack.c.h.b16 %v1536
    %v1713 = vunpack.c.l.b16 %v1537
    %v1714 = vunpack.c.h.b16 %v1537
    %v1715 = vunpack.c.l.b16 %v1538
    %v1716 = vunpack.c.h.b16 %v1538
    %v1717 = vunpack.c.l.b16 %v1539
    %v1718 = vunpack.c.h.b16 %v1539
    %v1719 = vunpack.c.l.b16 %v1540
    %v1720 = vunpack.c.h.b16 %v1540
    %v1721 = vunpack.c.l.b16 %v1541
    %v1722 = vunpack.c.h.b16 %v1541
    %v1723 = vunpack.c.l.b16 %v1542
    %v1724 = vunpack.c.h.b16 %v1542
    %v1725 = vunpack.c.l.b16 %v1543
    %v1726 = vunpack.c.h.b16 %v1543
    %v1727 = vunpack.c.l.b16 %v1544
    %v1728 = vunpack.c.h.b16 %v1544
    %v1729 = vunpack.c.l.b16 %v1545
    %v1730 = vunpack.c.h.b16 %v1545
    %v1731 = vunpack.c.l.b16 %v1546
    %v1732 = vunpack.c.h.b16 %v1546
    %v1733 = vunpack.c.l.b16 %v1547
    %v1734 = vunpack.c.h.b16 %v1547
    %v1735 = vunpack.c.l.b16 %v1548
    %v1736 = vunpack.c.h.b16 %v1548
    %v1737 = vunpack.c.l.b16 %v1549
    %v1738 = vunpack.c.h.b16 %v1549
    %v1739 = vunpack.c.l.b16 %v1550
    %v1740 = vunpack.c.h.b16 %v1550
    %v1741 = vunpack.c.l.b16 %v1551
    %v1742 = vunpack.c.h.b16 %v1551
    %v1743 = vunpack.c.l.b16 %v1552
    %v1744 = vunpack.c.h.b16 %v1552
    %v1745 = vunpack.c.l.b16 %v1553
    %v1746 = vunpack.c.h.b16 %v1553
    %v1747 = vunpack.c.l.b16 %v1554
    %v1748 = vunpack.c.h.b16 %v1554
    %v1749 = vunpack.c.l.b16 %v1555
    %v1750 = vunpack.c.h.b16 %v1555
    %v1751 = vunpack.c.l.b16 %v1556
    %v1752 = vunpack.c.h.b16 %v1556
    %v1753 = vunpack.c.l.b16 %v1557
    %v1754 = vunpack.c.h.b16 %v1557
    %v1755 = vunpack.c.l.b16 %v1558
    %v1756 = vunpack.c.h.b16 %v1558
    %v1757 = vunpack.c.l.b16 %v1559
    %v1758 = vunpack.c.h.b16 %v1559
    %v1759 = vunpack.c.l.b16 %v1560
    %v1760 = vunpack.c.h.b16 %v1560
    %v1761 = vunpack.c.l.b16 %v1561
    %v1762 = vunpack.c.h.b16 %v1561
    %v1763 = vunpack.c.l.b16 %v1562
    %v1764 = vunpack.c.h.b16 %v1562
    %v1765 = vunpack.c.l.b16 %v1563
    %v1766 = vunpack.c.h.b16 %v1563
    %v1767 = vunpack.c.l.b16 %v1564
    %v1768 = vunpack.c.h.b16 %v1564
    %v1769 = vpack.c.b16 %v1643, %v1641
    %v1770 = vpack.c.b16 %v1644, %v1642
    %v1771 = vpack.c.b16 %v1647, %v1645
    %v1772 = vpack.c.b16 %v1648, %v1646
    %v1773 = vpack.c.b16 %v1651, %v1649
    %v1774 = vpack.c.b16 %v1652, %v1650
    %v1775 = vpack.c.b16 %v1655, %v1653
    %v1776 = vpack.c.b16 %v1656, %v1654
    %v1777 = vpack.c.b16 %v1659, %v1657
    %v1778 = vpack.c.b16 %v1660, %v1658
    %v1779 = vpack.c.b16 %v1663, %v1661
    %v1780 = vpack.c.b16 %v1664, %v1662
    %v1781 = vpack.c.b16 %v1667, %v1665
    %v1782 = vpack.c.b16 %v1668, %v1666
    %v1783 = vpack.c.b16 %v1671, %v1669
    %v1784 = vpack.c.b16 %v1672, %v1670
    %v1785 = vpack.c.b16 %v1675, %v1673
    %v1786 = vpack.c.b16 %v1676, %v1674
    %v1787 = vpack.c.b16 %v1679, %v1677
    %v1788 = vpack.c.b16 %v1680, %v1678
    %v1789 = vpack.c.b16 %v1683, %v1681
    %v1790 = vpack.c.b16 %v1684, %v1682
    %v1791 = vpack.c.b16 %v1687, %v1685
    %v1792 = vpack.c.b16 %v1688, %v1686
    %v1793 = vpack.c.b16 %v1691, %v1689
    %v1794 = vpack.c.b16 %v1692, %v1690
    %v1795 = vpack.c.b16 %v1695, %v1693
    %v1796 = vpack.c.b16 %v1696, %v1694
    %v1797 = vpack.c.b16 %v1699, %v1697
    %v1798 = vpack.c.b16 %v1700, %v1698
    %v1799 = vpack.c.b16 %v1703, %v1701
    %v1800 = vpack.c.b16 %v1704, %v1702
    %v1801 = vpack.c.b16 %v1707, %v1705
    %v1802 = vpack.c.b16 %v1708, %v1706
    %v1803 = vpack.c.b16 %v1711, %v1709
    %v1804 = vpack.c.b16 %v1712, %v1710
    %v1805 = vpack.c.b16 %v1715, %v1713
    %v1806 = vpack.c.b16 %v1716, %v1714
    %v1807 = vpack.c.b16 %v1719, %v1717
    %v1808 = vpack.c.b16 %v1720, %v1718
    %v1809 = vpack.c.b16 %v1723, %v1721
    %v1810 = vpack.c.b16 %v1724, %v1722
    %v1811 = vpack.c.b16 %v1727, %v1725
    %v1812 = vpack.c.b16 %v1728, %v1726
    %v1813 = vpack.c.b16 %v1731, %v1729
    %v1814 = vpack.c.b16 %v1732, %v1730
    %v1815 = vpack.c.b16 %v1735, %v1733
    %v1816 = vpack.c.b16 %v1736, %v1734
    %v1817 = vpack.c.b16 %v1739, %v1737
    %v1818 = vpack.c.b16 %v1740, %v1738
    %v1819 = vpack.c.b16 %v1743, %v1741
    %v1820 = vpack.c.b16 %v1744, %v1742
    %v1821 = vpack.c.b16 %v1747, %v1745
    %v1822 = vpack.c.b16 %v1748, %v1746
    %v1823 = vpack.c.b16 %v1751, %v1749
    %v1824 = vpack.c.b16 %v1752, %v1750
    %v1825 = vpack.c.b16 %v1755, %v1753
    %v1826 = vpack.c.b16 %v1756, %v1754
    %v1827 = vpack.c.b16 %v1759, %v1757
    %v1828 = vpack.c.b16 %v1760, %v1758
    %v1829 = vpack.c.b16 %v1763, %v1761
    %v1830 = vpack.c.b16 %v1764, %v1762
    %v1831 = vpack.c.b16 %v1767, %v1765
    %v1832 = vpack.c.b16 %v1768, %v1766
    %1897 = vmatprep.subr.bf16.mxu0 %v1770
    %1898 = vmatpush1.bf16.msra.mxu0 %v1769
    %1899 = vmatprep.subr.bf16.mxu0 %v1772
    %1900 = vmatpush1.bf16.msra.mxu0 %v1771
    %1901 = vmatprep.subr.bf16.mxu0 %v1774
    %1902 = vmatpush1.bf16.msra.mxu0 %v1773
    %1903 = vmatprep.subr.bf16.mxu0 %v1776
    %1904 = vmatpush1.bf16.msra.mxu0 %v1775
    %1905 = vmatprep.subr.bf16.mxu0 %v1778
    %1906 = vmatpush1.bf16.msra.mxu0 %v1777
    %1907 = vmatprep.subr.bf16.mxu0 %v1780
    %1908 = vmatpush1.bf16.msra.mxu0 %v1779
    %1909 = vmatprep.subr.bf16.mxu0 %v1782
    %1910 = vmatpush1.bf16.msra.mxu0 %v1781
    %1911 = vmatprep.subr.bf16.mxu0 %v1784
    %1912 = vmatpush1.bf16.msra.mxu0 %v1783
    %1913 = vmatprep.subr.bf16.mxu0 %v1786
    %1914 = vmatpush1.bf16.msra.mxu0 %v1785
    %1915 = vmatprep.subr.bf16.mxu0 %v1788
    %1916 = vmatpush1.bf16.msra.mxu0 %v1787
    %1917 = vmatprep.subr.bf16.mxu0 %v1790
    %1918 = vmatpush1.bf16.msra.mxu0 %v1789
    %1919 = vmatprep.subr.bf16.mxu0 %v1792
    %1920 = vmatpush1.bf16.msra.mxu0 %v1791
    %1921 = vmatprep.subr.bf16.mxu0 %v1794
    %1922 = vmatpush1.bf16.msra.mxu0 %v1793
    %1923 = vmatprep.subr.bf16.mxu0 %v1796
    %1924 = vmatpush1.bf16.msra.mxu0 %v1795
    %1925 = vmatprep.subr.bf16.mxu0 %v1798
    %1926 = vmatpush1.bf16.msra.mxu0 %v1797
    %1927 = vmatprep.subr.bf16.mxu0 %v1800
    %1928 = vmatpush1.bf16.msra.mxu0 %v1799
    %1929 = vmatprep.mubr.bf16.mxu0 %v1498
    %1930 = vmatmul.mubr.bf16.gmra.mrb[0].mxu0 %v1497
    %v1931 = vpop.f32.mrb[0].mxu0
    %v1932 = vadd.f32 %v1570, %v1931
    %v1933 = vpop.f32.mrb[0].mxu0
    %v1934 = vadd.f32 %v1574, %v1933
    %v1935 = vpop.f32.mrb[0].mxu0
    %v1936 = vpop.f32.mrb[0].mxu0
    %1937 = vdwg.mxu0
    %1938 = vmatprep.subr.bf16.mxu0 %v1802
    %1939 = vmatpush1.bf16.msra.mxu0 %v1801
    %1940 = vmatprep.subr.bf16.mxu0 %v1804
    %1941 = vmatpush1.bf16.msra.mxu0 %v1803
    %1942 = vmatprep.subr.bf16.mxu0 %v1806
    %1943 = vmatpush1.bf16.msra.mxu0 %v1805
    %1944 = vmatprep.subr.bf16.mxu0 %v1808
    %1945 = vmatpush1.bf16.msra.mxu0 %v1807
    %1946 = vmatprep.subr.bf16.mxu0 %v1810
    %1947 = vmatpush1.bf16.msra.mxu0 %v1809
    %1948 = vmatprep.subr.bf16.mxu0 %v1812
    %1949 = vmatpush1.bf16.msra.mxu0 %v1811
    %1950 = vmatprep.subr.bf16.mxu0 %v1814
    %1951 = vmatpush1.bf16.msra.mxu0 %v1813
    %1952 = vmatprep.subr.bf16.mxu0 %v1816
    %1953 = vmatpush1.bf16.msra.mxu0 %v1815
    %1954 = vmatprep.subr.bf16.mxu0 %v1818
    %1955 = vmatpush1.bf16.msra.mxu0 %v1817
    %1956 = vmatprep.subr.bf16.mxu0 %v1820
    %1957 = vmatpush1.bf16.msra.mxu0 %v1819
    %1958 = vmatprep.subr.bf16.mxu0 %v1822
    %1959 = vmatpush1.bf16.msra.mxu0 %v1821
    %1960 = vmatprep.subr.bf16.mxu0 %v1824
    %1961 = vmatpush1.bf16.msra.mxu0 %v1823
    %1962 = vmatprep.subr.bf16.mxu0 %v1826
    %1963 = vmatpush1.bf16.msra.mxu0 %v1825
    %1964 = vmatprep.subr.bf16.mxu0 %v1828
    %1965 = vmatpush1.bf16.msra.mxu0 %v1827
    %1966 = vmatprep.subr.bf16.mxu0 %v1830
    %1967 = vmatpush1.bf16.msra.mxu0 %v1829
    %1968 = vmatprep.subr.bf16.mxu0 %v1832
    %1969 = vmatpush1.bf16.msra.mxu0 %v1831
    %1970 = vmatprep.mubr.bf16.mxu0 %v1500
    %1971 = vmatmul.mubr.bf16.gmra.mrb[0].mxu0 %v1499
    %v1972 = vpop.f32.mrb[0].mxu0
    %v1973 = vadd.f32 %v1932, %v1972
    %v1974 = vpop.f32.mrb[0].mxu0
    %v1975 = vadd.f32 %v1934, %v1974
    %v1976 = vpop.f32.mrb[0].mxu0
    %v1977 = vpop.f32.mrb[0].mxu0
    %1978 = vdwg.mxu0
    %v1979 = vmax.f32 %v1973, 0.0
    %v1980 = vmax.f32 %v1975, 0.0
    %v1981 = vpack.c.bf16 %v1979, %v1979
    %v1982 = vpack.c.bf16 %v1980, %v1980
    %v1983 = vld [vmem:[#allocation20] sm:$0xf]
    %v1984 = vld [vmem:[#allocation20 + $0x4] sm:$0xf]
    %v1985 = vld [vmem:[#allocation20 + $0x8] sm:$0xf]
    %v1986 = vld [vmem:[#allocation20 + $0xc] sm:$0xf]
    %v1987 = vld [vmem:[#allocation20 + $0x10] sm:$0xf]
    %v1988 = vld [vmem:[#allocation20 + $0x14] sm:$0xf]
    %v1989 = vld [vmem:[#allocation20 + $0x18] sm:$0xf]
    %v1990 = vld [vmem:[#allocation20 + $0x1c] sm:$0xf]
    %v1991 = vld [vmem:[#allocation20 + $0x20] sm:$0xf]
    %v1992 = vld [vmem:[#allocation20 + $0x24] sm:$0xf]
    %v1993 = vld [vmem:[#allocation20 + $0x28] sm:$0xf]
    %v1994 = vld [vmem:[#allocation20 + $0x2c] sm:$0xf]
    %v1995 = vld [vmem:[#allocation20 + $0x30] sm:$0xf]
    %v1996 = vld [vmem:[#allocation20 + $0x34] sm:$0xf]
    %v1997 = vld [vmem:[#allocation20 + $0x38] sm:$0xf]
    %v1998 = vld [vmem:[#allocation20 + $0x3c] sm:$0xf]
    %v1999 = vld [vmem:[#allocation20 + $0x40] sm:$0xf]
    %v2000 = vld [vmem:[#allocation20 + $0x44] sm:$0xf]
    %v2001 = vld [vmem:[#allocation20 + $0x48] sm:$0xf]
    %v2002 = vld [vmem:[#allocation20 + $0x4c] sm:$0xf]
    %v2003 = vld [vmem:[#allocation20 + $0x50] sm:$0xf]
    %v2004 = vld [vmem:[#allocation20 + $0x54] sm:$0xf]
    %v2005 = vld [vmem:[#allocation20 + $0x58] sm:$0xf]
    %v2006 = vld [vmem:[#allocation20 + $0x5c] sm:$0xf]
    %v2007 = vld [vmem:[#allocation20 + $0x60] sm:$0xf]
    %v2008 = vld [vmem:[#allocation20 + $0x64] sm:$0xf]
    %v2009 = vld [vmem:[#allocation20 + $0x68] sm:$0xf]
    %v2010 = vld [vmem:[#allocation20 + $0x6c] sm:$0xf]
    %v2011 = vld [vmem:[#allocation20 + $0x70] sm:$0xf]
    %v2012 = vld [vmem:[#allocation20 + $0x74] sm:$0xf]
    %v2013 = vld [vmem:[#allocation20 + $0x78] sm:$0xf]
    %v2014 = vld [vmem:[#allocation20 + $0x7c] sm:$0xf]
    %v2015 = vld [vmem:[#allocation22] sm:$0x1]
    %v2017 = vlaneseq
    %v2018 = vshrl.u32 %v2017, 7
    %v2019 = vsub.s32 0, %v2018
    %v2020 = vrot.slane %v2015, %v2019
    %v2054 = vunpack.c.l.b16 %v1983
    %v2055 = vunpack.c.l.b16 %v1984
    %v2056 = vunpack.c.l.b16 %v1985
    %v2057 = vunpack.c.l.b16 %v1986
    %v2058 = vunpack.c.l.b16 %v1987
    %v2059 = vunpack.c.l.b16 %v1988
    %v2060 = vunpack.c.l.b16 %v1989
    %v2061 = vunpack.c.l.b16 %v1990
    %v2062 = vunpack.c.l.b16 %v1991
    %v2063 = vunpack.c.l.b16 %v1992
    %v2064 = vunpack.c.l.b16 %v1993
    %v2065 = vunpack.c.l.b16 %v1994
    %v2066 = vunpack.c.l.b16 %v1995
    %v2067 = vunpack.c.l.b16 %v1996
    %v2068 = vunpack.c.l.b16 %v1997
    %v2069 = vunpack.c.l.b16 %v1998
    %v2070 = vunpack.c.l.b16 %v1999
    %v2071 = vunpack.c.l.b16 %v2000
    %v2072 = vunpack.c.l.b16 %v2001
    %v2073 = vunpack.c.l.b16 %v2002
    %v2074 = vunpack.c.l.b16 %v2003
    %v2075 = vunpack.c.l.b16 %v2004
    %v2076 = vunpack.c.l.b16 %v2005
    %v2077 = vunpack.c.l.b16 %v2006
    %v2078 = vunpack.c.l.b16 %v2007
    %v2079 = vunpack.c.l.b16 %v2008
    %v2080 = vunpack.c.l.b16 %v2009
    %v2081 = vunpack.c.l.b16 %v2010
    %v2082 = vunpack.c.l.b16 %v2011
    %v2083 = vunpack.c.l.b16 %v2012
    %v2084 = vunpack.c.l.b16 %v2013
    %v2085 = vunpack.c.l.b16 %v2014
    %v2086 = vpack.c.b16 %v2055, %v2054
    %v2087 = vpack.c.b16 %v2057, %v2056
    %v2088 = vpack.c.b16 %v2059, %v2058
    %v2089 = vpack.c.b16 %v2061, %v2060
    %v2090 = vpack.c.b16 %v2063, %v2062
    %v2091 = vpack.c.b16 %v2065, %v2064
    %v2092 = vpack.c.b16 %v2067, %v2066
    %v2093 = vpack.c.b16 %v2069, %v2068
    %v2094 = vpack.c.b16 %v2071, %v2070
    %v2095 = vpack.c.b16 %v2073, %v2072
    %v2096 = vpack.c.b16 %v2075, %v2074
    %v2097 = vpack.c.b16 %v2077, %v2076
    %v2098 = vpack.c.b16 %v2079, %v2078
    %v2099 = vpack.c.b16 %v2081, %v2080
    %v2100 = vpack.c.b16 %v2083, %v2082
    %v2101 = vpack.c.b16 %v2085, %v2084
    %2118 = vmatprep.subr.bf16.mxu0 0
    %2119 = vmatpush1.bf16.msra.mxu0 %v2086
    %2120 = vmatprep.subr.bf16.mxu0 0
    %2121 = vmatpush1.bf16.msra.mxu0 %v2087
    %2122 = vmatprep.subr.bf16.mxu0 0
    %2123 = vmatpush1.bf16.msra.mxu0 %v2088
    %2124 = vmatprep.subr.bf16.mxu0 0
    %2125 = vmatpush1.bf16.msra.mxu0 %v2089
    %2126 = vmatprep.subr.bf16.mxu0 0
    %2127 = vmatpush1.bf16.msra.mxu0 %v2090
    %2128 = vmatprep.subr.bf16.mxu0 0
    %2129 = vmatpush1.bf16.msra.mxu0 %v2091
    %2130 = vmatprep.subr.bf16.mxu0 0
    %2131 = vmatpush1.bf16.msra.mxu0 %v2092
    %2132 = vmatprep.subr.bf16.mxu0 0
    %2133 = vmatpush1.bf16.msra.mxu0 %v2093
    %2134 = vmatprep.subr.bf16.mxu0 0
    %2135 = vmatpush1.bf16.msra.mxu0 %v2094
    %2136 = vmatprep.subr.bf16.mxu0 0
    %2137 = vmatpush1.bf16.msra.mxu0 %v2095
    %2138 = vmatprep.subr.bf16.mxu0 0
    %2139 = vmatpush1.bf16.msra.mxu0 %v2096
    %2140 = vmatprep.subr.bf16.mxu0 0
    %2141 = vmatpush1.bf16.msra.mxu0 %v2097
    %2142 = vmatprep.subr.bf16.mxu0 0
    %2143 = vmatpush1.bf16.msra.mxu0 %v2098
    %2144 = vmatprep.subr.bf16.mxu0 0
    %2145 = vmatpush1.bf16.msra.mxu0 %v2099
    %2146 = vmatprep.subr.bf16.mxu0 0
    %2147 = vmatpush1.bf16.msra.mxu0 %v2100
    %2148 = vmatprep.subr.bf16.mxu0 0
    %2149 = vmatpush1.bf16.msra.mxu0 %v2101
    %2150 = vmatprep.mubr.bf16.mxu0 %v1982
    %2151 = vmatmul.mubr.bf16.gmra.mrb[0].mxu0 %v1981
    %v2152 = vpop.f32.mrb[0].mxu0
    %v2153 = vadd.f32 %v2020, %v2152
    %v2154 = vpop.f32.mrb[0].mxu0
    %v2155 = vpop.f32.mrb[0].mxu0
    %v2156 = vpop.f32.mrb[0].mxu0
    %2157 = vdwg.mxu0
    %v2158 = vmax.f32 %v2153, 0.0
    %v2159 = vpack.c.bf16 %v2158, %v2158
    %v2160 = vld [vmem:[#allocation23] sm:$0xf]
    %v2161 = vld [vmem:[#allocation23 + $0x4] sm:$0xf]
    %v2162 = vld [vmem:[#allocation23 + $0x8] sm:$0xf]
    %v2163 = vld [vmem:[#allocation23 + $0xc] sm:$0xf]
    %v2164 = vld [vmem:[#allocation23 + $0x10] sm:$0xf]
    %v2165 = vld [vmem:[#allocation23 + $0x14] sm:$0xf]
    %v2166 = vld [vmem:[#allocation23 + $0x18] sm:$0xf]
    %v2167 = vld [vmem:[#allocation23 + $0x1c] sm:$0xf]
    %v2168 = vld [vmem:[#allocation23 + $0x20] sm:$0xf]
    %v2169 = vld [vmem:[#allocation23 + $0x24] sm:$0xf]
    %v2170 = vld [vmem:[#allocation23 + $0x28] sm:$0xf]
    %v2171 = vld [vmem:[#allocation23 + $0x2c] sm:$0xf]
    %v2172 = vld [vmem:[#allocation23 + $0x30] sm:$0xf]
    %v2173 = vld [vmem:[#allocation23 + $0x34] sm:$0xf]
    %v2174 = vld [vmem:[#allocation23 + $0x38] sm:$0xf]
    %v2175 = vld [vmem:[#allocation23 + $0x3c] sm:$0xf]
    %v2176 = vld [vmem:[#allocation25] sm:$0x1]
    %v2178 = vlaneseq
    %v2179 = vshrl.u32 %v2178, 7
    %v2180 = vsub.s32 0, %v2179
    %v2181 = vrot.slane %v2176, %v2180
    %v2199 = vunpack.c.l.b16 %v2160
    %v2200 = vunpack.c.l.b16 %v2161
    %v2201 = vunpack.c.l.b16 %v2162
    %v2202 = vunpack.c.l.b16 %v2163
    %v2203 = vunpack.c.l.b16 %v2164
    %v2204 = vunpack.c.l.b16 %v2165
    %v2205 = vunpack.c.l.b16 %v2166
    %v2206 = vunpack.c.l.b16 %v2167
    %v2207 = vunpack.c.l.b16 %v2168
    %v2208 = vunpack.c.l.b16 %v2169
    %v2209 = vunpack.c.l.b16 %v2170
    %v2210 = vunpack.c.l.b16 %v2171
    %v2211 = vunpack.c.l.b16 %v2172
    %v2212 = vunpack.c.l.b16 %v2173
    %v2213 = vunpack.c.l.b16 %v2174
    %v2214 = vunpack.c.l.b16 %v2175
    %v2215 = vpack.c.b16 %v2200, %v2199
    %v2216 = vpack.c.b16 %v2202, %v2201
    %v2217 = vpack.c.b16 %v2204, %v2203
    %v2218 = vpack.c.b16 %v2206, %v2205
    %v2219 = vpack.c.b16 %v2208, %v2207
    %v2220 = vpack.c.b16 %v2210, %v2209
    %v2221 = vpack.c.b16 %v2212, %v2211
    %v2222 = vpack.c.b16 %v2214, %v2213
    %2231 = vmatprep.subr.bf16.mxu0 0
    %2232 = vmatpush1.bf16.msra.mxu0 %v2215
    %2233 = vmatprep.subr.bf16.mxu0 0
    %2234 = vmatpush1.bf16.msra.mxu0 %v2216
    %2235 = vmatprep.subr.bf16.mxu0 0
    %2236 = vmatpush1.bf16.msra.mxu0 %v2217
    %2237 = vmatprep.subr.bf16.mxu0 0
    %2238 = vmatpush1.bf16.msra.mxu0 %v2218
    %2239 = vmatprep.subr.bf16.mxu0 0
    %2240 = vmatpush1.bf16.msra.mxu0 %v2219
    %2241 = vmatprep.subr.bf16.mxu0 0
    %2242 = vmatpush1.bf16.msra.mxu0 %v2220
    %2243 = vmatprep.subr.bf16.mxu0 0
    %2244 = vmatpush1.bf16.msra.mxu0 %v2221
    %2245 = vmatprep.subr.bf16.mxu0 0
    %2246 = vmatpush1.bf16.msra.mxu0 %v2222
    %2247 = vmatprep.subr.bf16.mxu0 0
    %2248 = vmatpush1.bf16.msra.mxu0 0
    %2249 = vmatprep.subr.bf16.mxu0 0
    %2250 = vmatpush1.bf16.msra.mxu0 0
    %2251 = vmatprep.subr.bf16.mxu0 0
    %2252 = vmatpush1.bf16.msra.mxu0 0
    %2253 = vmatprep.subr.bf16.mxu0 0
    %2254 = vmatpush1.bf16.msra.mxu0 0
    %2255 = vmatprep.subr.bf16.mxu0 0
    %2256 = vmatpush1.bf16.msra.mxu0 0
    %2257 = vmatprep.subr.bf16.mxu0 0
    %2258 = vmatpush1.bf16.msra.mxu0 0
    %2259 = vmatprep.subr.bf16.mxu0 0
    %2260 = vmatpush1.bf16.msra.mxu0 0
    %2261 = vmatprep.subr.bf16.mxu0 0
    %2262 = vmatpush1.bf16.msra.mxu0 0
    %2263 = vmatprep.mubr.bf16.mxu0 0
    %2264 = vmatmul.mubr.bf16.gmra.mrb[0].mxu0 %v2159
    %v2265 = vpop.f32.mrb[0].mxu0
    %v2266 = vadd.f32 %v2181, %v2265
    %v2267 = vpop.f32.mrb[0].mxu0
    %v2268 = vpop.f32.mrb[0].mxu0
    %v2269 = vpop.f32.mrb[0].mxu0
    %2270 = vdwg.mxu0
    %2271 = vst [vmem:[#allocation77] sm:$0xff] %v2266
    %v2272 = vpack.c.bf16 %v1450, %v1450
    %v2273 = vpack.c.bf16 %v1452, %v1452
    %v2274 = vpack.c.bf16 %v1491, %v1491
    %v2275 = vpack.c.bf16 %v1493, %v1493
    %v2276 = vld [vmem:[#allocation26] sm:$0xff]
    %v2277 = vld [vmem:[#allocation26 + $0x8] sm:$0xff]
    %v2278 = vld [vmem:[#allocation26 + $0x10] sm:$0xff]
    %v2279 = vld [vmem:[#allocation26 + $0x18] sm:$0xff]
    %v2280 = vld [vmem:[#allocation26 + $0x20] sm:$0xff]
    %v2281 = vld [vmem:[#allocation26 + $0x28] sm:$0xff]
    %v2282 = vld [vmem:[#allocation26 + $0x30] sm:$0xff]
    %v2283 = vld [vmem:[#allocation26 + $0x38] sm:$0xff]
    %v2284 = vld [vmem:[#allocation26 + $0x40] sm:$0xff]
    %v2285 = vld [vmem:[#allocation26 + $0x48] sm:$0xff]
    %v2286 = vld [vmem:[#allocation26 + $0x50] sm:$0xff]
    %v2287 = vld [vmem:[#allocation26 + $0x58] sm:$0xff]
    %v2288 = vld [vmem:[#allocation26 + $0x60] sm:$0xff]
    %v2289 = vld [vmem:[#allocation26 + $0x68] sm:$0xff]
    %v2290 = vld [vmem:[#allocation26 + $0x70] sm:$0xff]
    %v2291 = vld [vmem:[#allocation26 + $0x78] sm:$0xff]
    %v2292 = vld [vmem:[#allocation26 + $0x80] sm:$0xff]
    %v2293 = vld [vmem:[#allocation26 + $0x88] sm:$0xff]
    %v2294 = vld [vmem:[#allocation26 + $0x90] sm:$0xff]
    %v2295 = vld [vmem:[#allocation26 + $0x98] sm:$0xff]
    %v2296 = vld [vmem:[#allocation26 + $0xa0] sm:$0xff]
    %v2297 = vld [vmem:[#allocation26 + $0xa8] sm:$0xff]
    %v2298 = vld [vmem:[#allocation26 + $0xb0] sm:$0xff]
    %v2299 = vld [vmem:[#allocation26 + $0xb8] sm:$0xff]
    %v2300 = vld [vmem:[#allocation26 + $0xc0] sm:$0xff]
    %v2301 = vld [vmem:[#allocation26 + $0xc8] sm:$0xff]
    %v2302 = vld [vmem:[#allocation26 + $0xd0] sm:$0xff]
    %v2303 = vld [vmem:[#allocation26 + $0xd8] sm:$0xff]
    %v2304 = vld [vmem:[#allocation26 + $0xe0] sm:$0xff]
    %v2305 = vld [vmem:[#allocation26 + $0xe8] sm:$0xff]
    %v2306 = vld [vmem:[#allocation26 + $0xf0] sm:$0xff]
    %v2307 = vld [vmem:[#allocation26 + $0xf8] sm:$0xff]
    %v2308 = vld [vmem:[#allocation26 + $0x100] sm:$0xff]
    %v2309 = vld [vmem:[#allocation26 + $0x108] sm:$0xff]
    %v2310 = vld [vmem:[#allocation26 + $0x110] sm:$0xff]
    %v2311 = vld [vmem:[#allocation26 + $0x118] sm:$0xff]
    %v2312 = vld [vmem:[#allocation26 + $0x120] sm:$0xff]
    %v2313 = vld [vmem:[#allocation26 + $0x128] sm:$0xff]
    %v2314 = vld [vmem:[#allocation26 + $0x130] sm:$0xff]
    %v2315 = vld [vmem:[#allocation26 + $0x138] sm:$0xff]
    %v2316 = vld [vmem:[#allocation26 + $0x140] sm:$0xff]
    %v2317 = vld [vmem:[#allocation26 + $0x148] sm:$0xff]
    %v2318 = vld [vmem:[#allocation26 + $0x150] sm:$0xff]
    %v2319 = vld [vmem:[#allocation26 + $0x158] sm:$0xff]
    %v2320 = vld [vmem:[#allocation26 + $0x160] sm:$0xff]
    %v2321 = vld [vmem:[#allocation26 + $0x168] sm:$0xff]
    %v2322 = vld [vmem:[#allocation26 + $0x170] sm:$0xff]
    %v2323 = vld [vmem:[#allocation26 + $0x178] sm:$0xff]
    %v2324 = vld [vmem:[#allocation26 + $0x180] sm:$0xff]
    %v2325 = vld [vmem:[#allocation26 + $0x188] sm:$0xff]
    %v2326 = vld [vmem:[#allocation26 + $0x190] sm:$0xff]
    %v2327 = vld [vmem:[#allocation26 + $0x198] sm:$0xff]
    %v2328 = vld [vmem:[#allocation26 + $0x1a0] sm:$0xff]
    %v2329 = vld [vmem:[#allocation26 + $0x1a8] sm:$0xff]
    %v2330 = vld [vmem:[#allocation26 + $0x1b0] sm:$0xff]
    %v2331 = vld [vmem:[#allocation26 + $0x1b8] sm:$0xff]
    %v2332 = vld [vmem:[#allocation26 + $0x1c0] sm:$0xff]
    %v2333 = vld [vmem:[#allocation26 + $0x1c8] sm:$0xff]
    %v2334 = vld [vmem:[#allocation26 + $0x1d0] sm:$0xff]
    %v2335 = vld [vmem:[#allocation26 + $0x1d8] sm:$0xff]
    %v2336 = vld [vmem:[#allocation26 + $0x1e0] sm:$0xff]
    %v2337 = vld [vmem:[#allocation26 + $0x1e8] sm:$0xff]
    %v2338 = vld [vmem:[#allocation26 + $0x1f0] sm:$0xff]
    %v2339 = vld [vmem:[#allocation26 + $0x1f8] sm:$0xff]
    %v2340 = vld [vmem:[#allocation28] sm:$0x3]
    %v2342 = vlaneseq
    %v2343 = vshrl.u32 %v2342, 7
    %v2344 = vsub.s32 0, %v2343
    %v2345 = vrot.slane %v2340, %v2344
    %v2346 = vlaneseq
    %v2347 = vshrl.u32 %v2346, 7
    %v2348 = vsub.s32 1, %v2347
    %v2349 = vrot.slane %v2340, %v2348
    %v2416 = vunpack.c.l.b16 %v2276
    %v2417 = vunpack.c.h.b16 %v2276
    %v2418 = vunpack.c.l.b16 %v2277
    %v2419 = vunpack.c.h.b16 %v2277
    %v2420 = vunpack.c.l.b16 %v2278
    %v2421 = vunpack.c.h.b16 %v2278
    %v2422 = vunpack.c.l.b16 %v2279
    %v2423 = vunpack.c.h.b16 %v2279
    %v2424 = vunpack.c.l.b16 %v2280
    %v2425 = vunpack.c.h.b16 %v2280
    %v2426 = vunpack.c.l.b16 %v2281
    %v2427 = vunpack.c.h.b16 %v2281
    %v2428 = vunpack.c.l.b16 %v2282
    %v2429 = vunpack.c.h.b16 %v2282
    %v2430 = vunpack.c.l.b16 %v2283
    %v2431 = vunpack.c.h.b16 %v2283
    %v2432 = vunpack.c.l.b16 %v2284
    %v2433 = vunpack.c.h.b16 %v2284
    %v2434 = vunpack.c.l.b16 %v2285
    %v2435 = vunpack.c.h.b16 %v2285
    %v2436 = vunpack.c.l.b16 %v2286
    %v2437 = vunpack.c.h.b16 %v2286
    %v2438 = vunpack.c.l.b16 %v2287
    %v2439 = vunpack.c.h.b16 %v2287
    %v2440 = vunpack.c.l.b16 %v2288
    %v2441 = vunpack.c.h.b16 %v2288
    %v2442 = vunpack.c.l.b16 %v2289
    %v2443 = vunpack.c.h.b16 %v2289
    %v2444 = vunpack.c.l.b16 %v2290
    %v2445 = vunpack.c.h.b16 %v2290
    %v2446 = vunpack.c.l.b16 %v2291
    %v2447 = vunpack.c.h.b16 %v2291
    %v2448 = vunpack.c.l.b16 %v2292
    %v2449 = vunpack.c.h.b16 %v2292
    %v2450 = vunpack.c.l.b16 %v2293
    %v2451 = vunpack.c.h.b16 %v2293
    %v2452 = vunpack.c.l.b16 %v2294
    %v2453 = vunpack.c.h.b16 %v2294
    %v2454 = vunpack.c.l.b16 %v2295
    %v2455 = vunpack.c.h.b16 %v2295
    %v2456 = vunpack.c.l.b16 %v2296
    %v2457 = vunpack.c.h.b16 %v2296
    %v2458 = vunpack.c.l.b16 %v2297
    %v2459 = vunpack.c.h.b16 %v2297
    %v2460 = vunpack.c.l.b16 %v2298
    %v2461 = vunpack.c.h.b16 %v2298
    %v2462 = vunpack.c.l.b16 %v2299
    %v2463 = vunpack.c.h.b16 %v2299
    %v2464 = vunpack.c.l.b16 %v2300
    %v2465 = vunpack.c.h.b16 %v2300
    %v2466 = vunpack.c.l.b16 %v2301
    %v2467 = vunpack.c.h.b16 %v2301
    %v2468 = vunpack.c.l.b16 %v2302
    %v2469 = vunpack.c.h.b16 %v2302
    %v2470 = vunpack.c.l.b16 %v2303
    %v2471 = vunpack.c.h.b16 %v2303
    %v2472 = vunpack.c.l.b16 %v2304
    %v2473 = vunpack.c.h.b16 %v2304
    %v2474 = vunpack.c.l.b16 %v2305
    %v2475 = vunpack.c.h.b16 %v2305
    %v2476 = vunpack.c.l.b16 %v2306
    %v2477 = vunpack.c.h.b16 %v2306
    %v2478 = vunpack.c.l.b16 %v2307
    %v2479 = vunpack.c.h.b16 %v2307
    %v2480 = vunpack.c.l.b16 %v2308
    %v2481 = vunpack.c.h.b16 %v2308
    %v2482 = vunpack.c.l.b16 %v2309
    %v2483 = vunpack.c.h.b16 %v2309
    %v2484 = vunpack.c.l.b16 %v2310
    %v2485 = vunpack.c.h.b16 %v2310
    %v2486 = vunpack.c.l.b16 %v2311
    %v2487 = vunpack.c.h.b16 %v2311
    %v2488 = vunpack.c.l.b16 %v2312
    %v2489 = vunpack.c.h.b16 %v2312
    %v2490 = vunpack.c.l.b16 %v2313
    %v2491 = vunpack.c.h.b16 %v2313
    %v2492 = vunpack.c.l.b16 %v2314
    %v2493 = vunpack.c.h.b16 %v2314
    %v2494 = vunpack.c.l.b16 %v2315
    %v2495 = vunpack.c.h.b16 %v2315
    %v2496 = vunpack.c.l.b16 %v2316
    %v2497 = vunpack.c.h.b16 %v2316
    %v2498 = vunpack.c.l.b16 %v2317
    %v2499 = vunpack.c.h.b16 %v2317
    %v2500 = vunpack.c.l.b16 %v2318
    %v2501 = vunpack.c.h.b16 %v2318
    %v2502 = vunpack.c.l.b16 %v2319
    %v2503 = vunpack.c.h.b16 %v2319
    %v2504 = vunpack.c.l.b16 %v2320
    %v2505 = vunpack.c.h.b16 %v2320
    %v2506 = vunpack.c.l.b16 %v2321
    %v2507 = vunpack.c.h.b16 %v2321
    %v2508 = vunpack.c.l.b16 %v2322
    %v2509 = vunpack.c.h.b16 %v2322
    %v2510 = vunpack.c.l.b16 %v2323
    %v2511 = vunpack.c.h.b16 %v2323
    %v2512 = vunpack.c.l.b16 %v2324
    %v2513 = vunpack.c.h.b16 %v2324
    %v2514 = vunpack.c.l.b16 %v2325
    %v2515 = vunpack.c.h.b16 %v2325
    %v2516 = vunpack.c.l.b16 %v2326
    %v2517 = vunpack.c.h.b16 %v2326
    %v2518 = vunpack.c.l.b16 %v2327
    %v2519 = vunpack.c.h.b16 %v2327
    %v2520 = vunpack.c.l.b16 %v2328
    %v2521 = vunpack.c.h.b16 %v2328
    %v2522 = vunpack.c.l.b16 %v2329
    %v2523 = vunpack.c.h.b16 %v2329
    %v2524 = vunpack.c.l.b16 %v2330
    %v2525 = vunpack.c.h.b16 %v2330
    %v2526 = vunpack.c.l.b16 %v2331
    %v2527 = vunpack.c.h.b16 %v2331
    %v2528 = vunpack.c.l.b16 %v2332
    %v2529 = vunpack.c.h.b16 %v2332
    %v2530 = vunpack.c.l.b16 %v2333
    %v2531 = vunpack.c.h.b16 %v2333
    %v2532 = vunpack.c.l.b16 %v2334
    %v2533 = vunpack.c.h.b16 %v2334
    %v2534 = vunpack.c.l.b16 %v2335
    %v2535 = vunpack.c.h.b16 %v2335
    %v2536 = vunpack.c.l.b16 %v2336
    %v2537 = vunpack.c.h.b16 %v2336
    %v2538 = vunpack.c.l.b16 %v2337
    %v2539 = vunpack.c.h.b16 %v2337
    %v2540 = vunpack.c.l.b16 %v2338
    %v2541 = vunpack.c.h.b16 %v2338
    %v2542 = vunpack.c.l.b16 %v2339
    %v2543 = vunpack.c.h.b16 %v2339
    %v2544 = vpack.c.b16 %v2418, %v2416
    %v2545 = vpack.c.b16 %v2419, %v2417
    %v2546 = vpack.c.b16 %v2422, %v2420
    %v2547 = vpack.c.b16 %v2423, %v2421
    %v2548 = vpack.c.b16 %v2426, %v2424
    %v2549 = vpack.c.b16 %v2427, %v2425
    %v2550 = vpack.c.b16 %v2430, %v2428
    %v2551 = vpack.c.b16 %v2431, %v2429
    %v2552 = vpack.c.b16 %v2434, %v2432
    %v2553 = vpack.c.b16 %v2435, %v2433
    %v2554 = vpack.c.b16 %v2438, %v2436
    %v2555 = vpack.c.b16 %v2439, %v2437
    %v2556 = vpack.c.b16 %v2442, %v2440
    %v2557 = vpack.c.b16 %v2443, %v2441
    %v2558 = vpack.c.b16 %v2446, %v2444
    %v2559 = vpack.c.b16 %v2447, %v2445
    %v2560 = vpack.c.b16 %v2450, %v2448
    %v2561 = vpack.c.b16 %v2451, %v2449
    %v2562 = vpack.c.b16 %v2454, %v2452
    %v2563 = vpack.c.b16 %v2455, %v2453
    %v2564 = vpack.c.b16 %v2458, %v2456
    %v2565 = vpack.c.b16 %v2459, %v2457
    %v2566 = vpack.c.b16 %v2462, %v2460
    %v2567 = vpack.c.b16 %v2463, %v2461
    %v2568 = vpack.c.b16 %v2466, %v2464
    %v2569 = vpack.c.b16 %v2467, %v2465
    %v2570 = vpack.c.b16 %v2470, %v2468
    %v2571 = vpack.c.b16 %v2471, %v2469
    %v2572 = vpack.c.b16 %v2474, %v2472
    %v2573 = vpack.c.b16 %v2475, %v2473
    %v2574 = vpack.c.b16 %v2478, %v2476
    %v2575 = vpack.c.b16 %v2479, %v2477
    %v2576 = vpack.c.b16 %v2482, %v2480
    %v2577 = vpack.c.b16 %v2483, %v2481
    %v2578 = vpack.c.b16 %v2486, %v2484
    %v2579 = vpack.c.b16 %v2487, %v2485
    %v2580 = vpack.c.b16 %v2490, %v2488
    %v2581 = vpack.c.b16 %v2491, %v2489
    %v2582 = vpack.c.b16 %v2494, %v2492
    %v2583 = vpack.c.b16 %v2495, %v2493
    %v2584 = vpack.c.b16 %v2498, %v2496
    %v2585 = vpack.c.b16 %v2499, %v2497
    %v2586 = vpack.c.b16 %v2502, %v2500
    %v2587 = vpack.c.b16 %v2503, %v2501
    %v2588 = vpack.c.b16 %v2506, %v2504
    %v2589 = vpack.c.b16 %v2507, %v2505
    %v2590 = vpack.c.b16 %v2510, %v2508
    %v2591 = vpack.c.b16 %v2511, %v2509
    %v2592 = vpack.c.b16 %v2514, %v2512
    %v2593 = vpack.c.b16 %v2515, %v2513
    %v2594 = vpack.c.b16 %v2518, %v2516
    %v2595 = vpack.c.b16 %v2519, %v2517
    %v2596 = vpack.c.b16 %v2522, %v2520
    %v2597 = vpack.c.b16 %v2523, %v2521
    %v2598 = vpack.c.b16 %v2526, %v2524
    %v2599 = vpack.c.b16 %v2527, %v2525
    %v2600 = vpack.c.b16 %v2530, %v2528
    %v2601 = vpack.c.b16 %v2531, %v2529
    %v2602 = vpack.c.b16 %v2534, %v2532
    %v2603 = vpack.c.b16 %v2535, %v2533
    %v2604 = vpack.c.b16 %v2538, %v2536
    %v2605 = vpack.c.b16 %v2539, %v2537
    %v2606 = vpack.c.b16 %v2542, %v2540
    %v2607 = vpack.c.b16 %v2543, %v2541
    %2672 = vmatprep.subr.bf16.mxu0 %v2545
    %2673 = vmatpush1.bf16.msra.mxu0 %v2544
    %2674 = vmatprep.subr.bf16.mxu0 %v2547
    %2675 = vmatpush1.bf16.msra.mxu0 %v2546
    %2676 = vmatprep.subr.bf16.mxu0 %v2549
    %2677 = vmatpush1.bf16.msra.mxu0 %v2548
    %2678 = vmatprep.subr.bf16.mxu0 %v2551
    %2679 = vmatpush1.bf16.msra.mxu0 %v2550
    %2680 = vmatprep.subr.bf16.mxu0 %v2553
    %2681 = vmatpush1.bf16.msra.mxu0 %v2552
    %2682 = vmatprep.subr.bf16.mxu0 %v2555
    %2683 = vmatpush1.bf16.msra.mxu0 %v2554
    %2684 = vmatprep.subr.bf16.mxu0 %v2557
    %2685 = vmatpush1.bf16.msra.mxu0 %v2556
    %2686 = vmatprep.subr.bf16.mxu0 %v2559
    %2687 = vmatpush1.bf16.msra.mxu0 %v2558
    %2688 = vmatprep.subr.bf16.mxu0 %v2561
    %2689 = vmatpush1.bf16.msra.mxu0 %v2560
    %2690 = vmatprep.subr.bf16.mxu0 %v2563
    %2691 = vmatpush1.bf16.msra.mxu0 %v2562
    %2692 = vmatprep.subr.bf16.mxu0 %v2565
    %2693 = vmatpush1.bf16.msra.mxu0 %v2564
    %2694 = vmatprep.subr.bf16.mxu0 %v2567
    %2695 = vmatpush1.bf16.msra.mxu0 %v2566
    %2696 = vmatprep.subr.bf16.mxu0 %v2569
    %2697 = vmatpush1.bf16.msra.mxu0 %v2568
    %2698 = vmatprep.subr.bf16.mxu0 %v2571
    %2699 = vmatpush1.bf16.msra.mxu0 %v2570
    %2700 = vmatprep.subr.bf16.mxu0 %v2573
    %2701 = vmatpush1.bf16.msra.mxu0 %v2572
    %2702 = vmatprep.subr.bf16.mxu0 %v2575
    %2703 = vmatpush1.bf16.msra.mxu0 %v2574
    %2704 = vmatprep.mubr.bf16.mxu0 %v2273
    %2705 = vmatmul.mubr.bf16.gmra.mrb[0].mxu0 %v2272
    %v2706 = vpop.f32.mrb[0].mxu0
    %v2707 = vadd.f32 %v2345, %v2706
    %v2708 = vpop.f32.mrb[0].mxu0
    %v2709 = vadd.f32 %v2349, %v2708
    %v2710 = vpop.f32.mrb[0].mxu0
    %v2711 = vpop.f32.mrb[0].mxu0
    %2712 = vdwg.mxu0
    %2713 = vmatprep.subr.bf16.mxu0 %v2577
    %2714 = vmatpush1.bf16.msra.mxu0 %v2576
    %2715 = vmatprep.subr.bf16.mxu0 %v2579
    %2716 = vmatpush1.bf16.msra.mxu0 %v2578
    %2717 = vmatprep.subr.bf16.mxu0 %v2581
    %2718 = vmatpush1.bf16.msra.mxu0 %v2580
    %2719 = vmatprep.subr.bf16.mxu0 %v2583
    %2720 = vmatpush1.bf16.msra.mxu0 %v2582
    %2721 = vmatprep.subr.bf16.mxu0 %v2585
    %2722 = vmatpush1.bf16.msra.mxu0 %v2584
    %2723 = vmatprep.subr.bf16.mxu0 %v2587
    %2724 = vmatpush1.bf16.msra.mxu0 %v2586
    %2725 = vmatprep.subr.bf16.mxu0 %v2589
    %2726 = vmatpush1.bf16.msra.mxu0 %v2588
    %2727 = vmatprep.subr.bf16.mxu0 %v2591
    %2728 = vmatpush1.bf16.msra.mxu0 %v2590
    %2729 = vmatprep.subr.bf16.mxu0 %v2593
    %2730 = vmatpush1.bf16.msra.mxu0 %v2592
    %2731 = vmatprep.subr.bf16.mxu0 %v2595
    %2732 = vmatpush1.bf16.msra.mxu0 %v2594
    %2733 = vmatprep.subr.bf16.mxu0 %v2597
    %2734 = vmatpush1.bf16.msra.mxu0 %v2596
    %2735 = vmatprep.subr.bf16.mxu0 %v2599
    %2736 = vmatpush1.bf16.msra.mxu0 %v2598
    %2737 = vmatprep.subr.bf16.mxu0 %v2601
    %2738 = vmatpush1.bf16.msra.mxu0 %v2600
    %2739 = vmatprep.subr.bf16.mxu0 %v2603
    %2740 = vmatpush1.bf16.msra.mxu0 %v2602
    %2741 = vmatprep.subr.bf16.mxu0 %v2605
    %2742 = vmatpush1.bf16.msra.mxu0 %v2604
    %2743 = vmatprep.subr.bf16.mxu0 %v2607
    %2744 = vmatpush1.bf16.msra.mxu0 %v2606
    %2745 = vmatprep.mubr.bf16.mxu0 %v2275
    %2746 = vmatmul.mubr.bf16.gmra.mrb[0].mxu0 %v2274
    %v2747 = vpop.f32.mrb[0].mxu0
    %v2748 = vadd.f32 %v2707, %v2747
    %v2749 = vpop.f32.mrb[0].mxu0
    %v2750 = vadd.f32 %v2709, %v2749
    %v2751 = vpop.f32.mrb[0].mxu0
    %v2752 = vpop.f32.mrb[0].mxu0
    %2753 = vdwg.mxu0
    %v2754 = vmax.f32 %v2748, 0.0
    %v2755 = vmax.f32 %v2750, 0.0
    %v2756 = vpack.c.bf16 %v2754, %v2754
    %v2757 = vpack.c.bf16 %v2755, %v2755
    %v2758 = vld [vmem:[#allocation29] sm:$0xf]
    %v2759 = vld [vmem:[#allocation29 + $0x4] sm:$0xf]
    %v2760 = vld [vmem:[#allocation29 + $0x8] sm:$0xf]
    %v2761 = vld [vmem:[#allocation29 + $0xc] sm:$0xf]
    %v2762 = vld [vmem:[#allocation29 + $0x10] sm:$0xf]
    %v2763 = vld [vmem:[#allocation29 + $0x14] sm:$0xf]
    %v2764 = vld [vmem:[#allocation29 + $0x18] sm:$0xf]
    %v2765 = vld [vmem:[#allocation29 + $0x1c] sm:$0xf]
    %v2766 = vld [vmem:[#allocation29 + $0x20] sm:$0xf]
    %v2767 = vld [vmem:[#allocation29 + $0x24] sm:$0xf]
    %v2768 = vld [vmem:[#allocation29 + $0x28] sm:$0xf]
    %v2769 = vld [vmem:[#allocation29 + $0x2c] sm:$0xf]
    %v2770 = vld [vmem:[#allocation29 + $0x30] sm:$0xf]
    %v2771 = vld [vmem:[#allocation29 + $0x34] sm:$0xf]
    %v2772 = vld [vmem:[#allocation29 + $0x38] sm:$0xf]
    %v2773 = vld [vmem:[#allocation29 + $0x3c] sm:$0xf]
    %v2774 = vld [vmem:[#allocation29 + $0x40] sm:$0xf]
    %v2775 = vld [vmem:[#allocation29 + $0x44] sm:$0xf]
    %v2776 = vld [vmem:[#allocation29 + $0x48] sm:$0xf]
    %v2777 = vld [vmem:[#allocation29 + $0x4c] sm:$0xf]
    %v2778 = vld [vmem:[#allocation29 + $0x50] sm:$0xf]
    %v2779 = vld [vmem:[#allocation29 + $0x54] sm:$0xf]
    %v2780 = vld [vmem:[#allocation29 + $0x58] sm:$0xf]
    %v2781 = vld [vmem:[#allocation29 + $0x5c] sm:$0xf]
    %v2782 = vld [vmem:[#allocation29 + $0x60] sm:$0xf]
    %v2783 = vld [vmem:[#allocation29 + $0x64] sm:$0xf]
    %v2784 = vld [vmem:[#allocation29 + $0x68] sm:$0xf]
    %v2785 = vld [vmem:[#allocation29 + $0x6c] sm:$0xf]
    %v2786 = vld [vmem:[#allocation29 + $0x70] sm:$0xf]
    %v2787 = vld [vmem:[#allocation29 + $0x74] sm:$0xf]
    %v2788 = vld [vmem:[#allocation29 + $0x78] sm:$0xf]
    %v2789 = vld [vmem:[#allocation29 + $0x7c] sm:$0xf]
    %v2790 = vld [vmem:[#allocation31] sm:$0x1]
    %v2792 = vlaneseq
    %v2793 = vshrl.u32 %v2792, 7
    %v2794 = vsub.s32 0, %v2793
    %v2795 = vrot.slane %v2790, %v2794
    %v2829 = vunpack.c.l.b16 %v2758
    %v2830 = vunpack.c.l.b16 %v2759
    %v2831 = vunpack.c.l.b16 %v2760
    %v2832 = vunpack.c.l.b16 %v2761
    %v2833 = vunpack.c.l.b16 %v2762
    %v2834 = vunpack.c.l.b16 %v2763
    %v2835 = vunpack.c.l.b16 %v2764
    %v2836 = vunpack.c.l.b16 %v2765
    %v2837 = vunpack.c.l.b16 %v2766
    %v2838 = vunpack.c.l.b16 %v2767
    %v2839 = vunpack.c.l.b16 %v2768
    %v2840 = vunpack.c.l.b16 %v2769
    %v2841 = vunpack.c.l.b16 %v2770
    %v2842 = vunpack.c.l.b16 %v2771
    %v2843 = vunpack.c.l.b16 %v2772
    %v2844 = vunpack.c.l.b16 %v2773
    %v2845 = vunpack.c.l.b16 %v2774
    %v2846 = vunpack.c.l.b16 %v2775
    %v2847 = vunpack.c.l.b16 %v2776
    %v2848 = vunpack.c.l.b16 %v2777
    %v2849 = vunpack.c.l.b16 %v2778
    %v2850 = vunpack.c.l.b16 %v2779
    %v2851 = vunpack.c.l.b16 %v2780
    %v2852 = vunpack.c.l.b16 %v2781
    %v2853 = vunpack.c.l.b16 %v2782
    %v2854 = vunpack.c.l.b16 %v2783
    %v2855 = vunpack.c.l.b16 %v2784
    %v2856 = vunpack.c.l.b16 %v2785
    %v2857 = vunpack.c.l.b16 %v2786
    %v2858 = vunpack.c.l.b16 %v2787
    %v2859 = vunpack.c.l.b16 %v2788
    %v2860 = vunpack.c.l.b16 %v2789
    %v2861 = vpack.c.b16 %v2830, %v2829
    %v2862 = vpack.c.b16 %v2832, %v2831
    %v2863 = vpack.c.b16 %v2834, %v2833
    %v2864 = vpack.c.b16 %v2836, %v2835
    %v2865 = vpack.c.b16 %v2838, %v2837
    %v2866 = vpack.c.b16 %v2840, %v2839
    %v2867 = vpack.c.b16 %v2842, %v2841
    %v2868 = vpack.c.b16 %v2844, %v2843
    %v2869 = vpack.c.b16 %v2846, %v2845
    %v2870 = vpack.c.b16 %v2848, %v2847
    %v2871 = vpack.c.b16 %v2850, %v2849
    %v2872 = vpack.c.b16 %v2852, %v2851
    %v2873 = vpack.c.b16 %v2854, %v2853
    %v2874 = vpack.c.b16 %v2856, %v2855
    %v2875 = vpack.c.b16 %v2858, %v2857
    %v2876 = vpack.c.b16 %v2860, %v2859
    %2893 = vmatprep.subr.bf16.mxu0 0
    %2894 = vmatpush1.bf16.msra.mxu0 %v2861
    %2895 = vmatprep.subr.bf16.mxu0 0
    %2896 = vmatpush1.bf16.msra.mxu0 %v2862
    %2897 = vmatprep.subr.bf16.mxu0 0
    %2898 = vmatpush1.bf16.msra.mxu0 %v2863
    %2899 = vmatprep.subr.bf16.mxu0 0
    %2900 = vmatpush1.bf16.msra.mxu0 %v2864
    %2901 = vmatprep.subr.bf16.mxu0 0
    %2902 = vmatpush1.bf16.msra.mxu0 %v2865
    %2903 = vmatprep.subr.bf16.mxu0 0
    %2904 = vmatpush1.bf16.msra.mxu0 %v2866
    %2905 = vmatprep.subr.bf16.mxu0 0
    %2906 = vmatpush1.bf16.msra.mxu0 %v2867
    %2907 = vmatprep.subr.bf16.mxu0 0
    %2908 = vmatpush1.bf16.msra.mxu0 %v2868
    %2909 = vmatprep.subr.bf16.mxu0 0
    %2910 = vmatpush1.bf16.msra.mxu0 %v2869
    %2911 = vmatprep.subr.bf16.mxu0 0
    %2912 = vmatpush1.bf16.msra.mxu0 %v2870
    %2913 = vmatprep.subr.bf16.mxu0 0
    %2914 = vmatpush1.bf16.msra.mxu0 %v2871
    %2915 = vmatprep.subr.bf16.mxu0 0
    %2916 = vmatpush1.bf16.msra.mxu0 %v2872
    %2917 = vmatprep.subr.bf16.mxu0 0
    %2918 = vmatpush1.bf16.msra.mxu0 %v2873
    %2919 = vmatprep.subr.bf16.mxu0 0
    %2920 = vmatpush1.bf16.msra.mxu0 %v2874
    %2921 = vmatprep.subr.bf16.mxu0 0
    %2922 = vmatpush1.bf16.msra.mxu0 %v2875
    %2923 = vmatprep.subr.bf16.mxu0 0
    %2924 = vmatpush1.bf16.msra.mxu0 %v2876
    %2925 = vmatprep.mubr.bf16.mxu0 %v2757
    %2926 = vmatmul.mubr.bf16.gmra.mrb[0].mxu0 %v2756
    %v2927 = vpop.f32.mrb[0].mxu0
    %v2928 = vadd.f32 %v2795, %v2927
    %v2929 = vpop.f32.mrb[0].mxu0
    %v2930 = vpop.f32.mrb[0].mxu0
    %v2931 = vpop.f32.mrb[0].mxu0
    %2932 = vdwg.mxu0
    %v2933 = vmax.f32 %v2928, 0.0
    %v2934 = vpack.c.bf16 %v2933, %v2933
    %v2935 = vld [vmem:[#allocation32] sm:$0xf]
    %v2936 = vld [vmem:[#allocation32 + $0x4] sm:$0xf]
    %v2937 = vld [vmem:[#allocation32 + $0x8] sm:$0xf]
    %v2938 = vld [vmem:[#allocation32 + $0xc] sm:$0xf]
    %v2939 = vld [vmem:[#allocation32 + $0x10] sm:$0xf]
    %v2940 = vld [vmem:[#allocation32 + $0x14] sm:$0xf]
    %v2941 = vld [vmem:[#allocation32 + $0x18] sm:$0xf]
    %v2942 = vld [vmem:[#allocation32 + $0x1c] sm:$0xf]
    %v2943 = vld [vmem:[#allocation32 + $0x20] sm:$0xf]
    %v2944 = vld [vmem:[#allocation32 + $0x24] sm:$0xf]
    %v2945 = vld [vmem:[#allocation32 + $0x28] sm:$0xf]
    %v2946 = vld [vmem:[#allocation32 + $0x2c] sm:$0xf]
    %v2947 = vld [vmem:[#allocation32 + $0x30] sm:$0xf]
    %v2948 = vld [vmem:[#allocation32 + $0x34] sm:$0xf]
    %v2949 = vld [vmem:[#allocation32 + $0x38] sm:$0xf]
    %v2950 = vld [vmem:[#allocation32 + $0x3c] sm:$0xf]
    %v2951 = vld [vmem:[#allocation34] sm:$0x1]
    %v2953 = vlaneseq
    %v2954 = vshrl.u32 %v2953, 7
    %v2955 = vsub.s32 0, %v2954
    %v2956 = vrot.slane %v2951, %v2955
    %v2974 = vunpack.c.l.b16 %v2935
    %v2975 = vunpack.c.l.b16 %v2936
    %v2976 = vunpack.c.l.b16 %v2937
    %v2977 = vunpack.c.l.b16 %v2938
    %v2978 = vunpack.c.l.b16 %v2939
    %v2979 = vunpack.c.l.b16 %v2940
    %v2980 = vunpack.c.l.b16 %v2941
    %v2981 = vunpack.c.l.b16 %v2942
    %v2982 = vunpack.c.l.b16 %v2943
    %v2983 = vunpack.c.l.b16 %v2944
    %v2984 = vunpack.c.l.b16 %v2945
    %v2985 = vunpack.c.l.b16 %v2946
    %v2986 = vunpack.c.l.b16 %v2947
    %v2987 = vunpack.c.l.b16 %v2948
    %v2988 = vunpack.c.l.b16 %v2949
    %v2989 = vunpack.c.l.b16 %v2950
    %v2990 = vpack.c.b16 %v2975, %v2974
    %v2991 = vpack.c.b16 %v2977, %v2976
    %v2992 = vpack.c.b16 %v2979, %v2978
    %v2993 = vpack.c.b16 %v2981, %v2980
    %v2994 = vpack.c.b16 %v2983, %v2982
    %v2995 = vpack.c.b16 %v2985, %v2984
    %v2996 = vpack.c.b16 %v2987, %v2986
    %v2997 = vpack.c.b16 %v2989, %v2988
    %3006 = vmatprep.subr.bf16.mxu0 0
    %3007 = vmatpush1.bf16.msra.mxu0 %v2990
    %3008 = vmatprep.subr.bf16.mxu0 0
    %3009 = vmatpush1.bf16.msra.mxu0 %v2991
    %3010 = vmatprep.subr.bf16.mxu0 0
    %3011 = vmatpush1.bf16.msra.mxu0 %v2992
    %3012 = vmatprep.subr.bf16.mxu0 0
    %3013 = vmatpush1.bf16.msra.mxu0 %v2993
    %3014 = vmatprep.subr.bf16.mxu0 0
    %3015 = vmatpush1.bf16.msra.mxu0 %v2994
    %3016 = vmatprep.subr.bf16.mxu0 0
    %3017 = vmatpush1.bf16.msra.mxu0 %v2995
    %3018 = vmatprep.subr.bf16.mxu0 0
    %3019 = vmatpush1.bf16.msra.mxu0 %v2996
    %3020 = vmatprep.subr.bf16.mxu0 0
    %3021 = vmatpush1.bf16.msra.mxu0 %v2997
    %3022 = vmatprep.subr.bf16.mxu0 0
    %3023 = vmatpush1.bf16.msra.mxu0 0
    %3024 = vmatprep.subr.bf16.mxu0 0
    %3025 = vmatpush1.bf16.msra.mxu0 0
    %3026 = vmatprep.subr.bf16.mxu0 0
    %3027 = vmatpush1.bf16.msra.mxu0 0
    %3028 = vmatprep.subr.bf16.mxu0 0
    %3029 = vmatpush1.bf16.msra.mxu0 0
    %3030 = vmatprep.subr.bf16.mxu0 0
    %3031 = vmatpush1.bf16.msra.mxu0 0
    %3032 = vmatprep.subr.bf16.mxu0 0
    %3033 = vmatpush1.bf16.msra.mxu0 0
    %3034 = vmatprep.subr.bf16.mxu0 0
    %3035 = vmatpush1.bf16.msra.mxu0 0
    %3036 = vmatprep.subr.bf16.mxu0 0
    %3037 = vmatpush1.bf16.msra.mxu0 0
    %3038 = vmatprep.mubr.bf16.mxu0 0
    %3039 = vmatmul.mubr.bf16.gmra.mrb[0].mxu0 %v2934
    %v3040 = vpop.f32.mrb[0].mxu0
    %v3041 = vadd.f32 %v2956, %v3040
    %v3042 = vpop.f32.mrb[0].mxu0
    %v3043 = vpop.f32.mrb[0].mxu0
    %v3044 = vpop.f32.mrb[0].mxu0
    %3045 = vdwg.mxu0
    %3046 = vst [vmem:[#allocation78] sm:$0xff] %v3041
    %v3047 = vpack.c.bf16 %v1175, %v1175
    %v3048 = vpack.c.bf16 %v1177, %v1177
    %v3049 = vld [vmem:[#allocation35] sm:$0xff]
    %v3050 = vld [vmem:[#allocation35 + $0x8] sm:$0xff]
    %v3051 = vld [vmem:[#allocation35 + $0x10] sm:$0xff]
    %v3052 = vld [vmem:[#allocation35 + $0x18] sm:$0xff]
    %v3053 = vld [vmem:[#allocation35 + $0x20] sm:$0xff]
    %v3054 = vld [vmem:[#allocation35 + $0x28] sm:$0xff]
    %v3055 = vld [vmem:[#allocation35 + $0x30] sm:$0xff]
    %v3056 = vld [vmem:[#allocation35 + $0x38] sm:$0xff]
    %v3057 = vld [vmem:[#allocation35 + $0x40] sm:$0xff]
    %v3058 = vld [vmem:[#allocation35 + $0x48] sm:$0xff]
    %v3059 = vld [vmem:[#allocation35 + $0x50] sm:$0xff]
    %v3060 = vld [vmem:[#allocation35 + $0x58] sm:$0xff]
    %v3061 = vld [vmem:[#allocation35 + $0x60] sm:$0xff]
    %v3062 = vld [vmem:[#allocation35 + $0x68] sm:$0xff]
    %v3063 = vld [vmem:[#allocation35 + $0x70] sm:$0xff]
    %v3064 = vld [vmem:[#allocation35 + $0x78] sm:$0xff]
    %v3065 = vld [vmem:[#allocation35 + $0x80] sm:$0xff]
    %v3066 = vld [vmem:[#allocation35 + $0x88] sm:$0xff]
    %v3067 = vld [vmem:[#allocation35 + $0x90] sm:$0xff]
    %v3068 = vld [vmem:[#allocation35 + $0x98] sm:$0xff]
    %v3069 = vld [vmem:[#allocation35 + $0xa0] sm:$0xff]
    %v3070 = vld [vmem:[#allocation35 + $0xa8] sm:$0xff]
    %v3071 = vld [vmem:[#allocation35 + $0xb0] sm:$0xff]
    %v3072 = vld [vmem:[#allocation35 + $0xb8] sm:$0xff]
    %v3073 = vld [vmem:[#allocation35 + $0xc0] sm:$0xff]
    %v3074 = vld [vmem:[#allocation35 + $0xc8] sm:$0xff]
    %v3075 = vld [vmem:[#allocation35 + $0xd0] sm:$0xff]
    %v3076 = vld [vmem:[#allocation35 + $0xd8] sm:$0xff]
    %v3077 = vld [vmem:[#allocation35 + $0xe0] sm:$0xff]
    %v3078 = vld [vmem:[#allocation35 + $0xe8] sm:$0xff]
    %v3079 = vld [vmem:[#allocation35 + $0xf0] sm:$0xff]
    %v3080 = vld [vmem:[#allocation35 + $0xf8] sm:$0xff]
    %v3081 = vpack.c.bf16 %v1052, %v1052
    %v3082 = vpack.c.bf16 %v1054, %v1054
    %v3083 = vld [vmem:[#allocation37] sm:$0xff]
    %v3084 = vld [vmem:[#allocation37 + $0x8] sm:$0xff]
    %v3085 = vld [vmem:[#allocation37 + $0x10] sm:$0xff]
    %v3086 = vld [vmem:[#allocation37 + $0x18] sm:$0xff]
    %v3087 = vld [vmem:[#allocation37 + $0x20] sm:$0xff]
    %v3088 = vld [vmem:[#allocation37 + $0x28] sm:$0xff]
    %v3089 = vld [vmem:[#allocation37 + $0x30] sm:$0xff]
    %v3090 = vld [vmem:[#allocation37 + $0x38] sm:$0xff]
    %v3091 = vld [vmem:[#allocation37 + $0x40] sm:$0xff]
    %v3092 = vld [vmem:[#allocation37 + $0x48] sm:$0xff]
    %v3093 = vld [vmem:[#allocation37 + $0x50] sm:$0xff]
    %v3094 = vld [vmem:[#allocation37 + $0x58] sm:$0xff]
    %v3095 = vld [vmem:[#allocation37 + $0x60] sm:$0xff]
    %v3096 = vld [vmem:[#allocation37 + $0x68] sm:$0xff]
    %v3097 = vld [vmem:[#allocation37 + $0x70] sm:$0xff]
    %v3098 = vld [vmem:[#allocation37 + $0x78] sm:$0xff]
    %v3099 = vld [vmem:[#allocation37 + $0x80] sm:$0xff]
    %v3100 = vld [vmem:[#allocation37 + $0x88] sm:$0xff]
    %v3101 = vld [vmem:[#allocation37 + $0x90] sm:$0xff]
    %v3102 = vld [vmem:[#allocation37 + $0x98] sm:$0xff]
    %v3103 = vld [vmem:[#allocation37 + $0xa0] sm:$0xff]
    %v3104 = vld [vmem:[#allocation37 + $0xa8] sm:$0xff]
    %v3105 = vld [vmem:[#allocation37 + $0xb0] sm:$0xff]
    %v3106 = vld [vmem:[#allocation37 + $0xb8] sm:$0xff]
    %v3107 = vld [vmem:[#allocation37 + $0xc0] sm:$0xff]
    %v3108 = vld [vmem:[#allocation37 + $0xc8] sm:$0xff]
    %v3109 = vld [vmem:[#allocation37 + $0xd0] sm:$0xff]
    %v3110 = vld [vmem:[#allocation37 + $0xd8] sm:$0xff]
    %v3111 = vld [vmem:[#allocation37 + $0xe0] sm:$0xff]
    %v3112 = vld [vmem:[#allocation37 + $0xe8] sm:$0xff]
    %v3113 = vld [vmem:[#allocation37 + $0xf0] sm:$0xff]
    %v3114 = vld [vmem:[#allocation37 + $0xf8] sm:$0xff]
    %v3147 = vunpack.c.l.b16 %v3083
    %v3148 = vunpack.c.h.b16 %v3083
    %v3149 = vunpack.c.l.b16 %v3084
    %v3150 = vunpack.c.h.b16 %v3084
    %v3151 = vunpack.c.l.b16 %v3085
    %v3152 = vunpack.c.h.b16 %v3085
    %v3153 = vunpack.c.l.b16 %v3086
    %v3154 = vunpack.c.h.b16 %v3086
    %v3155 = vunpack.c.l.b16 %v3087
    %v3156 = vunpack.c.h.b16 %v3087
    %v3157 = vunpack.c.l.b16 %v3088
    %v3158 = vunpack.c.h.b16 %v3088
    %v3159 = vunpack.c.l.b16 %v3089
    %v3160 = vunpack.c.h.b16 %v3089
    %v3161 = vunpack.c.l.b16 %v3090
    %v3162 = vunpack.c.h.b16 %v3090
    %v3163 = vunpack.c.l.b16 %v3091
    %v3164 = vunpack.c.h.b16 %v3091
    %v3165 = vunpack.c.l.b16 %v3092
    %v3166 = vunpack.c.h.b16 %v3092
    %v3167 = vunpack.c.l.b16 %v3093
    %v3168 = vunpack.c.h.b16 %v3093
    %v3169 = vunpack.c.l.b16 %v3094
    %v3170 = vunpack.c.h.b16 %v3094
    %v3171 = vunpack.c.l.b16 %v3095
    %v3172 = vunpack.c.h.b16 %v3095
    %v3173 = vunpack.c.l.b16 %v3096
    %v3174 = vunpack.c.h.b16 %v3096
    %v3175 = vunpack.c.l.b16 %v3097
    %v3176 = vunpack.c.h.b16 %v3097
    %v3177 = vunpack.c.l.b16 %v3098
    %v3178 = vunpack.c.h.b16 %v3098
    %v3179 = vunpack.c.l.b16 %v3099
    %v3180 = vunpack.c.h.b16 %v3099
    %v3181 = vunpack.c.l.b16 %v3100
    %v3182 = vunpack.c.h.b16 %v3100
    %v3183 = vunpack.c.l.b16 %v3101
    %v3184 = vunpack.c.h.b16 %v3101
    %v3185 = vunpack.c.l.b16 %v3102
    %v3186 = vunpack.c.h.b16 %v3102
    %v3187 = vunpack.c.l.b16 %v3103
    %v3188 = vunpack.c.h.b16 %v3103
    %v3189 = vunpack.c.l.b16 %v3104
    %v3190 = vunpack.c.h.b16 %v3104
    %v3191 = vunpack.c.l.b16 %v3105
    %v3192 = vunpack.c.h.b16 %v3105
    %v3193 = vunpack.c.l.b16 %v3106
    %v3194 = vunpack.c.h.b16 %v3106
    %v3195 = vunpack.c.l.b16 %v3107
    %v3196 = vunpack.c.h.b16 %v3107
    %v3197 = vunpack.c.l.b16 %v3108
    %v3198 = vunpack.c.h.b16 %v3108
    %v3199 = vunpack.c.l.b16 %v3109
    %v3200 = vunpack.c.h.b16 %v3109
    %v3201 = vunpack.c.l.b16 %v3110
    %v3202 = vunpack.c.h.b16 %v3110
    %v3203 = vunpack.c.l.b16 %v3111
    %v3204 = vunpack.c.h.b16 %v3111
    %v3205 = vunpack.c.l.b16 %v3112
    %v3206 = vunpack.c.h.b16 %v3112
    %v3207 = vunpack.c.l.b16 %v3113
    %v3208 = vunpack.c.h.b16 %v3113
    %v3209 = vunpack.c.l.b16 %v3114
    %v3210 = vunpack.c.h.b16 %v3114
    %v3211 = vpack.c.b16 %v3149, %v3147
    %v3212 = vpack.c.b16 %v3150, %v3148
    %v3213 = vpack.c.b16 %v3153, %v3151
    %v3214 = vpack.c.b16 %v3154, %v3152
    %v3215 = vpack.c.b16 %v3157, %v3155
    %v3216 = vpack.c.b16 %v3158, %v3156
    %v3217 = vpack.c.b16 %v3161, %v3159
    %v3218 = vpack.c.b16 %v3162, %v3160
    %v3219 = vpack.c.b16 %v3165, %v3163
    %v3220 = vpack.c.b16 %v3166, %v3164
    %v3221 = vpack.c.b16 %v3169, %v3167
    %v3222 = vpack.c.b16 %v3170, %v3168
    %v3223 = vpack.c.b16 %v3173, %v3171
    %v3224 = vpack.c.b16 %v3174, %v3172
    %v3225 = vpack.c.b16 %v3177, %v3175
    %v3226 = vpack.c.b16 %v3178, %v3176
    %v3227 = vpack.c.b16 %v3181, %v3179
    %v3228 = vpack.c.b16 %v3182, %v3180
    %v3229 = vpack.c.b16 %v3185, %v3183
    %v3230 = vpack.c.b16 %v3186, %v3184
    %v3231 = vpack.c.b16 %v3189, %v3187
    %v3232 = vpack.c.b16 %v3190, %v3188
    %v3233 = vpack.c.b16 %v3193, %v3191
    %v3234 = vpack.c.b16 %v3194, %v3192
    %v3235 = vpack.c.b16 %v3197, %v3195
    %v3236 = vpack.c.b16 %v3198, %v3196
    %v3237 = vpack.c.b16 %v3201, %v3199
    %v3238 = vpack.c.b16 %v3202, %v3200
    %v3239 = vpack.c.b16 %v3205, %v3203
    %v3240 = vpack.c.b16 %v3206, %v3204
    %v3241 = vpack.c.b16 %v3209, %v3207
    %v3242 = vpack.c.b16 %v3210, %v3208
    %3275 = vmatprep.subr.bf16.mxu0 %v3212
    %3276 = vmatpush1.bf16.msra.mxu0 %v3211
    %3277 = vmatprep.subr.bf16.mxu0 %v3214
    %3278 = vmatpush1.bf16.msra.mxu0 %v3213
    %3279 = vmatprep.subr.bf16.mxu0 %v3216
    %3280 = vmatpush1.bf16.msra.mxu0 %v3215
    %3281 = vmatprep.subr.bf16.mxu0 %v3218
    %3282 = vmatpush1.bf16.msra.mxu0 %v3217
    %3283 = vmatprep.subr.bf16.mxu0 %v3220
    %3284 = vmatpush1.bf16.msra.mxu0 %v3219
    %3285 = vmatprep.subr.bf16.mxu0 %v3222
    %3286 = vmatpush1.bf16.msra.mxu0 %v3221
    %3287 = vmatprep.subr.bf16.mxu0 %v3224
    %3288 = vmatpush1.bf16.msra.mxu0 %v3223
    %3289 = vmatprep.subr.bf16.mxu0 %v3226
    %3290 = vmatpush1.bf16.msra.mxu0 %v3225
    %3291 = vmatprep.subr.bf16.mxu0 %v3228
    %3292 = vmatpush1.bf16.msra.mxu0 %v3227
    %3293 = vmatprep.subr.bf16.mxu0 %v3230
    %3294 = vmatpush1.bf16.msra.mxu0 %v3229
    %3295 = vmatprep.subr.bf16.mxu0 %v3232
    %3296 = vmatpush1.bf16.msra.mxu0 %v3231
    %3297 = vmatprep.subr.bf16.mxu0 %v3234
    %3298 = vmatpush1.bf16.msra.mxu0 %v3233
    %3299 = vmatprep.subr.bf16.mxu0 %v3236
    %3300 = vmatpush1.bf16.msra.mxu0 %v3235
    %3301 = vmatprep.subr.bf16.mxu0 %v3238
    %3302 = vmatpush1.bf16.msra.mxu0 %v3237
    %3303 = vmatprep.subr.bf16.mxu0 %v3240
    %3304 = vmatpush1.bf16.msra.mxu0 %v3239
    %3305 = vmatprep.subr.bf16.mxu0 %v3242
    %3306 = vmatpush1.bf16.msra.mxu0 %v3241
    %3307 = vmatprep.mubr.bf16.mxu0 %v3082
    %3308 = vmatmul.mubr.bf16.gmra.mrb[0].mxu0 %v3081
    %v3309 = vpop.f32.mrb[0].mxu0
    %v3310 = vadd.f32 0.0, %v3309
    %v3311 = vpop.f32.mrb[0].mxu0
    %v3312 = vadd.f32 0.0, %v3311
    %v3313 = vpop.f32.mrb[0].mxu0
    %v3314 = vpop.f32.mrb[0].mxu0
    %3315 = vdwg.mxu0
    %v3348 = vunpack.c.l.b16 %v3049
    %v3349 = vunpack.c.h.b16 %v3049
    %v3350 = vunpack.c.l.b16 %v3050
    %v3351 = vunpack.c.h.b16 %v3050
    %v3352 = vunpack.c.l.b16 %v3051
    %v3353 = vunpack.c.h.b16 %v3051
    %v3354 = vunpack.c.l.b16 %v3052
    %v3355 = vunpack.c.h.b16 %v3052
    %v3356 = vunpack.c.l.b16 %v3053
    %v3357 = vunpack.c.h.b16 %v3053
    %v3358 = vunpack.c.l.b16 %v3054
    %v3359 = vunpack.c.h.b16 %v3054
    %v3360 = vunpack.c.l.b16 %v3055
    %v3361 = vunpack.c.h.b16 %v3055
    %v3362 = vunpack.c.l.b16 %v3056
    %v3363 = vunpack.c.h.b16 %v3056
    %v3364 = vunpack.c.l.b16 %v3057
    %v3365 = vunpack.c.h.b16 %v3057
    %v3366 = vunpack.c.l.b16 %v3058
    %v3367 = vunpack.c.h.b16 %v3058
    %v3368 = vunpack.c.l.b16 %v3059
    %v3369 = vunpack.c.h.b16 %v3059
    %v3370 = vunpack.c.l.b16 %v3060
    %v3371 = vunpack.c.h.b16 %v3060
    %v3372 = vunpack.c.l.b16 %v3061
    %v3373 = vunpack.c.h.b16 %v3061
    %v3374 = vunpack.c.l.b16 %v3062
    %v3375 = vunpack.c.h.b16 %v3062
    %v3376 = vunpack.c.l.b16 %v3063
    %v3377 = vunpack.c.h.b16 %v3063
    %v3378 = vunpack.c.l.b16 %v3064
    %v3379 = vunpack.c.h.b16 %v3064
    %v3380 = vunpack.c.l.b16 %v3065
    %v3381 = vunpack.c.h.b16 %v3065
    %v3382 = vunpack.c.l.b16 %v3066
    %v3383 = vunpack.c.h.b16 %v3066
    %v3384 = vunpack.c.l.b16 %v3067
    %v3385 = vunpack.c.h.b16 %v3067
    %v3386 = vunpack.c.l.b16 %v3068
    %v3387 = vunpack.c.h.b16 %v3068
    %v3388 = vunpack.c.l.b16 %v3069
    %v3389 = vunpack.c.h.b16 %v3069
    %v3390 = vunpack.c.l.b16 %v3070
    %v3391 = vunpack.c.h.b16 %v3070
    %v3392 = vunpack.c.l.b16 %v3071
    %v3393 = vunpack.c.h.b16 %v3071
    %v3394 = vunpack.c.l.b16 %v3072
    %v3395 = vunpack.c.h.b16 %v3072
    %v3396 = vunpack.c.l.b16 %v3073
    %v3397 = vunpack.c.h.b16 %v3073
    %v3398 = vunpack.c.l.b16 %v3074
    %v3399 = vunpack.c.h.b16 %v3074
    %v3400 = vunpack.c.l.b16 %v3075
    %v3401 = vunpack.c.h.b16 %v3075
    %v3402 = vunpack.c.l.b16 %v3076
    %v3403 = vunpack.c.h.b16 %v3076
    %v3404 = vunpack.c.l.b16 %v3077
    %v3405 = vunpack.c.h.b16 %v3077
    %v3406 = vunpack.c.l.b16 %v3078
    %v3407 = vunpack.c.h.b16 %v3078
    %v3408 = vunpack.c.l.b16 %v3079
    %v3409 = vunpack.c.h.b16 %v3079
    %v3410 = vunpack.c.l.b16 %v3080
    %v3411 = vunpack.c.h.b16 %v3080
    %v3412 = vpack.c.b16 %v3350, %v3348
    %v3413 = vpack.c.b16 %v3351, %v3349
    %v3414 = vpack.c.b16 %v3354, %v3352
    %v3415 = vpack.c.b16 %v3355, %v3353
    %v3416 = vpack.c.b16 %v3358, %v3356
    %v3417 = vpack.c.b16 %v3359, %v3357
    %v3418 = vpack.c.b16 %v3362, %v3360
    %v3419 = vpack.c.b16 %v3363, %v3361
    %v3420 = vpack.c.b16 %v3366, %v3364
    %v3421 = vpack.c.b16 %v3367, %v3365
    %v3422 = vpack.c.b16 %v3370, %v3368
    %v3423 = vpack.c.b16 %v3371, %v3369
    %v3424 = vpack.c.b16 %v3374, %v3372
    %v3425 = vpack.c.b16 %v3375, %v3373
    %v3426 = vpack.c.b16 %v3378, %v3376
    %v3427 = vpack.c.b16 %v3379, %v3377
    %v3428 = vpack.c.b16 %v3382, %v3380
    %v3429 = vpack.c.b16 %v3383, %v3381
    %v3430 = vpack.c.b16 %v3386, %v3384
    %v3431 = vpack.c.b16 %v3387, %v3385
    %v3432 = vpack.c.b16 %v3390, %v3388
    %v3433 = vpack.c.b16 %v3391, %v3389
    %v3434 = vpack.c.b16 %v3394, %v3392
    %v3435 = vpack.c.b16 %v3395, %v3393
    %v3436 = vpack.c.b16 %v3398, %v3396
    %v3437 = vpack.c.b16 %v3399, %v3397
    %v3438 = vpack.c.b16 %v3402, %v3400
    %v3439 = vpack.c.b16 %v3403, %v3401
    %v3440 = vpack.c.b16 %v3406, %v3404
    %v3441 = vpack.c.b16 %v3407, %v3405
    %v3442 = vpack.c.b16 %v3410, %v3408
    %v3443 = vpack.c.b16 %v3411, %v3409
    %3476 = vmatprep.subr.bf16.mxu0 %v3413
    %3477 = vmatpush1.bf16.msra.mxu0 %v3412
    %3478 = vmatprep.subr.bf16.mxu0 %v3415
    %3479 = vmatpush1.bf16.msra.mxu0 %v3414
    %3480 = vmatprep.subr.bf16.mxu0 %v3417
    %3481 = vmatpush1.bf16.msra.mxu0 %v3416
    %3482 = vmatprep.subr.bf16.mxu0 %v3419
    %3483 = vmatpush1.bf16.msra.mxu0 %v3418
    %3484 = vmatprep.subr.bf16.mxu0 %v3421
    %3485 = vmatpush1.bf16.msra.mxu0 %v3420
    %3486 = vmatprep.subr.bf16.mxu0 %v3423
    %3487 = vmatpush1.bf16.msra.mxu0 %v3422
    %3488 = vmatprep.subr.bf16.mxu0 %v3425
    %3489 = vmatpush1.bf16.msra.mxu0 %v3424
    %3490 = vmatprep.subr.bf16.mxu0 %v3427
    %3491 = vmatpush1.bf16.msra.mxu0 %v3426
    %3492 = vmatprep.subr.bf16.mxu0 %v3429
    %3493 = vmatpush1.bf16.msra.mxu0 %v3428
    %3494 = vmatprep.subr.bf16.mxu0 %v3431
    %3495 = vmatpush1.bf16.msra.mxu0 %v3430
    %3496 = vmatprep.subr.bf16.mxu0 %v3433
    %3497 = vmatpush1.bf16.msra.mxu0 %v3432
    %3498 = vmatprep.subr.bf16.mxu0 %v3435
    %3499 = vmatpush1.bf16.msra.mxu0 %v3434
    %3500 = vmatprep.subr.bf16.mxu0 %v3437
    %3501 = vmatpush1.bf16.msra.mxu0 %v3436
    %3502 = vmatprep.subr.bf16.mxu0 %v3439
    %3503 = vmatpush1.bf16.msra.mxu0 %v3438
    %3504 = vmatprep.subr.bf16.mxu0 %v3441
    %3505 = vmatpush1.bf16.msra.mxu0 %v3440
    %3506 = vmatprep.subr.bf16.mxu0 %v3443
    %3507 = vmatpush1.bf16.msra.mxu0 %v3442
    %3508 = vmatprep.mubr.bf16.mxu0 %v3048
    %3509 = vmatmul.mubr.bf16.gmra.mrb[0].mxu0 %v3047
    %v3510 = vpop.f32.mrb[0].mxu0
    %v3511 = vadd.f32 %v3310, %v3510
    %v3512 = vpop.f32.mrb[0].mxu0
    %v3513 = vadd.f32 %v3312, %v3512
    %v3514 = vpop.f32.mrb[0].mxu0
    %v3515 = vpop.f32.mrb[0].mxu0
    %3516 = vdwg.mxu0
    %v3517 = vld [vmem:[#allocation38] sm:$0x3]
    %v3519 = vlaneseq
    %v3520 = vshrl.u32 %v3519, 7
    %v3521 = vsub.s32 0, %v3520
    %v3522 = vrot.slane %v3517, %v3521
    %v3523 = vlaneseq
    %v3524 = vshrl.u32 %v3523, 7
    %v3525 = vsub.s32 1, %v3524
    %v3526 = vrot.slane %v3517, %v3525
    %v3529 = vadd.f32 %v3511, %v3522
    %v3530 = vadd.f32 %v3513, %v3526
    %v3531 = vmax.f32 %v3529, 0.0
    %v3532 = vmax.f32 %v3530, 0.0
    %v3533 = vpack.c.bf16 %v3531, %v3531
    %v3534 = vpack.c.bf16 %v3532, %v3532
    %v3535 = vld [vmem:[#allocation40] sm:$0xf]
    %v3536 = vld [vmem:[#allocation40 + $0x4] sm:$0xf]
    %v3537 = vld [vmem:[#allocation40 + $0x8] sm:$0xf]
    %v3538 = vld [vmem:[#allocation40 + $0xc] sm:$0xf]
    %v3539 = vld [vmem:[#allocation40 + $0x10] sm:$0xf]
    %v3540 = vld [vmem:[#allocation40 + $0x14] sm:$0xf]
    %v3541 = vld [vmem:[#allocation40 + $0x18] sm:$0xf]
    %v3542 = vld [vmem:[#allocation40 + $0x1c] sm:$0xf]
    %v3543 = vld [vmem:[#allocation40 + $0x20] sm:$0xf]
    %v3544 = vld [vmem:[#allocation40 + $0x24] sm:$0xf]
    %v3545 = vld [vmem:[#allocation40 + $0x28] sm:$0xf]
    %v3546 = vld [vmem:[#allocation40 + $0x2c] sm:$0xf]
    %v3547 = vld [vmem:[#allocation40 + $0x30] sm:$0xf]
    %v3548 = vld [vmem:[#allocation40 + $0x34] sm:$0xf]
    %v3549 = vld [vmem:[#allocation40 + $0x38] sm:$0xf]
    %v3550 = vld [vmem:[#allocation40 + $0x3c] sm:$0xf]
    %v3551 = vld [vmem:[#allocation40 + $0x40] sm:$0xf]
    %v3552 = vld [vmem:[#allocation40 + $0x44] sm:$0xf]
    %v3553 = vld [vmem:[#allocation40 + $0x48] sm:$0xf]
    %v3554 = vld [vmem:[#allocation40 + $0x4c] sm:$0xf]
    %v3555 = vld [vmem:[#allocation40 + $0x50] sm:$0xf]
    %v3556 = vld [vmem:[#allocation40 + $0x54] sm:$0xf]
    %v3557 = vld [vmem:[#allocation40 + $0x58] sm:$0xf]
    %v3558 = vld [vmem:[#allocation40 + $0x5c] sm:$0xf]
    %v3559 = vld [vmem:[#allocation40 + $0x60] sm:$0xf]
    %v3560 = vld [vmem:[#allocation40 + $0x64] sm:$0xf]
    %v3561 = vld [vmem:[#allocation40 + $0x68] sm:$0xf]
    %v3562 = vld [vmem:[#allocation40 + $0x6c] sm:$0xf]
    %v3563 = vld [vmem:[#allocation40 + $0x70] sm:$0xf]
    %v3564 = vld [vmem:[#allocation40 + $0x74] sm:$0xf]
    %v3565 = vld [vmem:[#allocation40 + $0x78] sm:$0xf]
    %v3566 = vld [vmem:[#allocation40 + $0x7c] sm:$0xf]
    %v3567 = vld [vmem:[#allocation41] sm:$0x1]
    %v3569 = vlaneseq
    %v3570 = vshrl.u32 %v3569, 7
    %v3571 = vsub.s32 0, %v3570
    %v3572 = vrot.slane %v3567, %v3571
    %v3606 = vunpack.c.l.b16 %v3535
    %v3607 = vunpack.c.l.b16 %v3536
    %v3608 = vunpack.c.l.b16 %v3537
    %v3609 = vunpack.c.l.b16 %v3538
    %v3610 = vunpack.c.l.b16 %v3539
    %v3611 = vunpack.c.l.b16 %v3540
    %v3612 = vunpack.c.l.b16 %v3541
    %v3613 = vunpack.c.l.b16 %v3542
    %v3614 = vunpack.c.l.b16 %v3543
    %v3615 = vunpack.c.l.b16 %v3544
    %v3616 = vunpack.c.l.b16 %v3545
    %v3617 = vunpack.c.l.b16 %v3546
    %v3618 = vunpack.c.l.b16 %v3547
    %v3619 = vunpack.c.l.b16 %v3548
    %v3620 = vunpack.c.l.b16 %v3549
    %v3621 = vunpack.c.l.b16 %v3550
    %v3622 = vunpack.c.l.b16 %v3551
    %v3623 = vunpack.c.l.b16 %v3552
    %v3624 = vunpack.c.l.b16 %v3553
    %v3625 = vunpack.c.l.b16 %v3554
    %v3626 = vunpack.c.l.b16 %v3555
    %v3627 = vunpack.c.l.b16 %v3556
    %v3628 = vunpack.c.l.b16 %v3557
    %v3629 = vunpack.c.l.b16 %v3558
    %v3630 = vunpack.c.l.b16 %v3559
    %v3631 = vunpack.c.l.b16 %v3560
    %v3632 = vunpack.c.l.b16 %v3561
    %v3633 = vunpack.c.l.b16 %v3562
    %v3634 = vunpack.c.l.b16 %v3563
    %v3635 = vunpack.c.l.b16 %v3564
    %v3636 = vunpack.c.l.b16 %v3565
    %v3637 = vunpack.c.l.b16 %v3566
    %v3638 = vpack.c.b16 %v3607, %v3606
    %v3639 = vpack.c.b16 %v3609, %v3608
    %v3640 = vpack.c.b16 %v3611, %v3610
    %v3641 = vpack.c.b16 %v3613, %v3612
    %v3642 = vpack.c.b16 %v3615, %v3614
    %v3643 = vpack.c.b16 %v3617, %v3616
    %v3644 = vpack.c.b16 %v3619, %v3618
    %v3645 = vpack.c.b16 %v3621, %v3620
    %v3646 = vpack.c.b16 %v3623, %v3622
    %v3647 = vpack.c.b16 %v3625, %v3624
    %v3648 = vpack.c.b16 %v3627, %v3626
    %v3649 = vpack.c.b16 %v3629, %v3628
    %v3650 = vpack.c.b16 %v3631, %v3630
    %v3651 = vpack.c.b16 %v3633, %v3632
    %v3652 = vpack.c.b16 %v3635, %v3634
    %v3653 = vpack.c.b16 %v3637, %v3636
    %3670 = vmatprep.subr.bf16.mxu0 0
    %3671 = vmatpush1.bf16.msra.mxu0 %v3638
    %3672 = vmatprep.subr.bf16.mxu0 0
    %3673 = vmatpush1.bf16.msra.mxu0 %v3639
    %3674 = vmatprep.subr.bf16.mxu0 0
    %3675 = vmatpush1.bf16.msra.mxu0 %v3640
    %3676 = vmatprep.subr.bf16.mxu0 0
    %3677 = vmatpush1.bf16.msra.mxu0 %v3641
    %3678 = vmatprep.subr.bf16.mxu0 0
    %3679 = vmatpush1.bf16.msra.mxu0 %v3642
    %3680 = vmatprep.subr.bf16.mxu0 0
    %3681 = vmatpush1.bf16.msra.mxu0 %v3643
    %3682 = vmatprep.subr.bf16.mxu0 0
    %3683 = vmatpush1.bf16.msra.mxu0 %v3644
    %3684 = vmatprep.subr.bf16.mxu0 0
    %3685 = vmatpush1.bf16.msra.mxu0 %v3645
    %3686 = vmatprep.subr.bf16.mxu0 0
    %3687 = vmatpush1.bf16.msra.mxu0 %v3646
    %3688 = vmatprep.subr.bf16.mxu0 0
    %3689 = vmatpush1.bf16.msra.mxu0 %v3647
    %3690 = vmatprep.subr.bf16.mxu0 0
    %3691 = vmatpush1.bf16.msra.mxu0 %v3648
    %3692 = vmatprep.subr.bf16.mxu0 0
    %3693 = vmatpush1.bf16.msra.mxu0 %v3649
    %3694 = vmatprep.subr.bf16.mxu0 0
    %3695 = vmatpush1.bf16.msra.mxu0 %v3650
    %3696 = vmatprep.subr.bf16.mxu0 0
    %3697 = vmatpush1.bf16.msra.mxu0 %v3651
    %3698 = vmatprep.subr.bf16.mxu0 0
    %3699 = vmatpush1.bf16.msra.mxu0 %v3652
    %3700 = vmatprep.subr.bf16.mxu0 0
    %3701 = vmatpush1.bf16.msra.mxu0 %v3653
    %3702 = vmatprep.mubr.bf16.mxu0 %v3534
    %3703 = vmatmul.mubr.bf16.gmra.mrb[0].mxu0 %v3533
    %v3704 = vpop.f32.mrb[0].mxu0
    %v3705 = vadd.f32 %v3572, %v3704
    %v3706 = vpop.f32.mrb[0].mxu0
    %v3707 = vpop.f32.mrb[0].mxu0
    %v3708 = vpop.f32.mrb[0].mxu0
    %3709 = vdwg.mxu0
    %v3710 = vmax.f32 %v3705, 0.0
    %v3711 = vpack.c.bf16 %v3710, %v3710
    %v3712 = vld [vmem:[#allocation43] sm:$0xf]
    %v3713 = vld [vmem:[#allocation43 + $0x4] sm:$0xf]
    %v3714 = vld [vmem:[#allocation43 + $0x8] sm:$0xf]
    %v3715 = vld [vmem:[#allocation43 + $0xc] sm:$0xf]
    %v3716 = vld [vmem:[#allocation43 + $0x10] sm:$0xf]
    %v3717 = vld [vmem:[#allocation43 + $0x14] sm:$0xf]
    %v3718 = vld [vmem:[#allocation43 + $0x18] sm:$0xf]
    %v3719 = vld [vmem:[#allocation43 + $0x1c] sm:$0xf]
    %v3720 = vld [vmem:[#allocation43 + $0x20] sm:$0xf]
    %v3721 = vld [vmem:[#allocation43 + $0x24] sm:$0xf]
    %v3722 = vld [vmem:[#allocation43 + $0x28] sm:$0xf]
    %v3723 = vld [vmem:[#allocation43 + $0x2c] sm:$0xf]
    %v3724 = vld [vmem:[#allocation43 + $0x30] sm:$0xf]
    %v3725 = vld [vmem:[#allocation43 + $0x34] sm:$0xf]
    %v3726 = vld [vmem:[#allocation43 + $0x38] sm:$0xf]
    %v3727 = vld [vmem:[#allocation43 + $0x3c] sm:$0xf]
    %v3728 = vld [vmem:[#allocation44] sm:$0x1]
    %v3730 = vlaneseq
    %v3731 = vshrl.u32 %v3730, 7
    %v3732 = vsub.s32 0, %v3731
    %v3733 = vrot.slane %v3728, %v3732
    %v3751 = vunpack.c.l.b16 %v3712
    %v3752 = vunpack.c.l.b16 %v3713
    %v3753 = vunpack.c.l.b16 %v3714
    %v3754 = vunpack.c.l.b16 %v3715
    %v3755 = vunpack.c.l.b16 %v3716
    %v3756 = vunpack.c.l.b16 %v3717
    %v3757 = vunpack.c.l.b16 %v3718
    %v3758 = vunpack.c.l.b16 %v3719
    %v3759 = vunpack.c.l.b16 %v3720
    %v3760 = vunpack.c.l.b16 %v3721
    %v3761 = vunpack.c.l.b16 %v3722
    %v3762 = vunpack.c.l.b16 %v3723
    %v3763 = vunpack.c.l.b16 %v3724
    %v3764 = vunpack.c.l.b16 %v3725
    %v3765 = vunpack.c.l.b16 %v3726
    %v3766 = vunpack.c.l.b16 %v3727
    %v3767 = vpack.c.b16 %v3752, %v3751
    %v3768 = vpack.c.b16 %v3754, %v3753
    %v3769 = vpack.c.b16 %v3756, %v3755
    %v3770 = vpack.c.b16 %v3758, %v3757
    %v3771 = vpack.c.b16 %v3760, %v3759
    %v3772 = vpack.c.b16 %v3762, %v3761
    %v3773 = vpack.c.b16 %v3764, %v3763
    %v3774 = vpack.c.b16 %v3766, %v3765
    %3783 = vmatprep.subr.bf16.mxu0 0
    %3784 = vmatpush1.bf16.msra.mxu0 %v3767
    %3785 = vmatprep.subr.bf16.mxu0 0
    %3786 = vmatpush1.bf16.msra.mxu0 %v3768
    %3787 = vmatprep.subr.bf16.mxu0 0
    %3788 = vmatpush1.bf16.msra.mxu0 %v3769
    %3789 = vmatprep.subr.bf16.mxu0 0
    %3790 = vmatpush1.bf16.msra.mxu0 %v3770
    %3791 = vmatprep.subr.bf16.mxu0 0
    %3792 = vmatpush1.bf16.msra.mxu0 %v3771
    %3793 = vmatprep.subr.bf16.mxu0 0
    %3794 = vmatpush1.bf16.msra.mxu0 %v3772
    %3795 = vmatprep.subr.bf16.mxu0 0
    %3796 = vmatpush1.bf16.msra.mxu0 %v3773
    %3797 = vmatprep.subr.bf16.mxu0 0
    %3798 = vmatpush1.bf16.msra.mxu0 %v3774
    %3799 = vmatprep.subr.bf16.mxu0 0
    %3800 = vmatpush1.bf16.msra.mxu0 0
    %3801 = vmatprep.subr.bf16.mxu0 0
    %3802 = vmatpush1.bf16.msra.mxu0 0
    %3803 = vmatprep.subr.bf16.mxu0 0
    %3804 = vmatpush1.bf16.msra.mxu0 0
    %3805 = vmatprep.subr.bf16.mxu0 0
    %3806 = vmatpush1.bf16.msra.mxu0 0
    %3807 = vmatprep.subr.bf16.mxu0 0
    %3808 = vmatpush1.bf16.msra.mxu0 0
    %3809 = vmatprep.subr.bf16.mxu0 0
    %3810 = vmatpush1.bf16.msra.mxu0 0
    %3811 = vmatprep.subr.bf16.mxu0 0
    %3812 = vmatpush1.bf16.msra.mxu0 0
    %3813 = vmatprep.subr.bf16.mxu0 0
    %3814 = vmatpush1.bf16.msra.mxu0 0
    %3815 = vmatprep.mubr.bf16.mxu0 0
    %3816 = vmatmul.mubr.bf16.gmra.mrb[0].mxu0 %v3711
    %v3817 = vpop.f32.mrb[0].mxu0
    %v3818 = vadd.f32 %v3733, %v3817
    %v3819 = vpop.f32.mrb[0].mxu0
    %v3820 = vpop.f32.mrb[0].mxu0
    %v3821 = vpop.f32.mrb[0].mxu0
    %3822 = vdwg.mxu0
    %3823 = vst [vmem:[#allocation80] sm:$0xff] %v3818
    %v3824 = vpack.c.bf16 %v1134, %v1134
    %v3825 = vpack.c.bf16 %v1136, %v1136
    %v3826 = vld [vmem:[#allocation46] sm:$0xff]
    %v3827 = vld [vmem:[#allocation46 + $0x8] sm:$0xff]
    %v3828 = vld [vmem:[#allocation46 + $0x10] sm:$0xff]
    %v3829 = vld [vmem:[#allocation46 + $0x18] sm:$0xff]
    %v3830 = vld [vmem:[#allocation46 + $0x20] sm:$0xff]
    %v3831 = vld [vmem:[#allocation46 + $0x28] sm:$0xff]
    %v3832 = vld [vmem:[#allocation46 + $0x30] sm:$0xff]
    %v3833 = vld [vmem:[#allocation46 + $0x38] sm:$0xff]
    %v3834 = vld [vmem:[#allocation46 + $0x40] sm:$0xff]
    %v3835 = vld [vmem:[#allocation46 + $0x48] sm:$0xff]
    %v3836 = vld [vmem:[#allocation46 + $0x50] sm:$0xff]
    %v3837 = vld [vmem:[#allocation46 + $0x58] sm:$0xff]
    %v3838 = vld [vmem:[#allocation46 + $0x60] sm:$0xff]
    %v3839 = vld [vmem:[#allocation46 + $0x68] sm:$0xff]
    %v3840 = vld [vmem:[#allocation46 + $0x70] sm:$0xff]
    %v3841 = vld [vmem:[#allocation46 + $0x78] sm:$0xff]
    %v3842 = vld [vmem:[#allocation46 + $0x80] sm:$0xff]
    %v3843 = vld [vmem:[#allocation46 + $0x88] sm:$0xff]
    %v3844 = vld [vmem:[#allocation46 + $0x90] sm:$0xff]
    %v3845 = vld [vmem:[#allocation46 + $0x98] sm:$0xff]
    %v3846 = vld [vmem:[#allocation46 + $0xa0] sm:$0xff]
    %v3847 = vld [vmem:[#allocation46 + $0xa8] sm:$0xff]
    %v3848 = vld [vmem:[#allocation46 + $0xb0] sm:$0xff]
    %v3849 = vld [vmem:[#allocation46 + $0xb8] sm:$0xff]
    %v3850 = vld [vmem:[#allocation46 + $0xc0] sm:$0xff]
    %v3851 = vld [vmem:[#allocation46 + $0xc8] sm:$0xff]
    %v3852 = vld [vmem:[#allocation46 + $0xd0] sm:$0xff]
    %v3853 = vld [vmem:[#allocation46 + $0xd8] sm:$0xff]
    %v3854 = vld [vmem:[#allocation46 + $0xe0] sm:$0xff]
    %v3855 = vld [vmem:[#allocation46 + $0xe8] sm:$0xff]
    %v3856 = vld [vmem:[#allocation46 + $0xf0] sm:$0xff]
    %v3857 = vld [vmem:[#allocation46 + $0xf8] sm:$0xff]
    %v3858 = vld [vmem:[#allocation47] sm:$0xff]
    %v3859 = vld [vmem:[#allocation47 + $0x8] sm:$0xff]
    %v3860 = vld [vmem:[#allocation47 + $0x10] sm:$0xff]
    %v3861 = vld [vmem:[#allocation47 + $0x18] sm:$0xff]
    %v3862 = vld [vmem:[#allocation47 + $0x20] sm:$0xff]
    %v3863 = vld [vmem:[#allocation47 + $0x28] sm:$0xff]
    %v3864 = vld [vmem:[#allocation47 + $0x30] sm:$0xff]
    %v3865 = vld [vmem:[#allocation47 + $0x38] sm:$0xff]
    %v3866 = vld [vmem:[#allocation47 + $0x40] sm:$0xff]
    %v3867 = vld [vmem:[#allocation47 + $0x48] sm:$0xff]
    %v3868 = vld [vmem:[#allocation47 + $0x50] sm:$0xff]
    %v3869 = vld [vmem:[#allocation47 + $0x58] sm:$0xff]
    %v3870 = vld [vmem:[#allocation47 + $0x60] sm:$0xff]
    %v3871 = vld [vmem:[#allocation47 + $0x68] sm:$0xff]
    %v3872 = vld [vmem:[#allocation47 + $0x70] sm:$0xff]
    %v3873 = vld [vmem:[#allocation47 + $0x78] sm:$0xff]
    %v3874 = vld [vmem:[#allocation47 + $0x80] sm:$0xff]
    %v3875 = vld [vmem:[#allocation47 + $0x88] sm:$0xff]
    %v3876 = vld [vmem:[#allocation47 + $0x90] sm:$0xff]
    %v3877 = vld [vmem:[#allocation47 + $0x98] sm:$0xff]
    %v3878 = vld [vmem:[#allocation47 + $0xa0] sm:$0xff]
    %v3879 = vld [vmem:[#allocation47 + $0xa8] sm:$0xff]
    %v3880 = vld [vmem:[#allocation47 + $0xb0] sm:$0xff]
    %v3881 = vld [vmem:[#allocation47 + $0xb8] sm:$0xff]
    %v3882 = vld [vmem:[#allocation47 + $0xc0] sm:$0xff]
    %v3883 = vld [vmem:[#allocation47 + $0xc8] sm:$0xff]
    %v3884 = vld [vmem:[#allocation47 + $0xd0] sm:$0xff]
    %v3885 = vld [vmem:[#allocation47 + $0xd8] sm:$0xff]
    %v3886 = vld [vmem:[#allocation47 + $0xe0] sm:$0xff]
    %v3887 = vld [vmem:[#allocation47 + $0xe8] sm:$0xff]
    %v3888 = vld [vmem:[#allocation47 + $0xf0] sm:$0xff]
    %v3889 = vld [vmem:[#allocation47 + $0xf8] sm:$0xff]
    %v3922 = vunpack.c.l.b16 %v3858
    %v3923 = vunpack.c.h.b16 %v3858
    %v3924 = vunpack.c.l.b16 %v3859
    %v3925 = vunpack.c.h.b16 %v3859
    %v3926 = vunpack.c.l.b16 %v3860
    %v3927 = vunpack.c.h.b16 %v3860
    %v3928 = vunpack.c.l.b16 %v3861
    %v3929 = vunpack.c.h.b16 %v3861
    %v3930 = vunpack.c.l.b16 %v3862
    %v3931 = vunpack.c.h.b16 %v3862
    %v3932 = vunpack.c.l.b16 %v3863
    %v3933 = vunpack.c.h.b16 %v3863
    %v3934 = vunpack.c.l.b16 %v3864
    %v3935 = vunpack.c.h.b16 %v3864
    %v3936 = vunpack.c.l.b16 %v3865
    %v3937 = vunpack.c.h.b16 %v3865
    %v3938 = vunpack.c.l.b16 %v3866
    %v3939 = vunpack.c.h.b16 %v3866
    %v3940 = vunpack.c.l.b16 %v3867
    %v3941 = vunpack.c.h.b16 %v3867
    %v3942 = vunpack.c.l.b16 %v3868
    %v3943 = vunpack.c.h.b16 %v3868
    %v3944 = vunpack.c.l.b16 %v3869
    %v3945 = vunpack.c.h.b16 %v3869
    %v3946 = vunpack.c.l.b16 %v3870
    %v3947 = vunpack.c.h.b16 %v3870
    %v3948 = vunpack.c.l.b16 %v3871
    %v3949 = vunpack.c.h.b16 %v3871
    %v3950 = vunpack.c.l.b16 %v3872
    %v3951 = vunpack.c.h.b16 %v3872
    %v3952 = vunpack.c.l.b16 %v3873
    %v3953 = vunpack.c.h.b16 %v3873
    %v3954 = vunpack.c.l.b16 %v3874
    %v3955 = vunpack.c.h.b16 %v3874
    %v3956 = vunpack.c.l.b16 %v3875
    %v3957 = vunpack.c.h.b16 %v3875
    %v3958 = vunpack.c.l.b16 %v3876
    %v3959 = vunpack.c.h.b16 %v3876
    %v3960 = vunpack.c.l.b16 %v3877
    %v3961 = vunpack.c.h.b16 %v3877
    %v3962 = vunpack.c.l.b16 %v3878
    %v3963 = vunpack.c.h.b16 %v3878
    %v3964 = vunpack.c.l.b16 %v3879
    %v3965 = vunpack.c.h.b16 %v3879
    %v3966 = vunpack.c.l.b16 %v3880
    %v3967 = vunpack.c.h.b16 %v3880
    %v3968 = vunpack.c.l.b16 %v3881
    %v3969 = vunpack.c.h.b16 %v3881
    %v3970 = vunpack.c.l.b16 %v3882
    %v3971 = vunpack.c.h.b16 %v3882
    %v3972 = vunpack.c.l.b16 %v3883
    %v3973 = vunpack.c.h.b16 %v3883
    %v3974 = vunpack.c.l.b16 %v3884
    %v3975 = vunpack.c.h.b16 %v3884
    %v3976 = vunpack.c.l.b16 %v3885
    %v3977 = vunpack.c.h.b16 %v3885
    %v3978 = vunpack.c.l.b16 %v3886
    %v3979 = vunpack.c.h.b16 %v3886
    %v3980 = vunpack.c.l.b16 %v3887
    %v3981 = vunpack.c.h.b16 %v3887
    %v3982 = vunpack.c.l.b16 %v3888
    %v3983 = vunpack.c.h.b16 %v3888
    %v3984 = vunpack.c.l.b16 %v3889
    %v3985 = vunpack.c.h.b16 %v3889
    %v3986 = vpack.c.b16 %v3924, %v3922
    %v3987 = vpack.c.b16 %v3925, %v3923
    %v3988 = vpack.c.b16 %v3928, %v3926
    %v3989 = vpack.c.b16 %v3929, %v3927
    %v3990 = vpack.c.b16 %v3932, %v3930
    %v3991 = vpack.c.b16 %v3933, %v3931
    %v3992 = vpack.c.b16 %v3936, %v3934
    %v3993 = vpack.c.b16 %v3937, %v3935
    %v3994 = vpack.c.b16 %v3940, %v3938
    %v3995 = vpack.c.b16 %v3941, %v3939
    %v3996 = vpack.c.b16 %v3944, %v3942
    %v3997 = vpack.c.b16 %v3945, %v3943
    %v3998 = vpack.c.b16 %v3948, %v3946
    %v3999 = vpack.c.b16 %v3949, %v3947
    %v4000 = vpack.c.b16 %v3952, %v3950
    %v4001 = vpack.c.b16 %v3953, %v3951
    %v4002 = vpack.c.b16 %v3956, %v3954
    %v4003 = vpack.c.b16 %v3957, %v3955
    %v4004 = vpack.c.b16 %v3960, %v3958
    %v4005 = vpack.c.b16 %v3961, %v3959
    %v4006 = vpack.c.b16 %v3964, %v3962
    %v4007 = vpack.c.b16 %v3965, %v3963
    %v4008 = vpack.c.b16 %v3968, %v3966
    %v4009 = vpack.c.b16 %v3969, %v3967
    %v4010 = vpack.c.b16 %v3972, %v3970
    %v4011 = vpack.c.b16 %v3973, %v3971
    %v4012 = vpack.c.b16 %v3976, %v3974
    %v4013 = vpack.c.b16 %v3977, %v3975
    %v4014 = vpack.c.b16 %v3980, %v3978
    %v4015 = vpack.c.b16 %v3981, %v3979
    %v4016 = vpack.c.b16 %v3984, %v3982
    %v4017 = vpack.c.b16 %v3985, %v3983
    %4050 = vmatprep.subr.bf16.mxu0 %v3987
    %4051 = vmatpush1.bf16.msra.mxu0 %v3986
    %4052 = vmatprep.subr.bf16.mxu0 %v3989
    %4053 = vmatpush1.bf16.msra.mxu0 %v3988
    %4054 = vmatprep.subr.bf16.mxu0 %v3991
    %4055 = vmatpush1.bf16.msra.mxu0 %v3990
    %4056 = vmatprep.subr.bf16.mxu0 %v3993
    %4057 = vmatpush1.bf16.msra.mxu0 %v3992
    %4058 = vmatprep.subr.bf16.mxu0 %v3995
    %4059 = vmatpush1.bf16.msra.mxu0 %v3994
    %4060 = vmatprep.subr.bf16.mxu0 %v3997
    %4061 = vmatpush1.bf16.msra.mxu0 %v3996
    %4062 = vmatprep.subr.bf16.mxu0 %v3999
    %4063 = vmatpush1.bf16.msra.mxu0 %v3998
    %4064 = vmatprep.subr.bf16.mxu0 %v4001
    %4065 = vmatpush1.bf16.msra.mxu0 %v4000
    %4066 = vmatprep.subr.bf16.mxu0 %v4003
    %4067 = vmatpush1.bf16.msra.mxu0 %v4002
    %4068 = vmatprep.subr.bf16.mxu0 %v4005
    %4069 = vmatpush1.bf16.msra.mxu0 %v4004
    %4070 = vmatprep.subr.bf16.mxu0 %v4007
    %4071 = vmatpush1.bf16.msra.mxu0 %v4006
    %4072 = vmatprep.subr.bf16.mxu0 %v4009
    %4073 = vmatpush1.bf16.msra.mxu0 %v4008
    %4074 = vmatprep.subr.bf16.mxu0 %v4011
    %4075 = vmatpush1.bf16.msra.mxu0 %v4010
    %4076 = vmatprep.subr.bf16.mxu0 %v4013
    %4077 = vmatpush1.bf16.msra.mxu0 %v4012
    %4078 = vmatprep.subr.bf16.mxu0 %v4015
    %4079 = vmatpush1.bf16.msra.mxu0 %v4014
    %4080 = vmatprep.subr.bf16.mxu0 %v4017
    %4081 = vmatpush1.bf16.msra.mxu0 %v4016
    %4082 = vmatprep.mubr.bf16.mxu0 %v3082
    %4083 = vmatmul.mubr.bf16.gmra.mrb[0].mxu0 %v3081
    %v4084 = vpop.f32.mrb[0].mxu0
    %v4085 = vadd.f32 0.0, %v4084
    %v4086 = vpop.f32.mrb[0].mxu0
    %v4087 = vadd.f32 0.0, %v4086
    %v4088 = vpop.f32.mrb[0].mxu0
    %v4089 = vpop.f32.mrb[0].mxu0
    %4090 = vdwg.mxu0
    %v4123 = vunpack.c.l.b16 %v3826
    %v4124 = vunpack.c.h.b16 %v3826
    %v4125 = vunpack.c.l.b16 %v3827
    %v4126 = vunpack.c.h.b16 %v3827
    %v4127 = vunpack.c.l.b16 %v3828
    %v4128 = vunpack.c.h.b16 %v3828
    %v4129 = vunpack.c.l.b16 %v3829
    %v4130 = vunpack.c.h.b16 %v3829
    %v4131 = vunpack.c.l.b16 %v3830
    %v4132 = vunpack.c.h.b16 %v3830
    %v4133 = vunpack.c.l.b16 %v3831
    %v4134 = vunpack.c.h.b16 %v3831
    %v4135 = vunpack.c.l.b16 %v3832
    %v4136 = vunpack.c.h.b16 %v3832
    %v4137 = vunpack.c.l.b16 %v3833
    %v4138 = vunpack.c.h.b16 %v3833
    %v4139 = vunpack.c.l.b16 %v3834
    %v4140 = vunpack.c.h.b16 %v3834
    %v4141 = vunpack.c.l.b16 %v3835
    %v4142 = vunpack.c.h.b16 %v3835
    %v4143 = vunpack.c.l.b16 %v3836
    %v4144 = vunpack.c.h.b16 %v3836
    %v4145 = vunpack.c.l.b16 %v3837
    %v4146 = vunpack.c.h.b16 %v3837
    %v4147 = vunpack.c.l.b16 %v3838
    %v4148 = vunpack.c.h.b16 %v3838
    %v4149 = vunpack.c.l.b16 %v3839
    %v4150 = vunpack.c.h.b16 %v3839
    %v4151 = vunpack.c.l.b16 %v3840
    %v4152 = vunpack.c.h.b16 %v3840
    %v4153 = vunpack.c.l.b16 %v3841
    %v4154 = vunpack.c.h.b16 %v3841
    %v4155 = vunpack.c.l.b16 %v3842
    %v4156 = vunpack.c.h.b16 %v3842
    %v4157 = vunpack.c.l.b16 %v3843
    %v4158 = vunpack.c.h.b16 %v3843
    %v4159 = vunpack.c.l.b16 %v3844
    %v4160 = vunpack.c.h.b16 %v3844
    %v4161 = vunpack.c.l.b16 %v3845
    %v4162 = vunpack.c.h.b16 %v3845
    %v4163 = vunpack.c.l.b16 %v3846
    %v4164 = vunpack.c.h.b16 %v3846
    %v4165 = vunpack.c.l.b16 %v3847
    %v4166 = vunpack.c.h.b16 %v3847
    %v4167 = vunpack.c.l.b16 %v3848
    %v4168 = vunpack.c.h.b16 %v3848
    %v4169 = vunpack.c.l.b16 %v3849
    %v4170 = vunpack.c.h.b16 %v3849
    %v4171 = vunpack.c.l.b16 %v3850
    %v4172 = vunpack.c.h.b16 %v3850
    %v4173 = vunpack.c.l.b16 %v3851
    %v4174 = vunpack.c.h.b16 %v3851
    %v4175 = vunpack.c.l.b16 %v3852
    %v4176 = vunpack.c.h.b16 %v3852
    %v4177 = vunpack.c.l.b16 %v3853
    %v4178 = vunpack.c.h.b16 %v3853
    %v4179 = vunpack.c.l.b16 %v3854
    %v4180 = vunpack.c.h.b16 %v3854
    %v4181 = vunpack.c.l.b16 %v3855
    %v4182 = vunpack.c.h.b16 %v3855
    %v4183 = vunpack.c.l.b16 %v3856
    %v4184 = vunpack.c.h.b16 %v3856
    %v4185 = vunpack.c.l.b16 %v3857
    %v4186 = vunpack.c.h.b16 %v3857
    %v4187 = vpack.c.b16 %v4125, %v4123
    %v4188 = vpack.c.b16 %v4126, %v4124
    %v4189 = vpack.c.b16 %v4129, %v4127
    %v4190 = vpack.c.b16 %v4130, %v4128
    %v4191 = vpack.c.b16 %v4133, %v4131
    %v4192 = vpack.c.b16 %v4134, %v4132
    %v4193 = vpack.c.b16 %v4137, %v4135
    %v4194 = vpack.c.b16 %v4138, %v4136
    %v4195 = vpack.c.b16 %v4141, %v4139
    %v4196 = vpack.c.b16 %v4142, %v4140
    %v4197 = vpack.c.b16 %v4145, %v4143
    %v4198 = vpack.c.b16 %v4146, %v4144
    %v4199 = vpack.c.b16 %v4149, %v4147
    %v4200 = vpack.c.b16 %v4150, %v4148
    %v4201 = vpack.c.b16 %v4153, %v4151
    %v4202 = vpack.c.b16 %v4154, %v4152
    %v4203 = vpack.c.b16 %v4157, %v4155
    %v4204 = vpack.c.b16 %v4158, %v4156
    %v4205 = vpack.c.b16 %v4161, %v4159
    %v4206 = vpack.c.b16 %v4162, %v4160
    %v4207 = vpack.c.b16 %v4165, %v4163
    %v4208 = vpack.c.b16 %v4166, %v4164
    %v4209 = vpack.c.b16 %v4169, %v4167
    %v4210 = vpack.c.b16 %v4170, %v4168
    %v4211 = vpack.c.b16 %v4173, %v4171
    %v4212 = vpack.c.b16 %v4174, %v4172
    %v4213 = vpack.c.b16 %v4177, %v4175
    %v4214 = vpack.c.b16 %v4178, %v4176
    %v4215 = vpack.c.b16 %v4181, %v4179
    %v4216 = vpack.c.b16 %v4182, %v4180
    %v4217 = vpack.c.b16 %v4185, %v4183
    %v4218 = vpack.c.b16 %v4186, %v4184
    %4251 = vmatprep.subr.bf16.mxu0 %v4188
    %4252 = vmatpush1.bf16.msra.mxu0 %v4187
    %4253 = vmatprep.subr.bf16.mxu0 %v4190
    %4254 = vmatpush1.bf16.msra.mxu0 %v4189
    %4255 = vmatprep.subr.bf16.mxu0 %v4192
    %4256 = vmatpush1.bf16.msra.mxu0 %v4191
    %4257 = vmatprep.subr.bf16.mxu0 %v4194
    %4258 = vmatpush1.bf16.msra.mxu0 %v4193
    %4259 = vmatprep.subr.bf16.mxu0 %v4196
    %4260 = vmatpush1.bf16.msra.mxu0 %v4195
    %4261 = vmatprep.subr.bf16.mxu0 %v4198
    %4262 = vmatpush1.bf16.msra.mxu0 %v4197
    %4263 = vmatprep.subr.bf16.mxu0 %v4200
    %4264 = vmatpush1.bf16.msra.mxu0 %v4199
    %4265 = vmatprep.subr.bf16.mxu0 %v4202
    %4266 = vmatpush1.bf16.msra.mxu0 %v4201
    %4267 = vmatprep.subr.bf16.mxu0 %v4204
    %4268 = vmatpush1.bf16.msra.mxu0 %v4203
    %4269 = vmatprep.subr.bf16.mxu0 %v4206
    %4270 = vmatpush1.bf16.msra.mxu0 %v4205
    %4271 = vmatprep.subr.bf16.mxu0 %v4208
    %4272 = vmatpush1.bf16.msra.mxu0 %v4207
    %4273 = vmatprep.subr.bf16.mxu0 %v4210
    %4274 = vmatpush1.bf16.msra.mxu0 %v4209
    %4275 = vmatprep.subr.bf16.mxu0 %v4212
    %4276 = vmatpush1.bf16.msra.mxu0 %v4211
    %4277 = vmatprep.subr.bf16.mxu0 %v4214
    %4278 = vmatpush1.bf16.msra.mxu0 %v4213
    %4279 = vmatprep.subr.bf16.mxu0 %v4216
    %4280 = vmatpush1.bf16.msra.mxu0 %v4215
    %4281 = vmatprep.subr.bf16.mxu0 %v4218
    %4282 = vmatpush1.bf16.msra.mxu0 %v4217
    %4283 = vmatprep.mubr.bf16.mxu0 %v3825
    %4284 = vmatmul.mubr.bf16.gmra.mrb[0].mxu0 %v3824
    %v4285 = vpop.f32.mrb[0].mxu0
    %v4286 = vadd.f32 %v4085, %v4285
    %v4287 = vpop.f32.mrb[0].mxu0
    %v4288 = vadd.f32 %v4087, %v4287
    %v4289 = vpop.f32.mrb[0].mxu0
    %v4290 = vpop.f32.mrb[0].mxu0
    %4291 = vdwg.mxu0
    %v4292 = vld [vmem:[#allocation49] sm:$0x3]
    %v4294 = vlaneseq
    %v4295 = vshrl.u32 %v4294, 7
    %v4296 = vsub.s32 0, %v4295
    %v4297 = vrot.slane %v4292, %v4296
    %v4298 = vlaneseq
    %v4299 = vshrl.u32 %v4298, 7
    %v4300 = vsub.s32 1, %v4299
    %v4301 = vrot.slane %v4292, %v4300
    %v4304 = vadd.f32 %v4286, %v4297
    %v4305 = vadd.f32 %v4288, %v4301
    %v4306 = vmax.f32 %v4304, 0.0
    %v4307 = vmax.f32 %v4305, 0.0
    %v4308 = vpack.c.bf16 %v4306, %v4306
    %v4309 = vpack.c.bf16 %v4307, %v4307
    %v4310 = vld [vmem:[#allocation50] sm:$0xf]
    %v4311 = vld [vmem:[#allocation50 + $0x4] sm:$0xf]
    %v4312 = vld [vmem:[#allocation50 + $0x8] sm:$0xf]
    %v4313 = vld [vmem:[#allocation50 + $0xc] sm:$0xf]
    %v4314 = vld [vmem:[#allocation50 + $0x10] sm:$0xf]
    %v4315 = vld [vmem:[#allocation50 + $0x14] sm:$0xf]
    %v4316 = vld [vmem:[#allocation50 + $0x18] sm:$0xf]
    %v4317 = vld [vmem:[#allocation50 + $0x1c] sm:$0xf]
    %v4318 = vld [vmem:[#allocation50 + $0x20] sm:$0xf]
    %v4319 = vld [vmem:[#allocation50 + $0x24] sm:$0xf]
    %v4320 = vld [vmem:[#allocation50 + $0x28] sm:$0xf]
    %v4321 = vld [vmem:[#allocation50 + $0x2c] sm:$0xf]
    %v4322 = vld [vmem:[#allocation50 + $0x30] sm:$0xf]
    %v4323 = vld [vmem:[#allocation50 + $0x34] sm:$0xf]
    %v4324 = vld [vmem:[#allocation50 + $0x38] sm:$0xf]
    %v4325 = vld [vmem:[#allocation50 + $0x3c] sm:$0xf]
    %v4326 = vld [vmem:[#allocation50 + $0x40] sm:$0xf]
    %v4327 = vld [vmem:[#allocation50 + $0x44] sm:$0xf]
    %v4328 = vld [vmem:[#allocation50 + $0x48] sm:$0xf]
    %v4329 = vld [vmem:[#allocation50 + $0x4c] sm:$0xf]
    %v4330 = vld [vmem:[#allocation50 + $0x50] sm:$0xf]
    %v4331 = vld [vmem:[#allocation50 + $0x54] sm:$0xf]
    %v4332 = vld [vmem:[#allocation50 + $0x58] sm:$0xf]
    %v4333 = vld [vmem:[#allocation50 + $0x5c] sm:$0xf]
    %v4334 = vld [vmem:[#allocation50 + $0x60] sm:$0xf]
    %v4335 = vld [vmem:[#allocation50 + $0x64] sm:$0xf]
    %v4336 = vld [vmem:[#allocation50 + $0x68] sm:$0xf]
    %v4337 = vld [vmem:[#allocation50 + $0x6c] sm:$0xf]
    %v4338 = vld [vmem:[#allocation50 + $0x70] sm:$0xf]
    %v4339 = vld [vmem:[#allocation50 + $0x74] sm:$0xf]
    %v4340 = vld [vmem:[#allocation50 + $0x78] sm:$0xf]
    %v4341 = vld [vmem:[#allocation50 + $0x7c] sm:$0xf]
    %v4342 = vld [vmem:[#allocation52] sm:$0x1]
    %v4344 = vlaneseq
    %v4345 = vshrl.u32 %v4344, 7
    %v4346 = vsub.s32 0, %v4345
    %v4347 = vrot.slane %v4342, %v4346
    %v4381 = vunpack.c.l.b16 %v4310
    %v4382 = vunpack.c.l.b16 %v4311
    %v4383 = vunpack.c.l.b16 %v4312
    %v4384 = vunpack.c.l.b16 %v4313
    %v4385 = vunpack.c.l.b16 %v4314
    %v4386 = vunpack.c.l.b16 %v4315
    %v4387 = vunpack.c.l.b16 %v4316
    %v4388 = vunpack.c.l.b16 %v4317
    %v4389 = vunpack.c.l.b16 %v4318
    %v4390 = vunpack.c.l.b16 %v4319
    %v4391 = vunpack.c.l.b16 %v4320
    %v4392 = vunpack.c.l.b16 %v4321
    %v4393 = vunpack.c.l.b16 %v4322
    %v4394 = vunpack.c.l.b16 %v4323
    %v4395 = vunpack.c.l.b16 %v4324
    %v4396 = vunpack.c.l.b16 %v4325
    %v4397 = vunpack.c.l.b16 %v4326
    %v4398 = vunpack.c.l.b16 %v4327
    %v4399 = vunpack.c.l.b16 %v4328
    %v4400 = vunpack.c.l.b16 %v4329
    %v4401 = vunpack.c.l.b16 %v4330
    %v4402 = vunpack.c.l.b16 %v4331
    %v4403 = vunpack.c.l.b16 %v4332
    %v4404 = vunpack.c.l.b16 %v4333
    %v4405 = vunpack.c.l.b16 %v4334
    %v4406 = vunpack.c.l.b16 %v4335
    %v4407 = vunpack.c.l.b16 %v4336
    %v4408 = vunpack.c.l.b16 %v4337
    %v4409 = vunpack.c.l.b16 %v4338
    %v4410 = vunpack.c.l.b16 %v4339
    %v4411 = vunpack.c.l.b16 %v4340
    %v4412 = vunpack.c.l.b16 %v4341
    %v4413 = vpack.c.b16 %v4382, %v4381
    %v4414 = vpack.c.b16 %v4384, %v4383
    %v4415 = vpack.c.b16 %v4386, %v4385
    %v4416 = vpack.c.b16 %v4388, %v4387
    %v4417 = vpack.c.b16 %v4390, %v4389
    %v4418 = vpack.c.b16 %v4392, %v4391
    %v4419 = vpack.c.b16 %v4394, %v4393
    %v4420 = vpack.c.b16 %v4396, %v4395
    %v4421 = vpack.c.b16 %v4398, %v4397
    %v4422 = vpack.c.b16 %v4400, %v4399
    %v4423 = vpack.c.b16 %v4402, %v4401
    %v4424 = vpack.c.b16 %v4404, %v4403
    %v4425 = vpack.c.b16 %v4406, %v4405
    %v4426 = vpack.c.b16 %v4408, %v4407
    %v4427 = vpack.c.b16 %v4410, %v4409
    %v4428 = vpack.c.b16 %v4412, %v4411
    %4445 = vmatprep.subr.bf16.mxu0 0
    %4446 = vmatpush1.bf16.msra.mxu0 %v4413
    %4447 = vmatprep.subr.bf16.mxu0 0
    %4448 = vmatpush1.bf16.msra.mxu0 %v4414
    %4449 = vmatprep.subr.bf16.mxu0 0
    %4450 = vmatpush1.bf16.msra.mxu0 %v4415
    %4451 = vmatprep.subr.bf16.mxu0 0
    %4452 = vmatpush1.bf16.msra.mxu0 %v4416
    %4453 = vmatprep.subr.bf16.mxu0 0
    %4454 = vmatpush1.bf16.msra.mxu0 %v4417
    %4455 = vmatprep.subr.bf16.mxu0 0
    %4456 = vmatpush1.bf16.msra.mxu0 %v4418
    %4457 = vmatprep.subr.bf16.mxu0 0
    %4458 = vmatpush1.bf16.msra.mxu0 %v4419
    %4459 = vmatprep.subr.bf16.mxu0 0
    %4460 = vmatpush1.bf16.msra.mxu0 %v4420
    %4461 = vmatprep.subr.bf16.mxu0 0
    %4462 = vmatpush1.bf16.msra.mxu0 %v4421
    %4463 = vmatprep.subr.bf16.mxu0 0
    %4464 = vmatpush1.bf16.msra.mxu0 %v4422
    %4465 = vmatprep.subr.bf16.mxu0 0
    %4466 = vmatpush1.bf16.msra.mxu0 %v4423
    %4467 = vmatprep.subr.bf16.mxu0 0
    %4468 = vmatpush1.bf16.msra.mxu0 %v4424
    %4469 = vmatprep.subr.bf16.mxu0 0
    %4470 = vmatpush1.bf16.msra.mxu0 %v4425
    %4471 = vmatprep.subr.bf16.mxu0 0
    %4472 = vmatpush1.bf16.msra.mxu0 %v4426
    %4473 = vmatprep.subr.bf16.mxu0 0
    %4474 = vmatpush1.bf16.msra.mxu0 %v4427
    %4475 = vmatprep.subr.bf16.mxu0 0
    %4476 = vmatpush1.bf16.msra.mxu0 %v4428
    %4477 = vmatprep.mubr.bf16.mxu0 %v4309
    %4478 = vmatmul.mubr.bf16.gmra.mrb[0].mxu0 %v4308
    %v4479 = vpop.f32.mrb[0].mxu0
    %v4480 = vadd.f32 %v4347, %v4479
    %v4481 = vpop.f32.mrb[0].mxu0
    %v4482 = vpop.f32.mrb[0].mxu0
    %v4483 = vpop.f32.mrb[0].mxu0
    %4484 = vdwg.mxu0
    %v4485 = vmax.f32 %v4480, 0.0
    %v4486 = vpack.c.bf16 %v4485, %v4485
    %v4487 = vld [vmem:[#allocation53] sm:$0xf]
    %v4488 = vld [vmem:[#allocation53 + $0x4] sm:$0xf]
    %v4489 = vld [vmem:[#allocation53 + $0x8] sm:$0xf]
    %v4490 = vld [vmem:[#allocation53 + $0xc] sm:$0xf]
    %v4491 = vld [vmem:[#allocation53 + $0x10] sm:$0xf]
    %v4492 = vld [vmem:[#allocation53 + $0x14] sm:$0xf]
    %v4493 = vld [vmem:[#allocation53 + $0x18] sm:$0xf]
    %v4494 = vld [vmem:[#allocation53 + $0x1c] sm:$0xf]
    %v4495 = vld [vmem:[#allocation53 + $0x20] sm:$0xf]
    %v4496 = vld [vmem:[#allocation53 + $0x24] sm:$0xf]
    %v4497 = vld [vmem:[#allocation53 + $0x28] sm:$0xf]
    %v4498 = vld [vmem:[#allocation53 + $0x2c] sm:$0xf]
    %v4499 = vld [vmem:[#allocation53 + $0x30] sm:$0xf]
    %v4500 = vld [vmem:[#allocation53 + $0x34] sm:$0xf]
    %v4501 = vld [vmem:[#allocation53 + $0x38] sm:$0xf]
    %v4502 = vld [vmem:[#allocation53 + $0x3c] sm:$0xf]
    %v4503 = vld [vmem:[#allocation55] sm:$0x1]
    %v4505 = vlaneseq
    %v4506 = vshrl.u32 %v4505, 7
    %v4507 = vsub.s32 0, %v4506
    %v4508 = vrot.slane %v4503, %v4507
    %v4526 = vunpack.c.l.b16 %v4487
    %v4527 = vunpack.c.l.b16 %v4488
    %v4528 = vunpack.c.l.b16 %v4489
    %v4529 = vunpack.c.l.b16 %v4490
    %v4530 = vunpack.c.l.b16 %v4491
    %v4531 = vunpack.c.l.b16 %v4492
    %v4532 = vunpack.c.l.b16 %v4493
    %v4533 = vunpack.c.l.b16 %v4494
    %v4534 = vunpack.c.l.b16 %v4495
    %v4535 = vunpack.c.l.b16 %v4496
    %v4536 = vunpack.c.l.b16 %v4497
    %v4537 = vunpack.c.l.b16 %v4498
    %v4538 = vunpack.c.l.b16 %v4499
    %v4539 = vunpack.c.l.b16 %v4500
    %v4540 = vunpack.c.l.b16 %v4501
    %v4541 = vunpack.c.l.b16 %v4502
    %v4542 = vpack.c.b16 %v4527, %v4526
    %v4543 = vpack.c.b16 %v4529, %v4528
    %v4544 = vpack.c.b16 %v4531, %v4530
    %v4545 = vpack.c.b16 %v4533, %v4532
    %v4546 = vpack.c.b16 %v4535, %v4534
    %v4547 = vpack.c.b16 %v4537, %v4536
    %v4548 = vpack.c.b16 %v4539, %v4538
    %v4549 = vpack.c.b16 %v4541, %v4540
    %4558 = vmatprep.subr.bf16.mxu0 0
    %4559 = vmatpush1.bf16.msra.mxu0 %v4542
    %4560 = vmatprep.subr.bf16.mxu0 0
    %4561 = vmatpush1.bf16.msra.mxu0 %v4543
    %4562 = vmatprep.subr.bf16.mxu0 0
    %4563 = vmatpush1.bf16.msra.mxu0 %v4544
    %4564 = vmatprep.subr.bf16.mxu0 0
    %4565 = vmatpush1.bf16.msra.mxu0 %v4545
    %4566 = vmatprep.subr.bf16.mxu0 0
    %4567 = vmatpush1.bf16.msra.mxu0 %v4546
    %4568 = vmatprep.subr.bf16.mxu0 0
    %4569 = vmatpush1.bf16.msra.mxu0 %v4547
    %4570 = vmatprep.subr.bf16.mxu0 0
    %4571 = vmatpush1.bf16.msra.mxu0 %v4548
    %4572 = vmatprep.subr.bf16.mxu0 0
    %4573 = vmatpush1.bf16.msra.mxu0 %v4549
    %4574 = vmatprep.subr.bf16.mxu0 0
    %4575 = vmatpush1.bf16.msra.mxu0 0
    %4576 = vmatprep.subr.bf16.mxu0 0
    %4577 = vmatpush1.bf16.msra.mxu0 0
    %4578 = vmatprep.subr.bf16.mxu0 0
    %4579 = vmatpush1.bf16.msra.mxu0 0
    %4580 = vmatprep.subr.bf16.mxu0 0
    %4581 = vmatpush1.bf16.msra.mxu0 0
    %4582 = vmatprep.subr.bf16.mxu0 0
    %4583 = vmatpush1.bf16.msra.mxu0 0
    %4584 = vmatprep.subr.bf16.mxu0 0
    %4585 = vmatpush1.bf16.msra.mxu0 0
    %4586 = vmatprep.subr.bf16.mxu0 0
    %4587 = vmatpush1.bf16.msra.mxu0 0
    %4588 = vmatprep.subr.bf16.mxu0 0
    %4589 = vmatpush1.bf16.msra.mxu0 0
    %4590 = vmatprep.mubr.bf16.mxu0 0
    %4591 = vmatmul.mubr.bf16.gmra.mrb[0].mxu0 %v4486
    %v4592 = vpop.f32.mrb[0].mxu0
    %v4593 = vadd.f32 %v4508, %v4592
    %v4594 = vpop.f32.mrb[0].mxu0
    %v4595 = vpop.f32.mrb[0].mxu0
    %v4596 = vpop.f32.mrb[0].mxu0
    %4597 = vdwg.mxu0
    %4598 = vst [vmem:[#allocation81] sm:$0xff] %v4593
    %v4599 = vld [vmem:[#allocation56] sm:$0x1]
    %v4600 = vld [vmem:[#allocation58] sm:$0x1]
    %v4602 = vlaneseq
    %v4603 = vshrl.u32 %v4602, 7
    %v4604 = vsub.s32 0, %v4603
    %v4605 = vrot.slane %v4600, %v4604
    %vm4607 = vcmask 7168
    %v4609 = vsel %vm4607, %v3818, 0
    %vm4611 = vcmask 1040384
    %v4613 = vsel %vm4611, %v4599, 0
    %4615 = vmatprep.subr.mxu0 0.0
    %4616 = vmatpush1.msra.mxu0 %v4613
    %4617 = vmatprep.subr.mxu0 0.0
    %4618 = vmatpush1.msra.mxu0 0.0
    %4619 = vmatprep.subr.mxu0 0.0
    %4620 = vmatpush1.msra.mxu0 0.0
    %4621 = vmatprep.subr.mxu0 0.0
    %4622 = vmatpush1.msra.mxu0 0.0
    %4623 = vmatprep.subr.mxu0 0.0
    %4624 = vmatpush1.msra.mxu0 0.0
    %4625 = vmatprep.subr.mxu0 0.0
    %4626 = vmatpush1.msra.mxu0 0.0
    %4627 = vmatprep.subr.mxu0 0.0
    %4628 = vmatpush1.msra.mxu0 0.0
    %4629 = vmatprep.subr.mxu0 0.0
    %4630 = vmatpush1.msra.mxu0 0.0
    %4631 = vmatprep.subr.mxu0 0.0
    %4632 = vmatpush1.msra.mxu0 0.0
    %4633 = vmatprep.subr.mxu0 0.0
    %4634 = vmatpush1.msra.mxu0 0.0
    %4635 = vmatprep.subr.mxu0 0.0
    %4636 = vmatpush1.msra.mxu0 0.0
    %4637 = vmatprep.subr.mxu0 0.0
    %4638 = vmatpush1.msra.mxu0 0.0
    %4639 = vmatprep.subr.mxu0 0.0
    %4640 = vmatpush1.msra.mxu0 0.0
    %4641 = vmatprep.subr.mxu0 0.0
    %4642 = vmatpush1.msra.mxu0 0.0
    %4643 = vmatprep.subr.mxu0 0.0
    %4644 = vmatpush1.msra.mxu0 0.0
    %4645 = vmatprep.subr.mxu0 0.0
    %4646 = vmatpush1.msra.mxu0 0.0
    %4647 = vmatprep.subr.mxu0 0.0
    %4648 = vmatpush1.msra.mxu0 0.0
    %4649 = vmatprep.subr.mxu0 0.0
    %4650 = vmatpush1.msra.mxu0 0.0
    %4651 = vmatprep.subr.mxu0 0.0
    %4652 = vmatpush1.msra.mxu0 0.0
    %4653 = vmatprep.subr.mxu0 0.0
    %4654 = vmatpush1.msra.mxu0 0.0
    %4655 = vmatprep.subr.mxu0 0.0
    %4656 = vmatpush1.msra.mxu0 0.0
    %4657 = vmatprep.subr.mxu0 0.0
    %4658 = vmatpush1.msra.mxu0 0.0
    %4659 = vmatprep.subr.mxu0 0.0
    %4660 = vmatpush1.msra.mxu0 0.0
    %4661 = vmatprep.subr.mxu0 0.0
    %4662 = vmatpush1.msra.mxu0 0.0
    %4663 = vmatprep.subr.mxu0 0.0
    %4664 = vmatpush1.msra.mxu0 0.0
    %4665 = vmatprep.subr.mxu0 0.0
    %4666 = vmatpush1.msra.mxu0 0.0
    %4667 = vmatprep.subr.mxu0 0.0
    %4668 = vmatpush1.msra.mxu0 0.0
    %4669 = vmatprep.subr.mxu0 0.0
    %4670 = vmatpush1.msra.mxu0 0.0
    %4671 = vmatprep.subr.mxu0 0.0
    %4672 = vmatpush1.msra.mxu0 0.0
    %4673 = vmatprep.subr.mxu0 0.0
    %4674 = vmatpush1.msra.mxu0 0.0
    %4675 = vmatprep.subr.mxu0 0.0
    %4676 = vmatpush1.msra.mxu0 0.0
    %4677 = vmatprep.subr.mxu0 0.0
    %4678 = vmatpush1.msra.mxu0 0.0
    %4679 = vmatprep.mubr.f32.mxu0 0.0
    %4680 = vmatmul.mubr.f32.gmra.mrb[0].mxu0 %v4609
    %v4681 = vpop.f32.mrb[0].mxu0
    %v4682 = vadd.f32 %v4605, %v4681
    %v4683 = vpop.f32.mrb[0].mxu0
    %4684 = vdwg.mxu0
    %v4685 = vmax.f32 %v4682, 0.0
    %v4686 = vld [vmem:[#allocation59] sm:$0xf]
    %v4687 = vld [vmem:[#allocation61] sm:$0x1]
    %v4689 = vlaneseq
    %v4690 = vshrl.u32 %v4689, 7
    %v4691 = vsub.s32 0, %v4690
    %v4692 = vrot.slane %v4687, %v4691
    %vm4694 = vcmask 31744
    %v4696 = vsel %vm4694, %v4685, 0
    %v4699 = vsel %vm1245, %v4686, 0
    %4701 = vmatprep.subr.mxu0 0.0
    %4702 = vmatpush1.msra.mxu0 %v4699
    %4703 = vmatprep.subr.mxu0 0.0
    %4704 = vmatpush1.msra.mxu0 0.0
    %4705 = vmatprep.subr.mxu0 0.0
    %4706 = vmatpush1.msra.mxu0 0.0
    %4707 = vmatprep.subr.mxu0 0.0
    %4708 = vmatpush1.msra.mxu0 0.0
    %4709 = vmatprep.subr.mxu0 0.0
    %4710 = vmatpush1.msra.mxu0 0.0
    %4711 = vmatprep.subr.mxu0 0.0
    %4712 = vmatpush1.msra.mxu0 0.0
    %4713 = vmatprep.subr.mxu0 0.0
    %4714 = vmatpush1.msra.mxu0 0.0
    %4715 = vmatprep.subr.mxu0 0.0
    %4716 = vmatpush1.msra.mxu0 0.0
    %4717 = vmatprep.subr.mxu0 0.0
    %4718 = vmatpush1.msra.mxu0 0.0
    %4719 = vmatprep.subr.mxu0 0.0
    %4720 = vmatpush1.msra.mxu0 0.0
    %4721 = vmatprep.subr.mxu0 0.0
    %4722 = vmatpush1.msra.mxu0 0.0
    %4723 = vmatprep.subr.mxu0 0.0
    %4724 = vmatpush1.msra.mxu0 0.0
    %4725 = vmatprep.subr.mxu0 0.0
    %4726 = vmatpush1.msra.mxu0 0.0
    %4727 = vmatprep.subr.mxu0 0.0
    %4728 = vmatpush1.msra.mxu0 0.0
    %4729 = vmatprep.subr.mxu0 0.0
    %4730 = vmatpush1.msra.mxu0 0.0
    %4731 = vmatprep.subr.mxu0 0.0
    %4732 = vmatpush1.msra.mxu0 0.0
    %4733 = vmatprep.subr.mxu0 0.0
    %4734 = vmatpush1.msra.mxu0 0.0
    %4735 = vmatprep.subr.mxu0 0.0
    %4736 = vmatpush1.msra.mxu0 0.0
    %4737 = vmatprep.subr.mxu0 0.0
    %4738 = vmatpush1.msra.mxu0 0.0
    %4739 = vmatprep.subr.mxu0 0.0
    %4740 = vmatpush1.msra.mxu0 0.0
    %4741 = vmatprep.subr.mxu0 0.0
    %4742 = vmatpush1.msra.mxu0 0.0
    %4743 = vmatprep.subr.mxu0 0.0
    %4744 = vmatpush1.msra.mxu0 0.0
    %4745 = vmatprep.subr.mxu0 0.0
    %4746 = vmatpush1.msra.mxu0 0.0
    %4747 = vmatprep.subr.mxu0 0.0
    %4748 = vmatpush1.msra.mxu0 0.0
    %4749 = vmatprep.subr.mxu0 0.0
    %4750 = vmatpush1.msra.mxu0 0.0
    %4751 = vmatprep.subr.mxu0 0.0
    %4752 = vmatpush1.msra.mxu0 0.0
    %4753 = vmatprep.subr.mxu0 0.0
    %4754 = vmatpush1.msra.mxu0 0.0
    %4755 = vmatprep.subr.mxu0 0.0
    %4756 = vmatpush1.msra.mxu0 0.0
    %4757 = vmatprep.subr.mxu0 0.0
    %4758 = vmatpush1.msra.mxu0 0.0
    %4759 = vmatprep.subr.mxu0 0.0
    %4760 = vmatpush1.msra.mxu0 0.0
    %4761 = vmatprep.subr.mxu0 0.0
    %4762 = vmatpush1.msra.mxu0 0.0
    %4763 = vmatprep.subr.mxu0 0.0
    %4764 = vmatpush1.msra.mxu0 0.0
    %4765 = vmatprep.mubr.f32.mxu0 0.0
    %4766 = vmatmul.mubr.f32.gmra.mrb[0].mxu0 %v4696
    %v4767 = vpop.f32.mrb[0].mxu0
    %v4768 = vadd.f32 %v4692, %v4767
    %v4769 = vpop.f32.mrb[0].mxu0
    %4770 = vdwg.mxu0
    %v4771 = vmax.f32 %v4768, 0.0
    %v4772 = vld [vmem:[#allocation62] sm:$0xff]
    %v4773 = vld [vmem:[#allocation62 + $0x8] sm:$0xff]
    %v4774 = vld [vmem:[#allocation64] sm:$0x1]
    %v4776 = vlaneseq
    %v4777 = vshrl.u32 %v4776, 7
    %v4778 = vsub.s32 0, %v4777
    %v4779 = vrot.slane %v4774, %v4778
    %vm4781 = vcmask 130048
    %v4783 = vsel %vm4781, %v4771, 0
    %4785 = vmatprep.subr.mxu0 0.0
    %4786 = vmatpush1.msra.mxu0 %v4772
    %4787 = vmatprep.subr.mxu0 0.0
    %4788 = vmatpush1.msra.mxu0 %v4773
    %4789 = vmatprep.subr.mxu0 0.0
    %4790 = vmatpush1.msra.mxu0 0.0
    %4791 = vmatprep.subr.mxu0 0.0
    %4792 = vmatpush1.msra.mxu0 0.0
    %4793 = vmatprep.subr.mxu0 0.0
    %4794 = vmatpush1.msra.mxu0 0.0
    %4795 = vmatprep.subr.mxu0 0.0
    %4796 = vmatpush1.msra.mxu0 0.0
    %4797 = vmatprep.subr.mxu0 0.0
    %4798 = vmatpush1.msra.mxu0 0.0
    %4799 = vmatprep.subr.mxu0 0.0
    %4800 = vmatpush1.msra.mxu0 0.0
    %4801 = vmatprep.subr.mxu0 0.0
    %4802 = vmatpush1.msra.mxu0 0.0
    %4803 = vmatprep.subr.mxu0 0.0
    %4804 = vmatpush1.msra.mxu0 0.0
    %4805 = vmatprep.subr.mxu0 0.0
    %4806 = vmatpush1.msra.mxu0 0.0
    %4807 = vmatprep.subr.mxu0 0.0
    %4808 = vmatpush1.msra.mxu0 0.0
    %4809 = vmatprep.subr.mxu0 0.0
    %4810 = vmatpush1.msra.mxu0 0.0
    %4811 = vmatprep.subr.mxu0 0.0
    %4812 = vmatpush1.msra.mxu0 0.0
    %4813 = vmatprep.subr.mxu0 0.0
    %4814 = vmatpush1.msra.mxu0 0.0
    %4815 = vmatprep.subr.mxu0 0.0
    %4816 = vmatpush1.msra.mxu0 0.0
    %4817 = vmatprep.subr.mxu0 0.0
    %4818 = vmatpush1.msra.mxu0 0.0
    %4819 = vmatprep.subr.mxu0 0.0
    %4820 = vmatpush1.msra.mxu0 0.0
    %4821 = vmatprep.subr.mxu0 0.0
    %4822 = vmatpush1.msra.mxu0 0.0
    %4823 = vmatprep.subr.mxu0 0.0
    %4824 = vmatpush1.msra.mxu0 0.0
    %4825 = vmatprep.subr.mxu0 0.0
    %4826 = vmatpush1.msra.mxu0 0.0
    %4827 = vmatprep.subr.mxu0 0.0
    %4828 = vmatpush1.msra.mxu0 0.0
    %4829 = vmatprep.subr.mxu0 0.0
    %4830 = vmatpush1.msra.mxu0 0.0
    %4831 = vmatprep.subr.mxu0 0.0
    %4832 = vmatpush1.msra.mxu0 0.0
    %4833 = vmatprep.subr.mxu0 0.0
    %4834 = vmatpush1.msra.mxu0 0.0
    %4835 = vmatprep.subr.mxu0 0.0
    %4836 = vmatpush1.msra.mxu0 0.0
    %4837 = vmatprep.subr.mxu0 0.0
    %4838 = vmatpush1.msra.mxu0 0.0
    %4839 = vmatprep.subr.mxu0 0.0
    %4840 = vmatpush1.msra.mxu0 0.0
    %4841 = vmatprep.subr.mxu0 0.0
    %4842 = vmatpush1.msra.mxu0 0.0
    %4843 = vmatprep.subr.mxu0 0.0
    %4844 = vmatpush1.msra.mxu0 0.0
    %4845 = vmatprep.subr.mxu0 0.0
    %4846 = vmatpush1.msra.mxu0 0.0
    %4847 = vmatprep.subr.mxu0 0.0
    %4848 = vmatpush1.msra.mxu0 0.0
    %4849 = vmatprep.mubr.f32.mxu0 0.0
    %4850 = vmatmul.mubr.f32.gmra.mrb[0].mxu0 %v4783
    %v4851 = vpop.f32.mrb[0].mxu0
    %v4852 = vadd.f32 %v4779, %v4851
    %v4853 = vpop.f32.mrb[0].mxu0
    %4854 = vdwg.mxu0
    %v4855 = vpack.c.bf16 %v1093, %v1093
    %v4856 = vpack.c.bf16 %v1095, %v1095
    %v4857 = vld [vmem:[#allocation65] sm:$0xff]
    %v4858 = vld [vmem:[#allocation65 + $0x8] sm:$0xff]
    %v4859 = vld [vmem:[#allocation65 + $0x10] sm:$0xff]
    %v4860 = vld [vmem:[#allocation65 + $0x18] sm:$0xff]
    %v4861 = vld [vmem:[#allocation65 + $0x20] sm:$0xff]
    %v4862 = vld [vmem:[#allocation65 + $0x28] sm:$0xff]
    %v4863 = vld [vmem:[#allocation65 + $0x30] sm:$0xff]
    %v4864 = vld [vmem:[#allocation65 + $0x38] sm:$0xff]
    %v4865 = vld [vmem:[#allocation65 + $0x40] sm:$0xff]
    %v4866 = vld [vmem:[#allocation65 + $0x48] sm:$0xff]
    %v4867 = vld [vmem:[#allocation65 + $0x50] sm:$0xff]
    %v4868 = vld [vmem:[#allocation65 + $0x58] sm:$0xff]
    %v4869 = vld [vmem:[#allocation65 + $0x60] sm:$0xff]
    %v4870 = vld [vmem:[#allocation65 + $0x68] sm:$0xff]
    %v4871 = vld [vmem:[#allocation65 + $0x70] sm:$0xff]
    %v4872 = vld [vmem:[#allocation65 + $0x78] sm:$0xff]
    %v4873 = vld [vmem:[#allocation65 + $0x80] sm:$0xff]
    %v4874 = vld [vmem:[#allocation65 + $0x88] sm:$0xff]
    %v4875 = vld [vmem:[#allocation65 + $0x90] sm:$0xff]
    %v4876 = vld [vmem:[#allocation65 + $0x98] sm:$0xff]
    %v4877 = vld [vmem:[#allocation65 + $0xa0] sm:$0xff]
    %v4878 = vld [vmem:[#allocation65 + $0xa8] sm:$0xff]
    %v4879 = vld [vmem:[#allocation65 + $0xb0] sm:$0xff]
    %v4880 = vld [vmem:[#allocation65 + $0xb8] sm:$0xff]
    %v4881 = vld [vmem:[#allocation65 + $0xc0] sm:$0xff]
    %v4882 = vld [vmem:[#allocation65 + $0xc8] sm:$0xff]
    %v4883 = vld [vmem:[#allocation65 + $0xd0] sm:$0xff]
    %v4884 = vld [vmem:[#allocation65 + $0xd8] sm:$0xff]
    %v4885 = vld [vmem:[#allocation65 + $0xe0] sm:$0xff]
    %v4886 = vld [vmem:[#allocation65 + $0xe8] sm:$0xff]
    %v4887 = vld [vmem:[#allocation65 + $0xf0] sm:$0xff]
    %v4888 = vld [vmem:[#allocation65 + $0xf8] sm:$0xff]
    %v4889 = vld [vmem:[#allocation65 + $0x100] sm:$0xff]
    %v4890 = vld [vmem:[#allocation65 + $0x108] sm:$0xff]
    %v4891 = vld [vmem:[#allocation65 + $0x110] sm:$0xff]
    %v4892 = vld [vmem:[#allocation65 + $0x118] sm:$0xff]
    %v4893 = vld [vmem:[#allocation65 + $0x120] sm:$0xff]
    %v4894 = vld [vmem:[#allocation65 + $0x128] sm:$0xff]
    %v4895 = vld [vmem:[#allocation65 + $0x130] sm:$0xff]
    %v4896 = vld [vmem:[#allocation65 + $0x138] sm:$0xff]
    %v4897 = vld [vmem:[#allocation65 + $0x140] sm:$0xff]
    %v4898 = vld [vmem:[#allocation65 + $0x148] sm:$0xff]
    %v4899 = vld [vmem:[#allocation65 + $0x150] sm:$0xff]
    %v4900 = vld [vmem:[#allocation65 + $0x158] sm:$0xff]
    %v4901 = vld [vmem:[#allocation65 + $0x160] sm:$0xff]
    %v4902 = vld [vmem:[#allocation65 + $0x168] sm:$0xff]
    %v4903 = vld [vmem:[#allocation65 + $0x170] sm:$0xff]
    %v4904 = vld [vmem:[#allocation65 + $0x178] sm:$0xff]
    %v4905 = vld [vmem:[#allocation65 + $0x180] sm:$0xff]
    %v4906 = vld [vmem:[#allocation65 + $0x188] sm:$0xff]
    %v4907 = vld [vmem:[#allocation65 + $0x190] sm:$0xff]
    %v4908 = vld [vmem:[#allocation65 + $0x198] sm:$0xff]
    %v4909 = vld [vmem:[#allocation65 + $0x1a0] sm:$0xff]
    %v4910 = vld [vmem:[#allocation65 + $0x1a8] sm:$0xff]
    %v4911 = vld [vmem:[#allocation65 + $0x1b0] sm:$0xff]
    %v4912 = vld [vmem:[#allocation65 + $0x1b8] sm:$0xff]
    %v4913 = vld [vmem:[#allocation65 + $0x1c0] sm:$0xff]
    %v4914 = vld [vmem:[#allocation65 + $0x1c8] sm:$0xff]
    %v4915 = vld [vmem:[#allocation65 + $0x1d0] sm:$0xff]
    %v4916 = vld [vmem:[#allocation65 + $0x1d8] sm:$0xff]
    %v4917 = vld [vmem:[#allocation65 + $0x1e0] sm:$0xff]
    %v4918 = vld [vmem:[#allocation65 + $0x1e8] sm:$0xff]
    %v4919 = vld [vmem:[#allocation65 + $0x1f0] sm:$0xff]
    %v4920 = vld [vmem:[#allocation65 + $0x1f8] sm:$0xff]
    %v4921 = vld [vmem:[#allocation65 + $0x200] sm:$0xff]
    %v4922 = vld [vmem:[#allocation65 + $0x208] sm:$0xff]
    %v4923 = vld [vmem:[#allocation65 + $0x210] sm:$0xff]
    %v4924 = vld [vmem:[#allocation65 + $0x218] sm:$0xff]
    %v4925 = vld [vmem:[#allocation65 + $0x220] sm:$0xff]
    %v4926 = vld [vmem:[#allocation65 + $0x228] sm:$0xff]
    %v4927 = vld [vmem:[#allocation65 + $0x230] sm:$0xff]
    %v4928 = vld [vmem:[#allocation65 + $0x238] sm:$0xff]
    %v4929 = vld [vmem:[#allocation65 + $0x240] sm:$0xff]
    %v4930 = vld [vmem:[#allocation65 + $0x248] sm:$0xff]
    %v4931 = vld [vmem:[#allocation65 + $0x250] sm:$0xff]
    %v4932 = vld [vmem:[#allocation65 + $0x258] sm:$0xff]
    %v4933 = vld [vmem:[#allocation65 + $0x260] sm:$0xff]
    %v4934 = vld [vmem:[#allocation65 + $0x268] sm:$0xff]
    %v4935 = vld [vmem:[#allocation65 + $0x270] sm:$0xff]
    %v4936 = vld [vmem:[#allocation65 + $0x278] sm:$0xff]
    %v4937 = vld [vmem:[#allocation65 + $0x280] sm:$0xff]
    %v4938 = vld [vmem:[#allocation65 + $0x288] sm:$0xff]
    %v4939 = vld [vmem:[#allocation65 + $0x290] sm:$0xff]
    %v4940 = vld [vmem:[#allocation65 + $0x298] sm:$0xff]
    %v4941 = vld [vmem:[#allocation65 + $0x2a0] sm:$0xff]
    %v4942 = vld [vmem:[#allocation65 + $0x2a8] sm:$0xff]
    %v4943 = vld [vmem:[#allocation65 + $0x2b0] sm:$0xff]
    %v4944 = vld [vmem:[#allocation65 + $0x2b8] sm:$0xff]
    %v4945 = vld [vmem:[#allocation65 + $0x2c0] sm:$0xff]
    %v4946 = vld [vmem:[#allocation65 + $0x2c8] sm:$0xff]
    %v4947 = vld [vmem:[#allocation65 + $0x2d0] sm:$0xff]
    %v4948 = vld [vmem:[#allocation65 + $0x2d8] sm:$0xff]
    %v4949 = vld [vmem:[#allocation65 + $0x2e0] sm:$0xff]
    %v4950 = vld [vmem:[#allocation65 + $0x2e8] sm:$0xff]
    %v4951 = vld [vmem:[#allocation65 + $0x2f0] sm:$0xff]
    %v4952 = vld [vmem:[#allocation65 + $0x2f8] sm:$0xff]
    %v4953 = vld [vmem:[#allocation65 + $0x300] sm:$0xff]
    %v4954 = vld [vmem:[#allocation65 + $0x308] sm:$0xff]
    %v4955 = vld [vmem:[#allocation65 + $0x310] sm:$0xff]
    %v4956 = vld [vmem:[#allocation65 + $0x318] sm:$0xff]
    %v4957 = vld [vmem:[#allocation65 + $0x320] sm:$0xff]
    %v4958 = vld [vmem:[#allocation65 + $0x328] sm:$0xff]
    %v4959 = vld [vmem:[#allocation65 + $0x330] sm:$0xff]
    %v4960 = vld [vmem:[#allocation65 + $0x338] sm:$0xff]
    %v4961 = vld [vmem:[#allocation65 + $0x340] sm:$0xff]
    %v4962 = vld [vmem:[#allocation65 + $0x348] sm:$0xff]
    %v4963 = vld [vmem:[#allocation65 + $0x350] sm:$0xff]
    %v4964 = vld [vmem:[#allocation65 + $0x358] sm:$0xff]
    %v4965 = vld [vmem:[#allocation65 + $0x360] sm:$0xff]
    %v4966 = vld [vmem:[#allocation65 + $0x368] sm:$0xff]
    %v4967 = vld [vmem:[#allocation65 + $0x370] sm:$0xff]
    %v4968 = vld [vmem:[#allocation65 + $0x378] sm:$0xff]
    %v4969 = vld [vmem:[#allocation65 + $0x380] sm:$0xff]
    %v4970 = vld [vmem:[#allocation65 + $0x388] sm:$0xff]
    %v4971 = vld [vmem:[#allocation65 + $0x390] sm:$0xff]
    %v4972 = vld [vmem:[#allocation65 + $0x398] sm:$0xff]
    %v4973 = vld [vmem:[#allocation65 + $0x3a0] sm:$0xff]
    %v4974 = vld [vmem:[#allocation65 + $0x3a8] sm:$0xff]
    %v4975 = vld [vmem:[#allocation65 + $0x3b0] sm:$0xff]
    %v4976 = vld [vmem:[#allocation65 + $0x3b8] sm:$0xff]
    %v4977 = vld [vmem:[#allocation65 + $0x3c0] sm:$0xff]
    %v4978 = vld [vmem:[#allocation65 + $0x3c8] sm:$0xff]
    %v4979 = vld [vmem:[#allocation65 + $0x3d0] sm:$0xff]
    %v4980 = vld [vmem:[#allocation65 + $0x3d8] sm:$0xff]
    %v4981 = vld [vmem:[#allocation65 + $0x3e0] sm:$0xff]
    %v4982 = vld [vmem:[#allocation65 + $0x3e8] sm:$0xff]
    %v4983 = vld [vmem:[#allocation65 + $0x3f0] sm:$0xff]
    %v4984 = vld [vmem:[#allocation65 + $0x3f8] sm:$0xff]
    %v4985 = vld [vmem:[#allocation67] sm:$0xff]
    %v4986 = vld [vmem:[#allocation67 + $0x8] sm:$0xff]
    %v4987 = vld [vmem:[#allocation67 + $0x10] sm:$0xff]
    %v4988 = vld [vmem:[#allocation67 + $0x18] sm:$0xff]
    %v4989 = vld [vmem:[#allocation67 + $0x20] sm:$0xff]
    %v4990 = vld [vmem:[#allocation67 + $0x28] sm:$0xff]
    %v4991 = vld [vmem:[#allocation67 + $0x30] sm:$0xff]
    %v4992 = vld [vmem:[#allocation67 + $0x38] sm:$0xff]
    %v4993 = vld [vmem:[#allocation67 + $0x40] sm:$0xff]
    %v4994 = vld [vmem:[#allocation67 + $0x48] sm:$0xff]
    %v4995 = vld [vmem:[#allocation67 + $0x50] sm:$0xff]
    %v4996 = vld [vmem:[#allocation67 + $0x58] sm:$0xff]
    %v4997 = vld [vmem:[#allocation67 + $0x60] sm:$0xff]
    %v4998 = vld [vmem:[#allocation67 + $0x68] sm:$0xff]
    %v4999 = vld [vmem:[#allocation67 + $0x70] sm:$0xff]
    %v5000 = vld [vmem:[#allocation67 + $0x78] sm:$0xff]
    %v5001 = vld [vmem:[#allocation67 + $0x80] sm:$0xff]
    %v5002 = vld [vmem:[#allocation67 + $0x88] sm:$0xff]
    %v5003 = vld [vmem:[#allocation67 + $0x90] sm:$0xff]
    %v5004 = vld [vmem:[#allocation67 + $0x98] sm:$0xff]
    %v5005 = vld [vmem:[#allocation67 + $0xa0] sm:$0xff]
    %v5006 = vld [vmem:[#allocation67 + $0xa8] sm:$0xff]
    %v5007 = vld [vmem:[#allocation67 + $0xb0] sm:$0xff]
    %v5008 = vld [vmem:[#allocation67 + $0xb8] sm:$0xff]
    %v5009 = vld [vmem:[#allocation67 + $0xc0] sm:$0xff]
    %v5010 = vld [vmem:[#allocation67 + $0xc8] sm:$0xff]
    %v5011 = vld [vmem:[#allocation67 + $0xd0] sm:$0xff]
    %v5012 = vld [vmem:[#allocation67 + $0xd8] sm:$0xff]
    %v5013 = vld [vmem:[#allocation67 + $0xe0] sm:$0xff]
    %v5014 = vld [vmem:[#allocation67 + $0xe8] sm:$0xff]
    %v5015 = vld [vmem:[#allocation67 + $0xf0] sm:$0xff]
    %v5016 = vld [vmem:[#allocation67 + $0xf8] sm:$0xff]
    %v5017 = vld [vmem:[#allocation67 + $0x100] sm:$0xff]
    %v5018 = vld [vmem:[#allocation67 + $0x108] sm:$0xff]
    %v5019 = vld [vmem:[#allocation67 + $0x110] sm:$0xff]
    %v5020 = vld [vmem:[#allocation67 + $0x118] sm:$0xff]
    %v5021 = vld [vmem:[#allocation67 + $0x120] sm:$0xff]
    %v5022 = vld [vmem:[#allocation67 + $0x128] sm:$0xff]
    %v5023 = vld [vmem:[#allocation67 + $0x130] sm:$0xff]
    %v5024 = vld [vmem:[#allocation67 + $0x138] sm:$0xff]
    %v5025 = vld [vmem:[#allocation67 + $0x140] sm:$0xff]
    %v5026 = vld [vmem:[#allocation67 + $0x148] sm:$0xff]
    %v5027 = vld [vmem:[#allocation67 + $0x150] sm:$0xff]
    %v5028 = vld [vmem:[#allocation67 + $0x158] sm:$0xff]
    %v5029 = vld [vmem:[#allocation67 + $0x160] sm:$0xff]
    %v5030 = vld [vmem:[#allocation67 + $0x168] sm:$0xff]
    %v5031 = vld [vmem:[#allocation67 + $0x170] sm:$0xff]
    %v5032 = vld [vmem:[#allocation67 + $0x178] sm:$0xff]
    %v5033 = vld [vmem:[#allocation67 + $0x180] sm:$0xff]
    %v5034 = vld [vmem:[#allocation67 + $0x188] sm:$0xff]
    %v5035 = vld [vmem:[#allocation67 + $0x190] sm:$0xff]
    %v5036 = vld [vmem:[#allocation67 + $0x198] sm:$0xff]
    %v5037 = vld [vmem:[#allocation67 + $0x1a0] sm:$0xff]
    %v5038 = vld [vmem:[#allocation67 + $0x1a8] sm:$0xff]
    %v5039 = vld [vmem:[#allocation67 + $0x1b0] sm:$0xff]
    %v5040 = vld [vmem:[#allocation67 + $0x1b8] sm:$0xff]
    %v5041 = vld [vmem:[#allocation67 + $0x1c0] sm:$0xff]
    %v5042 = vld [vmem:[#allocation67 + $0x1c8] sm:$0xff]
    %v5043 = vld [vmem:[#allocation67 + $0x1d0] sm:$0xff]
    %v5044 = vld [vmem:[#allocation67 + $0x1d8] sm:$0xff]
    %v5045 = vld [vmem:[#allocation67 + $0x1e0] sm:$0xff]
    %v5046 = vld [vmem:[#allocation67 + $0x1e8] sm:$0xff]
    %v5047 = vld [vmem:[#allocation67 + $0x1f0] sm:$0xff]
    %v5048 = vld [vmem:[#allocation67 + $0x1f8] sm:$0xff]
    %v5049 = vld [vmem:[#allocation67 + $0x200] sm:$0xff]
    %v5050 = vld [vmem:[#allocation67 + $0x208] sm:$0xff]
    %v5051 = vld [vmem:[#allocation67 + $0x210] sm:$0xff]
    %v5052 = vld [vmem:[#allocation67 + $0x218] sm:$0xff]
    %v5053 = vld [vmem:[#allocation67 + $0x220] sm:$0xff]
    %v5054 = vld [vmem:[#allocation67 + $0x228] sm:$0xff]
    %v5055 = vld [vmem:[#allocation67 + $0x230] sm:$0xff]
    %v5056 = vld [vmem:[#allocation67 + $0x238] sm:$0xff]
    %v5057 = vld [vmem:[#allocation67 + $0x240] sm:$0xff]
    %v5058 = vld [vmem:[#allocation67 + $0x248] sm:$0xff]
    %v5059 = vld [vmem:[#allocation67 + $0x250] sm:$0xff]
    %v5060 = vld [vmem:[#allocation67 + $0x258] sm:$0xff]
    %v5061 = vld [vmem:[#allocation67 + $0x260] sm:$0xff]
    %v5062 = vld [vmem:[#allocation67 + $0x268] sm:$0xff]
    %v5063 = vld [vmem:[#allocation67 + $0x270] sm:$0xff]
    %v5064 = vld [vmem:[#allocation67 + $0x278] sm:$0xff]
    %v5065 = vld [vmem:[#allocation67 + $0x280] sm:$0xff]
    %v5066 = vld [vmem:[#allocation67 + $0x288] sm:$0xff]
    %v5067 = vld [vmem:[#allocation67 + $0x290] sm:$0xff]
    %v5068 = vld [vmem:[#allocation67 + $0x298] sm:$0xff]
    %v5069 = vld [vmem:[#allocation67 + $0x2a0] sm:$0xff]
    %v5070 = vld [vmem:[#allocation67 + $0x2a8] sm:$0xff]
    %v5071 = vld [vmem:[#allocation67 + $0x2b0] sm:$0xff]
    %v5072 = vld [vmem:[#allocation67 + $0x2b8] sm:$0xff]
    %v5073 = vld [vmem:[#allocation67 + $0x2c0] sm:$0xff]
    %v5074 = vld [vmem:[#allocation67 + $0x2c8] sm:$0xff]
    %v5075 = vld [vmem:[#allocation67 + $0x2d0] sm:$0xff]
    %v5076 = vld [vmem:[#allocation67 + $0x2d8] sm:$0xff]
    %v5077 = vld [vmem:[#allocation67 + $0x2e0] sm:$0xff]
    %v5078 = vld [vmem:[#allocation67 + $0x2e8] sm:$0xff]
    %v5079 = vld [vmem:[#allocation67 + $0x2f0] sm:$0xff]
    %v5080 = vld [vmem:[#allocation67 + $0x2f8] sm:$0xff]
    %v5081 = vld [vmem:[#allocation67 + $0x300] sm:$0xff]
    %v5082 = vld [vmem:[#allocation67 + $0x308] sm:$0xff]
    %v5083 = vld [vmem:[#allocation67 + $0x310] sm:$0xff]
    %v5084 = vld [vmem:[#allocation67 + $0x318] sm:$0xff]
    %v5085 = vld [vmem:[#allocation67 + $0x320] sm:$0xff]
    %v5086 = vld [vmem:[#allocation67 + $0x328] sm:$0xff]
    %v5087 = vld [vmem:[#allocation67 + $0x330] sm:$0xff]
    %v5088 = vld [vmem:[#allocation67 + $0x338] sm:$0xff]
    %v5089 = vld [vmem:[#allocation67 + $0x340] sm:$0xff]
    %v5090 = vld [vmem:[#allocation67 + $0x348] sm:$0xff]
    %v5091 = vld [vmem:[#allocation67 + $0x350] sm:$0xff]
    %v5092 = vld [vmem:[#allocation67 + $0x358] sm:$0xff]
    %v5093 = vld [vmem:[#allocation67 + $0x360] sm:$0xff]
    %v5094 = vld [vmem:[#allocation67 + $0x368] sm:$0xff]
    %v5095 = vld [vmem:[#allocation67 + $0x370] sm:$0xff]
    %v5096 = vld [vmem:[#allocation67 + $0x378] sm:$0xff]
    %v5097 = vld [vmem:[#allocation67 + $0x380] sm:$0xff]
    %v5098 = vld [vmem:[#allocation67 + $0x388] sm:$0xff]
    %v5099 = vld [vmem:[#allocation67 + $0x390] sm:$0xff]
    %v5100 = vld [vmem:[#allocation67 + $0x398] sm:$0xff]
    %v5101 = vld [vmem:[#allocation67 + $0x3a0] sm:$0xff]
    %v5102 = vld [vmem:[#allocation67 + $0x3a8] sm:$0xff]
    %v5103 = vld [vmem:[#allocation67 + $0x3b0] sm:$0xff]
    %v5104 = vld [vmem:[#allocation67 + $0x3b8] sm:$0xff]
    %v5105 = vld [vmem:[#allocation67 + $0x3c0] sm:$0xff]
    %v5106 = vld [vmem:[#allocation67 + $0x3c8] sm:$0xff]
    %v5107 = vld [vmem:[#allocation67 + $0x3d0] sm:$0xff]
    %v5108 = vld [vmem:[#allocation67 + $0x3d8] sm:$0xff]
    %v5109 = vld [vmem:[#allocation67 + $0x3e0] sm:$0xff]
    %v5110 = vld [vmem:[#allocation67 + $0x3e8] sm:$0xff]
    %v5111 = vld [vmem:[#allocation67 + $0x3f0] sm:$0xff]
    %v5112 = vld [vmem:[#allocation67 + $0x3f8] sm:$0xff]
    %v5241 = vunpack.c.l.b16 %v4985
    %v5242 = vunpack.c.h.b16 %v4985
    %v5243 = vunpack.c.l.b16 %v4986
    %v5244 = vunpack.c.h.b16 %v4986
    %v5245 = vunpack.c.l.b16 %v4987
    %v5246 = vunpack.c.h.b16 %v4987
    %v5247 = vunpack.c.l.b16 %v4988
    %v5248 = vunpack.c.h.b16 %v4988
    %v5249 = vunpack.c.l.b16 %v4989
    %v5250 = vunpack.c.h.b16 %v4989
    %v5251 = vunpack.c.l.b16 %v4990
    %v5252 = vunpack.c.h.b16 %v4990
    %v5253 = vunpack.c.l.b16 %v4991
    %v5254 = vunpack.c.h.b16 %v4991
    %v5255 = vunpack.c.l.b16 %v4992
    %v5256 = vunpack.c.h.b16 %v4992
    %v5257 = vunpack.c.l.b16 %v4993
    %v5258 = vunpack.c.h.b16 %v4993
    %v5259 = vunpack.c.l.b16 %v4994
    %v5260 = vunpack.c.h.b16 %v4994
    %v5261 = vunpack.c.l.b16 %v4995
    %v5262 = vunpack.c.h.b16 %v4995
    %v5263 = vunpack.c.l.b16 %v4996
    %v5264 = vunpack.c.h.b16 %v4996
    %v5265 = vunpack.c.l.b16 %v4997
    %v5266 = vunpack.c.h.b16 %v4997
    %v5267 = vunpack.c.l.b16 %v4998
    %v5268 = vunpack.c.h.b16 %v4998
    %v5269 = vunpack.c.l.b16 %v4999
    %v5270 = vunpack.c.h.b16 %v4999
    %v5271 = vunpack.c.l.b16 %v5000
    %v5272 = vunpack.c.h.b16 %v5000
    %v5273 = vunpack.c.l.b16 %v5001
    %v5274 = vunpack.c.h.b16 %v5001
    %v5275 = vunpack.c.l.b16 %v5002
    %v5276 = vunpack.c.h.b16 %v5002
    %v5277 = vunpack.c.l.b16 %v5003
    %v5278 = vunpack.c.h.b16 %v5003
    %v5279 = vunpack.c.l.b16 %v5004
    %v5280 = vunpack.c.h.b16 %v5004
    %v5281 = vunpack.c.l.b16 %v5005
    %v5282 = vunpack.c.h.b16 %v5005
    %v5283 = vunpack.c.l.b16 %v5006
    %v5284 = vunpack.c.h.b16 %v5006
    %v5285 = vunpack.c.l.b16 %v5007
    %v5286 = vunpack.c.h.b16 %v5007
    %v5287 = vunpack.c.l.b16 %v5008
    %v5288 = vunpack.c.h.b16 %v5008
    %v5289 = vunpack.c.l.b16 %v5009
    %v5290 = vunpack.c.h.b16 %v5009
    %v5291 = vunpack.c.l.b16 %v5010
    %v5292 = vunpack.c.h.b16 %v5010
    %v5293 = vunpack.c.l.b16 %v5011
    %v5294 = vunpack.c.h.b16 %v5011
    %v5295 = vunpack.c.l.b16 %v5012
    %v5296 = vunpack.c.h.b16 %v5012
    %v5297 = vunpack.c.l.b16 %v5013
    %v5298 = vunpack.c.h.b16 %v5013
    %v5299 = vunpack.c.l.b16 %v5014
    %v5300 = vunpack.c.h.b16 %v5014
    %v5301 = vunpack.c.l.b16 %v5015
    %v5302 = vunpack.c.h.b16 %v5015
    %v5303 = vunpack.c.l.b16 %v5016
    %v5304 = vunpack.c.h.b16 %v5016
    %v5305 = vunpack.c.l.b16 %v5017
    %v5306 = vunpack.c.h.b16 %v5017
    %v5307 = vunpack.c.l.b16 %v5018
    %v5308 = vunpack.c.h.b16 %v5018
    %v5309 = vunpack.c.l.b16 %v5019
    %v5310 = vunpack.c.h.b16 %v5019
    %v5311 = vunpack.c.l.b16 %v5020
    %v5312 = vunpack.c.h.b16 %v5020
    %v5313 = vunpack.c.l.b16 %v5021
    %v5314 = vunpack.c.h.b16 %v5021
    %v5315 = vunpack.c.l.b16 %v5022
    %v5316 = vunpack.c.h.b16 %v5022
    %v5317 = vunpack.c.l.b16 %v5023
    %v5318 = vunpack.c.h.b16 %v5023
    %v5319 = vunpack.c.l.b16 %v5024
    %v5320 = vunpack.c.h.b16 %v5024
    %v5321 = vunpack.c.l.b16 %v5025
    %v5322 = vunpack.c.h.b16 %v5025
    %v5323 = vunpack.c.l.b16 %v5026
    %v5324 = vunpack.c.h.b16 %v5026
    %v5325 = vunpack.c.l.b16 %v5027
    %v5326 = vunpack.c.h.b16 %v5027
    %v5327 = vunpack.c.l.b16 %v5028
    %v5328 = vunpack.c.h.b16 %v5028
    %v5329 = vunpack.c.l.b16 %v5029
    %v5330 = vunpack.c.h.b16 %v5029
    %v5331 = vunpack.c.l.b16 %v5030
    %v5332 = vunpack.c.h.b16 %v5030
    %v5333 = vunpack.c.l.b16 %v5031
    %v5334 = vunpack.c.h.b16 %v5031
    %v5335 = vunpack.c.l.b16 %v5032
    %v5336 = vunpack.c.h.b16 %v5032
    %v5337 = vunpack.c.l.b16 %v5033
    %v5338 = vunpack.c.h.b16 %v5033
    %v5339 = vunpack.c.l.b16 %v5034
    %v5340 = vunpack.c.h.b16 %v5034
    %v5341 = vunpack.c.l.b16 %v5035
    %v5342 = vunpack.c.h.b16 %v5035
    %v5343 = vunpack.c.l.b16 %v5036
    %v5344 = vunpack.c.h.b16 %v5036
    %v5345 = vunpack.c.l.b16 %v5037
    %v5346 = vunpack.c.h.b16 %v5037
    %v5347 = vunpack.c.l.b16 %v5038
    %v5348 = vunpack.c.h.b16 %v5038
    %v5349 = vunpack.c.l.b16 %v5039
    %v5350 = vunpack.c.h.b16 %v5039
    %v5351 = vunpack.c.l.b16 %v5040
    %v5352 = vunpack.c.h.b16 %v5040
    %v5353 = vunpack.c.l.b16 %v5041
    %v5354 = vunpack.c.h.b16 %v5041
    %v5355 = vunpack.c.l.b16 %v5042
    %v5356 = vunpack.c.h.b16 %v5042
    %v5357 = vunpack.c.l.b16 %v5043
    %v5358 = vunpack.c.h.b16 %v5043
    %v5359 = vunpack.c.l.b16 %v5044
    %v5360 = vunpack.c.h.b16 %v5044
    %v5361 = vunpack.c.l.b16 %v5045
    %v5362 = vunpack.c.h.b16 %v5045
    %v5363 = vunpack.c.l.b16 %v5046
    %v5364 = vunpack.c.h.b16 %v5046
    %v5365 = vunpack.c.l.b16 %v5047
    %v5366 = vunpack.c.h.b16 %v5047
    %v5367 = vunpack.c.l.b16 %v5048
    %v5368 = vunpack.c.h.b16 %v5048
    %v5369 = vunpack.c.l.b16 %v5049
    %v5370 = vunpack.c.h.b16 %v5049
    %v5371 = vunpack.c.l.b16 %v5050
    %v5372 = vunpack.c.h.b16 %v5050
    %v5373 = vunpack.c.l.b16 %v5051
    %v5374 = vunpack.c.h.b16 %v5051
    %v5375 = vunpack.c.l.b16 %v5052
    %v5376 = vunpack.c.h.b16 %v5052
    %v5377 = vunpack.c.l.b16 %v5053
    %v5378 = vunpack.c.h.b16 %v5053
    %v5379 = vunpack.c.l.b16 %v5054
    %v5380 = vunpack.c.h.b16 %v5054
    %v5381 = vunpack.c.l.b16 %v5055
    %v5382 = vunpack.c.h.b16 %v5055
    %v5383 = vunpack.c.l.b16 %v5056
    %v5384 = vunpack.c.h.b16 %v5056
    %v5385 = vunpack.c.l.b16 %v5057
    %v5386 = vunpack.c.h.b16 %v5057
    %v5387 = vunpack.c.l.b16 %v5058
    %v5388 = vunpack.c.h.b16 %v5058
    %v5389 = vunpack.c.l.b16 %v5059
    %v5390 = vunpack.c.h.b16 %v5059
    %v5391 = vunpack.c.l.b16 %v5060
    %v5392 = vunpack.c.h.b16 %v5060
    %v5393 = vunpack.c.l.b16 %v5061
    %v5394 = vunpack.c.h.b16 %v5061
    %v5395 = vunpack.c.l.b16 %v5062
    %v5396 = vunpack.c.h.b16 %v5062
    %v5397 = vunpack.c.l.b16 %v5063
    %v5398 = vunpack.c.h.b16 %v5063
    %v5399 = vunpack.c.l.b16 %v5064
    %v5400 = vunpack.c.h.b16 %v5064
    %v5401 = vunpack.c.l.b16 %v5065
    %v5402 = vunpack.c.h.b16 %v5065
    %v5403 = vunpack.c.l.b16 %v5066
    %v5404 = vunpack.c.h.b16 %v5066
    %v5405 = vunpack.c.l.b16 %v5067
    %v5406 = vunpack.c.h.b16 %v5067
    %v5407 = vunpack.c.l.b16 %v5068
    %v5408 = vunpack.c.h.b16 %v5068
    %v5409 = vunpack.c.l.b16 %v5069
    %v5410 = vunpack.c.h.b16 %v5069
    %v5411 = vunpack.c.l.b16 %v5070
    %v5412 = vunpack.c.h.b16 %v5070
    %v5413 = vunpack.c.l.b16 %v5071
    %v5414 = vunpack.c.h.b16 %v5071
    %v5415 = vunpack.c.l.b16 %v5072
    %v5416 = vunpack.c.h.b16 %v5072
    %v5417 = vunpack.c.l.b16 %v5073
    %v5418 = vunpack.c.h.b16 %v5073
    %v5419 = vunpack.c.l.b16 %v5074
    %v5420 = vunpack.c.h.b16 %v5074
    %v5421 = vunpack.c.l.b16 %v5075
    %v5422 = vunpack.c.h.b16 %v5075
    %v5423 = vunpack.c.l.b16 %v5076
    %v5424 = vunpack.c.h.b16 %v5076
    %v5425 = vunpack.c.l.b16 %v5077
    %v5426 = vunpack.c.h.b16 %v5077
    %v5427 = vunpack.c.l.b16 %v5078
    %v5428 = vunpack.c.h.b16 %v5078
    %v5429 = vunpack.c.l.b16 %v5079
    %v5430 = vunpack.c.h.b16 %v5079
    %v5431 = vunpack.c.l.b16 %v5080
    %v5432 = vunpack.c.h.b16 %v5080
    %v5433 = vunpack.c.l.b16 %v5081
    %v5434 = vunpack.c.h.b16 %v5081
    %v5435 = vunpack.c.l.b16 %v5082
    %v5436 = vunpack.c.h.b16 %v5082
    %v5437 = vunpack.c.l.b16 %v5083
    %v5438 = vunpack.c.h.b16 %v5083
    %v5439 = vunpack.c.l.b16 %v5084
    %v5440 = vunpack.c.h.b16 %v5084
    %v5441 = vunpack.c.l.b16 %v5085
    %v5442 = vunpack.c.h.b16 %v5085
    %v5443 = vunpack.c.l.b16 %v5086
    %v5444 = vunpack.c.h.b16 %v5086
    %v5445 = vunpack.c.l.b16 %v5087
    %v5446 = vunpack.c.h.b16 %v5087
    %v5447 = vunpack.c.l.b16 %v5088
    %v5448 = vunpack.c.h.b16 %v5088
    %v5449 = vunpack.c.l.b16 %v5089
    %v5450 = vunpack.c.h.b16 %v5089
    %v5451 = vunpack.c.l.b16 %v5090
    %v5452 = vunpack.c.h.b16 %v5090
    %v5453 = vunpack.c.l.b16 %v5091
    %v5454 = vunpack.c.h.b16 %v5091
    %v5455 = vunpack.c.l.b16 %v5092
    %v5456 = vunpack.c.h.b16 %v5092
    %v5457 = vunpack.c.l.b16 %v5093
    %v5458 = vunpack.c.h.b16 %v5093
    %v5459 = vunpack.c.l.b16 %v5094
    %v5460 = vunpack.c.h.b16 %v5094
    %v5461 = vunpack.c.l.b16 %v5095
    %v5462 = vunpack.c.h.b16 %v5095
    %v5463 = vunpack.c.l.b16 %v5096
    %v5464 = vunpack.c.h.b16 %v5096
    %v5465 = vunpack.c.l.b16 %v5097
    %v5466 = vunpack.c.h.b16 %v5097
    %v5467 = vunpack.c.l.b16 %v5098
    %v5468 = vunpack.c.h.b16 %v5098
    %v5469 = vunpack.c.l.b16 %v5099
    %v5470 = vunpack.c.h.b16 %v5099
    %v5471 = vunpack.c.l.b16 %v5100
    %v5472 = vunpack.c.h.b16 %v5100
    %v5473 = vunpack.c.l.b16 %v5101
    %v5474 = vunpack.c.h.b16 %v5101
    %v5475 = vunpack.c.l.b16 %v5102
    %v5476 = vunpack.c.h.b16 %v5102
    %v5477 = vunpack.c.l.b16 %v5103
    %v5478 = vunpack.c.h.b16 %v5103
    %v5479 = vunpack.c.l.b16 %v5104
    %v5480 = vunpack.c.h.b16 %v5104
    %v5481 = vunpack.c.l.b16 %v5105
    %v5482 = vunpack.c.h.b16 %v5105
    %v5483 = vunpack.c.l.b16 %v5106
    %v5484 = vunpack.c.h.b16 %v5106
    %v5485 = vunpack.c.l.b16 %v5107
    %v5486 = vunpack.c.h.b16 %v5107
    %v5487 = vunpack.c.l.b16 %v5108
    %v5488 = vunpack.c.h.b16 %v5108
    %v5489 = vunpack.c.l.b16 %v5109
    %v5490 = vunpack.c.h.b16 %v5109
    %v5491 = vunpack.c.l.b16 %v5110
    %v5492 = vunpack.c.h.b16 %v5110
    %v5493 = vunpack.c.l.b16 %v5111
    %v5494 = vunpack.c.h.b16 %v5111
    %v5495 = vunpack.c.l.b16 %v5112
    %v5496 = vunpack.c.h.b16 %v5112
    %v5497 = vpack.c.b16 %v5249, %v5241
    %v5498 = vpack.c.b16 %v5250, %v5242
    %v5499 = vpack.c.b16 %v5251, %v5243
    %v5500 = vpack.c.b16 %v5252, %v5244
    %v5501 = vpack.c.b16 %v5253, %v5245
    %v5502 = vpack.c.b16 %v5254, %v5246
    %v5503 = vpack.c.b16 %v5255, %v5247
    %v5504 = vpack.c.b16 %v5256, %v5248
    %v5505 = vpack.c.b16 %v5265, %v5257
    %v5506 = vpack.c.b16 %v5266, %v5258
    %v5507 = vpack.c.b16 %v5267, %v5259
    %v5508 = vpack.c.b16 %v5268, %v5260
    %v5509 = vpack.c.b16 %v5269, %v5261
    %v5510 = vpack.c.b16 %v5270, %v5262
    %v5511 = vpack.c.b16 %v5271, %v5263
    %v5512 = vpack.c.b16 %v5272, %v5264
    %v5513 = vpack.c.b16 %v5281, %v5273
    %v5514 = vpack.c.b16 %v5282, %v5274
    %v5515 = vpack.c.b16 %v5283, %v5275
    %v5516 = vpack.c.b16 %v5284, %v5276
    %v5517 = vpack.c.b16 %v5285, %v5277
    %v5518 = vpack.c.b16 %v5286, %v5278
    %v5519 = vpack.c.b16 %v5287, %v5279
    %v5520 = vpack.c.b16 %v5288, %v5280
    %v5521 = vpack.c.b16 %v5297, %v5289
    %v5522 = vpack.c.b16 %v5298, %v5290
    %v5523 = vpack.c.b16 %v5299, %v5291
    %v5524 = vpack.c.b16 %v5300, %v5292
    %v5525 = vpack.c.b16 %v5301, %v5293
    %v5526 = vpack.c.b16 %v5302, %v5294
    %v5527 = vpack.c.b16 %v5303, %v5295
    %v5528 = vpack.c.b16 %v5304, %v5296
    %v5529 = vpack.c.b16 %v5313, %v5305
    %v5530 = vpack.c.b16 %v5314, %v5306
    %v5531 = vpack.c.b16 %v5315, %v5307
    %v5532 = vpack.c.b16 %v5316, %v5308
    %v5533 = vpack.c.b16 %v5317, %v5309
    %v5534 = vpack.c.b16 %v5318, %v5310
    %v5535 = vpack.c.b16 %v5319, %v5311
    %v5536 = vpack.c.b16 %v5320, %v5312
    %v5537 = vpack.c.b16 %v5329, %v5321
    %v5538 = vpack.c.b16 %v5330, %v5322
    %v5539 = vpack.c.b16 %v5331, %v5323
    %v5540 = vpack.c.b16 %v5332, %v5324
    %v5541 = vpack.c.b16 %v5333, %v5325
    %v5542 = vpack.c.b16 %v5334, %v5326
    %v5543 = vpack.c.b16 %v5335, %v5327
    %v5544 = vpack.c.b16 %v5336, %v5328
    %v5545 = vpack.c.b16 %v5345, %v5337
    %v5546 = vpack.c.b16 %v5346, %v5338
    %v5547 = vpack.c.b16 %v5347, %v5339
    %v5548 = vpack.c.b16 %v5348, %v5340
    %v5549 = vpack.c.b16 %v5349, %v5341
    %v5550 = vpack.c.b16 %v5350, %v5342
    %v5551 = vpack.c.b16 %v5351, %v5343
    %v5552 = vpack.c.b16 %v5352, %v5344
    %v5553 = vpack.c.b16 %v5361, %v5353
    %v5554 = vpack.c.b16 %v5362, %v5354
    %v5555 = vpack.c.b16 %v5363, %v5355
    %v5556 = vpack.c.b16 %v5364, %v5356
    %v5557 = vpack.c.b16 %v5365, %v5357
    %v5558 = vpack.c.b16 %v5366, %v5358
    %v5559 = vpack.c.b16 %v5367, %v5359
    %v5560 = vpack.c.b16 %v5368, %v5360
    %v5561 = vpack.c.b16 %v5377, %v5369
    %v5562 = vpack.c.b16 %v5378, %v5370
    %v5563 = vpack.c.b16 %v5379, %v5371
    %v5564 = vpack.c.b16 %v5380, %v5372
    %v5565 = vpack.c.b16 %v5381, %v5373
    %v5566 = vpack.c.b16 %v5382, %v5374
    %v5567 = vpack.c.b16 %v5383, %v5375
    %v5568 = vpack.c.b16 %v5384, %v5376
    %v5569 = vpack.c.b16 %v5393, %v5385
    %v5570 = vpack.c.b16 %v5394, %v5386
    %v5571 = vpack.c.b16 %v5395, %v5387
    %v5572 = vpack.c.b16 %v5396, %v5388
    %v5573 = vpack.c.b16 %v5397, %v5389
    %v5574 = vpack.c.b16 %v5398, %v5390
    %v5575 = vpack.c.b16 %v5399, %v5391
    %v5576 = vpack.c.b16 %v5400, %v5392
    %v5577 = vpack.c.b16 %v5409, %v5401
    %v5578 = vpack.c.b16 %v5410, %v5402
    %v5579 = vpack.c.b16 %v5411, %v5403
    %v5580 = vpack.c.b16 %v5412, %v5404
    %v5581 = vpack.c.b16 %v5413, %v5405
    %v5582 = vpack.c.b16 %v5414, %v5406
    %v5583 = vpack.c.b16 %v5415, %v5407
    %v5584 = vpack.c.b16 %v5416, %v5408
    %v5585 = vpack.c.b16 %v5425, %v5417
    %v5586 = vpack.c.b16 %v5426, %v5418
    %v5587 = vpack.c.b16 %v5427, %v5419
    %v5588 = vpack.c.b16 %v5428, %v5420
    %v5589 = vpack.c.b16 %v5429, %v5421
    %v5590 = vpack.c.b16 %v5430, %v5422
    %v5591 = vpack.c.b16 %v5431, %v5423
    %v5592 = vpack.c.b16 %v5432, %v5424
    %v5593 = vpack.c.b16 %v5441, %v5433
    %v5594 = vpack.c.b16 %v5442, %v5434
    %v5595 = vpack.c.b16 %v5443, %v5435
    %v5596 = vpack.c.b16 %v5444, %v5436
    %v5597 = vpack.c.b16 %v5445, %v5437
    %v5598 = vpack.c.b16 %v5446, %v5438
    %v5599 = vpack.c.b16 %v5447, %v5439
    %v5600 = vpack.c.b16 %v5448, %v5440
    %v5601 = vpack.c.b16 %v5457, %v5449
    %v5602 = vpack.c.b16 %v5458, %v5450
    %v5603 = vpack.c.b16 %v5459, %v5451
    %v5604 = vpack.c.b16 %v5460, %v5452
    %v5605 = vpack.c.b16 %v5461, %v5453
    %v5606 = vpack.c.b16 %v5462, %v5454
    %v5607 = vpack.c.b16 %v5463, %v5455
    %v5608 = vpack.c.b16 %v5464, %v5456
    %v5609 = vpack.c.b16 %v5473, %v5465
    %v5610 = vpack.c.b16 %v5474, %v5466
    %v5611 = vpack.c.b16 %v5475, %v5467
    %v5612 = vpack.c.b16 %v5476, %v5468
    %v5613 = vpack.c.b16 %v5477, %v5469
    %v5614 = vpack.c.b16 %v5478, %v5470
    %v5615 = vpack.c.b16 %v5479, %v5471
    %v5616 = vpack.c.b16 %v5480, %v5472
    %v5617 = vpack.c.b16 %v5489, %v5481
    %v5618 = vpack.c.b16 %v5490, %v5482
    %v5619 = vpack.c.b16 %v5491, %v5483
    %v5620 = vpack.c.b16 %v5492, %v5484
    %v5621 = vpack.c.b16 %v5493, %v5485
    %v5622 = vpack.c.b16 %v5494, %v5486
    %v5623 = vpack.c.b16 %v5495, %v5487
    %v5624 = vpack.c.b16 %v5496, %v5488
    %5753 = vmatprep.subr.bf16.mxu0 %v5498
    %5754 = vmatpush1.bf16.msra.mxu0 %v5497
    %5755 = vmatprep.subr.bf16.mxu0 %v5506
    %5756 = vmatpush1.bf16.msra.mxu0 %v5505
    %5757 = vmatprep.subr.bf16.mxu0 %v5514
    %5758 = vmatpush1.bf16.msra.mxu0 %v5513
    %5759 = vmatprep.subr.bf16.mxu0 %v5522
    %5760 = vmatpush1.bf16.msra.mxu0 %v5521
    %5761 = vmatprep.subr.bf16.mxu0 %v5530
    %5762 = vmatpush1.bf16.msra.mxu0 %v5529
    %5763 = vmatprep.subr.bf16.mxu0 %v5538
    %5764 = vmatpush1.bf16.msra.mxu0 %v5537
    %5765 = vmatprep.subr.bf16.mxu0 %v5546
    %5766 = vmatpush1.bf16.msra.mxu0 %v5545
    %5767 = vmatprep.subr.bf16.mxu0 %v5554
    %5768 = vmatpush1.bf16.msra.mxu0 %v5553
    %5769 = vmatprep.subr.bf16.mxu0 %v5562
    %5770 = vmatpush1.bf16.msra.mxu0 %v5561
    %5771 = vmatprep.subr.bf16.mxu0 %v5570
    %5772 = vmatpush1.bf16.msra.mxu0 %v5569
    %5773 = vmatprep.subr.bf16.mxu0 %v5578
    %5774 = vmatpush1.bf16.msra.mxu0 %v5577
    %5775 = vmatprep.subr.bf16.mxu0 %v5586
    %5776 = vmatpush1.bf16.msra.mxu0 %v5585
    %5777 = vmatprep.subr.bf16.mxu0 %v5594
    %5778 = vmatpush1.bf16.msra.mxu0 %v5593
    %5779 = vmatprep.subr.bf16.mxu0 %v5602
    %5780 = vmatpush1.bf16.msra.mxu0 %v5601
    %5781 = vmatprep.subr.bf16.mxu0 %v5610
    %5782 = vmatpush1.bf16.msra.mxu0 %v5609
    %5783 = vmatprep.subr.bf16.mxu0 %v5618
    %5784 = vmatpush1.bf16.msra.mxu0 %v5617
    %5785 = vmatprep.mubr.bf16.mxu0 %v3082
    %5786 = vmatmul.mubr.bf16.gmra.mrb[0].mxu0 %v3081
    %v5787 = vpop.f32.mrb[0].mxu0
    %v5788 = vadd.f32 0.0, %v5787
    %v5789 = vpop.f32.mrb[0].mxu0
    %v5790 = vadd.f32 0.0, %v5789
    %v5791 = vpop.f32.mrb[0].mxu0
    %v5792 = vpop.f32.mrb[0].mxu0
    %5793 = vdwg.mxu0
    %5794 = vmatprep.subr.bf16.mxu0 %v5500
    %5795 = vmatpush1.bf16.msra.mxu0 %v5499
    %5796 = vmatprep.subr.bf16.mxu0 %v5508
    %5797 = vmatpush1.bf16.msra.mxu0 %v5507
    %5798 = vmatprep.subr.bf16.mxu0 %v5516
    %5799 = vmatpush1.bf16.msra.mxu0 %v5515
    %5800 = vmatprep.subr.bf16.mxu0 %v5524
    %5801 = vmatpush1.bf16.msra.mxu0 %v5523
    %5802 = vmatprep.subr.bf16.mxu0 %v5532
    %5803 = vmatpush1.bf16.msra.mxu0 %v5531
    %5804 = vmatprep.subr.bf16.mxu0 %v5540
    %5805 = vmatpush1.bf16.msra.mxu0 %v5539
    %5806 = vmatprep.subr.bf16.mxu0 %v5548
    %5807 = vmatpush1.bf16.msra.mxu0 %v5547
    %5808 = vmatprep.subr.bf16.mxu0 %v5556
    %5809 = vmatpush1.bf16.msra.mxu0 %v5555
    %5810 = vmatprep.subr.bf16.mxu0 %v5564
    %5811 = vmatpush1.bf16.msra.mxu0 %v5563
    %5812 = vmatprep.subr.bf16.mxu0 %v5572
    %5813 = vmatpush1.bf16.msra.mxu0 %v5571
    %5814 = vmatprep.subr.bf16.mxu0 %v5580
    %5815 = vmatpush1.bf16.msra.mxu0 %v5579
    %5816 = vmatprep.subr.bf16.mxu0 %v5588
    %5817 = vmatpush1.bf16.msra.mxu0 %v5587
    %5818 = vmatprep.subr.bf16.mxu0 %v5596
    %5819 = vmatpush1.bf16.msra.mxu0 %v5595
    %5820 = vmatprep.subr.bf16.mxu0 %v5604
    %5821 = vmatpush1.bf16.msra.mxu0 %v5603
    %5822 = vmatprep.subr.bf16.mxu0 %v5612
    %5823 = vmatpush1.bf16.msra.mxu0 %v5611
    %5824 = vmatprep.subr.bf16.mxu0 %v5620
    %5825 = vmatpush1.bf16.msra.mxu0 %v5619
    %5826 = vmatprep.mubr.bf16.mxu0 %v3082
    %5827 = vmatmul.mubr.bf16.gmra.mrb[0].mxu0 %v3081
    %v5828 = vpop.f32.mrb[0].mxu0
    %v5829 = vadd.f32 0.0, %v5828
    %v5830 = vpop.f32.mrb[0].mxu0
    %v5831 = vadd.f32 0.0, %v5830
    %v5832 = vpop.f32.mrb[0].mxu0
    %v5833 = vpop.f32.mrb[0].mxu0
    %5834 = vdwg.mxu0
    %5835 = vmatprep.subr.bf16.mxu0 %v5502
    %5836 = vmatpush1.bf16.msra.mxu0 %v5501
    %5837 = vmatprep.subr.bf16.mxu0 %v5510
    %5838 = vmatpush1.bf16.msra.mxu0 %v5509
    %5839 = vmatprep.subr.bf16.mxu0 %v5518
    %5840 = vmatpush1.bf16.msra.mxu0 %v5517
    %5841 = vmatprep.subr.bf16.mxu0 %v5526
    %5842 = vmatpush1.bf16.msra.mxu0 %v5525
    %5843 = vmatprep.subr.bf16.mxu0 %v5534
    %5844 = vmatpush1.bf16.msra.mxu0 %v5533
    %5845 = vmatprep.subr.bf16.mxu0 %v5542
    %5846 = vmatpush1.bf16.msra.mxu0 %v5541
    %5847 = vmatprep.subr.bf16.mxu0 %v5550
    %5848 = vmatpush1.bf16.msra.mxu0 %v5549
    %5849 = vmatprep.subr.bf16.mxu0 %v5558
    %5850 = vmatpush1.bf16.msra.mxu0 %v5557
    %5851 = vmatprep.subr.bf16.mxu0 %v5566
    %5852 = vmatpush1.bf16.msra.mxu0 %v5565
    %5853 = vmatprep.subr.bf16.mxu0 %v5574
    %5854 = vmatpush1.bf16.msra.mxu0 %v5573
    %5855 = vmatprep.subr.bf16.mxu0 %v5582
    %5856 = vmatpush1.bf16.msra.mxu0 %v5581
    %5857 = vmatprep.subr.bf16.mxu0 %v5590
    %5858 = vmatpush1.bf16.msra.mxu0 %v5589
    %5859 = vmatprep.subr.bf16.mxu0 %v5598
    %5860 = vmatpush1.bf16.msra.mxu0 %v5597
    %5861 = vmatprep.subr.bf16.mxu0 %v5606
    %5862 = vmatpush1.bf16.msra.mxu0 %v5605
    %5863 = vmatprep.subr.bf16.mxu0 %v5614
    %5864 = vmatpush1.bf16.msra.mxu0 %v5613
    %5865 = vmatprep.subr.bf16.mxu0 %v5622
    %5866 = vmatpush1.bf16.msra.mxu0 %v5621
    %5867 = vmatprep.mubr.bf16.mxu0 %v3082
    %5868 = vmatmul.mubr.bf16.gmra.mrb[0].mxu0 %v3081
    %v5869 = vpop.f32.mrb[0].mxu0
    %v5870 = vadd.f32 0.0, %v5869
    %v5871 = vpop.f32.mrb[0].mxu0
    %v5872 = vadd.f32 0.0, %v5871
    %v5873 = vpop.f32.mrb[0].mxu0
    %v5874 = vpop.f32.mrb[0].mxu0
    %5875 = vdwg.mxu0
    %5876 = vmatprep.subr.bf16.mxu0 %v5504
    %5877 = vmatpush1.bf16.msra.mxu0 %v5503
    %5878 = vmatprep.subr.bf16.mxu0 %v5512
    %5879 = vmatpush1.bf16.msra.mxu0 %v5511
    %5880 = vmatprep.subr.bf16.mxu0 %v5520
    %5881 = vmatpush1.bf16.msra.mxu0 %v5519
    %5882 = vmatprep.subr.bf16.mxu0 %v5528
    %5883 = vmatpush1.bf16.msra.mxu0 %v5527
    %5884 = vmatprep.subr.bf16.mxu0 %v5536
    %5885 = vmatpush1.bf16.msra.mxu0 %v5535
    %5886 = vmatprep.subr.bf16.mxu0 %v5544
    %5887 = vmatpush1.bf16.msra.mxu0 %v5543
    %5888 = vmatprep.subr.bf16.mxu0 %v5552
    %5889 = vmatpush1.bf16.msra.mxu0 %v5551
    %5890 = vmatprep.subr.bf16.mxu0 %v5560
    %5891 = vmatpush1.bf16.msra.mxu0 %v5559
    %5892 = vmatprep.subr.bf16.mxu0 %v5568
    %5893 = vmatpush1.bf16.msra.mxu0 %v5567
    %5894 = vmatprep.subr.bf16.mxu0 %v5576
    %5895 = vmatpush1.bf16.msra.mxu0 %v5575
    %5896 = vmatprep.subr.bf16.mxu0 %v5584
    %5897 = vmatpush1.bf16.msra.mxu0 %v5583
    %5898 = vmatprep.subr.bf16.mxu0 %v5592
    %5899 = vmatpush1.bf16.msra.mxu0 %v5591
    %5900 = vmatprep.subr.bf16.mxu0 %v5600
    %5901 = vmatpush1.bf16.msra.mxu0 %v5599
    %5902 = vmatprep.subr.bf16.mxu0 %v5608
    %5903 = vmatpush1.bf16.msra.mxu0 %v5607
    %5904 = vmatprep.subr.bf16.mxu0 %v5616
    %5905 = vmatpush1.bf16.msra.mxu0 %v5615
    %5906 = vmatprep.subr.bf16.mxu0 %v5624
    %5907 = vmatpush1.bf16.msra.mxu0 %v5623
    %5908 = vmatprep.mubr.bf16.mxu0 %v3082
    %5909 = vmatmul.mubr.bf16.gmra.mrb[0].mxu0 %v3081
    %v5910 = vpop.f32.mrb[0].mxu0
    %v5911 = vadd.f32 0.0, %v5910
    %v5912 = vpop.f32.mrb[0].mxu0
    %v5913 = vadd.f32 0.0, %v5912
    %v5914 = vpop.f32.mrb[0].mxu0
    %v5915 = vpop.f32.mrb[0].mxu0
    %5916 = vdwg.mxu0
    %v6045 = vunpack.c.l.b16 %v4857
    %v6046 = vunpack.c.h.b16 %v4857
    %v6047 = vunpack.c.l.b16 %v4858
    %v6048 = vunpack.c.h.b16 %v4858
    %v6049 = vunpack.c.l.b16 %v4859
    %v6050 = vunpack.c.h.b16 %v4859
    %v6051 = vunpack.c.l.b16 %v4860
    %v6052 = vunpack.c.h.b16 %v4860
    %v6053 = vunpack.c.l.b16 %v4861
    %v6054 = vunpack.c.h.b16 %v4861
    %v6055 = vunpack.c.l.b16 %v4862
    %v6056 = vunpack.c.h.b16 %v4862
    %v6057 = vunpack.c.l.b16 %v4863
    %v6058 = vunpack.c.h.b16 %v4863
    %v6059 = vunpack.c.l.b16 %v4864
    %v6060 = vunpack.c.h.b16 %v4864
    %v6061 = vunpack.c.l.b16 %v4865
    %v6062 = vunpack.c.h.b16 %v4865
    %v6063 = vunpack.c.l.b16 %v4866
    %v6064 = vunpack.c.h.b16 %v4866
    %v6065 = vunpack.c.l.b16 %v4867
    %v6066 = vunpack.c.h.b16 %v4867
    %v6067 = vunpack.c.l.b16 %v4868
    %v6068 = vunpack.c.h.b16 %v4868
    %v6069 = vunpack.c.l.b16 %v4869
    %v6070 = vunpack.c.h.b16 %v4869
    %v6071 = vunpack.c.l.b16 %v4870
    %v6072 = vunpack.c.h.b16 %v4870
    %v6073 = vunpack.c.l.b16 %v4871
    %v6074 = vunpack.c.h.b16 %v4871
    %v6075 = vunpack.c.l.b16 %v4872
    %v6076 = vunpack.c.h.b16 %v4872
    %v6077 = vunpack.c.l.b16 %v4873
    %v6078 = vunpack.c.h.b16 %v4873
    %v6079 = vunpack.c.l.b16 %v4874
    %v6080 = vunpack.c.h.b16 %v4874
    %v6081 = vunpack.c.l.b16 %v4875
    %v6082 = vunpack.c.h.b16 %v4875
    %v6083 = vunpack.c.l.b16 %v4876
    %v6084 = vunpack.c.h.b16 %v4876
    %v6085 = vunpack.c.l.b16 %v4877
    %v6086 = vunpack.c.h.b16 %v4877
    %v6087 = vunpack.c.l.b16 %v4878
    %v6088 = vunpack.c.h.b16 %v4878
    %v6089 = vunpack.c.l.b16 %v4879
    %v6090 = vunpack.c.h.b16 %v4879
    %v6091 = vunpack.c.l.b16 %v4880
    %v6092 = vunpack.c.h.b16 %v4880
    %v6093 = vunpack.c.l.b16 %v4881
    %v6094 = vunpack.c.h.b16 %v4881
    %v6095 = vunpack.c.l.b16 %v4882
    %v6096 = vunpack.c.h.b16 %v4882
    %v6097 = vunpack.c.l.b16 %v4883
    %v6098 = vunpack.c.h.b16 %v4883
    %v6099 = vunpack.c.l.b16 %v4884
    %v6100 = vunpack.c.h.b16 %v4884
    %v6101 = vunpack.c.l.b16 %v4885
    %v6102 = vunpack.c.h.b16 %v4885
    %v6103 = vunpack.c.l.b16 %v4886
    %v6104 = vunpack.c.h.b16 %v4886
    %v6105 = vunpack.c.l.b16 %v4887
    %v6106 = vunpack.c.h.b16 %v4887
    %v6107 = vunpack.c.l.b16 %v4888
    %v6108 = vunpack.c.h.b16 %v4888
    %v6109 = vunpack.c.l.b16 %v4889
    %v6110 = vunpack.c.h.b16 %v4889
    %v6111 = vunpack.c.l.b16 %v4890
    %v6112 = vunpack.c.h.b16 %v4890
    %v6113 = vunpack.c.l.b16 %v4891
    %v6114 = vunpack.c.h.b16 %v4891
    %v6115 = vunpack.c.l.b16 %v4892
    %v6116 = vunpack.c.h.b16 %v4892
    %v6117 = vunpack.c.l.b16 %v4893
    %v6118 = vunpack.c.h.b16 %v4893
    %v6119 = vunpack.c.l.b16 %v4894
    %v6120 = vunpack.c.h.b16 %v4894
    %v6121 = vunpack.c.l.b16 %v4895
    %v6122 = vunpack.c.h.b16 %v4895
    %v6123 = vunpack.c.l.b16 %v4896
    %v6124 = vunpack.c.h.b16 %v4896
    %v6125 = vunpack.c.l.b16 %v4897
    %v6126 = vunpack.c.h.b16 %v4897
    %v6127 = vunpack.c.l.b16 %v4898
    %v6128 = vunpack.c.h.b16 %v4898
    %v6129 = vunpack.c.l.b16 %v4899
    %v6130 = vunpack.c.h.b16 %v4899
    %v6131 = vunpack.c.l.b16 %v4900
    %v6132 = vunpack.c.h.b16 %v4900
    %v6133 = vunpack.c.l.b16 %v4901
    %v6134 = vunpack.c.h.b16 %v4901
    %v6135 = vunpack.c.l.b16 %v4902
    %v6136 = vunpack.c.h.b16 %v4902
    %v6137 = vunpack.c.l.b16 %v4903
    %v6138 = vunpack.c.h.b16 %v4903
    %v6139 = vunpack.c.l.b16 %v4904
    %v6140 = vunpack.c.h.b16 %v4904
    %v6141 = vunpack.c.l.b16 %v4905
    %v6142 = vunpack.c.h.b16 %v4905
    %v6143 = vunpack.c.l.b16 %v4906
    %v6144 = vunpack.c.h.b16 %v4906
    %v6145 = vunpack.c.l.b16 %v4907
    %v6146 = vunpack.c.h.b16 %v4907
    %v6147 = vunpack.c.l.b16 %v4908
    %v6148 = vunpack.c.h.b16 %v4908
    %v6149 = vunpack.c.l.b16 %v4909
    %v6150 = vunpack.c.h.b16 %v4909
    %v6151 = vunpack.c.l.b16 %v4910
    %v6152 = vunpack.c.h.b16 %v4910
    %v6153 = vunpack.c.l.b16 %v4911
    %v6154 = vunpack.c.h.b16 %v4911
    %v6155 = vunpack.c.l.b16 %v4912
    %v6156 = vunpack.c.h.b16 %v4912
    %v6157 = vunpack.c.l.b16 %v4913
    %v6158 = vunpack.c.h.b16 %v4913
    %v6159 = vunpack.c.l.b16 %v4914
    %v6160 = vunpack.c.h.b16 %v4914
    %v6161 = vunpack.c.l.b16 %v4915
    %v6162 = vunpack.c.h.b16 %v4915
    %v6163 = vunpack.c.l.b16 %v4916
    %v6164 = vunpack.c.h.b16 %v4916
    %v6165 = vunpack.c.l.b16 %v4917
    %v6166 = vunpack.c.h.b16 %v4917
    %v6167 = vunpack.c.l.b16 %v4918
    %v6168 = vunpack.c.h.b16 %v4918
    %v6169 = vunpack.c.l.b16 %v4919
    %v6170 = vunpack.c.h.b16 %v4919
    %v6171 = vunpack.c.l.b16 %v4920
    %v6172 = vunpack.c.h.b16 %v4920
    %v6173 = vunpack.c.l.b16 %v4921
    %v6174 = vunpack.c.h.b16 %v4921
    %v6175 = vunpack.c.l.b16 %v4922
    %v6176 = vunpack.c.h.b16 %v4922
    %v6177 = vunpack.c.l.b16 %v4923
    %v6178 = vunpack.c.h.b16 %v4923
    %v6179 = vunpack.c.l.b16 %v4924
    %v6180 = vunpack.c.h.b16 %v4924
    %v6181 = vunpack.c.l.b16 %v4925
    %v6182 = vunpack.c.h.b16 %v4925
    %v6183 = vunpack.c.l.b16 %v4926
    %v6184 = vunpack.c.h.b16 %v4926
    %v6185 = vunpack.c.l.b16 %v4927
    %v6186 = vunpack.c.h.b16 %v4927
    %v6187 = vunpack.c.l.b16 %v4928
    %v6188 = vunpack.c.h.b16 %v4928
    %v6189 = vunpack.c.l.b16 %v4929
    %v6190 = vunpack.c.h.b16 %v4929
    %v6191 = vunpack.c.l.b16 %v4930
    %v6192 = vunpack.c.h.b16 %v4930
    %v6193 = vunpack.c.l.b16 %v4931
    %v6194 = vunpack.c.h.b16 %v4931
    %v6195 = vunpack.c.l.b16 %v4932
    %v6196 = vunpack.c.h.b16 %v4932
    %v6197 = vunpack.c.l.b16 %v4933
    %v6198 = vunpack.c.h.b16 %v4933
    %v6199 = vunpack.c.l.b16 %v4934
    %v6200 = vunpack.c.h.b16 %v4934
    %v6201 = vunpack.c.l.b16 %v4935
    %v6202 = vunpack.c.h.b16 %v4935
    %v6203 = vunpack.c.l.b16 %v4936
    %v6204 = vunpack.c.h.b16 %v4936
    %v6205 = vunpack.c.l.b16 %v4937
    %v6206 = vunpack.c.h.b16 %v4937
    %v6207 = vunpack.c.l.b16 %v4938
    %v6208 = vunpack.c.h.b16 %v4938
    %v6209 = vunpack.c.l.b16 %v4939
    %v6210 = vunpack.c.h.b16 %v4939
    %v6211 = vunpack.c.l.b16 %v4940
    %v6212 = vunpack.c.h.b16 %v4940
    %v6213 = vunpack.c.l.b16 %v4941
    %v6214 = vunpack.c.h.b16 %v4941
    %v6215 = vunpack.c.l.b16 %v4942
    %v6216 = vunpack.c.h.b16 %v4942
    %v6217 = vunpack.c.l.b16 %v4943
    %v6218 = vunpack.c.h.b16 %v4943
    %v6219 = vunpack.c.l.b16 %v4944
    %v6220 = vunpack.c.h.b16 %v4944
    %v6221 = vunpack.c.l.b16 %v4945
    %v6222 = vunpack.c.h.b16 %v4945
    %v6223 = vunpack.c.l.b16 %v4946
    %v6224 = vunpack.c.h.b16 %v4946
    %v6225 = vunpack.c.l.b16 %v4947
    %v6226 = vunpack.c.h.b16 %v4947
    %v6227 = vunpack.c.l.b16 %v4948
    %v6228 = vunpack.c.h.b16 %v4948
    %v6229 = vunpack.c.l.b16 %v4949
    %v6230 = vunpack.c.h.b16 %v4949
    %v6231 = vunpack.c.l.b16 %v4950
    %v6232 = vunpack.c.h.b16 %v4950
    %v6233 = vunpack.c.l.b16 %v4951
    %v6234 = vunpack.c.h.b16 %v4951
    %v6235 = vunpack.c.l.b16 %v4952
    %v6236 = vunpack.c.h.b16 %v4952
    %v6237 = vunpack.c.l.b16 %v4953
    %v6238 = vunpack.c.h.b16 %v4953
    %v6239 = vunpack.c.l.b16 %v4954
    %v6240 = vunpack.c.h.b16 %v4954
    %v6241 = vunpack.c.l.b16 %v4955
    %v6242 = vunpack.c.h.b16 %v4955
    %v6243 = vunpack.c.l.b16 %v4956
    %v6244 = vunpack.c.h.b16 %v4956
    %v6245 = vunpack.c.l.b16 %v4957
    %v6246 = vunpack.c.h.b16 %v4957
    %v6247 = vunpack.c.l.b16 %v4958
    %v6248 = vunpack.c.h.b16 %v4958
    %v6249 = vunpack.c.l.b16 %v4959
    %v6250 = vunpack.c.h.b16 %v4959
    %v6251 = vunpack.c.l.b16 %v4960
    %v6252 = vunpack.c.h.b16 %v4960
    %v6253 = vunpack.c.l.b16 %v4961
    %v6254 = vunpack.c.h.b16 %v4961
    %v6255 = vunpack.c.l.b16 %v4962
    %v6256 = vunpack.c.h.b16 %v4962
    %v6257 = vunpack.c.l.b16 %v4963
    %v6258 = vunpack.c.h.b16 %v4963
    %v6259 = vunpack.c.l.b16 %v4964
    %v6260 = vunpack.c.h.b16 %v4964
    %v6261 = vunpack.c.l.b16 %v4965
    %v6262 = vunpack.c.h.b16 %v4965
    %v6263 = vunpack.c.l.b16 %v4966
    %v6264 = vunpack.c.h.b16 %v4966
    %v6265 = vunpack.c.l.b16 %v4967
    %v6266 = vunpack.c.h.b16 %v4967
    %v6267 = vunpack.c.l.b16 %v4968
    %v6268 = vunpack.c.h.b16 %v4968
    %v6269 = vunpack.c.l.b16 %v4969
    %v6270 = vunpack.c.h.b16 %v4969
    %v6271 = vunpack.c.l.b16 %v4970
    %v6272 = vunpack.c.h.b16 %v4970
    %v6273 = vunpack.c.l.b16 %v4971
    %v6274 = vunpack.c.h.b16 %v4971
    %v6275 = vunpack.c.l.b16 %v4972
    %v6276 = vunpack.c.h.b16 %v4972
    %v6277 = vunpack.c.l.b16 %v4973
    %v6278 = vunpack.c.h.b16 %v4973
    %v6279 = vunpack.c.l.b16 %v4974
    %v6280 = vunpack.c.h.b16 %v4974
    %v6281 = vunpack.c.l.b16 %v4975
    %v6282 = vunpack.c.h.b16 %v4975
    %v6283 = vunpack.c.l.b16 %v4976
    %v6284 = vunpack.c.h.b16 %v4976
    %v6285 = vunpack.c.l.b16 %v4977
    %v6286 = vunpack.c.h.b16 %v4977
    %v6287 = vunpack.c.l.b16 %v4978
    %v6288 = vunpack.c.h.b16 %v4978
    %v6289 = vunpack.c.l.b16 %v4979
    %v6290 = vunpack.c.h.b16 %v4979
    %v6291 = vunpack.c.l.b16 %v4980
    %v6292 = vunpack.c.h.b16 %v4980
    %v6293 = vunpack.c.l.b16 %v4981
    %v6294 = vunpack.c.h.b16 %v4981
    %v6295 = vunpack.c.l.b16 %v4982
    %v6296 = vunpack.c.h.b16 %v4982
    %v6297 = vunpack.c.l.b16 %v4983
    %v6298 = vunpack.c.h.b16 %v4983
    %v6299 = vunpack.c.l.b16 %v4984
    %v6300 = vunpack.c.h.b16 %v4984
    %v6301 = vpack.c.b16 %v6053, %v6045
    %v6302 = vpack.c.b16 %v6054, %v6046
    %v6303 = vpack.c.b16 %v6055, %v6047
    %v6304 = vpack.c.b16 %v6056, %v6048
    %v6305 = vpack.c.b16 %v6057, %v6049
    %v6306 = vpack.c.b16 %v6058, %v6050
    %v6307 = vpack.c.b16 %v6059, %v6051
    %v6308 = vpack.c.b16 %v6060, %v6052
    %v6309 = vpack.c.b16 %v6069, %v6061
    %v6310 = vpack.c.b16 %v6070, %v6062
    %v6311 = vpack.c.b16 %v6071, %v6063
    %v6312 = vpack.c.b16 %v6072, %v6064
    %v6313 = vpack.c.b16 %v6073, %v6065
    %v6314 = vpack.c.b16 %v6074, %v6066
    %v6315 = vpack.c.b16 %v6075, %v6067
    %v6316 = vpack.c.b16 %v6076, %v6068
    %v6317 = vpack.c.b16 %v6085, %v6077
    %v6318 = vpack.c.b16 %v6086, %v6078
    %v6319 = vpack.c.b16 %v6087, %v6079
    %v6320 = vpack.c.b16 %v6088, %v6080
    %v6321 = vpack.c.b16 %v6089, %v6081
    %v6322 = vpack.c.b16 %v6090, %v6082
    %v6323 = vpack.c.b16 %v6091, %v6083
    %v6324 = vpack.c.b16 %v6092, %v6084
    %v6325 = vpack.c.b16 %v6101, %v6093
    %v6326 = vpack.c.b16 %v6102, %v6094
    %v6327 = vpack.c.b16 %v6103, %v6095
    %v6328 = vpack.c.b16 %v6104, %v6096
    %v6329 = vpack.c.b16 %v6105, %v6097
    %v6330 = vpack.c.b16 %v6106, %v6098
    %v6331 = vpack.c.b16 %v6107, %v6099
    %v6332 = vpack.c.b16 %v6108, %v6100
    %v6333 = vpack.c.b16 %v6117, %v6109
    %v6334 = vpack.c.b16 %v6118, %v6110
    %v6335 = vpack.c.b16 %v6119, %v6111
    %v6336 = vpack.c.b16 %v6120, %v6112
    %v6337 = vpack.c.b16 %v6121, %v6113
    %v6338 = vpack.c.b16 %v6122, %v6114
    %v6339 = vpack.c.b16 %v6123, %v6115
    %v6340 = vpack.c.b16 %v6124, %v6116
    %v6341 = vpack.c.b16 %v6133, %v6125
    %v6342 = vpack.c.b16 %v6134, %v6126
    %v6343 = vpack.c.b16 %v6135, %v6127
    %v6344 = vpack.c.b16 %v6136, %v6128
    %v6345 = vpack.c.b16 %v6137, %v6129
    %v6346 = vpack.c.b16 %v6138, %v6130
    %v6347 = vpack.c.b16 %v6139, %v6131
    %v6348 = vpack.c.b16 %v6140, %v6132
    %v6349 = vpack.c.b16 %v6149, %v6141
    %v6350 = vpack.c.b16 %v6150, %v6142
    %v6351 = vpack.c.b16 %v6151, %v6143
    %v6352 = vpack.c.b16 %v6152, %v6144
    %v6353 = vpack.c.b16 %v6153, %v6145
    %v6354 = vpack.c.b16 %v6154, %v6146
    %v6355 = vpack.c.b16 %v6155, %v6147
    %v6356 = vpack.c.b16 %v6156, %v6148
    %v6357 = vpack.c.b16 %v6165, %v6157
    %v6358 = vpack.c.b16 %v6166, %v6158
    %v6359 = vpack.c.b16 %v6167, %v6159
    %v6360 = vpack.c.b16 %v6168, %v6160
    %v6361 = vpack.c.b16 %v6169, %v6161
    %v6362 = vpack.c.b16 %v6170, %v6162
    %v6363 = vpack.c.b16 %v6171, %v6163
    %v6364 = vpack.c.b16 %v6172, %v6164
    %v6365 = vpack.c.b16 %v6181, %v6173
    %v6366 = vpack.c.b16 %v6182, %v6174
    %v6367 = vpack.c.b16 %v6183, %v6175
    %v6368 = vpack.c.b16 %v6184, %v6176
    %v6369 = vpack.c.b16 %v6185, %v6177
    %v6370 = vpack.c.b16 %v6186, %v6178
    %v6371 = vpack.c.b16 %v6187, %v6179
    %v6372 = vpack.c.b16 %v6188, %v6180
    %v6373 = vpack.c.b16 %v6197, %v6189
    %v6374 = vpack.c.b16 %v6198, %v6190
    %v6375 = vpack.c.b16 %v6199, %v6191
    %v6376 = vpack.c.b16 %v6200, %v6192
    %v6377 = vpack.c.b16 %v6201, %v6193
    %v6378 = vpack.c.b16 %v6202, %v6194
    %v6379 = vpack.c.b16 %v6203, %v6195
    %v6380 = vpack.c.b16 %v6204, %v6196
    %v6381 = vpack.c.b16 %v6213, %v6205
    %v6382 = vpack.c.b16 %v6214, %v6206
    %v6383 = vpack.c.b16 %v6215, %v6207
    %v6384 = vpack.c.b16 %v6216, %v6208
    %v6385 = vpack.c.b16 %v6217, %v6209
    %v6386 = vpack.c.b16 %v6218, %v6210
    %v6387 = vpack.c.b16 %v6219, %v6211
    %v6388 = vpack.c.b16 %v6220, %v6212
    %v6389 = vpack.c.b16 %v6229, %v6221
    %v6390 = vpack.c.b16 %v6230, %v6222
    %v6391 = vpack.c.b16 %v6231, %v6223
    %v6392 = vpack.c.b16 %v6232, %v6224
    %v6393 = vpack.c.b16 %v6233, %v6225
    %v6394 = vpack.c.b16 %v6234, %v6226
    %v6395 = vpack.c.b16 %v6235, %v6227
    %v6396 = vpack.c.b16 %v6236, %v6228
    %v6397 = vpack.c.b16 %v6245, %v6237
    %v6398 = vpack.c.b16 %v6246, %v6238
    %v6399 = vpack.c.b16 %v6247, %v6239
    %v6400 = vpack.c.b16 %v6248, %v6240
    %v6401 = vpack.c.b16 %v6249, %v6241
    %v6402 = vpack.c.b16 %v6250, %v6242
    %v6403 = vpack.c.b16 %v6251, %v6243
    %v6404 = vpack.c.b16 %v6252, %v6244
    %v6405 = vpack.c.b16 %v6261, %v6253
    %v6406 = vpack.c.b16 %v6262, %v6254
    %v6407 = vpack.c.b16 %v6263, %v6255
    %v6408 = vpack.c.b16 %v6264, %v6256
    %v6409 = vpack.c.b16 %v6265, %v6257
    %v6410 = vpack.c.b16 %v6266, %v6258
    %v6411 = vpack.c.b16 %v6267, %v6259
    %v6412 = vpack.c.b16 %v6268, %v6260
    %v6413 = vpack.c.b16 %v6277, %v6269
    %v6414 = vpack.c.b16 %v6278, %v6270
    %v6415 = vpack.c.b16 %v6279, %v6271
    %v6416 = vpack.c.b16 %v6280, %v6272
    %v6417 = vpack.c.b16 %v6281, %v6273
    %v6418 = vpack.c.b16 %v6282, %v6274
    %v6419 = vpack.c.b16 %v6283, %v6275
    %v6420 = vpack.c.b16 %v6284, %v6276
    %v6421 = vpack.c.b16 %v6293, %v6285
    %v6422 = vpack.c.b16 %v6294, %v6286
    %v6423 = vpack.c.b16 %v6295, %v6287
    %v6424 = vpack.c.b16 %v6296, %v6288
    %v6425 = vpack.c.b16 %v6297, %v6289
    %v6426 = vpack.c.b16 %v6298, %v6290
    %v6427 = vpack.c.b16 %v6299, %v6291
    %v6428 = vpack.c.b16 %v6300, %v6292
    %6557 = vmatprep.subr.bf16.mxu0 %v6302
    %6558 = vmatpush1.bf16.msra.mxu0 %v6301
    %6559 = vmatprep.subr.bf16.mxu0 %v6310
    %6560 = vmatpush1.bf16.msra.mxu0 %v6309
    %6561 = vmatprep.subr.bf16.mxu0 %v6318
    %6562 = vmatpush1.bf16.msra.mxu0 %v6317
    %6563 = vmatprep.subr.bf16.mxu0 %v6326
    %6564 = vmatpush1.bf16.msra.mxu0 %v6325
    %6565 = vmatprep.subr.bf16.mxu0 %v6334
    %6566 = vmatpush1.bf16.msra.mxu0 %v6333
    %6567 = vmatprep.subr.bf16.mxu0 %v6342
    %6568 = vmatpush1.bf16.msra.mxu0 %v6341
    %6569 = vmatprep.subr.bf16.mxu0 %v6350
    %6570 = vmatpush1.bf16.msra.mxu0 %v6349
    %6571 = vmatprep.subr.bf16.mxu0 %v6358
    %6572 = vmatpush1.bf16.msra.mxu0 %v6357
    %6573 = vmatprep.subr.bf16.mxu0 %v6366
    %6574 = vmatpush1.bf16.msra.mxu0 %v6365
    %6575 = vmatprep.subr.bf16.mxu0 %v6374
    %6576 = vmatpush1.bf16.msra.mxu0 %v6373
    %6577 = vmatprep.subr.bf16.mxu0 %v6382
    %6578 = vmatpush1.bf16.msra.mxu0 %v6381
    %6579 = vmatprep.subr.bf16.mxu0 %v6390
    %6580 = vmatpush1.bf16.msra.mxu0 %v6389
    %6581 = vmatprep.subr.bf16.mxu0 %v6398
    %6582 = vmatpush1.bf16.msra.mxu0 %v6397
    %6583 = vmatprep.subr.bf16.mxu0 %v6406
    %6584 = vmatpush1.bf16.msra.mxu0 %v6405
    %6585 = vmatprep.subr.bf16.mxu0 %v6414
    %6586 = vmatpush1.bf16.msra.mxu0 %v6413
    %6587 = vmatprep.subr.bf16.mxu0 %v6422
    %6588 = vmatpush1.bf16.msra.mxu0 %v6421
    %6589 = vmatprep.mubr.bf16.mxu0 %v4856
    %6590 = vmatmul.mubr.bf16.gmra.mrb[0].mxu0 %v4855
    %v6591 = vpop.f32.mrb[0].mxu0
    %v6592 = vadd.f32 %v5788, %v6591
    %v6593 = vpop.f32.mrb[0].mxu0
    %v6594 = vadd.f32 %v5790, %v6593
    %v6595 = vpop.f32.mrb[0].mxu0
    %v6596 = vpop.f32.mrb[0].mxu0
    %6597 = vdwg.mxu0
    %6598 = vmatprep.subr.bf16.mxu0 %v6304
    %6599 = vmatpush1.bf16.msra.mxu0 %v6303
    %6600 = vmatprep.subr.bf16.mxu0 %v6312
    %6601 = vmatpush1.bf16.msra.mxu0 %v6311
    %6602 = vmatprep.subr.bf16.mxu0 %v6320
    %6603 = vmatpush1.bf16.msra.mxu0 %v6319
    %6604 = vmatprep.subr.bf16.mxu0 %v6328
    %6605 = vmatpush1.bf16.msra.mxu0 %v6327
    %6606 = vmatprep.subr.bf16.mxu0 %v6336
    %6607 = vmatpush1.bf16.msra.mxu0 %v6335
    %6608 = vmatprep.subr.bf16.mxu0 %v6344
    %6609 = vmatpush1.bf16.msra.mxu0 %v6343
    %6610 = vmatprep.subr.bf16.mxu0 %v6352
    %6611 = vmatpush1.bf16.msra.mxu0 %v6351
    %6612 = vmatprep.subr.bf16.mxu0 %v6360
    %6613 = vmatpush1.bf16.msra.mxu0 %v6359
    %6614 = vmatprep.subr.bf16.mxu0 %v6368
    %6615 = vmatpush1.bf16.msra.mxu0 %v6367
    %6616 = vmatprep.subr.bf16.mxu0 %v6376
    %6617 = vmatpush1.bf16.msra.mxu0 %v6375
    %6618 = vmatprep.subr.bf16.mxu0 %v6384
    %6619 = vmatpush1.bf16.msra.mxu0 %v6383
    %6620 = vmatprep.subr.bf16.mxu0 %v6392
    %6621 = vmatpush1.bf16.msra.mxu0 %v6391
    %6622 = vmatprep.subr.bf16.mxu0 %v6400
    %6623 = vmatpush1.bf16.msra.mxu0 %v6399
    %6624 = vmatprep.subr.bf16.mxu0 %v6408
    %6625 = vmatpush1.bf16.msra.mxu0 %v6407
    %6626 = vmatprep.subr.bf16.mxu0 %v6416
    %6627 = vmatpush1.bf16.msra.mxu0 %v6415
    %6628 = vmatprep.subr.bf16.mxu0 %v6424
    %6629 = vmatpush1.bf16.msra.mxu0 %v6423
    %6630 = vmatprep.mubr.bf16.mxu0 %v4856
    %6631 = vmatmul.mubr.bf16.gmra.mrb[0].mxu0 %v4855
    %v6632 = vpop.f32.mrb[0].mxu0
    %v6633 = vadd.f32 %v5829, %v6632
    %v6634 = vpop.f32.mrb[0].mxu0
    %v6635 = vadd.f32 %v5831, %v6634
    %v6636 = vpop.f32.mrb[0].mxu0
    %v6637 = vpop.f32.mrb[0].mxu0
    %6638 = vdwg.mxu0
    %6639 = vmatprep.subr.bf16.mxu0 %v6306
    %6640 = vmatpush1.bf16.msra.mxu0 %v6305
    %6641 = vmatprep.subr.bf16.mxu0 %v6314
    %6642 = vmatpush1.bf16.msra.mxu0 %v6313
    %6643 = vmatprep.subr.bf16.mxu0 %v6322
    %6644 = vmatpush1.bf16.msra.mxu0 %v6321
    %6645 = vmatprep.subr.bf16.mxu0 %v6330
    %6646 = vmatpush1.bf16.msra.mxu0 %v6329
    %6647 = vmatprep.subr.bf16.mxu0 %v6338
    %6648 = vmatpush1.bf16.msra.mxu0 %v6337
    %6649 = vmatprep.subr.bf16.mxu0 %v6346
    %6650 = vmatpush1.bf16.msra.mxu0 %v6345
    %6651 = vmatprep.subr.bf16.mxu0 %v6354
    %6652 = vmatpush1.bf16.msra.mxu0 %v6353
    %6653 = vmatprep.subr.bf16.mxu0 %v6362
    %6654 = vmatpush1.bf16.msra.mxu0 %v6361
    %6655 = vmatprep.subr.bf16.mxu0 %v6370
    %6656 = vmatpush1.bf16.msra.mxu0 %v6369
    %6657 = vmatprep.subr.bf16.mxu0 %v6378
    %6658 = vmatpush1.bf16.msra.mxu0 %v6377
    %6659 = vmatprep.subr.bf16.mxu0 %v6386
    %6660 = vmatpush1.bf16.msra.mxu0 %v6385
    %6661 = vmatprep.subr.bf16.mxu0 %v6394
    %6662 = vmatpush1.bf16.msra.mxu0 %v6393
    %6663 = vmatprep.subr.bf16.mxu0 %v6402
    %6664 = vmatpush1.bf16.msra.mxu0 %v6401
    %6665 = vmatprep.subr.bf16.mxu0 %v6410
    %6666 = vmatpush1.bf16.msra.mxu0 %v6409
    %6667 = vmatprep.subr.bf16.mxu0 %v6418
    %6668 = vmatpush1.bf16.msra.mxu0 %v6417
    %6669 = vmatprep.subr.bf16.mxu0 %v6426
    %6670 = vmatpush1.bf16.msra.mxu0 %v6425
    %6671 = vmatprep.mubr.bf16.mxu0 %v4856
    %6672 = vmatmul.mubr.bf16.gmra.mrb[0].mxu0 %v4855
    %v6673 = vpop.f32.mrb[0].mxu0
    %v6674 = vadd.f32 %v5870, %v6673
    %v6675 = vpop.f32.mrb[0].mxu0
    %v6676 = vadd.f32 %v5872, %v6675
    %v6677 = vpop.f32.mrb[0].mxu0
    %v6678 = vpop.f32.mrb[0].mxu0
    %6679 = vdwg.mxu0
    %6680 = vmatprep.subr.bf16.mxu0 %v6308
    %6681 = vmatpush1.bf16.msra.mxu0 %v6307
    %6682 = vmatprep.subr.bf16.mxu0 %v6316
    %6683 = vmatpush1.bf16.msra.mxu0 %v6315
    %6684 = vmatprep.subr.bf16.mxu0 %v6324
    %6685 = vmatpush1.bf16.msra.mxu0 %v6323
    %6686 = vmatprep.subr.bf16.mxu0 %v6332
    %6687 = vmatpush1.bf16.msra.mxu0 %v6331
    %6688 = vmatprep.subr.bf16.mxu0 %v6340
    %6689 = vmatpush1.bf16.msra.mxu0 %v6339
    %6690 = vmatprep.subr.bf16.mxu0 %v6348
    %6691 = vmatpush1.bf16.msra.mxu0 %v6347
    %6692 = vmatprep.subr.bf16.mxu0 %v6356
    %6693 = vmatpush1.bf16.msra.mxu0 %v6355
    %6694 = vmatprep.subr.bf16.mxu0 %v6364
    %6695 = vmatpush1.bf16.msra.mxu0 %v6363
    %6696 = vmatprep.subr.bf16.mxu0 %v6372
    %6697 = vmatpush1.bf16.msra.mxu0 %v6371
    %6698 = vmatprep.subr.bf16.mxu0 %v6380
    %6699 = vmatpush1.bf16.msra.mxu0 %v6379
    %6700 = vmatprep.subr.bf16.mxu0 %v6388
    %6701 = vmatpush1.bf16.msra.mxu0 %v6387
    %6702 = vmatprep.subr.bf16.mxu0 %v6396
    %6703 = vmatpush1.bf16.msra.mxu0 %v6395
    %6704 = vmatprep.subr.bf16.mxu0 %v6404
    %6705 = vmatpush1.bf16.msra.mxu0 %v6403
    %6706 = vmatprep.subr.bf16.mxu0 %v6412
    %6707 = vmatpush1.bf16.msra.mxu0 %v6411
    %6708 = vmatprep.subr.bf16.mxu0 %v6420
    %6709 = vmatpush1.bf16.msra.mxu0 %v6419
    %6710 = vmatprep.subr.bf16.mxu0 %v6428
    %6711 = vmatpush1.bf16.msra.mxu0 %v6427
    %6712 = vmatprep.mubr.bf16.mxu0 %v4856
    %6713 = vmatmul.mubr.bf16.gmra.mrb[0].mxu0 %v4855
    %v6714 = vpop.f32.mrb[0].mxu0
    %v6715 = vadd.f32 %v5911, %v6714
    %v6716 = vpop.f32.mrb[0].mxu0
    %v6717 = vadd.f32 %v5913, %v6716
    %v6718 = vpop.f32.mrb[0].mxu0
    %v6719 = vpop.f32.mrb[0].mxu0
    %6720 = vdwg.mxu0
    %v6721 = vpack.c.bf16 %v4852, %v4852
    %v6722 = vld [vmem:[#allocation68] sm:$0xff]
    %v6723 = vld [vmem:[#allocation68 + $0x8] sm:$0xff]
    %v6724 = vld [vmem:[#allocation68 + $0x10] sm:$0xff]
    %v6725 = vld [vmem:[#allocation68 + $0x18] sm:$0xff]
    %v6726 = vld [vmem:[#allocation68 + $0x20] sm:$0xff]
    %v6727 = vld [vmem:[#allocation68 + $0x28] sm:$0xff]
    %v6728 = vld [vmem:[#allocation68 + $0x30] sm:$0xff]
    %v6729 = vld [vmem:[#allocation68 + $0x38] sm:$0xff]
    %v6730 = vld [vmem:[#allocation68 + $0x40] sm:$0xff]
    %v6731 = vld [vmem:[#allocation68 + $0x48] sm:$0xff]
    %v6732 = vld [vmem:[#allocation68 + $0x50] sm:$0xff]
    %v6733 = vld [vmem:[#allocation68 + $0x58] sm:$0xff]
    %v6734 = vld [vmem:[#allocation68 + $0x60] sm:$0xff]
    %v6735 = vld [vmem:[#allocation68 + $0x68] sm:$0xff]
    %v6736 = vld [vmem:[#allocation68 + $0x70] sm:$0xff]
    %v6737 = vld [vmem:[#allocation68 + $0x78] sm:$0xff]
    %v6754 = vunpack.c.l.b16 %v6722
    %v6755 = vunpack.c.h.b16 %v6722
    %v6756 = vunpack.c.l.b16 %v6723
    %v6757 = vunpack.c.h.b16 %v6723
    %v6758 = vunpack.c.l.b16 %v6724
    %v6759 = vunpack.c.h.b16 %v6724
    %v6760 = vunpack.c.l.b16 %v6725
    %v6761 = vunpack.c.h.b16 %v6725
    %v6762 = vunpack.c.l.b16 %v6726
    %v6763 = vunpack.c.h.b16 %v6726
    %v6764 = vunpack.c.l.b16 %v6727
    %v6765 = vunpack.c.h.b16 %v6727
    %v6766 = vunpack.c.l.b16 %v6728
    %v6767 = vunpack.c.h.b16 %v6728
    %v6768 = vunpack.c.l.b16 %v6729
    %v6769 = vunpack.c.h.b16 %v6729
    %v6770 = vunpack.c.l.b16 %v6730
    %v6771 = vunpack.c.h.b16 %v6730
    %v6772 = vunpack.c.l.b16 %v6731
    %v6773 = vunpack.c.h.b16 %v6731
    %v6774 = vunpack.c.l.b16 %v6732
    %v6775 = vunpack.c.h.b16 %v6732
    %v6776 = vunpack.c.l.b16 %v6733
    %v6777 = vunpack.c.h.b16 %v6733
    %v6778 = vunpack.c.l.b16 %v6734
    %v6779 = vunpack.c.h.b16 %v6734
    %v6780 = vunpack.c.l.b16 %v6735
    %v6781 = vunpack.c.h.b16 %v6735
    %v6782 = vunpack.c.l.b16 %v6736
    %v6783 = vunpack.c.h.b16 %v6736
    %v6784 = vunpack.c.l.b16 %v6737
    %v6785 = vunpack.c.h.b16 %v6737
    %v6786 = vpack.c.b16 %v6762, %v6754
    %v6787 = vpack.c.b16 %v6763, %v6755
    %v6788 = vpack.c.b16 %v6764, %v6756
    %v6789 = vpack.c.b16 %v6765, %v6757
    %v6790 = vpack.c.b16 %v6766, %v6758
    %v6791 = vpack.c.b16 %v6767, %v6759
    %v6792 = vpack.c.b16 %v6768, %v6760
    %v6793 = vpack.c.b16 %v6769, %v6761
    %v6794 = vpack.c.b16 %v6778, %v6770
    %v6795 = vpack.c.b16 %v6779, %v6771
    %v6796 = vpack.c.b16 %v6780, %v6772
    %v6797 = vpack.c.b16 %v6781, %v6773
    %v6798 = vpack.c.b16 %v6782, %v6774
    %v6799 = vpack.c.b16 %v6783, %v6775
    %v6800 = vpack.c.b16 %v6784, %v6776
    %v6801 = vpack.c.b16 %v6785, %v6777
    %vm6818 = vcmask 261120
    %v6820 = vsel %vm6818, %v6721, 0
    %6822 = vmatprep.subr.bf16.mxu0 %v6787
    %6823 = vmatpush1.bf16.msra.mxu0 %v6786
    %6824 = vmatprep.subr.bf16.mxu0 %v6795
    %6825 = vmatpush1.bf16.msra.mxu0 %v6794
    %6826 = vmatprep.subr.bf16.mxu0 0
    %6827 = vmatpush1.bf16.msra.mxu0 0
    %6828 = vmatprep.subr.bf16.mxu0 0
    %6829 = vmatpush1.bf16.msra.mxu0 0
    %6830 = vmatprep.subr.bf16.mxu0 0
    %6831 = vmatpush1.bf16.msra.mxu0 0
    %6832 = vmatprep.subr.bf16.mxu0 0
    %6833 = vmatpush1.bf16.msra.mxu0 0
    %6834 = vmatprep.subr.bf16.mxu0 0
    %6835 = vmatpush1.bf16.msra.mxu0 0
    %6836 = vmatprep.subr.bf16.mxu0 0
    %6837 = vmatpush1.bf16.msra.mxu0 0
    %6838 = vmatprep.subr.bf16.mxu0 0
    %6839 = vmatpush1.bf16.msra.mxu0 0
    %6840 = vmatprep.subr.bf16.mxu0 0
    %6841 = vmatpush1.bf16.msra.mxu0 0
    %6842 = vmatprep.subr.bf16.mxu0 0
    %6843 = vmatpush1.bf16.msra.mxu0 0
    %6844 = vmatprep.subr.bf16.mxu0 0
    %6845 = vmatpush1.bf16.msra.mxu0 0
    %6846 = vmatprep.subr.bf16.mxu0 0
    %6847 = vmatpush1.bf16.msra.mxu0 0
    %6848 = vmatprep.subr.bf16.mxu0 0
    %6849 = vmatpush1.bf16.msra.mxu0 0
    %6850 = vmatprep.subr.bf16.mxu0 0
    %6851 = vmatpush1.bf16.msra.mxu0 0
    %6852 = vmatprep.subr.bf16.mxu0 0
    %6853 = vmatpush1.bf16.msra.mxu0 0
    %6854 = vmatprep.mubr.bf16.mxu0 0
    %6855 = vmatmul.mubr.bf16.gmra.mrb[0].mxu0 %v6820
    %v6856 = vpop.f32.mrb[0].mxu0
    %v6857 = vadd.f32 0.0, %v6856
    %v6858 = vpop.f32.mrb[0].mxu0
    %v6859 = vadd.f32 0.0, %v6858
    %v6860 = vpop.f32.mrb[0].mxu0
    %v6861 = vpop.f32.mrb[0].mxu0
    %6862 = vdwg.mxu0
    %6863 = vmatprep.subr.bf16.mxu0 %v6789
    %6864 = vmatpush1.bf16.msra.mxu0 %v6788
    %6865 = vmatprep.subr.bf16.mxu0 %v6797
    %6866 = vmatpush1.bf16.msra.mxu0 %v6796
    %6867 = vmatprep.subr.bf16.mxu0 0
    %6868 = vmatpush1.bf16.msra.mxu0 0
    %6869 = vmatprep.subr.bf16.mxu0 0
    %6870 = vmatpush1.bf16.msra.mxu0 0
    %6871 = vmatprep.subr.bf16.mxu0 0
    %6872 = vmatpush1.bf16.msra.mxu0 0
    %6873 = vmatprep.subr.bf16.mxu0 0
    %6874 = vmatpush1.bf16.msra.mxu0 0
    %6875 = vmatprep.subr.bf16.mxu0 0
    %6876 = vmatpush1.bf16.msra.mxu0 0
    %6877 = vmatprep.subr.bf16.mxu0 0
    %6878 = vmatpush1.bf16.msra.mxu0 0
    %6879 = vmatprep.subr.bf16.mxu0 0
    %6880 = vmatpush1.bf16.msra.mxu0 0
    %6881 = vmatprep.subr.bf16.mxu0 0
    %6882 = vmatpush1.bf16.msra.mxu0 0
    %6883 = vmatprep.subr.bf16.mxu0 0
    %6884 = vmatpush1.bf16.msra.mxu0 0
    %6885 = vmatprep.subr.bf16.mxu0 0
    %6886 = vmatpush1.bf16.msra.mxu0 0
    %6887 = vmatprep.subr.bf16.mxu0 0
    %6888 = vmatpush1.bf16.msra.mxu0 0
    %6889 = vmatprep.subr.bf16.mxu0 0
    %6890 = vmatpush1.bf16.msra.mxu0 0
    %6891 = vmatprep.subr.bf16.mxu0 0
    %6892 = vmatpush1.bf16.msra.mxu0 0
    %6893 = vmatprep.subr.bf16.mxu0 0
    %6894 = vmatpush1.bf16.msra.mxu0 0
    %6895 = vmatprep.mubr.bf16.mxu0 0
    %6896 = vmatmul.mubr.bf16.gmra.mrb[0].mxu0 %v6820
    %v6897 = vpop.f32.mrb[0].mxu0
    %v6898 = vadd.f32 0.0, %v6897
    %v6899 = vpop.f32.mrb[0].mxu0
    %v6900 = vadd.f32 0.0, %v6899
    %v6901 = vpop.f32.mrb[0].mxu0
    %v6902 = vpop.f32.mrb[0].mxu0
    %6903 = vdwg.mxu0
    %6904 = vmatprep.subr.bf16.mxu0 %v6791
    %6905 = vmatpush1.bf16.msra.mxu0 %v6790
    %6906 = vmatprep.subr.bf16.mxu0 %v6799
    %6907 = vmatpush1.bf16.msra.mxu0 %v6798
    %6908 = vmatprep.subr.bf16.mxu0 0
    %6909 = vmatpush1.bf16.msra.mxu0 0
    %6910 = vmatprep.subr.bf16.mxu0 0
    %6911 = vmatpush1.bf16.msra.mxu0 0
    %6912 = vmatprep.subr.bf16.mxu0 0
    %6913 = vmatpush1.bf16.msra.mxu0 0
    %6914 = vmatprep.subr.bf16.mxu0 0
    %6915 = vmatpush1.bf16.msra.mxu0 0
    %6916 = vmatprep.subr.bf16.mxu0 0
    %6917 = vmatpush1.bf16.msra.mxu0 0
    %6918 = vmatprep.subr.bf16.mxu0 0
    %6919 = vmatpush1.bf16.msra.mxu0 0
    %6920 = vmatprep.subr.bf16.mxu0 0
    %6921 = vmatpush1.bf16.msra.mxu0 0
    %6922 = vmatprep.subr.bf16.mxu0 0
    %6923 = vmatpush1.bf16.msra.mxu0 0
    %6924 = vmatprep.subr.bf16.mxu0 0
    %6925 = vmatpush1.bf16.msra.mxu0 0
    %6926 = vmatprep.subr.bf16.mxu0 0
    %6927 = vmatpush1.bf16.msra.mxu0 0
    %6928 = vmatprep.subr.bf16.mxu0 0
    %6929 = vmatpush1.bf16.msra.mxu0 0
    %6930 = vmatprep.subr.bf16.mxu0 0
    %6931 = vmatpush1.bf16.msra.mxu0 0
    %6932 = vmatprep.subr.bf16.mxu0 0
    %6933 = vmatpush1.bf16.msra.mxu0 0
    %6934 = vmatprep.subr.bf16.mxu0 0
    %6935 = vmatpush1.bf16.msra.mxu0 0
    %6936 = vmatprep.mubr.bf16.mxu0 0
    %6937 = vmatmul.mubr.bf16.gmra.mrb[0].mxu0 %v6820
    %v6938 = vpop.f32.mrb[0].mxu0
    %v6939 = vadd.f32 0.0, %v6938
    %v6940 = vpop.f32.mrb[0].mxu0
    %v6941 = vadd.f32 0.0, %v6940
    %v6942 = vpop.f32.mrb[0].mxu0
    %v6943 = vpop.f32.mrb[0].mxu0
    %6944 = vdwg.mxu0
    %6945 = vmatprep.subr.bf16.mxu0 %v6793
    %6946 = vmatpush1.bf16.msra.mxu0 %v6792
    %6947 = vmatprep.subr.bf16.mxu0 %v6801
    %6948 = vmatpush1.bf16.msra.mxu0 %v6800
    %6949 = vmatprep.subr.bf16.mxu0 0
    %6950 = vmatpush1.bf16.msra.mxu0 0
    %6951 = vmatprep.subr.bf16.mxu0 0
    %6952 = vmatpush1.bf16.msra.mxu0 0
    %6953 = vmatprep.subr.bf16.mxu0 0
    %6954 = vmatpush1.bf16.msra.mxu0 0
    %6955 = vmatprep.subr.bf16.mxu0 0
    %6956 = vmatpush1.bf16.msra.mxu0 0
    %6957 = vmatprep.subr.bf16.mxu0 0
    %6958 = vmatpush1.bf16.msra.mxu0 0
    %6959 = vmatprep.subr.bf16.mxu0 0
    %6960 = vmatpush1.bf16.msra.mxu0 0
    %6961 = vmatprep.subr.bf16.mxu0 0
    %6962 = vmatpush1.bf16.msra.mxu0 0
    %6963 = vmatprep.subr.bf16.mxu0 0
    %6964 = vmatpush1.bf16.msra.mxu0 0
    %6965 = vmatprep.subr.bf16.mxu0 0
    %6966 = vmatpush1.bf16.msra.mxu0 0
    %6967 = vmatprep.subr.bf16.mxu0 0
    %6968 = vmatpush1.bf16.msra.mxu0 0
    %6969 = vmatprep.subr.bf16.mxu0 0
    %6970 = vmatpush1.bf16.msra.mxu0 0
    %6971 = vmatprep.subr.bf16.mxu0 0
    %6972 = vmatpush1.bf16.msra.mxu0 0
    %6973 = vmatprep.subr.bf16.mxu0 0
    %6974 = vmatpush1.bf16.msra.mxu0 0
    %6975 = vmatprep.subr.bf16.mxu0 0
    %6976 = vmatpush1.bf16.msra.mxu0 0
    %6977 = vmatprep.mubr.bf16.mxu0 0
    %6978 = vmatmul.mubr.bf16.gmra.mrb[0].mxu0 %v6820
    %v6979 = vpop.f32.mrb[0].mxu0
    %v6980 = vadd.f32 0.0, %v6979
    %v6981 = vpop.f32.mrb[0].mxu0
    %v6982 = vadd.f32 0.0, %v6981
    %v6983 = vpop.f32.mrb[0].mxu0
    %v6984 = vpop.f32.mrb[0].mxu0
    %6985 = vdwg.mxu0
    %v6986 = vadd.f32 %v6592, %v6857
    %v6987 = vadd.f32 %v6594, %v6859
    %v6988 = vadd.f32 %v6633, %v6898
    %v6989 = vadd.f32 %v6635, %v6900
    %v6990 = vadd.f32 %v6674, %v6939
    %v6991 = vadd.f32 %v6676, %v6941
    %v6992 = vadd.f32 %v6715, %v6980
    %v6993 = vadd.f32 %v6717, %v6982
    %v6994 = vld [vmem:[#allocation70] sm:$0xff]
    %v6996 = vlaneseq
    %v6997 = vshrl.u32 %v6996, 7
    %v6998 = vsub.s32 0, %v6997
    %v6999 = vrot.slane %v6994, %v6998
    %v7000 = vlaneseq
    %v7001 = vshrl.u32 %v7000, 7
    %v7002 = vsub.s32 1, %v7001
    %v7003 = vrot.slane %v6994, %v7002
    %v7004 = vlaneseq
    %v7005 = vshrl.u32 %v7004, 7
    %v7006 = vsub.s32 2, %v7005
    %v7007 = vrot.slane %v6994, %v7006
    %v7008 = vlaneseq
    %v7009 = vshrl.u32 %v7008, 7
    %v7010 = vsub.s32 3, %v7009
    %v7011 = vrot.slane %v6994, %v7010
    %v7012 = vlaneseq
    %v7013 = vshrl.u32 %v7012, 7
    %v7014 = vsub.s32 4, %v7013
    %v7015 = vrot.slane %v6994, %v7014
    %v7016 = vlaneseq
    %v7017 = vshrl.u32 %v7016, 7
    %v7018 = vsub.s32 5, %v7017
    %v7019 = vrot.slane %v6994, %v7018
    %v7020 = vlaneseq
    %v7021 = vshrl.u32 %v7020, 7
    %v7022 = vsub.s32 6, %v7021
    %v7023 = vrot.slane %v6994, %v7022
    %v7024 = vlaneseq
    %v7025 = vshrl.u32 %v7024, 7
    %v7026 = vsub.s32 7, %v7025
    %v7027 = vrot.slane %v6994, %v7026
    %v7036 = vadd.f32 %v6986, %v6999
    %v7037 = vadd.f32 %v6987, %v7003
    %v7038 = vadd.f32 %v6988, %v7007
    %v7039 = vadd.f32 %v6989, %v7011
    %v7040 = vadd.f32 %v6990, %v7015
    %v7041 = vadd.f32 %v6991, %v7019
    %v7042 = vadd.f32 %v6992, %v7023
    %v7043 = vadd.f32 %v6993, %v7027
    %v7044 = vmax.f32 %v7036, 0.0
    %v7045 = vmax.f32 %v7037, 0.0
    %v7046 = vmax.f32 %v7038, 0.0
    %v7047 = vmax.f32 %v7039, 0.0
    %v7048 = vmax.f32 %v7040, 0.0
    %v7049 = vmax.f32 %v7041, 0.0
    %v7050 = vmax.f32 %v7042, 0.0
    %v7051 = vmax.f32 %v7043, 0.0
    %v7052 = vpack.c.bf16 %v7044, %v7044
    %v7053 = vpack.c.bf16 %v7045, %v7045
    %v7054 = vpack.c.bf16 %v7046, %v7046
    %v7055 = vpack.c.bf16 %v7047, %v7047
    %v7056 = vpack.c.bf16 %v7048, %v7048
    %v7057 = vpack.c.bf16 %v7049, %v7049
    %v7058 = vpack.c.bf16 %v7050, %v7050
    %v7059 = vpack.c.bf16 %v7051, %v7051
    %v7060 = vld [vmem:[#allocation71] sm:$0xff]
    %v7061 = vld [vmem:[#allocation71 + $0x8] sm:$0xff]
    %v7062 = vld [vmem:[#allocation71 + $0x10] sm:$0xff]
    %v7063 = vld [vmem:[#allocation71 + $0x18] sm:$0xff]
    %v7064 = vld [vmem:[#allocation71 + $0x20] sm:$0xff]
    %v7065 = vld [vmem:[#allocation71 + $0x28] sm:$0xff]
    %v7066 = vld [vmem:[#allocation71 + $0x30] sm:$0xff]
    %v7067 = vld [vmem:[#allocation71 + $0x38] sm:$0xff]
    %v7068 = vld [vmem:[#allocation71 + $0x40] sm:$0xff]
    %v7069 = vld [vmem:[#allocation71 + $0x48] sm:$0xff]
    %v7070 = vld [vmem:[#allocation71 + $0x50] sm:$0xff]
    %v7071 = vld [vmem:[#allocation71 + $0x58] sm:$0xff]
    %v7072 = vld [vmem:[#allocation71 + $0x60] sm:$0xff]
    %v7073 = vld [vmem:[#allocation71 + $0x68] sm:$0xff]
    %v7074 = vld [vmem:[#allocation71 + $0x70] sm:$0xff]
    %v7075 = vld [vmem:[#allocation71 + $0x78] sm:$0xff]
    %v7076 = vld [vmem:[#allocation71 + $0x80] sm:$0xff]
    %v7077 = vld [vmem:[#allocation71 + $0x88] sm:$0xff]
    %v7078 = vld [vmem:[#allocation71 + $0x90] sm:$0xff]
    %v7079 = vld [vmem:[#allocation71 + $0x98] sm:$0xff]
    %v7080 = vld [vmem:[#allocation71 + $0xa0] sm:$0xff]
    %v7081 = vld [vmem:[#allocation71 + $0xa8] sm:$0xff]
    %v7082 = vld [vmem:[#allocation71 + $0xb0] sm:$0xff]
    %v7083 = vld [vmem:[#allocation71 + $0xb8] sm:$0xff]
    %v7084 = vld [vmem:[#allocation71 + $0xc0] sm:$0xff]
    %v7085 = vld [vmem:[#allocation71 + $0xc8] sm:$0xff]
    %v7086 = vld [vmem:[#allocation71 + $0xd0] sm:$0xff]
    %v7087 = vld [vmem:[#allocation71 + $0xd8] sm:$0xff]
    %v7088 = vld [vmem:[#allocation71 + $0xe0] sm:$0xff]
    %v7089 = vld [vmem:[#allocation71 + $0xe8] sm:$0xff]
    %v7090 = vld [vmem:[#allocation71 + $0xf0] sm:$0xff]
    %v7091 = vld [vmem:[#allocation71 + $0xf8] sm:$0xff]
    %v7092 = vld [vmem:[#allocation71 + $0x100] sm:$0xff]
    %v7093 = vld [vmem:[#allocation71 + $0x108] sm:$0xff]
    %v7094 = vld [vmem:[#allocation71 + $0x110] sm:$0xff]
    %v7095 = vld [vmem:[#allocation71 + $0x118] sm:$0xff]
    %v7096 = vld [vmem:[#allocation71 + $0x120] sm:$0xff]
    %v7097 = vld [vmem:[#allocation71 + $0x128] sm:$0xff]
    %v7098 = vld [vmem:[#allocation71 + $0x130] sm:$0xff]
    %v7099 = vld [vmem:[#allocation71 + $0x138] sm:$0xff]
    %v7100 = vld [vmem:[#allocation71 + $0x140] sm:$0xff]
    %v7101 = vld [vmem:[#allocation71 + $0x148] sm:$0xff]
    %v7102 = vld [vmem:[#allocation71 + $0x150] sm:$0xff]
    %v7103 = vld [vmem:[#allocation71 + $0x158] sm:$0xff]
    %v7104 = vld [vmem:[#allocation71 + $0x160] sm:$0xff]
    %v7105 = vld [vmem:[#allocation71 + $0x168] sm:$0xff]
    %v7106 = vld [vmem:[#allocation71 + $0x170] sm:$0xff]
    %v7107 = vld [vmem:[#allocation71 + $0x178] sm:$0xff]
    %v7108 = vld [vmem:[#allocation71 + $0x180] sm:$0xff]
    %v7109 = vld [vmem:[#allocation71 + $0x188] sm:$0xff]
    %v7110 = vld [vmem:[#allocation71 + $0x190] sm:$0xff]
    %v7111 = vld [vmem:[#allocation71 + $0x198] sm:$0xff]
    %v7112 = vld [vmem:[#allocation71 + $0x1a0] sm:$0xff]
    %v7113 = vld [vmem:[#allocation71 + $0x1a8] sm:$0xff]
    %v7114 = vld [vmem:[#allocation71 + $0x1b0] sm:$0xff]
    %v7115 = vld [vmem:[#allocation71 + $0x1b8] sm:$0xff]
    %v7116 = vld [vmem:[#allocation71 + $0x1c0] sm:$0xff]
    %v7117 = vld [vmem:[#allocation71 + $0x1c8] sm:$0xff]
    %v7118 = vld [vmem:[#allocation71 + $0x1d0] sm:$0xff]
    %v7119 = vld [vmem:[#allocation71 + $0x1d8] sm:$0xff]
    %v7120 = vld [vmem:[#allocation71 + $0x1e0] sm:$0xff]
    %v7121 = vld [vmem:[#allocation71 + $0x1e8] sm:$0xff]
    %v7122 = vld [vmem:[#allocation71 + $0x1f0] sm:$0xff]
    %v7123 = vld [vmem:[#allocation71 + $0x1f8] sm:$0xff]
    %v7124 = vld [vmem:[#allocation71 + $0x200] sm:$0xff]
    %v7125 = vld [vmem:[#allocation71 + $0x208] sm:$0xff]
    %v7126 = vld [vmem:[#allocation71 + $0x210] sm:$0xff]
    %v7127 = vld [vmem:[#allocation71 + $0x218] sm:$0xff]
    %v7128 = vld [vmem:[#allocation71 + $0x220] sm:$0xff]
    %v7129 = vld [vmem:[#allocation71 + $0x228] sm:$0xff]
    %v7130 = vld [vmem:[#allocation71 + $0x230] sm:$0xff]
    %v7131 = vld [vmem:[#allocation71 + $0x238] sm:$0xff]
    %v7132 = vld [vmem:[#allocation71 + $0x240] sm:$0xff]
    %v7133 = vld [vmem:[#allocation71 + $0x248] sm:$0xff]
    %v7134 = vld [vmem:[#allocation71 + $0x250] sm:$0xff]
    %v7135 = vld [vmem:[#allocation71 + $0x258] sm:$0xff]
    %v7136 = vld [vmem:[#allocation71 + $0x260] sm:$0xff]
    %v7137 = vld [vmem:[#allocation71 + $0x268] sm:$0xff]
    %v7138 = vld [vmem:[#allocation71 + $0x270] sm:$0xff]
    %v7139 = vld [vmem:[#allocation71 + $0x278] sm:$0xff]
    %v7140 = vld [vmem:[#allocation71 + $0x280] sm:$0xff]
    %v7141 = vld [vmem:[#allocation71 + $0x288] sm:$0xff]
    %v7142 = vld [vmem:[#allocation71 + $0x290] sm:$0xff]
    %v7143 = vld [vmem:[#allocation71 + $0x298] sm:$0xff]
    %v7144 = vld [vmem:[#allocation71 + $0x2a0] sm:$0xff]
    %v7145 = vld [vmem:[#allocation71 + $0x2a8] sm:$0xff]
    %v7146 = vld [vmem:[#allocation71 + $0x2b0] sm:$0xff]
    %v7147 = vld [vmem:[#allocation71 + $0x2b8] sm:$0xff]
    %v7148 = vld [vmem:[#allocation71 + $0x2c0] sm:$0xff]
    %v7149 = vld [vmem:[#allocation71 + $0x2c8] sm:$0xff]
    %v7150 = vld [vmem:[#allocation71 + $0x2d0] sm:$0xff]
    %v7151 = vld [vmem:[#allocation71 + $0x2d8] sm:$0xff]
    %v7152 = vld [vmem:[#allocation71 + $0x2e0] sm:$0xff]
    %v7153 = vld [vmem:[#allocation71 + $0x2e8] sm:$0xff]
    %v7154 = vld [vmem:[#allocation71 + $0x2f0] sm:$0xff]
    %v7155 = vld [vmem:[#allocation71 + $0x2f8] sm:$0xff]
    %v7156 = vld [vmem:[#allocation71 + $0x300] sm:$0xff]
    %v7157 = vld [vmem:[#allocation71 + $0x308] sm:$0xff]
    %v7158 = vld [vmem:[#allocation71 + $0x310] sm:$0xff]
    %v7159 = vld [vmem:[#allocation71 + $0x318] sm:$0xff]
    %v7160 = vld [vmem:[#allocation71 + $0x320] sm:$0xff]
    %v7161 = vld [vmem:[#allocation71 + $0x328] sm:$0xff]
    %v7162 = vld [vmem:[#allocation71 + $0x330] sm:$0xff]
    %v7163 = vld [vmem:[#allocation71 + $0x338] sm:$0xff]
    %v7164 = vld [vmem:[#allocation71 + $0x340] sm:$0xff]
    %v7165 = vld [vmem:[#allocation71 + $0x348] sm:$0xff]
    %v7166 = vld [vmem:[#allocation71 + $0x350] sm:$0xff]
    %v7167 = vld [vmem:[#allocation71 + $0x358] sm:$0xff]
    %v7168 = vld [vmem:[#allocation71 + $0x360] sm:$0xff]
    %v7169 = vld [vmem:[#allocation71 + $0x368] sm:$0xff]
    %v7170 = vld [vmem:[#allocation71 + $0x370] sm:$0xff]
    %v7171 = vld [vmem:[#allocation71 + $0x378] sm:$0xff]
    %v7172 = vld [vmem:[#allocation71 + $0x380] sm:$0xff]
    %v7173 = vld [vmem:[#allocation71 + $0x388] sm:$0xff]
    %v7174 = vld [vmem:[#allocation71 + $0x390] sm:$0xff]
    %v7175 = vld [vmem:[#allocation71 + $0x398] sm:$0xff]
    %v7176 = vld [vmem:[#allocation71 + $0x3a0] sm:$0xff]
    %v7177 = vld [vmem:[#allocation71 + $0x3a8] sm:$0xff]
    %v7178 = vld [vmem:[#allocation71 + $0x3b0] sm:$0xff]
    %v7179 = vld [vmem:[#allocation71 + $0x3b8] sm:$0xff]
    %v7180 = vld [vmem:[#allocation71 + $0x3c0] sm:$0xff]
    %v7181 = vld [vmem:[#allocation71 + $0x3c8] sm:$0xff]
    %v7182 = vld [vmem:[#allocation71 + $0x3d0] sm:$0xff]
    %v7183 = vld [vmem:[#allocation71 + $0x3d8] sm:$0xff]
    %v7184 = vld [vmem:[#allocation71 + $0x3e0] sm:$0xff]
    %v7185 = vld [vmem:[#allocation71 + $0x3e8] sm:$0xff]
    %v7186 = vld [vmem:[#allocation71 + $0x3f0] sm:$0xff]
    %v7187 = vld [vmem:[#allocation71 + $0x3f8] sm:$0xff]
    %v7188 = vld [vmem:[#allocation71 + $0x400] sm:$0xff]
    %v7189 = vld [vmem:[#allocation71 + $0x408] sm:$0xff]
    %v7190 = vld [vmem:[#allocation71 + $0x410] sm:$0xff]
    %v7191 = vld [vmem:[#allocation71 + $0x418] sm:$0xff]
    %v7192 = vld [vmem:[#allocation71 + $0x420] sm:$0xff]
    %v7193 = vld [vmem:[#allocation71 + $0x428] sm:$0xff]
    %v7194 = vld [vmem:[#allocation71 + $0x430] sm:$0xff]
    %v7195 = vld [vmem:[#allocation71 + $0x438] sm:$0xff]
    %v7196 = vld [vmem:[#allocation71 + $0x440] sm:$0xff]
    %v7197 = vld [vmem:[#allocation71 + $0x448] sm:$0xff]
    %v7198 = vld [vmem:[#allocation71 + $0x450] sm:$0xff]
    %v7199 = vld [vmem:[#allocation71 + $0x458] sm:$0xff]
    %v7200 = vld [vmem:[#allocation71 + $0x460] sm:$0xff]
    %v7201 = vld [vmem:[#allocation71 + $0x468] sm:$0xff]
    %v7202 = vld [vmem:[#allocation71 + $0x470] sm:$0xff]
    %v7203 = vld [vmem:[#allocation71 + $0x478] sm:$0xff]
    %v7204 = vld [vmem:[#allocation71 + $0x480] sm:$0xff]
    %v7205 = vld [vmem:[#allocation71 + $0x488] sm:$0xff]
    %v7206 = vld [vmem:[#allocation71 + $0x490] sm:$0xff]
    %v7207 = vld [vmem:[#allocation71 + $0x498] sm:$0xff]
    %v7208 = vld [vmem:[#allocation71 + $0x4a0] sm:$0xff]
    %v7209 = vld [vmem:[#allocation71 + $0x4a8] sm:$0xff]
    %v7210 = vld [vmem:[#allocation71 + $0x4b0] sm:$0xff]
    %v7211 = vld [vmem:[#allocation71 + $0x4b8] sm:$0xff]
    %v7212 = vld [vmem:[#allocation71 + $0x4c0] sm:$0xff]
    %v7213 = vld [vmem:[#allocation71 + $0x4c8] sm:$0xff]
    %v7214 = vld [vmem:[#allocation71 + $0x4d0] sm:$0xff]
    %v7215 = vld [vmem:[#allocation71 + $0x4d8] sm:$0xff]
    %v7216 = vld [vmem:[#allocation71 + $0x4e0] sm:$0xff]
    %v7217 = vld [vmem:[#allocation71 + $0x4e8] sm:$0xff]
    %v7218 = vld [vmem:[#allocation71 + $0x4f0] sm:$0xff]
    %v7219 = vld [vmem:[#allocation71 + $0x4f8] sm:$0xff]
    %v7220 = vld [vmem:[#allocation71 + $0x500] sm:$0xff]
    %v7221 = vld [vmem:[#allocation71 + $0x508] sm:$0xff]
    %v7222 = vld [vmem:[#allocation71 + $0x510] sm:$0xff]
    %v7223 = vld [vmem:[#allocation71 + $0x518] sm:$0xff]
    %v7224 = vld [vmem:[#allocation71 + $0x520] sm:$0xff]
    %v7225 = vld [vmem:[#allocation71 + $0x528] sm:$0xff]
    %v7226 = vld [vmem:[#allocation71 + $0x530] sm:$0xff]
    %v7227 = vld [vmem:[#allocation71 + $0x538] sm:$0xff]
    %v7228 = vld [vmem:[#allocation71 + $0x540] sm:$0xff]
    %v7229 = vld [vmem:[#allocation71 + $0x548] sm:$0xff]
    %v7230 = vld [vmem:[#allocation71 + $0x550] sm:$0xff]
    %v7231 = vld [vmem:[#allocation71 + $0x558] sm:$0xff]
    %v7232 = vld [vmem:[#allocation71 + $0x560] sm:$0xff]
    %v7233 = vld [vmem:[#allocation71 + $0x568] sm:$0xff]
    %v7234 = vld [vmem:[#allocation71 + $0x570] sm:$0xff]
    %v7235 = vld [vmem:[#allocation71 + $0x578] sm:$0xff]
    %v7236 = vld [vmem:[#allocation71 + $0x580] sm:$0xff]
    %v7237 = vld [vmem:[#allocation71 + $0x588] sm:$0xff]
    %v7238 = vld [vmem:[#allocation71 + $0x590] sm:$0xff]
    %v7239 = vld [vmem:[#allocation71 + $0x598] sm:$0xff]
    %v7240 = vld [vmem:[#allocation71 + $0x5a0] sm:$0xff]
    %v7241 = vld [vmem:[#allocation71 + $0x5a8] sm:$0xff]
    %v7242 = vld [vmem:[#allocation71 + $0x5b0] sm:$0xff]
    %v7243 = vld [vmem:[#allocation71 + $0x5b8] sm:$0xff]
    %v7244 = vld [vmem:[#allocation71 + $0x5c0] sm:$0xff]
    %v7245 = vld [vmem:[#allocation71 + $0x5c8] sm:$0xff]
    %v7246 = vld [vmem:[#allocation71 + $0x5d0] sm:$0xff]
    %v7247 = vld [vmem:[#allocation71 + $0x5d8] sm:$0xff]
    %v7248 = vld [vmem:[#allocation71 + $0x5e0] sm:$0xff]
    %v7249 = vld [vmem:[#allocation71 + $0x5e8] sm:$0xff]
    %v7250 = vld [vmem:[#allocation71 + $0x5f0] sm:$0xff]
    %v7251 = vld [vmem:[#allocation71 + $0x5f8] sm:$0xff]
    %v7252 = vld [vmem:[#allocation71 + $0x600] sm:$0xff]
    %v7253 = vld [vmem:[#allocation71 + $0x608] sm:$0xff]
    %v7254 = vld [vmem:[#allocation71 + $0x610] sm:$0xff]
    %v7255 = vld [vmem:[#allocation71 + $0x618] sm:$0xff]
    %v7256 = vld [vmem:[#allocation71 + $0x620] sm:$0xff]
    %v7257 = vld [vmem:[#allocation71 + $0x628] sm:$0xff]
    %v7258 = vld [vmem:[#allocation71 + $0x630] sm:$0xff]
    %v7259 = vld [vmem:[#allocation71 + $0x638] sm:$0xff]
    %v7260 = vld [vmem:[#allocation71 + $0x640] sm:$0xff]
    %v7261 = vld [vmem:[#allocation71 + $0x648] sm:$0xff]
    %v7262 = vld [vmem:[#allocation71 + $0x650] sm:$0xff]
    %v7263 = vld [vmem:[#allocation71 + $0x658] sm:$0xff]
    %v7264 = vld [vmem:[#allocation71 + $0x660] sm:$0xff]
    %v7265 = vld [vmem:[#allocation71 + $0x668] sm:$0xff]
    %v7266 = vld [vmem:[#allocation71 + $0x670] sm:$0xff]
    %v7267 = vld [vmem:[#allocation71 + $0x678] sm:$0xff]
    %v7268 = vld [vmem:[#allocation71 + $0x680] sm:$0xff]
    %v7269 = vld [vmem:[#allocation71 + $0x688] sm:$0xff]
    %v7270 = vld [vmem:[#allocation71 + $0x690] sm:$0xff]
    %v7271 = vld [vmem:[#allocation71 + $0x698] sm:$0xff]
    %v7272 = vld [vmem:[#allocation71 + $0x6a0] sm:$0xff]
    %v7273 = vld [vmem:[#allocation71 + $0x6a8] sm:$0xff]
    %v7274 = vld [vmem:[#allocation71 + $0x6b0] sm:$0xff]
    %v7275 = vld [vmem:[#allocation71 + $0x6b8] sm:$0xff]
    %v7276 = vld [vmem:[#allocation71 + $0x6c0] sm:$0xff]
    %v7277 = vld [vmem:[#allocation71 + $0x6c8] sm:$0xff]
    %v7278 = vld [vmem:[#allocation71 + $0x6d0] sm:$0xff]
    %v7279 = vld [vmem:[#allocation71 + $0x6d8] sm:$0xff]
    %v7280 = vld [vmem:[#allocation71 + $0x6e0] sm:$0xff]
    %v7281 = vld [vmem:[#allocation71 + $0x6e8] sm:$0xff]
    %v7282 = vld [vmem:[#allocation71 + $0x6f0] sm:$0xff]
    %v7283 = vld [vmem:[#allocation71 + $0x6f8] sm:$0xff]
    %v7284 = vld [vmem:[#allocation71 + $0x700] sm:$0xff]
    %v7285 = vld [vmem:[#allocation71 + $0x708] sm:$0xff]
    %v7286 = vld [vmem:[#allocation71 + $0x710] sm:$0xff]
    %v7287 = vld [vmem:[#allocation71 + $0x718] sm:$0xff]
    %v7288 = vld [vmem:[#allocation71 + $0x720] sm:$0xff]
    %v7289 = vld [vmem:[#allocation71 + $0x728] sm:$0xff]
    %v7290 = vld [vmem:[#allocation71 + $0x730] sm:$0xff]
    %v7291 = vld [vmem:[#allocation71 + $0x738] sm:$0xff]
    %v7292 = vld [vmem:[#allocation71 + $0x740] sm:$0xff]
    %v7293 = vld [vmem:[#allocation71 + $0x748] sm:$0xff]
    %v7294 = vld [vmem:[#allocation71 + $0x750] sm:$0xff]
    %v7295 = vld [vmem:[#allocation71 + $0x758] sm:$0xff]
    %v7296 = vld [vmem:[#allocation71 + $0x760] sm:$0xff]
    %v7297 = vld [vmem:[#allocation71 + $0x768] sm:$0xff]
    %v7298 = vld [vmem:[#allocation71 + $0x770] sm:$0xff]
    %v7299 = vld [vmem:[#allocation71 + $0x778] sm:$0xff]
    %v7300 = vld [vmem:[#allocation71 + $0x780] sm:$0xff]
    %v7301 = vld [vmem:[#allocation71 + $0x788] sm:$0xff]
    %v7302 = vld [vmem:[#allocation71 + $0x790] sm:$0xff]
    %v7303 = vld [vmem:[#allocation71 + $0x798] sm:$0xff]
    %v7304 = vld [vmem:[#allocation71 + $0x7a0] sm:$0xff]
    %v7305 = vld [vmem:[#allocation71 + $0x7a8] sm:$0xff]
    %v7306 = vld [vmem:[#allocation71 + $0x7b0] sm:$0xff]
    %v7307 = vld [vmem:[#allocation71 + $0x7b8] sm:$0xff]
    %v7308 = vld [vmem:[#allocation71 + $0x7c0] sm:$0xff]
    %v7309 = vld [vmem:[#allocation71 + $0x7c8] sm:$0xff]
    %v7310 = vld [vmem:[#allocation71 + $0x7d0] sm:$0xff]
    %v7311 = vld [vmem:[#allocation71 + $0x7d8] sm:$0xff]
    %v7312 = vld [vmem:[#allocation71 + $0x7e0] sm:$0xff]
    %v7313 = vld [vmem:[#allocation71 + $0x7e8] sm:$0xff]
    %v7314 = vld [vmem:[#allocation71 + $0x7f0] sm:$0xff]
    %v7315 = vld [vmem:[#allocation71 + $0x7f8] sm:$0xff]
    %v7316 = vld [vmem:[#allocation71 + $0x800] sm:$0xff]
    %v7317 = vld [vmem:[#allocation71 + $0x808] sm:$0xff]
    %v7318 = vld [vmem:[#allocation71 + $0x810] sm:$0xff]
    %v7319 = vld [vmem:[#allocation71 + $0x818] sm:$0xff]
    %v7320 = vld [vmem:[#allocation71 + $0x820] sm:$0xff]
    %v7321 = vld [vmem:[#allocation71 + $0x828] sm:$0xff]
    %v7322 = vld [vmem:[#allocation71 + $0x830] sm:$0xff]
    %v7323 = vld [vmem:[#allocation71 + $0x838] sm:$0xff]
    %v7324 = vld [vmem:[#allocation71 + $0x840] sm:$0xff]
    %v7325 = vld [vmem:[#allocation71 + $0x848] sm:$0xff]
    %v7326 = vld [vmem:[#allocation71 + $0x850] sm:$0xff]
    %v7327 = vld [vmem:[#allocation71 + $0x858] sm:$0xff]
    %v7328 = vld [vmem:[#allocation71 + $0x860] sm:$0xff]
    %v7329 = vld [vmem:[#allocation71 + $0x868] sm:$0xff]
    %v7330 = vld [vmem:[#allocation71 + $0x870] sm:$0xff]
    %v7331 = vld [vmem:[#allocation71 + $0x878] sm:$0xff]
    %v7332 = vld [vmem:[#allocation71 + $0x880] sm:$0xff]
    %v7333 = vld [vmem:[#allocation71 + $0x888] sm:$0xff]
    %v7334 = vld [vmem:[#allocation71 + $0x890] sm:$0xff]
    %v7335 = vld [vmem:[#allocation71 + $0x898] sm:$0xff]
    %v7336 = vld [vmem:[#allocation71 + $0x8a0] sm:$0xff]
    %v7337 = vld [vmem:[#allocation71 + $0x8a8] sm:$0xff]
    %v7338 = vld [vmem:[#allocation71 + $0x8b0] sm:$0xff]
    %v7339 = vld [vmem:[#allocation71 + $0x8b8] sm:$0xff]
    %v7340 = vld [vmem:[#allocation71 + $0x8c0] sm:$0xff]
    %v7341 = vld [vmem:[#allocation71 + $0x8c8] sm:$0xff]
    %v7342 = vld [vmem:[#allocation71 + $0x8d0] sm:$0xff]
    %v7343 = vld [vmem:[#allocation71 + $0x8d8] sm:$0xff]
    %v7344 = vld [vmem:[#allocation71 + $0x8e0] sm:$0xff]
    %v7345 = vld [vmem:[#allocation71 + $0x8e8] sm:$0xff]
    %v7346 = vld [vmem:[#allocation71 + $0x8f0] sm:$0xff]
    %v7347 = vld [vmem:[#allocation71 + $0x8f8] sm:$0xff]
    %v7348 = vld [vmem:[#allocation71 + $0x900] sm:$0xff]
    %v7349 = vld [vmem:[#allocation71 + $0x908] sm:$0xff]
    %v7350 = vld [vmem:[#allocation71 + $0x910] sm:$0xff]
    %v7351 = vld [vmem:[#allocation71 + $0x918] sm:$0xff]
    %v7352 = vld [vmem:[#allocation71 + $0x920] sm:$0xff]
    %v7353 = vld [vmem:[#allocation71 + $0x928] sm:$0xff]
    %v7354 = vld [vmem:[#allocation71 + $0x930] sm:$0xff]
    %v7355 = vld [vmem:[#allocation71 + $0x938] sm:$0xff]
    %v7356 = vld [vmem:[#allocation71 + $0x940] sm:$0xff]
    %v7357 = vld [vmem:[#allocation71 + $0x948] sm:$0xff]
    %v7358 = vld [vmem:[#allocation71 + $0x950] sm:$0xff]
    %v7359 = vld [vmem:[#allocation71 + $0x958] sm:$0xff]
    %v7360 = vld [vmem:[#allocation71 + $0x960] sm:$0xff]
    %v7361 = vld [vmem:[#allocation71 + $0x968] sm:$0xff]
    %v7362 = vld [vmem:[#allocation71 + $0x970] sm:$0xff]
    %v7363 = vld [vmem:[#allocation71 + $0x978] sm:$0xff]
    %v7364 = vld [vmem:[#allocation71 + $0x980] sm:$0xff]
    %v7365 = vld [vmem:[#allocation71 + $0x988] sm:$0xff]
    %v7366 = vld [vmem:[#allocation71 + $0x990] sm:$0xff]
    %v7367 = vld [vmem:[#allocation71 + $0x998] sm:$0xff]
    %v7368 = vld [vmem:[#allocation71 + $0x9a0] sm:$0xff]
    %v7369 = vld [vmem:[#allocation71 + $0x9a8] sm:$0xff]
    %v7370 = vld [vmem:[#allocation71 + $0x9b0] sm:$0xff]
    %v7371 = vld [vmem:[#allocation71 + $0x9b8] sm:$0xff]
    %v7372 = vld [vmem:[#allocation71 + $0x9c0] sm:$0xff]
    %v7373 = vld [vmem:[#allocation71 + $0x9c8] sm:$0xff]
    %v7374 = vld [vmem:[#allocation71 + $0x9d0] sm:$0xff]
    %v7375 = vld [vmem:[#allocation71 + $0x9d8] sm:$0xff]
    %v7376 = vld [vmem:[#allocation71 + $0x9e0] sm:$0xff]
    %v7377 = vld [vmem:[#allocation71 + $0x9e8] sm:$0xff]
    %v7378 = vld [vmem:[#allocation71 + $0x9f0] sm:$0xff]
    %v7379 = vld [vmem:[#allocation71 + $0x9f8] sm:$0xff]
    %v7380 = vld [vmem:[#allocation71 + $0xa00] sm:$0xff]
    %v7381 = vld [vmem:[#allocation71 + $0xa08] sm:$0xff]
    %v7382 = vld [vmem:[#allocation71 + $0xa10] sm:$0xff]
    %v7383 = vld [vmem:[#allocation71 + $0xa18] sm:$0xff]
    %v7384 = vld [vmem:[#allocation71 + $0xa20] sm:$0xff]
    %v7385 = vld [vmem:[#allocation71 + $0xa28] sm:$0xff]
    %v7386 = vld [vmem:[#allocation71 + $0xa30] sm:$0xff]
    %v7387 = vld [vmem:[#allocation71 + $0xa38] sm:$0xff]
    %v7388 = vld [vmem:[#allocation71 + $0xa40] sm:$0xff]
    %v7389 = vld [vmem:[#allocation71 + $0xa48] sm:$0xff]
    %v7390 = vld [vmem:[#allocation71 + $0xa50] sm:$0xff]
    %v7391 = vld [vmem:[#allocation71 + $0xa58] sm:$0xff]
    %v7392 = vld [vmem:[#allocation71 + $0xa60] sm:$0xff]
    %v7393 = vld [vmem:[#allocation71 + $0xa68] sm:$0xff]
    %v7394 = vld [vmem:[#allocation71 + $0xa70] sm:$0xff]
    %v7395 = vld [vmem:[#allocation71 + $0xa78] sm:$0xff]
    %v7396 = vld [vmem:[#allocation71 + $0xa80] sm:$0xff]
    %v7397 = vld [vmem:[#allocation71 + $0xa88] sm:$0xff]
    %v7398 = vld [vmem:[#allocation71 + $0xa90] sm:$0xff]
    %v7399 = vld [vmem:[#allocation71 + $0xa98] sm:$0xff]
    %v7400 = vld [vmem:[#allocation71 + $0xaa0] sm:$0xff]
    %v7401 = vld [vmem:[#allocation71 + $0xaa8] sm:$0xff]
    %v7402 = vld [vmem:[#allocation71 + $0xab0] sm:$0xff]
    %v7403 = vld [vmem:[#allocation71 + $0xab8] sm:$0xff]
    %v7404 = vld [vmem:[#allocation71 + $0xac0] sm:$0xff]
    %v7405 = vld [vmem:[#allocation71 + $0xac8] sm:$0xff]
    %v7406 = vld [vmem:[#allocation71 + $0xad0] sm:$0xff]
    %v7407 = vld [vmem:[#allocation71 + $0xad8] sm:$0xff]
    %v7408 = vld [vmem:[#allocation71 + $0xae0] sm:$0xff]
    %v7409 = vld [vmem:[#allocation71 + $0xae8] sm:$0xff]
    %v7410 = vld [vmem:[#allocation71 + $0xaf0] sm:$0xff]
    %v7411 = vld [vmem:[#allocation71 + $0xaf8] sm:$0xff]
    %v7412 = vld [vmem:[#allocation71 + $0xb00] sm:$0xff]
    %v7413 = vld [vmem:[#allocation71 + $0xb08] sm:$0xff]
    %v7414 = vld [vmem:[#allocation71 + $0xb10] sm:$0xff]
    %v7415 = vld [vmem:[#allocation71 + $0xb18] sm:$0xff]
    %v7416 = vld [vmem:[#allocation71 + $0xb20] sm:$0xff]
    %v7417 = vld [vmem:[#allocation71 + $0xb28] sm:$0xff]
    %v7418 = vld [vmem:[#allocation71 + $0xb30] sm:$0xff]
    %v7419 = vld [vmem:[#allocation71 + $0xb38] sm:$0xff]
    %v7420 = vld [vmem:[#allocation71 + $0xb40] sm:$0xff]
    %v7421 = vld [vmem:[#allocation71 + $0xb48] sm:$0xff]
    %v7422 = vld [vmem:[#allocation71 + $0xb50] sm:$0xff]
    %v7423 = vld [vmem:[#allocation71 + $0xb58] sm:$0xff]
    %v7424 = vld [vmem:[#allocation71 + $0xb60] sm:$0xff]
    %v7425 = vld [vmem:[#allocation71 + $0xb68] sm:$0xff]
    %v7426 = vld [vmem:[#allocation71 + $0xb70] sm:$0xff]
    %v7427 = vld [vmem:[#allocation71 + $0xb78] sm:$0xff]
    %v7428 = vld [vmem:[#allocation71 + $0xb80] sm:$0xff]
    %v7429 = vld [vmem:[#allocation71 + $0xb88] sm:$0xff]
    %v7430 = vld [vmem:[#allocation71 + $0xb90] sm:$0xff]
    %v7431 = vld [vmem:[#allocation71 + $0xb98] sm:$0xff]
    %v7432 = vld [vmem:[#allocation71 + $0xba0] sm:$0xff]
    %v7433 = vld [vmem:[#allocation71 + $0xba8] sm:$0xff]
    %v7434 = vld [vmem:[#allocation71 + $0xbb0] sm:$0xff]
    %v7435 = vld [vmem:[#allocation71 + $0xbb8] sm:$0xff]
    %v7436 = vld [vmem:[#allocation71 + $0xbc0] sm:$0xff]
    %v7437 = vld [vmem:[#allocation71 + $0xbc8] sm:$0xff]
    %v7438 = vld [vmem:[#allocation71 + $0xbd0] sm:$0xff]
    %v7439 = vld [vmem:[#allocation71 + $0xbd8] sm:$0xff]
    %v7440 = vld [vmem:[#allocation71 + $0xbe0] sm:$0xff]
    %v7441 = vld [vmem:[#allocation71 + $0xbe8] sm:$0xff]
    %v7442 = vld [vmem:[#allocation71 + $0xbf0] sm:$0xff]
    %v7443 = vld [vmem:[#allocation71 + $0xbf8] sm:$0xff]
    %v7444 = vld [vmem:[#allocation71 + $0xc00] sm:$0xff]
    %v7445 = vld [vmem:[#allocation71 + $0xc08] sm:$0xff]
    %v7446 = vld [vmem:[#allocation71 + $0xc10] sm:$0xff]
    %v7447 = vld [vmem:[#allocation71 + $0xc18] sm:$0xff]
    %v7448 = vld [vmem:[#allocation71 + $0xc20] sm:$0xff]
    %v7449 = vld [vmem:[#allocation71 + $0xc28] sm:$0xff]
    %v7450 = vld [vmem:[#allocation71 + $0xc30] sm:$0xff]
    %v7451 = vld [vmem:[#allocation71 + $0xc38] sm:$0xff]
    %v7452 = vld [vmem:[#allocation71 + $0xc40] sm:$0xff]
    %v7453 = vld [vmem:[#allocation71 + $0xc48] sm:$0xff]
    %v7454 = vld [vmem:[#allocation71 + $0xc50] sm:$0xff]
    %v7455 = vld [vmem:[#allocation71 + $0xc58] sm:$0xff]
    %v7456 = vld [vmem:[#allocation71 + $0xc60] sm:$0xff]
    %v7457 = vld [vmem:[#allocation71 + $0xc68] sm:$0xff]
    %v7458 = vld [vmem:[#allocation71 + $0xc70] sm:$0xff]
    %v7459 = vld [vmem:[#allocation71 + $0xc78] sm:$0xff]
    %v7460 = vld [vmem:[#allocation71 + $0xc80] sm:$0xff]
    %v7461 = vld [vmem:[#allocation71 + $0xc88] sm:$0xff]
    %v7462 = vld [vmem:[#allocation71 + $0xc90] sm:$0xff]
    %v7463 = vld [vmem:[#allocation71 + $0xc98] sm:$0xff]
    %v7464 = vld [vmem:[#allocation71 + $0xca0] sm:$0xff]
    %v7465 = vld [vmem:[#allocation71 + $0xca8] sm:$0xff]
    %v7466 = vld [vmem:[#allocation71 + $0xcb0] sm:$0xff]
    %v7467 = vld [vmem:[#allocation71 + $0xcb8] sm:$0xff]
    %v7468 = vld [vmem:[#allocation71 + $0xcc0] sm:$0xff]
    %v7469 = vld [vmem:[#allocation71 + $0xcc8] sm:$0xff]
    %v7470 = vld [vmem:[#allocation71 + $0xcd0] sm:$0xff]
    %v7471 = vld [vmem:[#allocation71 + $0xcd8] sm:$0xff]
    %v7472 = vld [vmem:[#allocation71 + $0xce0] sm:$0xff]
    %v7473 = vld [vmem:[#allocation71 + $0xce8] sm:$0xff]
    %v7474 = vld [vmem:[#allocation71 + $0xcf0] sm:$0xff]
    %v7475 = vld [vmem:[#allocation71 + $0xcf8] sm:$0xff]
    %v7476 = vld [vmem:[#allocation71 + $0xd00] sm:$0xff]
    %v7477 = vld [vmem:[#allocation71 + $0xd08] sm:$0xff]
    %v7478 = vld [vmem:[#allocation71 + $0xd10] sm:$0xff]
    %v7479 = vld [vmem:[#allocation71 + $0xd18] sm:$0xff]
    %v7480 = vld [vmem:[#allocation71 + $0xd20] sm:$0xff]
    %v7481 = vld [vmem:[#allocation71 + $0xd28] sm:$0xff]
    %v7482 = vld [vmem:[#allocation71 + $0xd30] sm:$0xff]
    %v7483 = vld [vmem:[#allocation71 + $0xd38] sm:$0xff]
    %v7484 = vld [vmem:[#allocation71 + $0xd40] sm:$0xff]
    %v7485 = vld [vmem:[#allocation71 + $0xd48] sm:$0xff]
    %v7486 = vld [vmem:[#allocation71 + $0xd50] sm:$0xff]
    %v7487 = vld [vmem:[#allocation71 + $0xd58] sm:$0xff]
    %v7488 = vld [vmem:[#allocation71 + $0xd60] sm:$0xff]
    %v7489 = vld [vmem:[#allocation71 + $0xd68] sm:$0xff]
    %v7490 = vld [vmem:[#allocation71 + $0xd70] sm:$0xff]
    %v7491 = vld [vmem:[#allocation71 + $0xd78] sm:$0xff]
    %v7492 = vld [vmem:[#allocation71 + $0xd80] sm:$0xff]
    %v7493 = vld [vmem:[#allocation71 + $0xd88] sm:$0xff]
    %v7494 = vld [vmem:[#allocation71 + $0xd90] sm:$0xff]
    %v7495 = vld [vmem:[#allocation71 + $0xd98] sm:$0xff]
    %v7496 = vld [vmem:[#allocation71 + $0xda0] sm:$0xff]
    %v7497 = vld [vmem:[#allocation71 + $0xda8] sm:$0xff]
    %v7498 = vld [vmem:[#allocation71 + $0xdb0] sm:$0xff]
    %v7499 = vld [vmem:[#allocation71 + $0xdb8] sm:$0xff]
    %v7500 = vld [vmem:[#allocation71 + $0xdc0] sm:$0xff]
    %v7501 = vld [vmem:[#allocation71 + $0xdc8] sm:$0xff]
    %v7502 = vld [vmem:[#allocation71 + $0xdd0] sm:$0xff]
    %v7503 = vld [vmem:[#allocation71 + $0xdd8] sm:$0xff]
    %v7504 = vld [vmem:[#allocation71 + $0xde0] sm:$0xff]
    %v7505 = vld [vmem:[#allocation71 + $0xde8] sm:$0xff]
    %v7506 = vld [vmem:[#allocation71 + $0xdf0] sm:$0xff]
    %v7507 = vld [vmem:[#allocation71 + $0xdf8] sm:$0xff]
    %v7508 = vld [vmem:[#allocation71 + $0xe00] sm:$0xff]
    %v7509 = vld [vmem:[#allocation71 + $0xe08] sm:$0xff]
    %v7510 = vld [vmem:[#allocation71 + $0xe10] sm:$0xff]
    %v7511 = vld [vmem:[#allocation71 + $0xe18] sm:$0xff]
    %v7512 = vld [vmem:[#allocation71 + $0xe20] sm:$0xff]
    %v7513 = vld [vmem:[#allocation71 + $0xe28] sm:$0xff]
    %v7514 = vld [vmem:[#allocation71 + $0xe30] sm:$0xff]
    %v7515 = vld [vmem:[#allocation71 + $0xe38] sm:$0xff]
    %v7516 = vld [vmem:[#allocation71 + $0xe40] sm:$0xff]
    %v7517 = vld [vmem:[#allocation71 + $0xe48] sm:$0xff]
    %v7518 = vld [vmem:[#allocation71 + $0xe50] sm:$0xff]
    %v7519 = vld [vmem:[#allocation71 + $0xe58] sm:$0xff]
    %v7520 = vld [vmem:[#allocation71 + $0xe60] sm:$0xff]
    %v7521 = vld [vmem:[#allocation71 + $0xe68] sm:$0xff]
    %v7522 = vld [vmem:[#allocation71 + $0xe70] sm:$0xff]
    %v7523 = vld [vmem:[#allocation71 + $0xe78] sm:$0xff]
    %v7524 = vld [vmem:[#allocation71 + $0xe80] sm:$0xff]
    %v7525 = vld [vmem:[#allocation71 + $0xe88] sm:$0xff]
    %v7526 = vld [vmem:[#allocation71 + $0xe90] sm:$0xff]
    %v7527 = vld [vmem:[#allocation71 + $0xe98] sm:$0xff]
    %v7528 = vld [vmem:[#allocation71 + $0xea0] sm:$0xff]
    %v7529 = vld [vmem:[#allocation71 + $0xea8] sm:$0xff]
    %v7530 = vld [vmem:[#allocation71 + $0xeb0] sm:$0xff]
    %v7531 = vld [vmem:[#allocation71 + $0xeb8] sm:$0xff]
    %v7532 = vld [vmem:[#allocation71 + $0xec0] sm:$0xff]
    %v7533 = vld [vmem:[#allocation71 + $0xec8] sm:$0xff]
    %v7534 = vld [vmem:[#allocation71 + $0xed0] sm:$0xff]
    %v7535 = vld [vmem:[#allocation71 + $0xed8] sm:$0xff]
    %v7536 = vld [vmem:[#allocation71 + $0xee0] sm:$0xff]
    %v7537 = vld [vmem:[#allocation71 + $0xee8] sm:$0xff]
    %v7538 = vld [vmem:[#allocation71 + $0xef0] sm:$0xff]
    %v7539 = vld [vmem:[#allocation71 + $0xef8] sm:$0xff]
    %v7540 = vld [vmem:[#allocation71 + $0xf00] sm:$0xff]
    %v7541 = vld [vmem:[#allocation71 + $0xf08] sm:$0xff]
    %v7542 = vld [vmem:[#allocation71 + $0xf10] sm:$0xff]
    %v7543 = vld [vmem:[#allocation71 + $0xf18] sm:$0xff]
    %v7544 = vld [vmem:[#allocation71 + $0xf20] sm:$0xff]
    %v7545 = vld [vmem:[#allocation71 + $0xf28] sm:$0xff]
    %v7546 = vld [vmem:[#allocation71 + $0xf30] sm:$0xff]
    %v7547 = vld [vmem:[#allocation71 + $0xf38] sm:$0xff]
    %v7548 = vld [vmem:[#allocation71 + $0xf40] sm:$0xff]
    %v7549 = vld [vmem:[#allocation71 + $0xf48] sm:$0xff]
    %v7550 = vld [vmem:[#allocation71 + $0xf50] sm:$0xff]
    %v7551 = vld [vmem:[#allocation71 + $0xf58] sm:$0xff]
    %v7552 = vld [vmem:[#allocation71 + $0xf60] sm:$0xff]
    %v7553 = vld [vmem:[#allocation71 + $0xf68] sm:$0xff]
    %v7554 = vld [vmem:[#allocation71 + $0xf70] sm:$0xff]
    %v7555 = vld [vmem:[#allocation71 + $0xf78] sm:$0xff]
    %v7556 = vld [vmem:[#allocation71 + $0xf80] sm:$0xff]
    %v7557 = vld [vmem:[#allocation71 + $0xf88] sm:$0xff]
    %v7558 = vld [vmem:[#allocation71 + $0xf90] sm:$0xff]
    %v7559 = vld [vmem:[#allocation71 + $0xf98] sm:$0xff]
    %v7560 = vld [vmem:[#allocation71 + $0xfa0] sm:$0xff]
    %v7561 = vld [vmem:[#allocation71 + $0xfa8] sm:$0xff]
    %v7562 = vld [vmem:[#allocation71 + $0xfb0] sm:$0xff]
    %v7563 = vld [vmem:[#allocation71 + $0xfb8] sm:$0xff]
    %v7564 = vld [vmem:[#allocation71 + $0xfc0] sm:$0xff]
    %v7565 = vld [vmem:[#allocation71 + $0xfc8] sm:$0xff]
    %v7566 = vld [vmem:[#allocation71 + $0xfd0] sm:$0xff]
    %v7567 = vld [vmem:[#allocation71 + $0xfd8] sm:$0xff]
    %v7568 = vld [vmem:[#allocation71 + $0xfe0] sm:$0xff]
    %v7569 = vld [vmem:[#allocation71 + $0xfe8] sm:$0xff]
    %v7570 = vld [vmem:[#allocation71 + $0xff0] sm:$0xff]
    %v7571 = vld [vmem:[#allocation71 + $0xff8] sm:$0xff]
    %v7572 = vld [vmem:[#allocation73] sm:$0xff]
    %v7574 = vlaneseq
    %v7575 = vshrl.u32 %v7574, 7
    %v7576 = vsub.s32 0, %v7575
    %v7577 = vrot.slane %v7572, %v7576
    %v7578 = vlaneseq
    %v7579 = vshrl.u32 %v7578, 7
    %v7580 = vsub.s32 1, %v7579
    %v7581 = vrot.slane %v7572, %v7580
    %v7582 = vlaneseq
    %v7583 = vshrl.u32 %v7582, 7
    %v7584 = vsub.s32 2, %v7583
    %v7585 = vrot.slane %v7572, %v7584
    %v7586 = vlaneseq
    %v7587 = vshrl.u32 %v7586, 7
    %v7588 = vsub.s32 3, %v7587
    %v7589 = vrot.slane %v7572, %v7588
    %v7590 = vlaneseq
    %v7591 = vshrl.u32 %v7590, 7
    %v7592 = vsub.s32 4, %v7591
    %v7593 = vrot.slane %v7572, %v7592
    %v7594 = vlaneseq
    %v7595 = vshrl.u32 %v7594, 7
    %v7596 = vsub.s32 5, %v7595
    %v7597 = vrot.slane %v7572, %v7596
    %v7598 = vlaneseq
    %v7599 = vshrl.u32 %v7598, 7
    %v7600 = vsub.s32 6, %v7599
    %v7601 = vrot.slane %v7572, %v7600
    %v7602 = vlaneseq
    %v7603 = vshrl.u32 %v7602, 7
    %v7604 = vsub.s32 7, %v7603
    %v7605 = vrot.slane %v7572, %v7604
    %v8126 = vunpack.c.l.b16 %v7060
    %v8127 = vunpack.c.h.b16 %v7060
    %v8128 = vunpack.c.l.b16 %v7061
    %v8129 = vunpack.c.h.b16 %v7061
    %v8130 = vunpack.c.l.b16 %v7062
    %v8131 = vunpack.c.h.b16 %v7062
    %v8132 = vunpack.c.l.b16 %v7063
    %v8133 = vunpack.c.h.b16 %v7063
    %v8134 = vunpack.c.l.b16 %v7064
    %v8135 = vunpack.c.h.b16 %v7064
    %v8136 = vunpack.c.l.b16 %v7065
    %v8137 = vunpack.c.h.b16 %v7065
    %v8138 = vunpack.c.l.b16 %v7066
    %v8139 = vunpack.c.h.b16 %v7066
    %v8140 = vunpack.c.l.b16 %v7067
    %v8141 = vunpack.c.h.b16 %v7067
    %v8142 = vunpack.c.l.b16 %v7068
    %v8143 = vunpack.c.h.b16 %v7068
    %v8144 = vunpack.c.l.b16 %v7069
    %v8145 = vunpack.c.h.b16 %v7069
    %v8146 = vunpack.c.l.b16 %v7070
    %v8147 = vunpack.c.h.b16 %v7070
    %v8148 = vunpack.c.l.b16 %v7071
    %v8149 = vunpack.c.h.b16 %v7071
    %v8150 = vunpack.c.l.b16 %v7072
    %v8151 = vunpack.c.h.b16 %v7072
    %v8152 = vunpack.c.l.b16 %v7073
    %v8153 = vunpack.c.h.b16 %v7073
    %v8154 = vunpack.c.l.b16 %v7074
    %v8155 = vunpack.c.h.b16 %v7074
    %v8156 = vunpack.c.l.b16 %v7075
    %v8157 = vunpack.c.h.b16 %v7075
    %v8158 = vunpack.c.l.b16 %v7076
    %v8159 = vunpack.c.h.b16 %v7076
    %v8160 = vunpack.c.l.b16 %v7077
    %v8161 = vunpack.c.h.b16 %v7077
    %v8162 = vunpack.c.l.b16 %v7078
    %v8163 = vunpack.c.h.b16 %v7078
    %v8164 = vunpack.c.l.b16 %v7079
    %v8165 = vunpack.c.h.b16 %v7079
    %v8166 = vunpack.c.l.b16 %v7080
    %v8167 = vunpack.c.h.b16 %v7080
    %v8168 = vunpack.c.l.b16 %v7081
    %v8169 = vunpack.c.h.b16 %v7081
    %v8170 = vunpack.c.l.b16 %v7082
    %v8171 = vunpack.c.h.b16 %v7082
    %v8172 = vunpack.c.l.b16 %v7083
    %v8173 = vunpack.c.h.b16 %v7083
    %v8174 = vunpack.c.l.b16 %v7084
    %v8175 = vunpack.c.h.b16 %v7084
    %v8176 = vunpack.c.l.b16 %v7085
    %v8177 = vunpack.c.h.b16 %v7085
    %v8178 = vunpack.c.l.b16 %v7086
    %v8179 = vunpack.c.h.b16 %v7086
    %v8180 = vunpack.c.l.b16 %v7087
    %v8181 = vunpack.c.h.b16 %v7087
    %v8182 = vunpack.c.l.b16 %v7088
    %v8183 = vunpack.c.h.b16 %v7088
    %v8184 = vunpack.c.l.b16 %v7089
    %v8185 = vunpack.c.h.b16 %v7089
    %v8186 = vunpack.c.l.b16 %v7090
    %v8187 = vunpack.c.h.b16 %v7090
    %v8188 = vunpack.c.l.b16 %v7091
    %v8189 = vunpack.c.h.b16 %v7091
    %v8190 = vunpack.c.l.b16 %v7092
    %v8191 = vunpack.c.h.b16 %v7092
    %v8192 = vunpack.c.l.b16 %v7093
    %v8193 = vunpack.c.h.b16 %v7093
    %v8194 = vunpack.c.l.b16 %v7094
    %v8195 = vunpack.c.h.b16 %v7094
    %v8196 = vunpack.c.l.b16 %v7095
    %v8197 = vunpack.c.h.b16 %v7095
    %v8198 = vunpack.c.l.b16 %v7096
    %v8199 = vunpack.c.h.b16 %v7096
    %v8200 = vunpack.c.l.b16 %v7097
    %v8201 = vunpack.c.h.b16 %v7097
    %v8202 = vunpack.c.l.b16 %v7098
    %v8203 = vunpack.c.h.b16 %v7098
    %v8204 = vunpack.c.l.b16 %v7099
    %v8205 = vunpack.c.h.b16 %v7099
    %v8206 = vunpack.c.l.b16 %v7100
    %v8207 = vunpack.c.h.b16 %v7100
    %v8208 = vunpack.c.l.b16 %v7101
    %v8209 = vunpack.c.h.b16 %v7101
    %v8210 = vunpack.c.l.b16 %v7102
    %v8211 = vunpack.c.h.b16 %v7102
    %v8212 = vunpack.c.l.b16 %v7103
    %v8213 = vunpack.c.h.b16 %v7103
    %v8214 = vunpack.c.l.b16 %v7104
    %v8215 = vunpack.c.h.b16 %v7104
    %v8216 = vunpack.c.l.b16 %v7105
    %v8217 = vunpack.c.h.b16 %v7105
    %v8218 = vunpack.c.l.b16 %v7106
    %v8219 = vunpack.c.h.b16 %v7106
    %v8220 = vunpack.c.l.b16 %v7107
    %v8221 = vunpack.c.h.b16 %v7107
    %v8222 = vunpack.c.l.b16 %v7108
    %v8223 = vunpack.c.h.b16 %v7108
    %v8224 = vunpack.c.l.b16 %v7109
    %v8225 = vunpack.c.h.b16 %v7109
    %v8226 = vunpack.c.l.b16 %v7110
    %v8227 = vunpack.c.h.b16 %v7110
    %v8228 = vunpack.c.l.b16 %v7111
    %v8229 = vunpack.c.h.b16 %v7111
    %v8230 = vunpack.c.l.b16 %v7112
    %v8231 = vunpack.c.h.b16 %v7112
    %v8232 = vunpack.c.l.b16 %v7113
    %v8233 = vunpack.c.h.b16 %v7113
    %v8234 = vunpack.c.l.b16 %v7114
    %v8235 = vunpack.c.h.b16 %v7114
    %v8236 = vunpack.c.l.b16 %v7115
    %v8237 = vunpack.c.h.b16 %v7115
    %v8238 = vunpack.c.l.b16 %v7116
    %v8239 = vunpack.c.h.b16 %v7116
    %v8240 = vunpack.c.l.b16 %v7117
    %v8241 = vunpack.c.h.b16 %v7117
    %v8242 = vunpack.c.l.b16 %v7118
    %v8243 = vunpack.c.h.b16 %v7118
    %v8244 = vunpack.c.l.b16 %v7119
    %v8245 = vunpack.c.h.b16 %v7119
    %v8246 = vunpack.c.l.b16 %v7120
    %v8247 = vunpack.c.h.b16 %v7120
    %v8248 = vunpack.c.l.b16 %v7121
    %v8249 = vunpack.c.h.b16 %v7121
    %v8250 = vunpack.c.l.b16 %v7122
    %v8251 = vunpack.c.h.b16 %v7122
    %v8252 = vunpack.c.l.b16 %v7123
    %v8253 = vunpack.c.h.b16 %v7123
    %v8254 = vunpack.c.l.b16 %v7124
    %v8255 = vunpack.c.h.b16 %v7124
    %v8256 = vunpack.c.l.b16 %v7125
    %v8257 = vunpack.c.h.b16 %v7125
    %v8258 = vunpack.c.l.b16 %v7126
    %v8259 = vunpack.c.h.b16 %v7126
    %v8260 = vunpack.c.l.b16 %v7127
    %v8261 = vunpack.c.h.b16 %v7127
    %v8262 = vunpack.c.l.b16 %v7128
    %v8263 = vunpack.c.h.b16 %v7128
    %v8264 = vunpack.c.l.b16 %v7129
    %v8265 = vunpack.c.h.b16 %v7129
    %v8266 = vunpack.c.l.b16 %v7130
    %v8267 = vunpack.c.h.b16 %v7130
    %v8268 = vunpack.c.l.b16 %v7131
    %v8269 = vunpack.c.h.b16 %v7131
    %v8270 = vunpack.c.l.b16 %v7132
    %v8271 = vunpack.c.h.b16 %v7132
    %v8272 = vunpack.c.l.b16 %v7133
    %v8273 = vunpack.c.h.b16 %v7133
    %v8274 = vunpack.c.l.b16 %v7134
    %v8275 = vunpack.c.h.b16 %v7134
    %v8276 = vunpack.c.l.b16 %v7135
    %v8277 = vunpack.c.h.b16 %v7135
    %v8278 = vunpack.c.l.b16 %v7136
    %v8279 = vunpack.c.h.b16 %v7136
    %v8280 = vunpack.c.l.b16 %v7137
    %v8281 = vunpack.c.h.b16 %v7137
    %v8282 = vunpack.c.l.b16 %v7138
    %v8283 = vunpack.c.h.b16 %v7138
    %v8284 = vunpack.c.l.b16 %v7139
    %v8285 = vunpack.c.h.b16 %v7139
    %v8286 = vunpack.c.l.b16 %v7140
    %v8287 = vunpack.c.h.b16 %v7140
    %v8288 = vunpack.c.l.b16 %v7141
    %v8289 = vunpack.c.h.b16 %v7141
    %v8290 = vunpack.c.l.b16 %v7142
    %v8291 = vunpack.c.h.b16 %v7142
    %v8292 = vunpack.c.l.b16 %v7143
    %v8293 = vunpack.c.h.b16 %v7143
    %v8294 = vunpack.c.l.b16 %v7144
    %v8295 = vunpack.c.h.b16 %v7144
    %v8296 = vunpack.c.l.b16 %v7145
    %v8297 = vunpack.c.h.b16 %v7145
    %v8298 = vunpack.c.l.b16 %v7146
    %v8299 = vunpack.c.h.b16 %v7146
    %v8300 = vunpack.c.l.b16 %v7147
    %v8301 = vunpack.c.h.b16 %v7147
    %v8302 = vunpack.c.l.b16 %v7148
    %v8303 = vunpack.c.h.b16 %v7148
    %v8304 = vunpack.c.l.b16 %v7149
    %v8305 = vunpack.c.h.b16 %v7149
    %v8306 = vunpack.c.l.b16 %v7150
    %v8307 = vunpack.c.h.b16 %v7150
    %v8308 = vunpack.c.l.b16 %v7151
    %v8309 = vunpack.c.h.b16 %v7151
    %v8310 = vunpack.c.l.b16 %v7152
    %v8311 = vunpack.c.h.b16 %v7152
    %v8312 = vunpack.c.l.b16 %v7153
    %v8313 = vunpack.c.h.b16 %v7153
    %v8314 = vunpack.c.l.b16 %v7154
    %v8315 = vunpack.c.h.b16 %v7154
    %v8316 = vunpack.c.l.b16 %v7155
    %v8317 = vunpack.c.h.b16 %v7155
    %v8318 = vunpack.c.l.b16 %v7156
    %v8319 = vunpack.c.h.b16 %v7156
    %v8320 = vunpack.c.l.b16 %v7157
    %v8321 = vunpack.c.h.b16 %v7157
    %v8322 = vunpack.c.l.b16 %v7158
    %v8323 = vunpack.c.h.b16 %v7158
    %v8324 = vunpack.c.l.b16 %v7159
    %v8325 = vunpack.c.h.b16 %v7159
    %v8326 = vunpack.c.l.b16 %v7160
    %v8327 = vunpack.c.h.b16 %v7160
    %v8328 = vunpack.c.l.b16 %v7161
    %v8329 = vunpack.c.h.b16 %v7161
    %v8330 = vunpack.c.l.b16 %v7162
    %v8331 = vunpack.c.h.b16 %v7162
    %v8332 = vunpack.c.l.b16 %v7163
    %v8333 = vunpack.c.h.b16 %v7163
    %v8334 = vunpack.c.l.b16 %v7164
    %v8335 = vunpack.c.h.b16 %v7164
    %v8336 = vunpack.c.l.b16 %v7165
    %v8337 = vunpack.c.h.b16 %v7165
    %v8338 = vunpack.c.l.b16 %v7166
    %v8339 = vunpack.c.h.b16 %v7166
    %v8340 = vunpack.c.l.b16 %v7167
    %v8341 = vunpack.c.h.b16 %v7167
    %v8342 = vunpack.c.l.b16 %v7168
    %v8343 = vunpack.c.h.b16 %v7168
    %v8344 = vunpack.c.l.b16 %v7169
    %v8345 = vunpack.c.h.b16 %v7169
    %v8346 = vunpack.c.l.b16 %v7170
    %v8347 = vunpack.c.h.b16 %v7170
    %v8348 = vunpack.c.l.b16 %v7171
    %v8349 = vunpack.c.h.b16 %v7171
    %v8350 = vunpack.c.l.b16 %v7172
    %v8351 = vunpack.c.h.b16 %v7172
    %v8352 = vunpack.c.l.b16 %v7173
    %v8353 = vunpack.c.h.b16 %v7173
    %v8354 = vunpack.c.l.b16 %v7174
    %v8355 = vunpack.c.h.b16 %v7174
    %v8356 = vunpack.c.l.b16 %v7175
    %v8357 = vunpack.c.h.b16 %v7175
    %v8358 = vunpack.c.l.b16 %v7176
    %v8359 = vunpack.c.h.b16 %v7176
    %v8360 = vunpack.c.l.b16 %v7177
    %v8361 = vunpack.c.h.b16 %v7177
    %v8362 = vunpack.c.l.b16 %v7178
    %v8363 = vunpack.c.h.b16 %v7178
    %v8364 = vunpack.c.l.b16 %v7179
    %v8365 = vunpack.c.h.b16 %v7179
    %v8366 = vunpack.c.l.b16 %v7180
    %v8367 = vunpack.c.h.b16 %v7180
    %v8368 = vunpack.c.l.b16 %v7181
    %v8369 = vunpack.c.h.b16 %v7181
    %v8370 = vunpack.c.l.b16 %v7182
    %v8371 = vunpack.c.h.b16 %v7182
    %v8372 = vunpack.c.l.b16 %v7183
    %v8373 = vunpack.c.h.b16 %v7183
    %v8374 = vunpack.c.l.b16 %v7184
    %v8375 = vunpack.c.h.b16 %v7184
    %v8376 = vunpack.c.l.b16 %v7185
    %v8377 = vunpack.c.h.b16 %v7185
    %v8378 = vunpack.c.l.b16 %v7186
    %v8379 = vunpack.c.h.b16 %v7186
    %v8380 = vunpack.c.l.b16 %v7187
    %v8381 = vunpack.c.h.b16 %v7187
    %v8382 = vunpack.c.l.b16 %v7188
    %v8383 = vunpack.c.h.b16 %v7188
    %v8384 = vunpack.c.l.b16 %v7189
    %v8385 = vunpack.c.h.b16 %v7189
    %v8386 = vunpack.c.l.b16 %v7190
    %v8387 = vunpack.c.h.b16 %v7190
    %v8388 = vunpack.c.l.b16 %v7191
    %v8389 = vunpack.c.h.b16 %v7191
    %v8390 = vunpack.c.l.b16 %v7192
    %v8391 = vunpack.c.h.b16 %v7192
    %v8392 = vunpack.c.l.b16 %v7193
    %v8393 = vunpack.c.h.b16 %v7193
    %v8394 = vunpack.c.l.b16 %v7194
    %v8395 = vunpack.c.h.b16 %v7194
    %v8396 = vunpack.c.l.b16 %v7195
    %v8397 = vunpack.c.h.b16 %v7195
    %v8398 = vunpack.c.l.b16 %v7196
    %v8399 = vunpack.c.h.b16 %v7196
    %v8400 = vunpack.c.l.b16 %v7197
    %v8401 = vunpack.c.h.b16 %v7197
    %v8402 = vunpack.c.l.b16 %v7198
    %v8403 = vunpack.c.h.b16 %v7198
    %v8404 = vunpack.c.l.b16 %v7199
    %v8405 = vunpack.c.h.b16 %v7199
    %v8406 = vunpack.c.l.b16 %v7200
    %v8407 = vunpack.c.h.b16 %v7200
    %v8408 = vunpack.c.l.b16 %v7201
    %v8409 = vunpack.c.h.b16 %v7201
    %v8410 = vunpack.c.l.b16 %v7202
    %v8411 = vunpack.c.h.b16 %v7202
    %v8412 = vunpack.c.l.b16 %v7203
    %v8413 = vunpack.c.h.b16 %v7203
    %v8414 = vunpack.c.l.b16 %v7204
    %v8415 = vunpack.c.h.b16 %v7204
    %v8416 = vunpack.c.l.b16 %v7205
    %v8417 = vunpack.c.h.b16 %v7205
    %v8418 = vunpack.c.l.b16 %v7206
    %v8419 = vunpack.c.h.b16 %v7206
    %v8420 = vunpack.c.l.b16 %v7207
    %v8421 = vunpack.c.h.b16 %v7207
    %v8422 = vunpack.c.l.b16 %v7208
    %v8423 = vunpack.c.h.b16 %v7208
    %v8424 = vunpack.c.l.b16 %v7209
    %v8425 = vunpack.c.h.b16 %v7209
    %v8426 = vunpack.c.l.b16 %v7210
    %v8427 = vunpack.c.h.b16 %v7210
    %v8428 = vunpack.c.l.b16 %v7211
    %v8429 = vunpack.c.h.b16 %v7211
    %v8430 = vunpack.c.l.b16 %v7212
    %v8431 = vunpack.c.h.b16 %v7212
    %v8432 = vunpack.c.l.b16 %v7213
    %v8433 = vunpack.c.h.b16 %v7213
    %v8434 = vunpack.c.l.b16 %v7214
    %v8435 = vunpack.c.h.b16 %v7214
    %v8436 = vunpack.c.l.b16 %v7215
    %v8437 = vunpack.c.h.b16 %v7215
    %v8438 = vunpack.c.l.b16 %v7216
    %v8439 = vunpack.c.h.b16 %v7216
    %v8440 = vunpack.c.l.b16 %v7217
    %v8441 = vunpack.c.h.b16 %v7217
    %v8442 = vunpack.c.l.b16 %v7218
    %v8443 = vunpack.c.h.b16 %v7218
    %v8444 = vunpack.c.l.b16 %v7219
    %v8445 = vunpack.c.h.b16 %v7219
    %v8446 = vunpack.c.l.b16 %v7220
    %v8447 = vunpack.c.h.b16 %v7220
    %v8448 = vunpack.c.l.b16 %v7221
    %v8449 = vunpack.c.h.b16 %v7221
    %v8450 = vunpack.c.l.b16 %v7222
    %v8451 = vunpack.c.h.b16 %v7222
    %v8452 = vunpack.c.l.b16 %v7223
    %v8453 = vunpack.c.h.b16 %v7223
    %v8454 = vunpack.c.l.b16 %v7224
    %v8455 = vunpack.c.h.b16 %v7224
    %v8456 = vunpack.c.l.b16 %v7225
    %v8457 = vunpack.c.h.b16 %v7225
    %v8458 = vunpack.c.l.b16 %v7226
    %v8459 = vunpack.c.h.b16 %v7226
    %v8460 = vunpack.c.l.b16 %v7227
    %v8461 = vunpack.c.h.b16 %v7227
    %v8462 = vunpack.c.l.b16 %v7228
    %v8463 = vunpack.c.h.b16 %v7228
    %v8464 = vunpack.c.l.b16 %v7229
    %v8465 = vunpack.c.h.b16 %v7229
    %v8466 = vunpack.c.l.b16 %v7230
    %v8467 = vunpack.c.h.b16 %v7230
    %v8468 = vunpack.c.l.b16 %v7231
    %v8469 = vunpack.c.h.b16 %v7231
    %v8470 = vunpack.c.l.b16 %v7232
    %v8471 = vunpack.c.h.b16 %v7232
    %v8472 = vunpack.c.l.b16 %v7233
    %v8473 = vunpack.c.h.b16 %v7233
    %v8474 = vunpack.c.l.b16 %v7234
    %v8475 = vunpack.c.h.b16 %v7234
    %v8476 = vunpack.c.l.b16 %v7235
    %v8477 = vunpack.c.h.b16 %v7235
    %v8478 = vunpack.c.l.b16 %v7236
    %v8479 = vunpack.c.h.b16 %v7236
    %v8480 = vunpack.c.l.b16 %v7237
    %v8481 = vunpack.c.h.b16 %v7237
    %v8482 = vunpack.c.l.b16 %v7238
    %v8483 = vunpack.c.h.b16 %v7238
    %v8484 = vunpack.c.l.b16 %v7239
    %v8485 = vunpack.c.h.b16 %v7239
    %v8486 = vunpack.c.l.b16 %v7240
    %v8487 = vunpack.c.h.b16 %v7240
    %v8488 = vunpack.c.l.b16 %v7241
    %v8489 = vunpack.c.h.b16 %v7241
    %v8490 = vunpack.c.l.b16 %v7242
    %v8491 = vunpack.c.h.b16 %v7242
    %v8492 = vunpack.c.l.b16 %v7243
    %v8493 = vunpack.c.h.b16 %v7243
    %v8494 = vunpack.c.l.b16 %v7244
    %v8495 = vunpack.c.h.b16 %v7244
    %v8496 = vunpack.c.l.b16 %v7245
    %v8497 = vunpack.c.h.b16 %v7245
    %v8498 = vunpack.c.l.b16 %v7246
    %v8499 = vunpack.c.h.b16 %v7246
    %v8500 = vunpack.c.l.b16 %v7247
    %v8501 = vunpack.c.h.b16 %v7247
    %v8502 = vunpack.c.l.b16 %v7248
    %v8503 = vunpack.c.h.b16 %v7248
    %v8504 = vunpack.c.l.b16 %v7249
    %v8505 = vunpack.c.h.b16 %v7249
    %v8506 = vunpack.c.l.b16 %v7250
    %v8507 = vunpack.c.h.b16 %v7250
    %v8508 = vunpack.c.l.b16 %v7251
    %v8509 = vunpack.c.h.b16 %v7251
    %v8510 = vunpack.c.l.b16 %v7252
    %v8511 = vunpack.c.h.b16 %v7252
    %v8512 = vunpack.c.l.b16 %v7253
    %v8513 = vunpack.c.h.b16 %v7253
    %v8514 = vunpack.c.l.b16 %v7254
    %v8515 = vunpack.c.h.b16 %v7254
    %v8516 = vunpack.c.l.b16 %v7255
    %v8517 = vunpack.c.h.b16 %v7255
    %v8518 = vunpack.c.l.b16 %v7256
    %v8519 = vunpack.c.h.b16 %v7256
    %v8520 = vunpack.c.l.b16 %v7257
    %v8521 = vunpack.c.h.b16 %v7257
    %v8522 = vunpack.c.l.b16 %v7258
    %v8523 = vunpack.c.h.b16 %v7258
    %v8524 = vunpack.c.l.b16 %v7259
    %v8525 = vunpack.c.h.b16 %v7259
    %v8526 = vunpack.c.l.b16 %v7260
    %v8527 = vunpack.c.h.b16 %v7260
    %v8528 = vunpack.c.l.b16 %v7261
    %v8529 = vunpack.c.h.b16 %v7261
    %v8530 = vunpack.c.l.b16 %v7262
    %v8531 = vunpack.c.h.b16 %v7262
    %v8532 = vunpack.c.l.b16 %v7263
    %v8533 = vunpack.c.h.b16 %v7263
    %v8534 = vunpack.c.l.b16 %v7264
    %v8535 = vunpack.c.h.b16 %v7264
    %v8536 = vunpack.c.l.b16 %v7265
    %v8537 = vunpack.c.h.b16 %v7265
    %v8538 = vunpack.c.l.b16 %v7266
    %v8539 = vunpack.c.h.b16 %v7266
    %v8540 = vunpack.c.l.b16 %v7267
    %v8541 = vunpack.c.h.b16 %v7267
    %v8542 = vunpack.c.l.b16 %v7268
    %v8543 = vunpack.c.h.b16 %v7268
    %v8544 = vunpack.c.l.b16 %v7269
    %v8545 = vunpack.c.h.b16 %v7269
    %v8546 = vunpack.c.l.b16 %v7270
    %v8547 = vunpack.c.h.b16 %v7270
    %v8548 = vunpack.c.l.b16 %v7271
    %v8549 = vunpack.c.h.b16 %v7271
    %v8550 = vunpack.c.l.b16 %v7272
    %v8551 = vunpack.c.h.b16 %v7272
    %v8552 = vunpack.c.l.b16 %v7273
    %v8553 = vunpack.c.h.b16 %v7273
    %v8554 = vunpack.c.l.b16 %v7274
    %v8555 = vunpack.c.h.b16 %v7274
    %v8556 = vunpack.c.l.b16 %v7275
    %v8557 = vunpack.c.h.b16 %v7275
    %v8558 = vunpack.c.l.b16 %v7276
    %v8559 = vunpack.c.h.b16 %v7276
    %v8560 = vunpack.c.l.b16 %v7277
    %v8561 = vunpack.c.h.b16 %v7277
    %v8562 = vunpack.c.l.b16 %v7278
    %v8563 = vunpack.c.h.b16 %v7278
    %v8564 = vunpack.c.l.b16 %v7279
    %v8565 = vunpack.c.h.b16 %v7279
    %v8566 = vunpack.c.l.b16 %v7280
    %v8567 = vunpack.c.h.b16 %v7280
    %v8568 = vunpack.c.l.b16 %v7281
    %v8569 = vunpack.c.h.b16 %v7281
    %v8570 = vunpack.c.l.b16 %v7282
    %v8571 = vunpack.c.h.b16 %v7282
    %v8572 = vunpack.c.l.b16 %v7283
    %v8573 = vunpack.c.h.b16 %v7283
    %v8574 = vunpack.c.l.b16 %v7284
    %v8575 = vunpack.c.h.b16 %v7284
    %v8576 = vunpack.c.l.b16 %v7285
    %v8577 = vunpack.c.h.b16 %v7285
    %v8578 = vunpack.c.l.b16 %v7286
    %v8579 = vunpack.c.h.b16 %v7286
    %v8580 = vunpack.c.l.b16 %v7287
    %v8581 = vunpack.c.h.b16 %v7287
    %v8582 = vunpack.c.l.b16 %v7288
    %v8583 = vunpack.c.h.b16 %v7288
    %v8584 = vunpack.c.l.b16 %v7289
    %v8585 = vunpack.c.h.b16 %v7289
    %v8586 = vunpack.c.l.b16 %v7290
    %v8587 = vunpack.c.h.b16 %v7290
    %v8588 = vunpack.c.l.b16 %v7291
    %v8589 = vunpack.c.h.b16 %v7291
    %v8590 = vunpack.c.l.b16 %v7292
    %v8591 = vunpack.c.h.b16 %v7292
    %v8592 = vunpack.c.l.b16 %v7293
    %v8593 = vunpack.c.h.b16 %v7293
    %v8594 = vunpack.c.l.b16 %v7294
    %v8595 = vunpack.c.h.b16 %v7294
    %v8596 = vunpack.c.l.b16 %v7295
    %v8597 = vunpack.c.h.b16 %v7295
    %v8598 = vunpack.c.l.b16 %v7296
    %v8599 = vunpack.c.h.b16 %v7296
    %v8600 = vunpack.c.l.b16 %v7297
    %v8601 = vunpack.c.h.b16 %v7297
    %v8602 = vunpack.c.l.b16 %v7298
    %v8603 = vunpack.c.h.b16 %v7298
    %v8604 = vunpack.c.l.b16 %v7299
    %v8605 = vunpack.c.h.b16 %v7299
    %v8606 = vunpack.c.l.b16 %v7300
    %v8607 = vunpack.c.h.b16 %v7300
    %v8608 = vunpack.c.l.b16 %v7301
    %v8609 = vunpack.c.h.b16 %v7301
    %v8610 = vunpack.c.l.b16 %v7302
    %v8611 = vunpack.c.h.b16 %v7302
    %v8612 = vunpack.c.l.b16 %v7303
    %v8613 = vunpack.c.h.b16 %v7303
    %v8614 = vunpack.c.l.b16 %v7304
    %v8615 = vunpack.c.h.b16 %v7304
    %v8616 = vunpack.c.l.b16 %v7305
    %v8617 = vunpack.c.h.b16 %v7305
    %v8618 = vunpack.c.l.b16 %v7306
    %v8619 = vunpack.c.h.b16 %v7306
    %v8620 = vunpack.c.l.b16 %v7307
    %v8621 = vunpack.c.h.b16 %v7307
    %v8622 = vunpack.c.l.b16 %v7308
    %v8623 = vunpack.c.h.b16 %v7308
    %v8624 = vunpack.c.l.b16 %v7309
    %v8625 = vunpack.c.h.b16 %v7309
    %v8626 = vunpack.c.l.b16 %v7310
    %v8627 = vunpack.c.h.b16 %v7310
    %v8628 = vunpack.c.l.b16 %v7311
    %v8629 = vunpack.c.h.b16 %v7311
    %v8630 = vunpack.c.l.b16 %v7312
    %v8631 = vunpack.c.h.b16 %v7312
    %v8632 = vunpack.c.l.b16 %v7313
    %v8633 = vunpack.c.h.b16 %v7313
    %v8634 = vunpack.c.l.b16 %v7314
    %v8635 = vunpack.c.h.b16 %v7314
    %v8636 = vunpack.c.l.b16 %v7315
    %v8637 = vunpack.c.h.b16 %v7315
    %v8638 = vunpack.c.l.b16 %v7316
    %v8639 = vunpack.c.h.b16 %v7316
    %v8640 = vunpack.c.l.b16 %v7317
    %v8641 = vunpack.c.h.b16 %v7317
    %v8642 = vunpack.c.l.b16 %v7318
    %v8643 = vunpack.c.h.b16 %v7318
    %v8644 = vunpack.c.l.b16 %v7319
    %v8645 = vunpack.c.h.b16 %v7319
    %v8646 = vunpack.c.l.b16 %v7320
    %v8647 = vunpack.c.h.b16 %v7320
    %v8648 = vunpack.c.l.b16 %v7321
    %v8649 = vunpack.c.h.b16 %v7321
    %v8650 = vunpack.c.l.b16 %v7322
    %v8651 = vunpack.c.h.b16 %v7322
    %v8652 = vunpack.c.l.b16 %v7323
    %v8653 = vunpack.c.h.b16 %v7323
    %v8654 = vunpack.c.l.b16 %v7324
    %v8655 = vunpack.c.h.b16 %v7324
    %v8656 = vunpack.c.l.b16 %v7325
    %v8657 = vunpack.c.h.b16 %v7325
    %v8658 = vunpack.c.l.b16 %v7326
    %v8659 = vunpack.c.h.b16 %v7326
    %v8660 = vunpack.c.l.b16 %v7327
    %v8661 = vunpack.c.h.b16 %v7327
    %v8662 = vunpack.c.l.b16 %v7328
    %v8663 = vunpack.c.h.b16 %v7328
    %v8664 = vunpack.c.l.b16 %v7329
    %v8665 = vunpack.c.h.b16 %v7329
    %v8666 = vunpack.c.l.b16 %v7330
    %v8667 = vunpack.c.h.b16 %v7330
    %v8668 = vunpack.c.l.b16 %v7331
    %v8669 = vunpack.c.h.b16 %v7331
    %v8670 = vunpack.c.l.b16 %v7332
    %v8671 = vunpack.c.h.b16 %v7332
    %v8672 = vunpack.c.l.b16 %v7333
    %v8673 = vunpack.c.h.b16 %v7333
    %v8674 = vunpack.c.l.b16 %v7334
    %v8675 = vunpack.c.h.b16 %v7334
    %v8676 = vunpack.c.l.b16 %v7335
    %v8677 = vunpack.c.h.b16 %v7335
    %v8678 = vunpack.c.l.b16 %v7336
    %v8679 = vunpack.c.h.b16 %v7336
    %v8680 = vunpack.c.l.b16 %v7337
    %v8681 = vunpack.c.h.b16 %v7337
    %v8682 = vunpack.c.l.b16 %v7338
    %v8683 = vunpack.c.h.b16 %v7338
    %v8684 = vunpack.c.l.b16 %v7339
    %v8685 = vunpack.c.h.b16 %v7339
    %v8686 = vunpack.c.l.b16 %v7340
    %v8687 = vunpack.c.h.b16 %v7340
    %v8688 = vunpack.c.l.b16 %v7341
    %v8689 = vunpack.c.h.b16 %v7341
    %v8690 = vunpack.c.l.b16 %v7342
    %v8691 = vunpack.c.h.b16 %v7342
    %v8692 = vunpack.c.l.b16 %v7343
    %v8693 = vunpack.c.h.b16 %v7343
    %v8694 = vunpack.c.l.b16 %v7344
    %v8695 = vunpack.c.h.b16 %v7344
    %v8696 = vunpack.c.l.b16 %v7345
    %v8697 = vunpack.c.h.b16 %v7345
    %v8698 = vunpack.c.l.b16 %v7346
    %v8699 = vunpack.c.h.b16 %v7346
    %v8700 = vunpack.c.l.b16 %v7347
    %v8701 = vunpack.c.h.b16 %v7347
    %v8702 = vunpack.c.l.b16 %v7348
    %v8703 = vunpack.c.h.b16 %v7348
    %v8704 = vunpack.c.l.b16 %v7349
    %v8705 = vunpack.c.h.b16 %v7349
    %v8706 = vunpack.c.l.b16 %v7350
    %v8707 = vunpack.c.h.b16 %v7350
    %v8708 = vunpack.c.l.b16 %v7351
    %v8709 = vunpack.c.h.b16 %v7351
    %v8710 = vunpack.c.l.b16 %v7352
    %v8711 = vunpack.c.h.b16 %v7352
    %v8712 = vunpack.c.l.b16 %v7353
    %v8713 = vunpack.c.h.b16 %v7353
    %v8714 = vunpack.c.l.b16 %v7354
    %v8715 = vunpack.c.h.b16 %v7354
    %v8716 = vunpack.c.l.b16 %v7355
    %v8717 = vunpack.c.h.b16 %v7355
    %v8718 = vunpack.c.l.b16 %v7356
    %v8719 = vunpack.c.h.b16 %v7356
    %v8720 = vunpack.c.l.b16 %v7357
    %v8721 = vunpack.c.h.b16 %v7357
    %v8722 = vunpack.c.l.b16 %v7358
    %v8723 = vunpack.c.h.b16 %v7358
    %v8724 = vunpack.c.l.b16 %v7359
    %v8725 = vunpack.c.h.b16 %v7359
    %v8726 = vunpack.c.l.b16 %v7360
    %v8727 = vunpack.c.h.b16 %v7360
    %v8728 = vunpack.c.l.b16 %v7361
    %v8729 = vunpack.c.h.b16 %v7361
    %v8730 = vunpack.c.l.b16 %v7362
    %v8731 = vunpack.c.h.b16 %v7362
    %v8732 = vunpack.c.l.b16 %v7363
    %v8733 = vunpack.c.h.b16 %v7363
    %v8734 = vunpack.c.l.b16 %v7364
    %v8735 = vunpack.c.h.b16 %v7364
    %v8736 = vunpack.c.l.b16 %v7365
    %v8737 = vunpack.c.h.b16 %v7365
    %v8738 = vunpack.c.l.b16 %v7366
    %v8739 = vunpack.c.h.b16 %v7366
    %v8740 = vunpack.c.l.b16 %v7367
    %v8741 = vunpack.c.h.b16 %v7367
    %v8742 = vunpack.c.l.b16 %v7368
    %v8743 = vunpack.c.h.b16 %v7368
    %v8744 = vunpack.c.l.b16 %v7369
    %v8745 = vunpack.c.h.b16 %v7369
    %v8746 = vunpack.c.l.b16 %v7370
    %v8747 = vunpack.c.h.b16 %v7370
    %v8748 = vunpack.c.l.b16 %v7371
    %v8749 = vunpack.c.h.b16 %v7371
    %v8750 = vunpack.c.l.b16 %v7372
    %v8751 = vunpack.c.h.b16 %v7372
    %v8752 = vunpack.c.l.b16 %v7373
    %v8753 = vunpack.c.h.b16 %v7373
    %v8754 = vunpack.c.l.b16 %v7374
    %v8755 = vunpack.c.h.b16 %v7374
    %v8756 = vunpack.c.l.b16 %v7375
    %v8757 = vunpack.c.h.b16 %v7375
    %v8758 = vunpack.c.l.b16 %v7376
    %v8759 = vunpack.c.h.b16 %v7376
    %v8760 = vunpack.c.l.b16 %v7377
    %v8761 = vunpack.c.h.b16 %v7377
    %v8762 = vunpack.c.l.b16 %v7378
    %v8763 = vunpack.c.h.b16 %v7378
    %v8764 = vunpack.c.l.b16 %v7379
    %v8765 = vunpack.c.h.b16 %v7379
    %v8766 = vunpack.c.l.b16 %v7380
    %v8767 = vunpack.c.h.b16 %v7380
    %v8768 = vunpack.c.l.b16 %v7381
    %v8769 = vunpack.c.h.b16 %v7381
    %v8770 = vunpack.c.l.b16 %v7382
    %v8771 = vunpack.c.h.b16 %v7382
    %v8772 = vunpack.c.l.b16 %v7383
    %v8773 = vunpack.c.h.b16 %v7383
    %v8774 = vunpack.c.l.b16 %v7384
    %v8775 = vunpack.c.h.b16 %v7384
    %v8776 = vunpack.c.l.b16 %v7385
    %v8777 = vunpack.c.h.b16 %v7385
    %v8778 = vunpack.c.l.b16 %v7386
    %v8779 = vunpack.c.h.b16 %v7386
    %v8780 = vunpack.c.l.b16 %v7387
    %v8781 = vunpack.c.h.b16 %v7387
    %v8782 = vunpack.c.l.b16 %v7388
    %v8783 = vunpack.c.h.b16 %v7388
    %v8784 = vunpack.c.l.b16 %v7389
    %v8785 = vunpack.c.h.b16 %v7389
    %v8786 = vunpack.c.l.b16 %v7390
    %v8787 = vunpack.c.h.b16 %v7390
    %v8788 = vunpack.c.l.b16 %v7391
    %v8789 = vunpack.c.h.b16 %v7391
    %v8790 = vunpack.c.l.b16 %v7392
    %v8791 = vunpack.c.h.b16 %v7392
    %v8792 = vunpack.c.l.b16 %v7393
    %v8793 = vunpack.c.h.b16 %v7393
    %v8794 = vunpack.c.l.b16 %v7394
    %v8795 = vunpack.c.h.b16 %v7394
    %v8796 = vunpack.c.l.b16 %v7395
    %v8797 = vunpack.c.h.b16 %v7395
    %v8798 = vunpack.c.l.b16 %v7396
    %v8799 = vunpack.c.h.b16 %v7396
    %v8800 = vunpack.c.l.b16 %v7397
    %v8801 = vunpack.c.h.b16 %v7397
    %v8802 = vunpack.c.l.b16 %v7398
    %v8803 = vunpack.c.h.b16 %v7398
    %v8804 = vunpack.c.l.b16 %v7399
    %v8805 = vunpack.c.h.b16 %v7399
    %v8806 = vunpack.c.l.b16 %v7400
    %v8807 = vunpack.c.h.b16 %v7400
    %v8808 = vunpack.c.l.b16 %v7401
    %v8809 = vunpack.c.h.b16 %v7401
    %v8810 = vunpack.c.l.b16 %v7402
    %v8811 = vunpack.c.h.b16 %v7402
    %v8812 = vunpack.c.l.b16 %v7403
    %v8813 = vunpack.c.h.b16 %v7403
    %v8814 = vunpack.c.l.b16 %v7404
    %v8815 = vunpack.c.h.b16 %v7404
    %v8816 = vunpack.c.l.b16 %v7405
    %v8817 = vunpack.c.h.b16 %v7405
    %v8818 = vunpack.c.l.b16 %v7406
    %v8819 = vunpack.c.h.b16 %v7406
    %v8820 = vunpack.c.l.b16 %v7407
    %v8821 = vunpack.c.h.b16 %v7407
    %v8822 = vunpack.c.l.b16 %v7408
    %v8823 = vunpack.c.h.b16 %v7408
    %v8824 = vunpack.c.l.b16 %v7409
    %v8825 = vunpack.c.h.b16 %v7409
    %v8826 = vunpack.c.l.b16 %v7410
    %v8827 = vunpack.c.h.b16 %v7410
    %v8828 = vunpack.c.l.b16 %v7411
    %v8829 = vunpack.c.h.b16 %v7411
    %v8830 = vunpack.c.l.b16 %v7412
    %v8831 = vunpack.c.h.b16 %v7412
    %v8832 = vunpack.c.l.b16 %v7413
    %v8833 = vunpack.c.h.b16 %v7413
    %v8834 = vunpack.c.l.b16 %v7414
    %v8835 = vunpack.c.h.b16 %v7414
    %v8836 = vunpack.c.l.b16 %v7415
    %v8837 = vunpack.c.h.b16 %v7415
    %v8838 = vunpack.c.l.b16 %v7416
    %v8839 = vunpack.c.h.b16 %v7416
    %v8840 = vunpack.c.l.b16 %v7417
    %v8841 = vunpack.c.h.b16 %v7417
    %v8842 = vunpack.c.l.b16 %v7418
    %v8843 = vunpack.c.h.b16 %v7418
    %v8844 = vunpack.c.l.b16 %v7419
    %v8845 = vunpack.c.h.b16 %v7419
    %v8846 = vunpack.c.l.b16 %v7420
    %v8847 = vunpack.c.h.b16 %v7420
    %v8848 = vunpack.c.l.b16 %v7421
    %v8849 = vunpack.c.h.b16 %v7421
    %v8850 = vunpack.c.l.b16 %v7422
    %v8851 = vunpack.c.h.b16 %v7422
    %v8852 = vunpack.c.l.b16 %v7423
    %v8853 = vunpack.c.h.b16 %v7423
    %v8854 = vunpack.c.l.b16 %v7424
    %v8855 = vunpack.c.h.b16 %v7424
    %v8856 = vunpack.c.l.b16 %v7425
    %v8857 = vunpack.c.h.b16 %v7425
    %v8858 = vunpack.c.l.b16 %v7426
    %v8859 = vunpack.c.h.b16 %v7426
    %v8860 = vunpack.c.l.b16 %v7427
    %v8861 = vunpack.c.h.b16 %v7427
    %v8862 = vunpack.c.l.b16 %v7428
    %v8863 = vunpack.c.h.b16 %v7428
    %v8864 = vunpack.c.l.b16 %v7429
    %v8865 = vunpack.c.h.b16 %v7429
    %v8866 = vunpack.c.l.b16 %v7430
    %v8867 = vunpack.c.h.b16 %v7430
    %v8868 = vunpack.c.l.b16 %v7431
    %v8869 = vunpack.c.h.b16 %v7431
    %v8870 = vunpack.c.l.b16 %v7432
    %v8871 = vunpack.c.h.b16 %v7432
    %v8872 = vunpack.c.l.b16 %v7433
    %v8873 = vunpack.c.h.b16 %v7433
    %v8874 = vunpack.c.l.b16 %v7434
    %v8875 = vunpack.c.h.b16 %v7434
    %v8876 = vunpack.c.l.b16 %v7435
    %v8877 = vunpack.c.h.b16 %v7435
    %v8878 = vunpack.c.l.b16 %v7436
    %v8879 = vunpack.c.h.b16 %v7436
    %v8880 = vunpack.c.l.b16 %v7437
    %v8881 = vunpack.c.h.b16 %v7437
    %v8882 = vunpack.c.l.b16 %v7438
    %v8883 = vunpack.c.h.b16 %v7438
    %v8884 = vunpack.c.l.b16 %v7439
    %v8885 = vunpack.c.h.b16 %v7439
    %v8886 = vunpack.c.l.b16 %v7440
    %v8887 = vunpack.c.h.b16 %v7440
    %v8888 = vunpack.c.l.b16 %v7441
    %v8889 = vunpack.c.h.b16 %v7441
    %v8890 = vunpack.c.l.b16 %v7442
    %v8891 = vunpack.c.h.b16 %v7442
    %v8892 = vunpack.c.l.b16 %v7443
    %v8893 = vunpack.c.h.b16 %v7443
    %v8894 = vunpack.c.l.b16 %v7444
    %v8895 = vunpack.c.h.b16 %v7444
    %v8896 = vunpack.c.l.b16 %v7445
    %v8897 = vunpack.c.h.b16 %v7445
    %v8898 = vunpack.c.l.b16 %v7446
    %v8899 = vunpack.c.h.b16 %v7446
    %v8900 = vunpack.c.l.b16 %v7447
    %v8901 = vunpack.c.h.b16 %v7447
    %v8902 = vunpack.c.l.b16 %v7448
    %v8903 = vunpack.c.h.b16 %v7448
    %v8904 = vunpack.c.l.b16 %v7449
    %v8905 = vunpack.c.h.b16 %v7449
    %v8906 = vunpack.c.l.b16 %v7450
    %v8907 = vunpack.c.h.b16 %v7450
    %v8908 = vunpack.c.l.b16 %v7451
    %v8909 = vunpack.c.h.b16 %v7451
    %v8910 = vunpack.c.l.b16 %v7452
    %v8911 = vunpack.c.h.b16 %v7452
    %v8912 = vunpack.c.l.b16 %v7453
    %v8913 = vunpack.c.h.b16 %v7453
    %v8914 = vunpack.c.l.b16 %v7454
    %v8915 = vunpack.c.h.b16 %v7454
    %v8916 = vunpack.c.l.b16 %v7455
    %v8917 = vunpack.c.h.b16 %v7455
    %v8918 = vunpack.c.l.b16 %v7456
    %v8919 = vunpack.c.h.b16 %v7456
    %v8920 = vunpack.c.l.b16 %v7457
    %v8921 = vunpack.c.h.b16 %v7457
    %v8922 = vunpack.c.l.b16 %v7458
    %v8923 = vunpack.c.h.b16 %v7458
    %v8924 = vunpack.c.l.b16 %v7459
    %v8925 = vunpack.c.h.b16 %v7459
    %v8926 = vunpack.c.l.b16 %v7460
    %v8927 = vunpack.c.h.b16 %v7460
    %v8928 = vunpack.c.l.b16 %v7461
    %v8929 = vunpack.c.h.b16 %v7461
    %v8930 = vunpack.c.l.b16 %v7462
    %v8931 = vunpack.c.h.b16 %v7462
    %v8932 = vunpack.c.l.b16 %v7463
    %v8933 = vunpack.c.h.b16 %v7463
    %v8934 = vunpack.c.l.b16 %v7464
    %v8935 = vunpack.c.h.b16 %v7464
    %v8936 = vunpack.c.l.b16 %v7465
    %v8937 = vunpack.c.h.b16 %v7465
    %v8938 = vunpack.c.l.b16 %v7466
    %v8939 = vunpack.c.h.b16 %v7466
    %v8940 = vunpack.c.l.b16 %v7467
    %v8941 = vunpack.c.h.b16 %v7467
    %v8942 = vunpack.c.l.b16 %v7468
    %v8943 = vunpack.c.h.b16 %v7468
    %v8944 = vunpack.c.l.b16 %v7469
    %v8945 = vunpack.c.h.b16 %v7469
    %v8946 = vunpack.c.l.b16 %v7470
    %v8947 = vunpack.c.h.b16 %v7470
    %v8948 = vunpack.c.l.b16 %v7471
    %v8949 = vunpack.c.h.b16 %v7471
    %v8950 = vunpack.c.l.b16 %v7472
    %v8951 = vunpack.c.h.b16 %v7472
    %v8952 = vunpack.c.l.b16 %v7473
    %v8953 = vunpack.c.h.b16 %v7473
    %v8954 = vunpack.c.l.b16 %v7474
    %v8955 = vunpack.c.h.b16 %v7474
    %v8956 = vunpack.c.l.b16 %v7475
    %v8957 = vunpack.c.h.b16 %v7475
    %v8958 = vunpack.c.l.b16 %v7476
    %v8959 = vunpack.c.h.b16 %v7476
    %v8960 = vunpack.c.l.b16 %v7477
    %v8961 = vunpack.c.h.b16 %v7477
    %v8962 = vunpack.c.l.b16 %v7478
    %v8963 = vunpack.c.h.b16 %v7478
    %v8964 = vunpack.c.l.b16 %v7479
    %v8965 = vunpack.c.h.b16 %v7479
    %v8966 = vunpack.c.l.b16 %v7480
    %v8967 = vunpack.c.h.b16 %v7480
    %v8968 = vunpack.c.l.b16 %v7481
    %v8969 = vunpack.c.h.b16 %v7481
    %v8970 = vunpack.c.l.b16 %v7482
    %v8971 = vunpack.c.h.b16 %v7482
    %v8972 = vunpack.c.l.b16 %v7483
    %v8973 = vunpack.c.h.b16 %v7483
    %v8974 = vunpack.c.l.b16 %v7484
    %v8975 = vunpack.c.h.b16 %v7484
    %v8976 = vunpack.c.l.b16 %v7485
    %v8977 = vunpack.c.h.b16 %v7485
    %v8978 = vunpack.c.l.b16 %v7486
    %v8979 = vunpack.c.h.b16 %v7486
    %v8980 = vunpack.c.l.b16 %v7487
    %v8981 = vunpack.c.h.b16 %v7487
    %v8982 = vunpack.c.l.b16 %v7488
    %v8983 = vunpack.c.h.b16 %v7488
    %v8984 = vunpack.c.l.b16 %v7489
    %v8985 = vunpack.c.h.b16 %v7489
    %v8986 = vunpack.c.l.b16 %v7490
    %v8987 = vunpack.c.h.b16 %v7490
    %v8988 = vunpack.c.l.b16 %v7491
    %v8989 = vunpack.c.h.b16 %v7491
    %v8990 = vunpack.c.l.b16 %v7492
    %v8991 = vunpack.c.h.b16 %v7492
    %v8992 = vunpack.c.l.b16 %v7493
    %v8993 = vunpack.c.h.b16 %v7493
    %v8994 = vunpack.c.l.b16 %v7494
    %v8995 = vunpack.c.h.b16 %v7494
    %v8996 = vunpack.c.l.b16 %v7495
    %v8997 = vunpack.c.h.b16 %v7495
    %v8998 = vunpack.c.l.b16 %v7496
    %v8999 = vunpack.c.h.b16 %v7496
    %v9000 = vunpack.c.l.b16 %v7497
    %v9001 = vunpack.c.h.b16 %v7497
    %v9002 = vunpack.c.l.b16 %v7498
    %v9003 = vunpack.c.h.b16 %v7498
    %v9004 = vunpack.c.l.b16 %v7499
    %v9005 = vunpack.c.h.b16 %v7499
    %v9006 = vunpack.c.l.b16 %v7500
    %v9007 = vunpack.c.h.b16 %v7500
    %v9008 = vunpack.c.l.b16 %v7501
    %v9009 = vunpack.c.h.b16 %v7501
    %v9010 = vunpack.c.l.b16 %v7502
    %v9011 = vunpack.c.h.b16 %v7502
    %v9012 = vunpack.c.l.b16 %v7503
    %v9013 = vunpack.c.h.b16 %v7503
    %v9014 = vunpack.c.l.b16 %v7504
    %v9015 = vunpack.c.h.b16 %v7504
    %v9016 = vunpack.c.l.b16 %v7505
    %v9017 = vunpack.c.h.b16 %v7505
    %v9018 = vunpack.c.l.b16 %v7506
    %v9019 = vunpack.c.h.b16 %v7506
    %v9020 = vunpack.c.l.b16 %v7507
    %v9021 = vunpack.c.h.b16 %v7507
    %v9022 = vunpack.c.l.b16 %v7508
    %v9023 = vunpack.c.h.b16 %v7508
    %v9024 = vunpack.c.l.b16 %v7509
    %v9025 = vunpack.c.h.b16 %v7509
    %v9026 = vunpack.c.l.b16 %v7510
    %v9027 = vunpack.c.h.b16 %v7510
    %v9028 = vunpack.c.l.b16 %v7511
    %v9029 = vunpack.c.h.b16 %v7511
    %v9030 = vunpack.c.l.b16 %v7512
    %v9031 = vunpack.c.h.b16 %v7512
    %v9032 = vunpack.c.l.b16 %v7513
    %v9033 = vunpack.c.h.b16 %v7513
    %v9034 = vunpack.c.l.b16 %v7514
    %v9035 = vunpack.c.h.b16 %v7514
    %v9036 = vunpack.c.l.b16 %v7515
    %v9037 = vunpack.c.h.b16 %v7515
    %v9038 = vunpack.c.l.b16 %v7516
    %v9039 = vunpack.c.h.b16 %v7516
    %v9040 = vunpack.c.l.b16 %v7517
    %v9041 = vunpack.c.h.b16 %v7517
    %v9042 = vunpack.c.l.b16 %v7518
    %v9043 = vunpack.c.h.b16 %v7518
    %v9044 = vunpack.c.l.b16 %v7519
    %v9045 = vunpack.c.h.b16 %v7519
    %v9046 = vunpack.c.l.b16 %v7520
    %v9047 = vunpack.c.h.b16 %v7520
    %v9048 = vunpack.c.l.b16 %v7521
    %v9049 = vunpack.c.h.b16 %v7521
    %v9050 = vunpack.c.l.b16 %v7522
    %v9051 = vunpack.c.h.b16 %v7522
    %v9052 = vunpack.c.l.b16 %v7523
    %v9053 = vunpack.c.h.b16 %v7523
    %v9054 = vunpack.c.l.b16 %v7524
    %v9055 = vunpack.c.h.b16 %v7524
    %v9056 = vunpack.c.l.b16 %v7525
    %v9057 = vunpack.c.h.b16 %v7525
    %v9058 = vunpack.c.l.b16 %v7526
    %v9059 = vunpack.c.h.b16 %v7526
    %v9060 = vunpack.c.l.b16 %v7527
    %v9061 = vunpack.c.h.b16 %v7527
    %v9062 = vunpack.c.l.b16 %v7528
    %v9063 = vunpack.c.h.b16 %v7528
    %v9064 = vunpack.c.l.b16 %v7529
    %v9065 = vunpack.c.h.b16 %v7529
    %v9066 = vunpack.c.l.b16 %v7530
    %v9067 = vunpack.c.h.b16 %v7530
    %v9068 = vunpack.c.l.b16 %v7531
    %v9069 = vunpack.c.h.b16 %v7531
    %v9070 = vunpack.c.l.b16 %v7532
    %v9071 = vunpack.c.h.b16 %v7532
    %v9072 = vunpack.c.l.b16 %v7533
    %v9073 = vunpack.c.h.b16 %v7533
    %v9074 = vunpack.c.l.b16 %v7534
    %v9075 = vunpack.c.h.b16 %v7534
    %v9076 = vunpack.c.l.b16 %v7535
    %v9077 = vunpack.c.h.b16 %v7535
    %v9078 = vunpack.c.l.b16 %v7536
    %v9079 = vunpack.c.h.b16 %v7536
    %v9080 = vunpack.c.l.b16 %v7537
    %v9081 = vunpack.c.h.b16 %v7537
    %v9082 = vunpack.c.l.b16 %v7538
    %v9083 = vunpack.c.h.b16 %v7538
    %v9084 = vunpack.c.l.b16 %v7539
    %v9085 = vunpack.c.h.b16 %v7539
    %v9086 = vunpack.c.l.b16 %v7540
    %v9087 = vunpack.c.h.b16 %v7540
    %v9088 = vunpack.c.l.b16 %v7541
    %v9089 = vunpack.c.h.b16 %v7541
    %v9090 = vunpack.c.l.b16 %v7542
    %v9091 = vunpack.c.h.b16 %v7542
    %v9092 = vunpack.c.l.b16 %v7543
    %v9093 = vunpack.c.h.b16 %v7543
    %v9094 = vunpack.c.l.b16 %v7544
    %v9095 = vunpack.c.h.b16 %v7544
    %v9096 = vunpack.c.l.b16 %v7545
    %v9097 = vunpack.c.h.b16 %v7545
    %v9098 = vunpack.c.l.b16 %v7546
    %v9099 = vunpack.c.h.b16 %v7546
    %v9100 = vunpack.c.l.b16 %v7547
    %v9101 = vunpack.c.h.b16 %v7547
    %v9102 = vunpack.c.l.b16 %v7548
    %v9103 = vunpack.c.h.b16 %v7548
    %v9104 = vunpack.c.l.b16 %v7549
    %v9105 = vunpack.c.h.b16 %v7549
    %v9106 = vunpack.c.l.b16 %v7550
    %v9107 = vunpack.c.h.b16 %v7550
    %v9108 = vunpack.c.l.b16 %v7551
    %v9109 = vunpack.c.h.b16 %v7551
    %v9110 = vunpack.c.l.b16 %v7552
    %v9111 = vunpack.c.h.b16 %v7552
    %v9112 = vunpack.c.l.b16 %v7553
    %v9113 = vunpack.c.h.b16 %v7553
    %v9114 = vunpack.c.l.b16 %v7554
    %v9115 = vunpack.c.h.b16 %v7554
    %v9116 = vunpack.c.l.b16 %v7555
    %v9117 = vunpack.c.h.b16 %v7555
    %v9118 = vunpack.c.l.b16 %v7556
    %v9119 = vunpack.c.h.b16 %v7556
    %v9120 = vunpack.c.l.b16 %v7557
    %v9121 = vunpack.c.h.b16 %v7557
    %v9122 = vunpack.c.l.b16 %v7558
    %v9123 = vunpack.c.h.b16 %v7558
    %v9124 = vunpack.c.l.b16 %v7559
    %v9125 = vunpack.c.h.b16 %v7559
    %v9126 = vunpack.c.l.b16 %v7560
    %v9127 = vunpack.c.h.b16 %v7560
    %v9128 = vunpack.c.l.b16 %v7561
    %v9129 = vunpack.c.h.b16 %v7561
    %v9130 = vunpack.c.l.b16 %v7562
    %v9131 = vunpack.c.h.b16 %v7562
    %v9132 = vunpack.c.l.b16 %v7563
    %v9133 = vunpack.c.h.b16 %v7563
    %v9134 = vunpack.c.l.b16 %v7564
    %v9135 = vunpack.c.h.b16 %v7564
    %v9136 = vunpack.c.l.b16 %v7565
    %v9137 = vunpack.c.h.b16 %v7565
    %v9138 = vunpack.c.l.b16 %v7566
    %v9139 = vunpack.c.h.b16 %v7566
    %v9140 = vunpack.c.l.b16 %v7567
    %v9141 = vunpack.c.h.b16 %v7567
    %v9142 = vunpack.c.l.b16 %v7568
    %v9143 = vunpack.c.h.b16 %v7568
    %v9144 = vunpack.c.l.b16 %v7569
    %v9145 = vunpack.c.h.b16 %v7569
    %v9146 = vunpack.c.l.b16 %v7570
    %v9147 = vunpack.c.h.b16 %v7570
    %v9148 = vunpack.c.l.b16 %v7571
    %v9149 = vunpack.c.h.b16 %v7571
    %v9150 = vpack.c.b16 %v8134, %v8126
    %v9151 = vpack.c.b16 %v8135, %v8127
    %v9152 = vpack.c.b16 %v8136, %v8128
    %v9153 = vpack.c.b16 %v8137, %v8129
    %v9154 = vpack.c.b16 %v8138, %v8130
    %v9155 = vpack.c.b16 %v8139, %v8131
    %v9156 = vpack.c.b16 %v8140, %v8132
    %v9157 = vpack.c.b16 %v8141, %v8133
    %v9158 = vpack.c.b16 %v8150, %v8142
    %v9159 = vpack.c.b16 %v8151, %v8143
    %v9160 = vpack.c.b16 %v8152, %v8144
    %v9161 = vpack.c.b16 %v8153, %v8145
    %v9162 = vpack.c.b16 %v8154, %v8146
    %v9163 = vpack.c.b16 %v8155, %v8147
    %v9164 = vpack.c.b16 %v8156, %v8148
    %v9165 = vpack.c.b16 %v8157, %v8149
    %v9166 = vpack.c.b16 %v8166, %v8158
    %v9167 = vpack.c.b16 %v8167, %v8159
    %v9168 = vpack.c.b16 %v8168, %v8160
    %v9169 = vpack.c.b16 %v8169, %v8161
    %v9170 = vpack.c.b16 %v8170, %v8162
    %v9171 = vpack.c.b16 %v8171, %v8163
    %v9172 = vpack.c.b16 %v8172, %v8164
    %v9173 = vpack.c.b16 %v8173, %v8165
    %v9174 = vpack.c.b16 %v8182, %v8174
    %v9175 = vpack.c.b16 %v8183, %v8175
    %v9176 = vpack.c.b16 %v8184, %v8176
    %v9177 = vpack.c.b16 %v8185, %v8177
    %v9178 = vpack.c.b16 %v8186, %v8178
    %v9179 = vpack.c.b16 %v8187, %v8179
    %v9180 = vpack.c.b16 %v8188, %v8180
    %v9181 = vpack.c.b16 %v8189, %v8181
    %v9182 = vpack.c.b16 %v8198, %v8190
    %v9183 = vpack.c.b16 %v8199, %v8191
    %v9184 = vpack.c.b16 %v8200, %v8192
    %v9185 = vpack.c.b16 %v8201, %v8193
    %v9186 = vpack.c.b16 %v8202, %v8194
    %v9187 = vpack.c.b16 %v8203, %v8195
    %v9188 = vpack.c.b16 %v8204, %v8196
    %v9189 = vpack.c.b16 %v8205, %v8197
    %v9190 = vpack.c.b16 %v8214, %v8206
    %v9191 = vpack.c.b16 %v8215, %v8207
    %v9192 = vpack.c.b16 %v8216, %v8208
    %v9193 = vpack.c.b16 %v8217, %v8209
    %v9194 = vpack.c.b16 %v8218, %v8210
    %v9195 = vpack.c.b16 %v8219, %v8211
    %v9196 = vpack.c.b16 %v8220, %v8212
    %v9197 = vpack.c.b16 %v8221, %v8213
    %v9198 = vpack.c.b16 %v8230, %v8222
    %v9199 = vpack.c.b16 %v8231, %v8223
    %v9200 = vpack.c.b16 %v8232, %v8224
    %v9201 = vpack.c.b16 %v8233, %v8225
    %v9202 = vpack.c.b16 %v8234, %v8226
    %v9203 = vpack.c.b16 %v8235, %v8227
    %v9204 = vpack.c.b16 %v8236, %v8228
    %v9205 = vpack.c.b16 %v8237, %v8229
    %v9206 = vpack.c.b16 %v8246, %v8238
    %v9207 = vpack.c.b16 %v8247, %v8239
    %v9208 = vpack.c.b16 %v8248, %v8240
    %v9209 = vpack.c.b16 %v8249, %v8241
    %v9210 = vpack.c.b16 %v8250, %v8242
    %v9211 = vpack.c.b16 %v8251, %v8243
    %v9212 = vpack.c.b16 %v8252, %v8244
    %v9213 = vpack.c.b16 %v8253, %v8245
    %v9214 = vpack.c.b16 %v8262, %v8254
    %v9215 = vpack.c.b16 %v8263, %v8255
    %v9216 = vpack.c.b16 %v8264, %v8256
    %v9217 = vpack.c.b16 %v8265, %v8257
    %v9218 = vpack.c.b16 %v8266, %v8258
    %v9219 = vpack.c.b16 %v8267, %v8259
    %v9220 = vpack.c.b16 %v8268, %v8260
    %v9221 = vpack.c.b16 %v8269, %v8261
    %v9222 = vpack.c.b16 %v8278, %v8270
    %v9223 = vpack.c.b16 %v8279, %v8271
    %v9224 = vpack.c.b16 %v8280, %v8272
    %v9225 = vpack.c.b16 %v8281, %v8273
    %v9226 = vpack.c.b16 %v8282, %v8274
    %v9227 = vpack.c.b16 %v8283, %v8275
    %v9228 = vpack.c.b16 %v8284, %v8276
    %v9229 = vpack.c.b16 %v8285, %v8277
    %v9230 = vpack.c.b16 %v8294, %v8286
    %v9231 = vpack.c.b16 %v8295, %v8287
    %v9232 = vpack.c.b16 %v8296, %v8288
    %v9233 = vpack.c.b16 %v8297, %v8289
    %v9234 = vpack.c.b16 %v8298, %v8290
    %v9235 = vpack.c.b16 %v8299, %v8291
    %v9236 = vpack.c.b16 %v8300, %v8292
    %v9237 = vpack.c.b16 %v8301, %v8293
    %v9238 = vpack.c.b16 %v8310, %v8302
    %v9239 = vpack.c.b16 %v8311, %v8303
    %v9240 = vpack.c.b16 %v8312, %v8304
    %v9241 = vpack.c.b16 %v8313, %v8305
    %v9242 = vpack.c.b16 %v8314, %v8306
    %v9243 = vpack.c.b16 %v8315, %v8307
    %v9244 = vpack.c.b16 %v8316, %v8308
    %v9245 = vpack.c.b16 %v8317, %v8309
    %v9246 = vpack.c.b16 %v8326, %v8318
    %v9247 = vpack.c.b16 %v8327, %v8319
    %v9248 = vpack.c.b16 %v8328, %v8320
    %v9249 = vpack.c.b16 %v8329, %v8321
    %v9250 = vpack.c.b16 %v8330, %v8322
    %v9251 = vpack.c.b16 %v8331, %v8323
    %v9252 = vpack.c.b16 %v8332, %v8324
    %v9253 = vpack.c.b16 %v8333, %v8325
    %v9254 = vpack.c.b16 %v8342, %v8334
    %v9255 = vpack.c.b16 %v8343, %v8335
    %v9256 = vpack.c.b16 %v8344, %v8336
    %v9257 = vpack.c.b16 %v8345, %v8337
    %v9258 = vpack.c.b16 %v8346, %v8338
    %v9259 = vpack.c.b16 %v8347, %v8339
    %v9260 = vpack.c.b16 %v8348, %v8340
    %v9261 = vpack.c.b16 %v8349, %v8341
    %v9262 = vpack.c.b16 %v8358, %v8350
    %v9263 = vpack.c.b16 %v8359, %v8351
    %v9264 = vpack.c.b16 %v8360, %v8352
    %v9265 = vpack.c.b16 %v8361, %v8353
    %v9266 = vpack.c.b16 %v8362, %v8354
    %v9267 = vpack.c.b16 %v8363, %v8355
    %v9268 = vpack.c.b16 %v8364, %v8356
    %v9269 = vpack.c.b16 %v8365, %v8357
    %v9270 = vpack.c.b16 %v8374, %v8366
    %v9271 = vpack.c.b16 %v8375, %v8367
    %v9272 = vpack.c.b16 %v8376, %v8368
    %v9273 = vpack.c.b16 %v8377, %v8369
    %v9274 = vpack.c.b16 %v8378, %v8370
    %v9275 = vpack.c.b16 %v8379, %v8371
    %v9276 = vpack.c.b16 %v8380, %v8372
    %v9277 = vpack.c.b16 %v8381, %v8373
    %v9278 = vpack.c.b16 %v8390, %v8382
    %v9279 = vpack.c.b16 %v8391, %v8383
    %v9280 = vpack.c.b16 %v8392, %v8384
    %v9281 = vpack.c.b16 %v8393, %v8385
    %v9282 = vpack.c.b16 %v8394, %v8386
    %v9283 = vpack.c.b16 %v8395, %v8387
    %v9284 = vpack.c.b16 %v8396, %v8388
    %v9285 = vpack.c.b16 %v8397, %v8389
    %v9286 = vpack.c.b16 %v8406, %v8398
    %v9287 = vpack.c.b16 %v8407, %v8399
    %v9288 = vpack.c.b16 %v8408, %v8400
    %v9289 = vpack.c.b16 %v8409, %v8401
    %v9290 = vpack.c.b16 %v8410, %v8402
    %v9291 = vpack.c.b16 %v8411, %v8403
    %v9292 = vpack.c.b16 %v8412, %v8404
    %v9293 = vpack.c.b16 %v8413, %v8405
    %v9294 = vpack.c.b16 %v8422, %v8414
    %v9295 = vpack.c.b16 %v8423, %v8415
    %v9296 = vpack.c.b16 %v8424, %v8416
    %v9297 = vpack.c.b16 %v8425, %v8417
    %v9298 = vpack.c.b16 %v8426, %v8418
    %v9299 = vpack.c.b16 %v8427, %v8419
    %v9300 = vpack.c.b16 %v8428, %v8420
    %v9301 = vpack.c.b16 %v8429, %v8421
    %v9302 = vpack.c.b16 %v8438, %v8430
    %v9303 = vpack.c.b16 %v8439, %v8431
    %v9304 = vpack.c.b16 %v8440, %v8432
    %v9305 = vpack.c.b16 %v8441, %v8433
    %v9306 = vpack.c.b16 %v8442, %v8434
    %v9307 = vpack.c.b16 %v8443, %v8435
    %v9308 = vpack.c.b16 %v8444, %v8436
    %v9309 = vpack.c.b16 %v8445, %v8437
    %v9310 = vpack.c.b16 %v8454, %v8446
    %v9311 = vpack.c.b16 %v8455, %v8447
    %v9312 = vpack.c.b16 %v8456, %v8448
    %v9313 = vpack.c.b16 %v8457, %v8449
    %v9314 = vpack.c.b16 %v8458, %v8450
    %v9315 = vpack.c.b16 %v8459, %v8451
    %v9316 = vpack.c.b16 %v8460, %v8452
    %v9317 = vpack.c.b16 %v8461, %v8453
    %v9318 = vpack.c.b16 %v8470, %v8462
    %v9319 = vpack.c.b16 %v8471, %v8463
    %v9320 = vpack.c.b16 %v8472, %v8464
    %v9321 = vpack.c.b16 %v8473, %v8465
    %v9322 = vpack.c.b16 %v8474, %v8466
    %v9323 = vpack.c.b16 %v8475, %v8467
    %v9324 = vpack.c.b16 %v8476, %v8468
    %v9325 = vpack.c.b16 %v8477, %v8469
    %v9326 = vpack.c.b16 %v8486, %v8478
    %v9327 = vpack.c.b16 %v8487, %v8479
    %v9328 = vpack.c.b16 %v8488, %v8480
    %v9329 = vpack.c.b16 %v8489, %v8481
    %v9330 = vpack.c.b16 %v8490, %v8482
    %v9331 = vpack.c.b16 %v8491, %v8483
    %v9332 = vpack.c.b16 %v8492, %v8484
    %v9333 = vpack.c.b16 %v8493, %v8485
    %v9334 = vpack.c.b16 %v8502, %v8494
    %v9335 = vpack.c.b16 %v8503, %v8495
    %v9336 = vpack.c.b16 %v8504, %v8496
    %v9337 = vpack.c.b16 %v8505, %v8497
    %v9338 = vpack.c.b16 %v8506, %v8498
    %v9339 = vpack.c.b16 %v8507, %v8499
    %v9340 = vpack.c.b16 %v8508, %v8500
    %v9341 = vpack.c.b16 %v8509, %v8501
    %v9342 = vpack.c.b16 %v8518, %v8510
    %v9343 = vpack.c.b16 %v8519, %v8511
    %v9344 = vpack.c.b16 %v8520, %v8512
    %v9345 = vpack.c.b16 %v8521, %v8513
    %v9346 = vpack.c.b16 %v8522, %v8514
    %v9347 = vpack.c.b16 %v8523, %v8515
    %v9348 = vpack.c.b16 %v8524, %v8516
    %v9349 = vpack.c.b16 %v8525, %v8517
    %v9350 = vpack.c.b16 %v8534, %v8526
    %v9351 = vpack.c.b16 %v8535, %v8527
    %v9352 = vpack.c.b16 %v8536, %v8528
    %v9353 = vpack.c.b16 %v8537, %v8529
    %v9354 = vpack.c.b16 %v8538, %v8530
    %v9355 = vpack.c.b16 %v8539, %v8531
    %v9356 = vpack.c.b16 %v8540, %v8532
    %v9357 = vpack.c.b16 %v8541, %v8533
    %v9358 = vpack.c.b16 %v8550, %v8542
    %v9359 = vpack.c.b16 %v8551, %v8543
    %v9360 = vpack.c.b16 %v8552, %v8544
    %v9361 = vpack.c.b16 %v8553, %v8545
    %v9362 = vpack.c.b16 %v8554, %v8546
    %v9363 = vpack.c.b16 %v8555, %v8547
    %v9364 = vpack.c.b16 %v8556, %v8548
    %v9365 = vpack.c.b16 %v8557, %v8549
    %v9366 = vpack.c.b16 %v8566, %v8558
    %v9367 = vpack.c.b16 %v8567, %v8559
    %v9368 = vpack.c.b16 %v8568, %v8560
    %v9369 = vpack.c.b16 %v8569, %v8561
    %v9370 = vpack.c.b16 %v8570, %v8562
    %v9371 = vpack.c.b16 %v8571, %v8563
    %v9372 = vpack.c.b16 %v8572, %v8564
    %v9373 = vpack.c.b16 %v8573, %v8565
    %v9374 = vpack.c.b16 %v8582, %v8574
    %v9375 = vpack.c.b16 %v8583, %v8575
    %v9376 = vpack.c.b16 %v8584, %v8576
    %v9377 = vpack.c.b16 %v8585, %v8577
    %v9378 = vpack.c.b16 %v8586, %v8578
    %v9379 = vpack.c.b16 %v8587, %v8579
    %v9380 = vpack.c.b16 %v8588, %v8580
    %v9381 = vpack.c.b16 %v8589, %v8581
    %v9382 = vpack.c.b16 %v8598, %v8590
    %v9383 = vpack.c.b16 %v8599, %v8591
    %v9384 = vpack.c.b16 %v8600, %v8592
    %v9385 = vpack.c.b16 %v8601, %v8593
    %v9386 = vpack.c.b16 %v8602, %v8594
    %v9387 = vpack.c.b16 %v8603, %v8595
    %v9388 = vpack.c.b16 %v8604, %v8596
    %v9389 = vpack.c.b16 %v8605, %v8597
    %v9390 = vpack.c.b16 %v8614, %v8606
    %v9391 = vpack.c.b16 %v8615, %v8607
    %v9392 = vpack.c.b16 %v8616, %v8608
    %v9393 = vpack.c.b16 %v8617, %v8609
    %v9394 = vpack.c.b16 %v8618, %v8610
    %v9395 = vpack.c.b16 %v8619, %v8611
    %v9396 = vpack.c.b16 %v8620, %v8612
    %v9397 = vpack.c.b16 %v8621, %v8613
    %v9398 = vpack.c.b16 %v8630, %v8622
    %v9399 = vpack.c.b16 %v8631, %v8623
    %v9400 = vpack.c.b16 %v8632, %v8624
    %v9401 = vpack.c.b16 %v8633, %v8625
    %v9402 = vpack.c.b16 %v8634, %v8626
    %v9403 = vpack.c.b16 %v8635, %v8627
    %v9404 = vpack.c.b16 %v8636, %v8628
    %v9405 = vpack.c.b16 %v8637, %v8629
    %v9406 = vpack.c.b16 %v8646, %v8638
    %v9407 = vpack.c.b16 %v8647, %v8639
    %v9408 = vpack.c.b16 %v8648, %v8640
    %v9409 = vpack.c.b16 %v8649, %v8641
    %v9410 = vpack.c.b16 %v8650, %v8642
    %v9411 = vpack.c.b16 %v8651, %v8643
    %v9412 = vpack.c.b16 %v8652, %v8644
    %v9413 = vpack.c.b16 %v8653, %v8645
    %v9414 = vpack.c.b16 %v8662, %v8654
    %v9415 = vpack.c.b16 %v8663, %v8655
    %v9416 = vpack.c.b16 %v8664, %v8656
    %v9417 = vpack.c.b16 %v8665, %v8657
    %v9418 = vpack.c.b16 %v8666, %v8658
    %v9419 = vpack.c.b16 %v8667, %v8659
    %v9420 = vpack.c.b16 %v8668, %v8660
    %v9421 = vpack.c.b16 %v8669, %v8661
    %v9422 = vpack.c.b16 %v8678, %v8670
    %v9423 = vpack.c.b16 %v8679, %v8671
    %v9424 = vpack.c.b16 %v8680, %v8672
    %v9425 = vpack.c.b16 %v8681, %v8673
    %v9426 = vpack.c.b16 %v8682, %v8674
    %v9427 = vpack.c.b16 %v8683, %v8675
    %v9428 = vpack.c.b16 %v8684, %v8676
    %v9429 = vpack.c.b16 %v8685, %v8677
    %v9430 = vpack.c.b16 %v8694, %v8686
    %v9431 = vpack.c.b16 %v8695, %v8687
    %v9432 = vpack.c.b16 %v8696, %v8688
    %v9433 = vpack.c.b16 %v8697, %v8689
    %v9434 = vpack.c.b16 %v8698, %v8690
    %v9435 = vpack.c.b16 %v8699, %v8691
    %v9436 = vpack.c.b16 %v8700, %v8692
    %v9437 = vpack.c.b16 %v8701, %v8693
    %v9438 = vpack.c.b16 %v8710, %v8702
    %v9439 = vpack.c.b16 %v8711, %v8703
    %v9440 = vpack.c.b16 %v8712, %v8704
    %v9441 = vpack.c.b16 %v8713, %v8705
    %v9442 = vpack.c.b16 %v8714, %v8706
    %v9443 = vpack.c.b16 %v8715, %v8707
    %v9444 = vpack.c.b16 %v8716, %v8708
    %v9445 = vpack.c.b16 %v8717, %v8709
    %v9446 = vpack.c.b16 %v8726, %v8718
    %v9447 = vpack.c.b16 %v8727, %v8719
    %v9448 = vpack.c.b16 %v8728, %v8720
    %v9449 = vpack.c.b16 %v8729, %v8721
    %v9450 = vpack.c.b16 %v8730, %v8722
    %v9451 = vpack.c.b16 %v8731, %v8723
    %v9452 = vpack.c.b16 %v8732, %v8724
    %v9453 = vpack.c.b16 %v8733, %v8725
    %v9454 = vpack.c.b16 %v8742, %v8734
    %v9455 = vpack.c.b16 %v8743, %v8735
    %v9456 = vpack.c.b16 %v8744, %v8736
    %v9457 = vpack.c.b16 %v8745, %v8737
    %v9458 = vpack.c.b16 %v8746, %v8738
    %v9459 = vpack.c.b16 %v8747, %v8739
    %v9460 = vpack.c.b16 %v8748, %v8740
    %v9461 = vpack.c.b16 %v8749, %v8741
    %v9462 = vpack.c.b16 %v8758, %v8750
    %v9463 = vpack.c.b16 %v8759, %v8751
    %v9464 = vpack.c.b16 %v8760, %v8752
    %v9465 = vpack.c.b16 %v8761, %v8753
    %v9466 = vpack.c.b16 %v8762, %v8754
    %v9467 = vpack.c.b16 %v8763, %v8755
    %v9468 = vpack.c.b16 %v8764, %v8756
    %v9469 = vpack.c.b16 %v8765, %v8757
    %v9470 = vpack.c.b16 %v8774, %v8766
    %v9471 = vpack.c.b16 %v8775, %v8767
    %v9472 = vpack.c.b16 %v8776, %v8768
    %v9473 = vpack.c.b16 %v8777, %v8769
    %v9474 = vpack.c.b16 %v8778, %v8770
    %v9475 = vpack.c.b16 %v8779, %v8771
    %v9476 = vpack.c.b16 %v8780, %v8772
    %v9477 = vpack.c.b16 %v8781, %v8773
    %v9478 = vpack.c.b16 %v8790, %v8782
    %v9479 = vpack.c.b16 %v8791, %v8783
    %v9480 = vpack.c.b16 %v8792, %v8784
    %v9481 = vpack.c.b16 %v8793, %v8785
    %v9482 = vpack.c.b16 %v8794, %v8786
    %v9483 = vpack.c.b16 %v8795, %v8787
    %v9484 = vpack.c.b16 %v8796, %v8788
    %v9485 = vpack.c.b16 %v8797, %v8789
    %v9486 = vpack.c.b16 %v8806, %v8798
    %v9487 = vpack.c.b16 %v8807, %v8799
    %v9488 = vpack.c.b16 %v8808, %v8800
    %v9489 = vpack.c.b16 %v8809, %v8801
    %v9490 = vpack.c.b16 %v8810, %v8802
    %v9491 = vpack.c.b16 %v8811, %v8803
    %v9492 = vpack.c.b16 %v8812, %v8804
    %v9493 = vpack.c.b16 %v8813, %v8805
    %v9494 = vpack.c.b16 %v8822, %v8814
    %v9495 = vpack.c.b16 %v8823, %v8815
    %v9496 = vpack.c.b16 %v8824, %v8816
    %v9497 = vpack.c.b16 %v8825, %v8817
    %v9498 = vpack.c.b16 %v8826, %v8818
    %v9499 = vpack.c.b16 %v8827, %v8819
    %v9500 = vpack.c.b16 %v8828, %v8820
    %v9501 = vpack.c.b16 %v8829, %v8821
    %v9502 = vpack.c.b16 %v8838, %v8830
    %v9503 = vpack.c.b16 %v8839, %v8831
    %v9504 = vpack.c.b16 %v8840, %v8832
    %v9505 = vpack.c.b16 %v8841, %v8833
    %v9506 = vpack.c.b16 %v8842, %v8834
    %v9507 = vpack.c.b16 %v8843, %v8835
    %v9508 = vpack.c.b16 %v8844, %v8836
    %v9509 = vpack.c.b16 %v8845, %v8837
    %v9510 = vpack.c.b16 %v8854, %v8846
    %v9511 = vpack.c.b16 %v8855, %v8847
    %v9512 = vpack.c.b16 %v8856, %v8848
    %v9513 = vpack.c.b16 %v8857, %v8849
    %v9514 = vpack.c.b16 %v8858, %v8850
    %v9515 = vpack.c.b16 %v8859, %v8851
    %v9516 = vpack.c.b16 %v8860, %v8852
    %v9517 = vpack.c.b16 %v8861, %v8853
    %v9518 = vpack.c.b16 %v8870, %v8862
    %v9519 = vpack.c.b16 %v8871, %v8863
    %v9520 = vpack.c.b16 %v8872, %v8864
    %v9521 = vpack.c.b16 %v8873, %v8865
    %v9522 = vpack.c.b16 %v8874, %v8866
    %v9523 = vpack.c.b16 %v8875, %v8867
    %v9524 = vpack.c.b16 %v8876, %v8868
    %v9525 = vpack.c.b16 %v8877, %v8869
    %v9526 = vpack.c.b16 %v8886, %v8878
    %v9527 = vpack.c.b16 %v8887, %v8879
    %v9528 = vpack.c.b16 %v8888, %v8880
    %v9529 = vpack.c.b16 %v8889, %v8881
    %v9530 = vpack.c.b16 %v8890, %v8882
    %v9531 = vpack.c.b16 %v8891, %v8883
    %v9532 = vpack.c.b16 %v8892, %v8884
    %v9533 = vpack.c.b16 %v8893, %v8885
    %v9534 = vpack.c.b16 %v8902, %v8894
    %v9535 = vpack.c.b16 %v8903, %v8895
    %v9536 = vpack.c.b16 %v8904, %v8896
    %v9537 = vpack.c.b16 %v8905, %v8897
    %v9538 = vpack.c.b16 %v8906, %v8898
    %v9539 = vpack.c.b16 %v8907, %v8899
    %v9540 = vpack.c.b16 %v8908, %v8900
    %v9541 = vpack.c.b16 %v8909, %v8901
    %v9542 = vpack.c.b16 %v8918, %v8910
    %v9543 = vpack.c.b16 %v8919, %v8911
    %v9544 = vpack.c.b16 %v8920, %v8912
    %v9545 = vpack.c.b16 %v8921, %v8913
    %v9546 = vpack.c.b16 %v8922, %v8914
    %v9547 = vpack.c.b16 %v8923, %v8915
    %v9548 = vpack.c.b16 %v8924, %v8916
    %v9549 = vpack.c.b16 %v8925, %v8917
    %v9550 = vpack.c.b16 %v8934, %v8926
    %v9551 = vpack.c.b16 %v8935, %v8927
    %v9552 = vpack.c.b16 %v8936, %v8928
    %v9553 = vpack.c.b16 %v8937, %v8929
    %v9554 = vpack.c.b16 %v8938, %v8930
    %v9555 = vpack.c.b16 %v8939, %v8931
    %v9556 = vpack.c.b16 %v8940, %v8932
    %v9557 = vpack.c.b16 %v8941, %v8933
    %v9558 = vpack.c.b16 %v8950, %v8942
    %v9559 = vpack.c.b16 %v8951, %v8943
    %v9560 = vpack.c.b16 %v8952, %v8944
    %v9561 = vpack.c.b16 %v8953, %v8945
    %v9562 = vpack.c.b16 %v8954, %v8946
    %v9563 = vpack.c.b16 %v8955, %v8947
    %v9564 = vpack.c.b16 %v8956, %v8948
    %v9565 = vpack.c.b16 %v8957, %v8949
    %v9566 = vpack.c.b16 %v8966, %v8958
    %v9567 = vpack.c.b16 %v8967, %v8959
    %v9568 = vpack.c.b16 %v8968, %v8960
    %v9569 = vpack.c.b16 %v8969, %v8961
    %v9570 = vpack.c.b16 %v8970, %v8962
    %v9571 = vpack.c.b16 %v8971, %v8963
    %v9572 = vpack.c.b16 %v8972, %v8964
    %v9573 = vpack.c.b16 %v8973, %v8965
    %v9574 = vpack.c.b16 %v8982, %v8974
    %v9575 = vpack.c.b16 %v8983, %v8975
    %v9576 = vpack.c.b16 %v8984, %v8976
    %v9577 = vpack.c.b16 %v8985, %v8977
    %v9578 = vpack.c.b16 %v8986, %v8978
    %v9579 = vpack.c.b16 %v8987, %v8979
    %v9580 = vpack.c.b16 %v8988, %v8980
    %v9581 = vpack.c.b16 %v8989, %v8981
    %v9582 = vpack.c.b16 %v8998, %v8990
    %v9583 = vpack.c.b16 %v8999, %v8991
    %v9584 = vpack.c.b16 %v9000, %v8992
    %v9585 = vpack.c.b16 %v9001, %v8993
    %v9586 = vpack.c.b16 %v9002, %v8994
    %v9587 = vpack.c.b16 %v9003, %v8995
    %v9588 = vpack.c.b16 %v9004, %v8996
    %v9589 = vpack.c.b16 %v9005, %v8997
    %v9590 = vpack.c.b16 %v9014, %v9006
    %v9591 = vpack.c.b16 %v9015, %v9007
    %v9592 = vpack.c.b16 %v9016, %v9008
    %v9593 = vpack.c.b16 %v9017, %v9009
    %v9594 = vpack.c.b16 %v9018, %v9010
    %v9595 = vpack.c.b16 %v9019, %v9011
    %v9596 = vpack.c.b16 %v9020, %v9012
    %v9597 = vpack.c.b16 %v9021, %v9013
    %v9598 = vpack.c.b16 %v9030, %v9022
    %v9599 = vpack.c.b16 %v9031, %v9023
    %v9600 = vpack.c.b16 %v9032, %v9024
    %v9601 = vpack.c.b16 %v9033, %v9025
    %v9602 = vpack.c.b16 %v9034, %v9026
    %v9603 = vpack.c.b16 %v9035, %v9027
    %v9604 = vpack.c.b16 %v9036, %v9028
    %v9605 = vpack.c.b16 %v9037, %v9029
    %v9606 = vpack.c.b16 %v9046, %v9038
    %v9607 = vpack.c.b16 %v9047, %v9039
    %v9608 = vpack.c.b16 %v9048, %v9040
    %v9609 = vpack.c.b16 %v9049, %v9041
    %v9610 = vpack.c.b16 %v9050, %v9042
    %v9611 = vpack.c.b16 %v9051, %v9043
    %v9612 = vpack.c.b16 %v9052, %v9044
    %v9613 = vpack.c.b16 %v9053, %v9045
    %v9614 = vpack.c.b16 %v9062, %v9054
    %v9615 = vpack.c.b16 %v9063, %v9055
    %v9616 = vpack.c.b16 %v9064, %v9056
    %v9617 = vpack.c.b16 %v9065, %v9057
    %v9618 = vpack.c.b16 %v9066, %v9058
    %v9619 = vpack.c.b16 %v9067, %v9059
    %v9620 = vpack.c.b16 %v9068, %v9060
    %v9621 = vpack.c.b16 %v9069, %v9061
    %v9622 = vpack.c.b16 %v9078, %v9070
    %v9623 = vpack.c.b16 %v9079, %v9071
    %v9624 = vpack.c.b16 %v9080, %v9072
    %v9625 = vpack.c.b16 %v9081, %v9073
    %v9626 = vpack.c.b16 %v9082, %v9074
    %v9627 = vpack.c.b16 %v9083, %v9075
    %v9628 = vpack.c.b16 %v9084, %v9076
    %v9629 = vpack.c.b16 %v9085, %v9077
    %v9630 = vpack.c.b16 %v9094, %v9086
    %v9631 = vpack.c.b16 %v9095, %v9087
    %v9632 = vpack.c.b16 %v9096, %v9088
    %v9633 = vpack.c.b16 %v9097, %v9089
    %v9634 = vpack.c.b16 %v9098, %v9090
    %v9635 = vpack.c.b16 %v9099, %v9091
    %v9636 = vpack.c.b16 %v9100, %v9092
    %v9637 = vpack.c.b16 %v9101, %v9093
    %v9638 = vpack.c.b16 %v9110, %v9102
    %v9639 = vpack.c.b16 %v9111, %v9103
    %v9640 = vpack.c.b16 %v9112, %v9104
    %v9641 = vpack.c.b16 %v9113, %v9105
    %v9642 = vpack.c.b16 %v9114, %v9106
    %v9643 = vpack.c.b16 %v9115, %v9107
    %v9644 = vpack.c.b16 %v9116, %v9108
    %v9645 = vpack.c.b16 %v9117, %v9109
    %v9646 = vpack.c.b16 %v9126, %v9118
    %v9647 = vpack.c.b16 %v9127, %v9119
    %v9648 = vpack.c.b16 %v9128, %v9120
    %v9649 = vpack.c.b16 %v9129, %v9121
    %v9650 = vpack.c.b16 %v9130, %v9122
    %v9651 = vpack.c.b16 %v9131, %v9123
    %v9652 = vpack.c.b16 %v9132, %v9124
    %v9653 = vpack.c.b16 %v9133, %v9125
    %v9654 = vpack.c.b16 %v9142, %v9134
    %v9655 = vpack.c.b16 %v9143, %v9135
    %v9656 = vpack.c.b16 %v9144, %v9136
    %v9657 = vpack.c.b16 %v9145, %v9137
    %v9658 = vpack.c.b16 %v9146, %v9138
    %v9659 = vpack.c.b16 %v9147, %v9139
    %v9660 = vpack.c.b16 %v9148, %v9140
    %v9661 = vpack.c.b16 %v9149, %v9141
    %10174 = vmatprep.subr.bf16.mxu0 %v9151
    %10175 = vmatpush1.bf16.msra.mxu0 %v9150
    %10176 = vmatprep.subr.bf16.mxu0 %v9159
    %10177 = vmatpush1.bf16.msra.mxu0 %v9158
    %10178 = vmatprep.subr.bf16.mxu0 %v9167
    %10179 = vmatpush1.bf16.msra.mxu0 %v9166
    %10180 = vmatprep.subr.bf16.mxu0 %v9175
    %10181 = vmatpush1.bf16.msra.mxu0 %v9174
    %10182 = vmatprep.subr.bf16.mxu0 %v9183
    %10183 = vmatpush1.bf16.msra.mxu0 %v9182
    %10184 = vmatprep.subr.bf16.mxu0 %v9191
    %10185 = vmatpush1.bf16.msra.mxu0 %v9190
    %10186 = vmatprep.subr.bf16.mxu0 %v9199
    %10187 = vmatpush1.bf16.msra.mxu0 %v9198
    %10188 = vmatprep.subr.bf16.mxu0 %v9207
    %10189 = vmatpush1.bf16.msra.mxu0 %v9206
    %10190 = vmatprep.subr.bf16.mxu0 %v9215
    %10191 = vmatpush1.bf16.msra.mxu0 %v9214
    %10192 = vmatprep.subr.bf16.mxu0 %v9223
    %10193 = vmatpush1.bf16.msra.mxu0 %v9222
    %10194 = vmatprep.subr.bf16.mxu0 %v9231
    %10195 = vmatpush1.bf16.msra.mxu0 %v9230
    %10196 = vmatprep.subr.bf16.mxu0 %v9239
    %10197 = vmatpush1.bf16.msra.mxu0 %v9238
    %10198 = vmatprep.subr.bf16.mxu0 %v9247
    %10199 = vmatpush1.bf16.msra.mxu0 %v9246
    %10200 = vmatprep.subr.bf16.mxu0 %v9255
    %10201 = vmatpush1.bf16.msra.mxu0 %v9254
    %10202 = vmatprep.subr.bf16.mxu0 %v9263
    %10203 = vmatpush1.bf16.msra.mxu0 %v9262
    %10204 = vmatprep.subr.bf16.mxu0 %v9271
    %10205 = vmatpush1.bf16.msra.mxu0 %v9270
    %10206 = vmatprep.mubr.bf16.mxu0 %v7053
    %10207 = vmatmul.mubr.bf16.gmra.mrb[0].mxu0 %v7052
    %v10208 = vpop.f32.mrb[0].mxu0
    %v10209 = vadd.f32 %v7577, %v10208
    %v10210 = vpop.f32.mrb[0].mxu0
    %v10211 = vadd.f32 %v7581, %v10210
    %v10212 = vpop.f32.mrb[0].mxu0
    %v10213 = vpop.f32.mrb[0].mxu0
    %10214 = vdwg.mxu0
    %10215 = vmatprep.subr.bf16.mxu0 %v9279
    %10216 = vmatpush1.bf16.msra.mxu0 %v9278
    %10217 = vmatprep.subr.bf16.mxu0 %v9287
    %10218 = vmatpush1.bf16.msra.mxu0 %v9286
    %10219 = vmatprep.subr.bf16.mxu0 %v9295
    %10220 = vmatpush1.bf16.msra.mxu0 %v9294
    %10221 = vmatprep.subr.bf16.mxu0 %v9303
    %10222 = vmatpush1.bf16.msra.mxu0 %v9302
    %10223 = vmatprep.subr.bf16.mxu0 %v9311
    %10224 = vmatpush1.bf16.msra.mxu0 %v9310
    %10225 = vmatprep.subr.bf16.mxu0 %v9319
    %10226 = vmatpush1.bf16.msra.mxu0 %v9318
    %10227 = vmatprep.subr.bf16.mxu0 %v9327
    %10228 = vmatpush1.bf16.msra.mxu0 %v9326
    %10229 = vmatprep.subr.bf16.mxu0 %v9335
    %10230 = vmatpush1.bf16.msra.mxu0 %v9334
    %10231 = vmatprep.subr.bf16.mxu0 %v9343
    %10232 = vmatpush1.bf16.msra.mxu0 %v9342
    %10233 = vmatprep.subr.bf16.mxu0 %v9351
    %10234 = vmatpush1.bf16.msra.mxu0 %v9350
    %10235 = vmatprep.subr.bf16.mxu0 %v9359
    %10236 = vmatpush1.bf16.msra.mxu0 %v9358
    %10237 = vmatprep.subr.bf16.mxu0 %v9367
    %10238 = vmatpush1.bf16.msra.mxu0 %v9366
    %10239 = vmatprep.subr.bf16.mxu0 %v9375
    %10240 = vmatpush1.bf16.msra.mxu0 %v9374
    %10241 = vmatprep.subr.bf16.mxu0 %v9383
    %10242 = vmatpush1.bf16.msra.mxu0 %v9382
    %10243 = vmatprep.subr.bf16.mxu0 %v9391
    %10244 = vmatpush1.bf16.msra.mxu0 %v9390
    %10245 = vmatprep.subr.bf16.mxu0 %v9399
    %10246 = vmatpush1.bf16.msra.mxu0 %v9398
    %10247 = vmatprep.mubr.bf16.mxu0 %v7055
    %10248 = vmatmul.mubr.bf16.gmra.mrb[0].mxu0 %v7054
    %v10249 = vpop.f32.mrb[0].mxu0
    %v10250 = vadd.f32 %v10209, %v10249
    %v10251 = vpop.f32.mrb[0].mxu0
    %v10252 = vadd.f32 %v10211, %v10251
    %v10253 = vpop.f32.mrb[0].mxu0
    %v10254 = vpop.f32.mrb[0].mxu0
    %10255 = vdwg.mxu0
    %10256 = vmatprep.subr.bf16.mxu0 %v9407
    %10257 = vmatpush1.bf16.msra.mxu0 %v9406
    %10258 = vmatprep.subr.bf16.mxu0 %v9415
    %10259 = vmatpush1.bf16.msra.mxu0 %v9414
    %10260 = vmatprep.subr.bf16.mxu0 %v9423
    %10261 = vmatpush1.bf16.msra.mxu0 %v9422
    %10262 = vmatprep.subr.bf16.mxu0 %v9431
    %10263 = vmatpush1.bf16.msra.mxu0 %v9430
    %10264 = vmatprep.subr.bf16.mxu0 %v9439
    %10265 = vmatpush1.bf16.msra.mxu0 %v9438
    %10266 = vmatprep.subr.bf16.mxu0 %v9447
    %10267 = vmatpush1.bf16.msra.mxu0 %v9446
    %10268 = vmatprep.subr.bf16.mxu0 %v9455
    %10269 = vmatpush1.bf16.msra.mxu0 %v9454
    %10270 = vmatprep.subr.bf16.mxu0 %v9463
    %10271 = vmatpush1.bf16.msra.mxu0 %v9462
    %10272 = vmatprep.subr.bf16.mxu0 %v9471
    %10273 = vmatpush1.bf16.msra.mxu0 %v9470
    %10274 = vmatprep.subr.bf16.mxu0 %v9479
    %10275 = vmatpush1.bf16.msra.mxu0 %v9478
    %10276 = vmatprep.subr.bf16.mxu0 %v9487
    %10277 = vmatpush1.bf16.msra.mxu0 %v9486
    %10278 = vmatprep.subr.bf16.mxu0 %v9495
    %10279 = vmatpush1.bf16.msra.mxu0 %v9494
    %10280 = vmatprep.subr.bf16.mxu0 %v9503
    %10281 = vmatpush1.bf16.msra.mxu0 %v9502
    %10282 = vmatprep.subr.bf16.mxu0 %v9511
    %10283 = vmatpush1.bf16.msra.mxu0 %v9510
    %10284 = vmatprep.subr.bf16.mxu0 %v9519
    %10285 = vmatpush1.bf16.msra.mxu0 %v9518
    %10286 = vmatprep.subr.bf16.mxu0 %v9527
    %10287 = vmatpush1.bf16.msra.mxu0 %v9526
    %10288 = vmatprep.mubr.bf16.mxu0 %v7057
    %10289 = vmatmul.mubr.bf16.gmra.mrb[0].mxu0 %v7056
    %v10290 = vpop.f32.mrb[0].mxu0
    %v10291 = vadd.f32 %v10250, %v10290
    %v10292 = vpop.f32.mrb[0].mxu0
    %v10293 = vadd.f32 %v10252, %v10292
    %v10294 = vpop.f32.mrb[0].mxu0
    %v10295 = vpop.f32.mrb[0].mxu0
    %10296 = vdwg.mxu0
    %10297 = vmatprep.subr.bf16.mxu0 %v9535
    %10298 = vmatpush1.bf16.msra.mxu0 %v9534
    %10299 = vmatprep.subr.bf16.mxu0 %v9543
    %10300 = vmatpush1.bf16.msra.mxu0 %v9542
    %10301 = vmatprep.subr.bf16.mxu0 %v9551
    %10302 = vmatpush1.bf16.msra.mxu0 %v9550
    %10303 = vmatprep.subr.bf16.mxu0 %v9559
    %10304 = vmatpush1.bf16.msra.mxu0 %v9558
    %10305 = vmatprep.subr.bf16.mxu0 %v9567
    %10306 = vmatpush1.bf16.msra.mxu0 %v9566
    %10307 = vmatprep.subr.bf16.mxu0 %v9575
    %10308 = vmatpush1.bf16.msra.mxu0 %v9574
    %10309 = vmatprep.subr.bf16.mxu0 %v9583
    %10310 = vmatpush1.bf16.msra.mxu0 %v9582
    %10311 = vmatprep.subr.bf16.mxu0 %v9591
    %10312 = vmatpush1.bf16.msra.mxu0 %v9590
    %10313 = vmatprep.subr.bf16.mxu0 %v9599
    %10314 = vmatpush1.bf16.msra.mxu0 %v9598
    %10315 = vmatprep.subr.bf16.mxu0 %v9607
    %10316 = vmatpush1.bf16.msra.mxu0 %v9606
    %10317 = vmatprep.subr.bf16.mxu0 %v9615
    %10318 = vmatpush1.bf16.msra.mxu0 %v9614
    %10319 = vmatprep.subr.bf16.mxu0 %v9623
    %10320 = vmatpush1.bf16.msra.mxu0 %v9622
    %10321 = vmatprep.subr.bf16.mxu0 %v9631
    %10322 = vmatpush1.bf16.msra.mxu0 %v9630
    %10323 = vmatprep.subr.bf16.mxu0 %v9639
    %10324 = vmatpush1.bf16.msra.mxu0 %v9638
    %10325 = vmatprep.subr.bf16.mxu0 %v9647
    %10326 = vmatpush1.bf16.msra.mxu0 %v9646
    %10327 = vmatprep.subr.bf16.mxu0 %v9655
    %10328 = vmatpush1.bf16.msra.mxu0 %v9654
    %10329 = vmatprep.mubr.bf16.mxu0 %v7059
    %10330 = vmatmul.mubr.bf16.gmra.mrb[0].mxu0 %v7058
    %v10331 = vpop.f32.mrb[0].mxu0
    %v10332 = vadd.f32 %v10291, %v10331
    %v10333 = vpop.f32.mrb[0].mxu0
    %v10334 = vadd.f32 %v10293, %v10333
    %v10335 = vpop.f32.mrb[0].mxu0
    %v10336 = vpop.f32.mrb[0].mxu0
    %10337 = vdwg.mxu0
    %10338 = vmatprep.subr.bf16.mxu0 %v9153
    %10339 = vmatpush1.bf16.msra.mxu0 %v9152
    %10340 = vmatprep.subr.bf16.mxu0 %v9161
    %10341 = vmatpush1.bf16.msra.mxu0 %v9160
    %10342 = vmatprep.subr.bf16.mxu0 %v9169
    %10343 = vmatpush1.bf16.msra.mxu0 %v9168
    %10344 = vmatprep.subr.bf16.mxu0 %v9177
    %10345 = vmatpush1.bf16.msra.mxu0 %v9176
    %10346 = vmatprep.subr.bf16.mxu0 %v9185
    %10347 = vmatpush1.bf16.msra.mxu0 %v9184
    %10348 = vmatprep.subr.bf16.mxu0 %v9193
    %10349 = vmatpush1.bf16.msra.mxu0 %v9192
    %10350 = vmatprep.subr.bf16.mxu0 %v9201
    %10351 = vmatpush1.bf16.msra.mxu0 %v9200
    %10352 = vmatprep.subr.bf16.mxu0 %v9209
    %10353 = vmatpush1.bf16.msra.mxu0 %v9208
    %10354 = vmatprep.subr.bf16.mxu0 %v9217
    %10355 = vmatpush1.bf16.msra.mxu0 %v9216
    %10356 = vmatprep.subr.bf16.mxu0 %v9225
    %10357 = vmatpush1.bf16.msra.mxu0 %v9224
    %10358 = vmatprep.subr.bf16.mxu0 %v9233
    %10359 = vmatpush1.bf16.msra.mxu0 %v9232
    %10360 = vmatprep.subr.bf16.mxu0 %v9241
    %10361 = vmatpush1.bf16.msra.mxu0 %v9240
    %10362 = vmatprep.subr.bf16.mxu0 %v9249
    %10363 = vmatpush1.bf16.msra.mxu0 %v9248
    %10364 = vmatprep.subr.bf16.mxu0 %v9257
    %10365 = vmatpush1.bf16.msra.mxu0 %v9256
    %10366 = vmatprep.subr.bf16.mxu0 %v9265
    %10367 = vmatpush1.bf16.msra.mxu0 %v9264
    %10368 = vmatprep.subr.bf16.mxu0 %v9273
    %10369 = vmatpush1.bf16.msra.mxu0 %v9272
    %10370 = vmatprep.mubr.bf16.mxu0 %v7053
    %10371 = vmatmul.mubr.bf16.gmra.mrb[0].mxu0 %v7052
    %v10372 = vpop.f32.mrb[0].mxu0
    %v10373 = vadd.f32 %v7585, %v10372
    %v10374 = vpop.f32.mrb[0].mxu0
    %v10375 = vadd.f32 %v7589, %v10374
    %v10376 = vpop.f32.mrb[0].mxu0
    %v10377 = vpop.f32.mrb[0].mxu0
    %10378 = vdwg.mxu0
    %10379 = vmatprep.subr.bf16.mxu0 %v9281
    %10380 = vmatpush1.bf16.msra.mxu0 %v9280
    %10381 = vmatprep.subr.bf16.mxu0 %v9289
    %10382 = vmatpush1.bf16.msra.mxu0 %v9288
    %10383 = vmatprep.subr.bf16.mxu0 %v9297
    %10384 = vmatpush1.bf16.msra.mxu0 %v9296
    %10385 = vmatprep.subr.bf16.mxu0 %v9305
    %10386 = vmatpush1.bf16.msra.mxu0 %v9304
    %10387 = vmatprep.subr.bf16.mxu0 %v9313
    %10388 = vmatpush1.bf16.msra.mxu0 %v9312
    %10389 = vmatprep.subr.bf16.mxu0 %v9321
    %10390 = vmatpush1.bf16.msra.mxu0 %v9320
    %10391 = vmatprep.subr.bf16.mxu0 %v9329
    %10392 = vmatpush1.bf16.msra.mxu0 %v9328
    %10393 = vmatprep.subr.bf16.mxu0 %v9337
    %10394 = vmatpush1.bf16.msra.mxu0 %v9336
    %10395 = vmatprep.subr.bf16.mxu0 %v9345
    %10396 = vmatpush1.bf16.msra.mxu0 %v9344
    %10397 = vmatprep.subr.bf16.mxu0 %v9353
    %10398 = vmatpush1.bf16.msra.mxu0 %v9352
    %10399 = vmatprep.subr.bf16.mxu0 %v9361
    %10400 = vmatpush1.bf16.msra.mxu0 %v9360
    %10401 = vmatprep.subr.bf16.mxu0 %v9369
    %10402 = vmatpush1.bf16.msra.mxu0 %v9368
    %10403 = vmatprep.subr.bf16.mxu0 %v9377
    %10404 = vmatpush1.bf16.msra.mxu0 %v9376
    %10405 = vmatprep.subr.bf16.mxu0 %v9385
    %10406 = vmatpush1.bf16.msra.mxu0 %v9384
    %10407 = vmatprep.subr.bf16.mxu0 %v9393
    %10408 = vmatpush1.bf16.msra.mxu0 %v9392
    %10409 = vmatprep.subr.bf16.mxu0 %v9401
    %10410 = vmatpush1.bf16.msra.mxu0 %v9400
    %10411 = vmatprep.mubr.bf16.mxu0 %v7055
    %10412 = vmatmul.mubr.bf16.gmra.mrb[0].mxu0 %v7054
    %v10413 = vpop.f32.mrb[0].mxu0
    %v10414 = vadd.f32 %v10373, %v10413
    %v10415 = vpop.f32.mrb[0].mxu0
    %v10416 = vadd.f32 %v10375, %v10415
    %v10417 = vpop.f32.mrb[0].mxu0
    %v10418 = vpop.f32.mrb[0].mxu0
    %10419 = vdwg.mxu0
    %10420 = vmatprep.subr.bf16.mxu0 %v9409
    %10421 = vmatpush1.bf16.msra.mxu0 %v9408
    %10422 = vmatprep.subr.bf16.mxu0 %v9417
    %10423 = vmatpush1.bf16.msra.mxu0 %v9416
    %10424 = vmatprep.subr.bf16.mxu0 %v9425
    %10425 = vmatpush1.bf16.msra.mxu0 %v9424
    %10426 = vmatprep.subr.bf16.mxu0 %v9433
    %10427 = vmatpush1.bf16.msra.mxu0 %v9432
    %10428 = vmatprep.subr.bf16.mxu0 %v9441
    %10429 = vmatpush1.bf16.msra.mxu0 %v9440
    %10430 = vmatprep.subr.bf16.mxu0 %v9449
    %10431 = vmatpush1.bf16.msra.mxu0 %v9448
    %10432 = vmatprep.subr.bf16.mxu0 %v9457
    %10433 = vmatpush1.bf16.msra.mxu0 %v9456
    %10434 = vmatprep.subr.bf16.mxu0 %v9465
    %10435 = vmatpush1.bf16.msra.mxu0 %v9464
    %10436 = vmatprep.subr.bf16.mxu0 %v9473
    %10437 = vmatpush1.bf16.msra.mxu0 %v9472
    %10438 = vmatprep.subr.bf16.mxu0 %v9481
    %10439 = vmatpush1.bf16.msra.mxu0 %v9480
    %10440 = vmatprep.subr.bf16.mxu0 %v9489
    %10441 = vmatpush1.bf16.msra.mxu0 %v9488
    %10442 = vmatprep.subr.bf16.mxu0 %v9497
    %10443 = vmatpush1.bf16.msra.mxu0 %v9496
    %10444 = vmatprep.subr.bf16.mxu0 %v9505
    %10445 = vmatpush1.bf16.msra.mxu0 %v9504
    %10446 = vmatprep.subr.bf16.mxu0 %v9513
    %10447 = vmatpush1.bf16.msra.mxu0 %v9512
    %10448 = vmatprep.subr.bf16.mxu0 %v9521
    %10449 = vmatpush1.bf16.msra.mxu0 %v9520
    %10450 = vmatprep.subr.bf16.mxu0 %v9529
    %10451 = vmatpush1.bf16.msra.mxu0 %v9528
    %10452 = vmatprep.mubr.bf16.mxu0 %v7057
    %10453 = vmatmul.mubr.bf16.gmra.mrb[0].mxu0 %v7056
    %v10454 = vpop.f32.mrb[0].mxu0
    %v10455 = vadd.f32 %v10414, %v10454
    %v10456 = vpop.f32.mrb[0].mxu0
    %v10457 = vadd.f32 %v10416, %v10456
    %v10458 = vpop.f32.mrb[0].mxu0
    %v10459 = vpop.f32.mrb[0].mxu0
    %10460 = vdwg.mxu0
    %10461 = vmatprep.subr.bf16.mxu0 %v9537
    %10462 = vmatpush1.bf16.msra.mxu0 %v9536
    %10463 = vmatprep.subr.bf16.mxu0 %v9545
    %10464 = vmatpush1.bf16.msra.mxu0 %v9544
    %10465 = vmatprep.subr.bf16.mxu0 %v9553
    %10466 = vmatpush1.bf16.msra.mxu0 %v9552
    %10467 = vmatprep.subr.bf16.mxu0 %v9561
    %10468 = vmatpush1.bf16.msra.mxu0 %v9560
    %10469 = vmatprep.subr.bf16.mxu0 %v9569
    %10470 = vmatpush1.bf16.msra.mxu0 %v9568
    %10471 = vmatprep.subr.bf16.mxu0 %v9577
    %10472 = vmatpush1.bf16.msra.mxu0 %v9576
    %10473 = vmatprep.subr.bf16.mxu0 %v9585
    %10474 = vmatpush1.bf16.msra.mxu0 %v9584
    %10475 = vmatprep.subr.bf16.mxu0 %v9593
    %10476 = vmatpush1.bf16.msra.mxu0 %v9592
    %10477 = vmatprep.subr.bf16.mxu0 %v9601
    %10478 = vmatpush1.bf16.msra.mxu0 %v9600
    %10479 = vmatprep.subr.bf16.mxu0 %v9609
    %10480 = vmatpush1.bf16.msra.mxu0 %v9608
    %10481 = vmatprep.subr.bf16.mxu0 %v9617
    %10482 = vmatpush1.bf16.msra.mxu0 %v9616
    %10483 = vmatprep.subr.bf16.mxu0 %v9625
    %10484 = vmatpush1.bf16.msra.mxu0 %v9624
    %10485 = vmatprep.subr.bf16.mxu0 %v9633
    %10486 = vmatpush1.bf16.msra.mxu0 %v9632
    %10487 = vmatprep.subr.bf16.mxu0 %v9641
    %10488 = vmatpush1.bf16.msra.mxu0 %v9640
    %10489 = vmatprep.subr.bf16.mxu0 %v9649
    %10490 = vmatpush1.bf16.msra.mxu0 %v9648
    %10491 = vmatprep.subr.bf16.mxu0 %v9657
    %10492 = vmatpush1.bf16.msra.mxu0 %v9656
    %10493 = vmatprep.mubr.bf16.mxu0 %v7059
    %10494 = vmatmul.mubr.bf16.gmra.mrb[0].mxu0 %v7058
    %v10495 = vpop.f32.mrb[0].mxu0
    %v10496 = vadd.f32 %v10455, %v10495
    %v10497 = vpop.f32.mrb[0].mxu0
    %v10498 = vadd.f32 %v10457, %v10497
    %v10499 = vpop.f32.mrb[0].mxu0
    %v10500 = vpop.f32.mrb[0].mxu0
    %10501 = vdwg.mxu0
    %10502 = vmatprep.subr.bf16.mxu0 %v9155
    %10503 = vmatpush1.bf16.msra.mxu0 %v9154
    %10504 = vmatprep.subr.bf16.mxu0 %v9163
    %10505 = vmatpush1.bf16.msra.mxu0 %v9162
    %10506 = vmatprep.subr.bf16.mxu0 %v9171
    %10507 = vmatpush1.bf16.msra.mxu0 %v9170
    %10508 = vmatprep.subr.bf16.mxu0 %v9179
    %10509 = vmatpush1.bf16.msra.mxu0 %v9178
    %10510 = vmatprep.subr.bf16.mxu0 %v9187
    %10511 = vmatpush1.bf16.msra.mxu0 %v9186
    %10512 = vmatprep.subr.bf16.mxu0 %v9195
    %10513 = vmatpush1.bf16.msra.mxu0 %v9194
    %10514 = vmatprep.subr.bf16.mxu0 %v9203
    %10515 = vmatpush1.bf16.msra.mxu0 %v9202
    %10516 = vmatprep.subr.bf16.mxu0 %v9211
    %10517 = vmatpush1.bf16.msra.mxu0 %v9210
    %10518 = vmatprep.subr.bf16.mxu0 %v9219
    %10519 = vmatpush1.bf16.msra.mxu0 %v9218
    %10520 = vmatprep.subr.bf16.mxu0 %v9227
    %10521 = vmatpush1.bf16.msra.mxu0 %v9226
    %10522 = vmatprep.subr.bf16.mxu0 %v9235
    %10523 = vmatpush1.bf16.msra.mxu0 %v9234
    %10524 = vmatprep.subr.bf16.mxu0 %v9243
    %10525 = vmatpush1.bf16.msra.mxu0 %v9242
    %10526 = vmatprep.subr.bf16.mxu0 %v9251
    %10527 = vmatpush1.bf16.msra.mxu0 %v9250
    %10528 = vmatprep.subr.bf16.mxu0 %v9259
    %10529 = vmatpush1.bf16.msra.mxu0 %v9258
    %10530 = vmatprep.subr.bf16.mxu0 %v9267
    %10531 = vmatpush1.bf16.msra.mxu0 %v9266
    %10532 = vmatprep.subr.bf16.mxu0 %v9275
    %10533 = vmatpush1.bf16.msra.mxu0 %v9274
    %10534 = vmatprep.mubr.bf16.mxu0 %v7053
    %10535 = vmatmul.mubr.bf16.gmra.mrb[0].mxu0 %v7052
    %v10536 = vpop.f32.mrb[0].mxu0
    %v10537 = vadd.f32 %v7593, %v10536
    %v10538 = vpop.f32.mrb[0].mxu0
    %v10539 = vadd.f32 %v7597, %v10538
    %v10540 = vpop.f32.mrb[0].mxu0
    %v10541 = vpop.f32.mrb[0].mxu0
    %10542 = vdwg.mxu0
    %10543 = vmatprep.subr.bf16.mxu0 %v9283
    %10544 = vmatpush1.bf16.msra.mxu0 %v9282
    %10545 = vmatprep.subr.bf16.mxu0 %v9291
    %10546 = vmatpush1.bf16.msra.mxu0 %v9290
    %10547 = vmatprep.subr.bf16.mxu0 %v9299
    %10548 = vmatpush1.bf16.msra.mxu0 %v9298
    %10549 = vmatprep.subr.bf16.mxu0 %v9307
    %10550 = vmatpush1.bf16.msra.mxu0 %v9306
    %10551 = vmatprep.subr.bf16.mxu0 %v9315
    %10552 = vmatpush1.bf16.msra.mxu0 %v9314
    %10553 = vmatprep.subr.bf16.mxu0 %v9323
    %10554 = vmatpush1.bf16.msra.mxu0 %v9322
    %10555 = vmatprep.subr.bf16.mxu0 %v9331
    %10556 = vmatpush1.bf16.msra.mxu0 %v9330
    %10557 = vmatprep.subr.bf16.mxu0 %v9339
    %10558 = vmatpush1.bf16.msra.mxu0 %v9338
    %10559 = vmatprep.subr.bf16.mxu0 %v9347
    %10560 = vmatpush1.bf16.msra.mxu0 %v9346
    %10561 = vmatprep.subr.bf16.mxu0 %v9355
    %10562 = vmatpush1.bf16.msra.mxu0 %v9354
    %10563 = vmatprep.subr.bf16.mxu0 %v9363
    %10564 = vmatpush1.bf16.msra.mxu0 %v9362
    %10565 = vmatprep.subr.bf16.mxu0 %v9371
    %10566 = vmatpush1.bf16.msra.mxu0 %v9370
    %10567 = vmatprep.subr.bf16.mxu0 %v9379
    %10568 = vmatpush1.bf16.msra.mxu0 %v9378
    %10569 = vmatprep.subr.bf16.mxu0 %v9387
    %10570 = vmatpush1.bf16.msra.mxu0 %v9386
    %10571 = vmatprep.subr.bf16.mxu0 %v9395
    %10572 = vmatpush1.bf16.msra.mxu0 %v9394
    %10573 = vmatprep.subr.bf16.mxu0 %v9403
    %10574 = vmatpush1.bf16.msra.mxu0 %v9402
    %10575 = vmatprep.mubr.bf16.mxu0 %v7055
    %10576 = vmatmul.mubr.bf16.gmra.mrb[0].mxu0 %v7054
    %v10577 = vpop.f32.mrb[0].mxu0
    %v10578 = vadd.f32 %v10537, %v10577
    %v10579 = vpop.f32.mrb[0].mxu0
    %v10580 = vadd.f32 %v10539, %v10579
    %v10581 = vpop.f32.mrb[0].mxu0
    %v10582 = vpop.f32.mrb[0].mxu0
    %10583 = vdwg.mxu0
    %10584 = vmatprep.subr.bf16.mxu0 %v9411
    %10585 = vmatpush1.bf16.msra.mxu0 %v9410
    %10586 = vmatprep.subr.bf16.mxu0 %v9419
    %10587 = vmatpush1.bf16.msra.mxu0 %v9418
    %10588 = vmatprep.subr.bf16.mxu0 %v9427
    %10589 = vmatpush1.bf16.msra.mxu0 %v9426
    %10590 = vmatprep.subr.bf16.mxu0 %v9435
    %10591 = vmatpush1.bf16.msra.mxu0 %v9434
    %10592 = vmatprep.subr.bf16.mxu0 %v9443
    %10593 = vmatpush1.bf16.msra.mxu0 %v9442
    %10594 = vmatprep.subr.bf16.mxu0 %v9451
    %10595 = vmatpush1.bf16.msra.mxu0 %v9450
    %10596 = vmatprep.subr.bf16.mxu0 %v9459
    %10597 = vmatpush1.bf16.msra.mxu0 %v9458
    %10598 = vmatprep.subr.bf16.mxu0 %v9467
    %10599 = vmatpush1.bf16.msra.mxu0 %v9466
    %10600 = vmatprep.subr.bf16.mxu0 %v9475
    %10601 = vmatpush1.bf16.msra.mxu0 %v9474
    %10602 = vmatprep.subr.bf16.mxu0 %v9483
    %10603 = vmatpush1.bf16.msra.mxu0 %v9482
    %10604 = vmatprep.subr.bf16.mxu0 %v9491
    %10605 = vmatpush1.bf16.msra.mxu0 %v9490
    %10606 = vmatprep.subr.bf16.mxu0 %v9499
    %10607 = vmatpush1.bf16.msra.mxu0 %v9498
    %10608 = vmatprep.subr.bf16.mxu0 %v9507
    %10609 = vmatpush1.bf16.msra.mxu0 %v9506
    %10610 = vmatprep.subr.bf16.mxu0 %v9515
    %10611 = vmatpush1.bf16.msra.mxu0 %v9514
    %10612 = vmatprep.subr.bf16.mxu0 %v9523
    %10613 = vmatpush1.bf16.msra.mxu0 %v9522
    %10614 = vmatprep.subr.bf16.mxu0 %v9531
    %10615 = vmatpush1.bf16.msra.mxu0 %v9530
    %10616 = vmatprep.mubr.bf16.mxu0 %v7057
    %10617 = vmatmul.mubr.bf16.gmra.mrb[0].mxu0 %v7056
    %v10618 = vpop.f32.mrb[0].mxu0
    %v10619 = vadd.f32 %v10578, %v10618
    %v10620 = vpop.f32.mrb[0].mxu0
    %v10621 = vadd.f32 %v10580, %v10620
    %v10622 = vpop.f32.mrb[0].mxu0
    %v10623 = vpop.f32.mrb[0].mxu0
    %10624 = vdwg.mxu0
    %10625 = vmatprep.subr.bf16.mxu0 %v9539
    %10626 = vmatpush1.bf16.msra.mxu0 %v9538
    %10627 = vmatprep.subr.bf16.mxu0 %v9547
    %10628 = vmatpush1.bf16.msra.mxu0 %v9546
    %10629 = vmatprep.subr.bf16.mxu0 %v9555
    %10630 = vmatpush1.bf16.msra.mxu0 %v9554
    %10631 = vmatprep.subr.bf16.mxu0 %v9563
    %10632 = vmatpush1.bf16.msra.mxu0 %v9562
    %10633 = vmatprep.subr.bf16.mxu0 %v9571
    %10634 = vmatpush1.bf16.msra.mxu0 %v9570
    %10635 = vmatprep.subr.bf16.mxu0 %v9579
    %10636 = vmatpush1.bf16.msra.mxu0 %v9578
    %10637 = vmatprep.subr.bf16.mxu0 %v9587
    %10638 = vmatpush1.bf16.msra.mxu0 %v9586
    %10639 = vmatprep.subr.bf16.mxu0 %v9595
    %10640 = vmatpush1.bf16.msra.mxu0 %v9594
    %10641 = vmatprep.subr.bf16.mxu0 %v9603
    %10642 = vmatpush1.bf16.msra.mxu0 %v9602
    %10643 = vmatprep.subr.bf16.mxu0 %v9611
    %10644 = vmatpush1.bf16.msra.mxu0 %v9610
    %10645 = vmatprep.subr.bf16.mxu0 %v9619
    %10646 = vmatpush1.bf16.msra.mxu0 %v9618
    %10647 = vmatprep.subr.bf16.mxu0 %v9627
    %10648 = vmatpush1.bf16.msra.mxu0 %v9626
    %10649 = vmatprep.subr.bf16.mxu0 %v9635
    %10650 = vmatpush1.bf16.msra.mxu0 %v9634
    %10651 = vmatprep.subr.bf16.mxu0 %v9643
    %10652 = vmatpush1.bf16.msra.mxu0 %v9642
    %10653 = vmatprep.subr.bf16.mxu0 %v9651
    %10654 = vmatpush1.bf16.msra.mxu0 %v9650
    %10655 = vmatprep.subr.bf16.mxu0 %v9659
    %10656 = vmatpush1.bf16.msra.mxu0 %v9658
    %10657 = vmatprep.mubr.bf16.mxu0 %v7059
    %10658 = vmatmul.mubr.bf16.gmra.mrb[0].mxu0 %v7058
    %v10659 = vpop.f32.mrb[0].mxu0
    %v10660 = vadd.f32 %v10619, %v10659
    %v10661 = vpop.f32.mrb[0].mxu0
    %v10662 = vadd.f32 %v10621, %v10661
    %v10663 = vpop.f32.mrb[0].mxu0
    %v10664 = vpop.f32.mrb[0].mxu0
    %10665 = vdwg.mxu0
    %10666 = vmatprep.subr.bf16.mxu0 %v9157
    %10667 = vmatpush1.bf16.msra.mxu0 %v9156
    %10668 = vmatprep.subr.bf16.mxu0 %v9165
    %10669 = vmatpush1.bf16.msra.mxu0 %v9164
    %10670 = vmatprep.subr.bf16.mxu0 %v9173
    %10671 = vmatpush1.bf16.msra.mxu0 %v9172
    %10672 = vmatprep.subr.bf16.mxu0 %v9181
    %10673 = vmatpush1.bf16.msra.mxu0 %v9180
    %10674 = vmatprep.subr.bf16.mxu0 %v9189
    %10675 = vmatpush1.bf16.msra.mxu0 %v9188
    %10676 = vmatprep.subr.bf16.mxu0 %v9197
    %10677 = vmatpush1.bf16.msra.mxu0 %v9196
    %10678 = vmatprep.subr.bf16.mxu0 %v9205
    %10679 = vmatpush1.bf16.msra.mxu0 %v9204
    %10680 = vmatprep.subr.bf16.mxu0 %v9213
    %10681 = vmatpush1.bf16.msra.mxu0 %v9212
    %10682 = vmatprep.subr.bf16.mxu0 %v9221
    %10683 = vmatpush1.bf16.msra.mxu0 %v9220
    %10684 = vmatprep.subr.bf16.mxu0 %v9229
    %10685 = vmatpush1.bf16.msra.mxu0 %v9228
    %10686 = vmatprep.subr.bf16.mxu0 %v9237
    %10687 = vmatpush1.bf16.msra.mxu0 %v9236
    %10688 = vmatprep.subr.bf16.mxu0 %v9245
    %10689 = vmatpush1.bf16.msra.mxu0 %v9244
    %10690 = vmatprep.subr.bf16.mxu0 %v9253
    %10691 = vmatpush1.bf16.msra.mxu0 %v9252
    %10692 = vmatprep.subr.bf16.mxu0 %v9261
    %10693 = vmatpush1.bf16.msra.mxu0 %v9260
    %10694 = vmatprep.subr.bf16.mxu0 %v9269
    %10695 = vmatpush1.bf16.msra.mxu0 %v9268
    %10696 = vmatprep.subr.bf16.mxu0 %v9277
    %10697 = vmatpush1.bf16.msra.mxu0 %v9276
    %10698 = vmatprep.mubr.bf16.mxu0 %v7053
    %10699 = vmatmul.mubr.bf16.gmra.mrb[0].mxu0 %v7052
    %v10700 = vpop.f32.mrb[0].mxu0
    %v10701 = vadd.f32 %v7601, %v10700
    %v10702 = vpop.f32.mrb[0].mxu0
    %v10703 = vadd.f32 %v7605, %v10702
    %v10704 = vpop.f32.mrb[0].mxu0
    %v10705 = vpop.f32.mrb[0].mxu0
    %10706 = vdwg.mxu0
    %10707 = vmatprep.subr.bf16.mxu0 %v9285
    %10708 = vmatpush1.bf16.msra.mxu0 %v9284
    %10709 = vmatprep.subr.bf16.mxu0 %v9293
    %10710 = vmatpush1.bf16.msra.mxu0 %v9292
    %10711 = vmatprep.subr.bf16.mxu0 %v9301
    %10712 = vmatpush1.bf16.msra.mxu0 %v9300
    %10713 = vmatprep.subr.bf16.mxu0 %v9309
    %10714 = vmatpush1.bf16.msra.mxu0 %v9308
    %10715 = vmatprep.subr.bf16.mxu0 %v9317
    %10716 = vmatpush1.bf16.msra.mxu0 %v9316
    %10717 = vmatprep.subr.bf16.mxu0 %v9325
    %10718 = vmatpush1.bf16.msra.mxu0 %v9324
    %10719 = vmatprep.subr.bf16.mxu0 %v9333
    %10720 = vmatpush1.bf16.msra.mxu0 %v9332
    %10721 = vmatprep.subr.bf16.mxu0 %v9341
    %10722 = vmatpush1.bf16.msra.mxu0 %v9340
    %10723 = vmatprep.subr.bf16.mxu0 %v9349
    %10724 = vmatpush1.bf16.msra.mxu0 %v9348
    %10725 = vmatprep.subr.bf16.mxu0 %v9357
    %10726 = vmatpush1.bf16.msra.mxu0 %v9356
    %10727 = vmatprep.subr.bf16.mxu0 %v9365
    %10728 = vmatpush1.bf16.msra.mxu0 %v9364
    %10729 = vmatprep.subr.bf16.mxu0 %v9373
    %10730 = vmatpush1.bf16.msra.mxu0 %v9372
    %10731 = vmatprep.subr.bf16.mxu0 %v9381
    %10732 = vmatpush1.bf16.msra.mxu0 %v9380
    %10733 = vmatprep.subr.bf16.mxu0 %v9389
    %10734 = vmatpush1.bf16.msra.mxu0 %v9388
    %10735 = vmatprep.subr.bf16.mxu0 %v9397
    %10736 = vmatpush1.bf16.msra.mxu0 %v9396
    %10737 = vmatprep.subr.bf16.mxu0 %v9405
    %10738 = vmatpush1.bf16.msra.mxu0 %v9404
    %10739 = vmatprep.mubr.bf16.mxu0 %v7055
    %10740 = vmatmul.mubr.bf16.gmra.mrb[0].mxu0 %v7054
    %v10741 = vpop.f32.mrb[0].mxu0
    %v10742 = vadd.f32 %v10701, %v10741
    %v10743 = vpop.f32.mrb[0].mxu0
    %v10744 = vadd.f32 %v10703, %v10743
    %v10745 = vpop.f32.mrb[0].mxu0
    %v10746 = vpop.f32.mrb[0].mxu0
    %10747 = vdwg.mxu0
    %10748 = vmatprep.subr.bf16.mxu0 %v9413
    %10749 = vmatpush1.bf16.msra.mxu0 %v9412
    %10750 = vmatprep.subr.bf16.mxu0 %v9421
    %10751 = vmatpush1.bf16.msra.mxu0 %v9420
    %10752 = vmatprep.subr.bf16.mxu0 %v9429
    %10753 = vmatpush1.bf16.msra.mxu0 %v9428
    %10754 = vmatprep.subr.bf16.mxu0 %v9437
    %10755 = vmatpush1.bf16.msra.mxu0 %v9436
    %10756 = vmatprep.subr.bf16.mxu0 %v9445
    %10757 = vmatpush1.bf16.msra.mxu0 %v9444
    %10758 = vmatprep.subr.bf16.mxu0 %v9453
    %10759 = vmatpush1.bf16.msra.mxu0 %v9452
    %10760 = vmatprep.subr.bf16.mxu0 %v9461
    %10761 = vmatpush1.bf16.msra.mxu0 %v9460
    %10762 = vmatprep.subr.bf16.mxu0 %v9469
    %10763 = vmatpush1.bf16.msra.mxu0 %v9468
    %10764 = vmatprep.subr.bf16.mxu0 %v9477
    %10765 = vmatpush1.bf16.msra.mxu0 %v9476
    %10766 = vmatprep.subr.bf16.mxu0 %v9485
    %10767 = vmatpush1.bf16.msra.mxu0 %v9484
    %10768 = vmatprep.subr.bf16.mxu0 %v9493
    %10769 = vmatpush1.bf16.msra.mxu0 %v9492
    %10770 = vmatprep.subr.bf16.mxu0 %v9501
    %10771 = vmatpush1.bf16.msra.mxu0 %v9500
    %10772 = vmatprep.subr.bf16.mxu0 %v9509
    %10773 = vmatpush1.bf16.msra.mxu0 %v9508
    %10774 = vmatprep.subr.bf16.mxu0 %v9517
    %10775 = vmatpush1.bf16.msra.mxu0 %v9516
    %10776 = vmatprep.subr.bf16.mxu0 %v9525
    %10777 = vmatpush1.bf16.msra.mxu0 %v9524
    %10778 = vmatprep.subr.bf16.mxu0 %v9533
    %10779 = vmatpush1.bf16.msra.mxu0 %v9532
    %10780 = vmatprep.mubr.bf16.mxu0 %v7057
    %10781 = vmatmul.mubr.bf16.gmra.mrb[0].mxu0 %v7056
    %v10782 = vpop.f32.mrb[0].mxu0
    %v10783 = vadd.f32 %v10742, %v10782
    %v10784 = vpop.f32.mrb[0].mxu0
    %v10785 = vadd.f32 %v10744, %v10784
    %v10786 = vpop.f32.mrb[0].mxu0
    %v10787 = vpop.f32.mrb[0].mxu0
    %10788 = vdwg.mxu0
    %10789 = vmatprep.subr.bf16.mxu0 %v9541
    %10790 = vmatpush1.bf16.msra.mxu0 %v9540
    %10791 = vmatprep.subr.bf16.mxu0 %v9549
    %10792 = vmatpush1.bf16.msra.mxu0 %v9548
    %10793 = vmatprep.subr.bf16.mxu0 %v9557
    %10794 = vmatpush1.bf16.msra.mxu0 %v9556
    %10795 = vmatprep.subr.bf16.mxu0 %v9565
    %10796 = vmatpush1.bf16.msra.mxu0 %v9564
    %10797 = vmatprep.subr.bf16.mxu0 %v9573
    %10798 = vmatpush1.bf16.msra.mxu0 %v9572
    %10799 = vmatprep.subr.bf16.mxu0 %v9581
    %10800 = vmatpush1.bf16.msra.mxu0 %v9580
    %10801 = vmatprep.subr.bf16.mxu0 %v9589
    %10802 = vmatpush1.bf16.msra.mxu0 %v9588
    %10803 = vmatprep.subr.bf16.mxu0 %v9597
    %10804 = vmatpush1.bf16.msra.mxu0 %v9596
    %10805 = vmatprep.subr.bf16.mxu0 %v9605
    %10806 = vmatpush1.bf16.msra.mxu0 %v9604
    %10807 = vmatprep.subr.bf16.mxu0 %v9613
    %10808 = vmatpush1.bf16.msra.mxu0 %v9612
    %10809 = vmatprep.subr.bf16.mxu0 %v9621
    %10810 = vmatpush1.bf16.msra.mxu0 %v9620
    %10811 = vmatprep.subr.bf16.mxu0 %v9629
    %10812 = vmatpush1.bf16.msra.mxu0 %v9628
    %10813 = vmatprep.subr.bf16.mxu0 %v9637
    %10814 = vmatpush1.bf16.msra.mxu0 %v9636
    %10815 = vmatprep.subr.bf16.mxu0 %v9645
    %10816 = vmatpush1.bf16.msra.mxu0 %v9644
    %10817 = vmatprep.subr.bf16.mxu0 %v9653
    %10818 = vmatpush1.bf16.msra.mxu0 %v9652
    %10819 = vmatprep.subr.bf16.mxu0 %v9661
    %10820 = vmatpush1.bf16.msra.mxu0 %v9660
    %10821 = vmatprep.mubr.bf16.mxu0 %v7059
    %10822 = vmatmul.mubr.bf16.gmra.mrb[0].mxu0 %v7058
    %v10823 = vpop.f32.mrb[0].mxu0
    %v10824 = vadd.f32 %v10783, %v10823
    %v10825 = vpop.f32.mrb[0].mxu0
    %v10826 = vadd.f32 %v10785, %v10825
    %v10827 = vpop.f32.mrb[0].mxu0
    %v10828 = vpop.f32.mrb[0].mxu0
    %10829 = vdwg.mxu0
    %v10830 = vmax.f32 %v10332, 0.0
    %v10831 = vmax.f32 %v10334, 0.0
    %v10832 = vmax.f32 %v10496, 0.0
    %v10833 = vmax.f32 %v10498, 0.0
    %v10834 = vmax.f32 %v10660, 0.0
    %v10835 = vmax.f32 %v10662, 0.0
    %v10836 = vmax.f32 %v10824, 0.0
    %v10837 = vmax.f32 %v10826, 0.0
    %v10838 = vpack.c.bf16 %v10830, %v10830
    %v10839 = vpack.c.bf16 %v10831, %v10831
    %v10840 = vpack.c.bf16 %v10832, %v10832
    %v10841 = vpack.c.bf16 %v10833, %v10833
    %v10842 = vpack.c.bf16 %v10834, %v10834
    %v10843 = vpack.c.bf16 %v10835, %v10835
    %v10844 = vpack.c.bf16 %v10836, %v10836
    %v10845 = vpack.c.bf16 %v10837, %v10837
    %v10846 = vld [vmem:[#allocation74] sm:$0xf]
    %v10847 = vld [vmem:[#allocation74 + $0x4] sm:$0xf]
    %v10848 = vld [vmem:[#allocation74 + $0x8] sm:$0xf]
    %v10849 = vld [vmem:[#allocation74 + $0xc] sm:$0xf]
    %v10850 = vld [vmem:[#allocation74 + $0x10] sm:$0xf]
    %v10851 = vld [vmem:[#allocation74 + $0x14] sm:$0xf]
    %v10852 = vld [vmem:[#allocation74 + $0x18] sm:$0xf]
    %v10853 = vld [vmem:[#allocation74 + $0x1c] sm:$0xf]
    %v10854 = vld [vmem:[#allocation74 + $0x20] sm:$0xf]
    %v10855 = vld [vmem:[#allocation74 + $0x24] sm:$0xf]
    %v10856 = vld [vmem:[#allocation74 + $0x28] sm:$0xf]
    %v10857 = vld [vmem:[#allocation74 + $0x2c] sm:$0xf]
    %v10858 = vld [vmem:[#allocation74 + $0x30] sm:$0xf]
    %v10859 = vld [vmem:[#allocation74 + $0x34] sm:$0xf]
    %v10860 = vld [vmem:[#allocation74 + $0x38] sm:$0xf]
    %v10861 = vld [vmem:[#allocation74 + $0x3c] sm:$0xf]
    %v10862 = vld [vmem:[#allocation74 + $0x40] sm:$0xf]
    %v10863 = vld [vmem:[#allocation74 + $0x44] sm:$0xf]
    %v10864 = vld [vmem:[#allocation74 + $0x48] sm:$0xf]
    %v10865 = vld [vmem:[#allocation74 + $0x4c] sm:$0xf]
    %v10866 = vld [vmem:[#allocation74 + $0x50] sm:$0xf]
    %v10867 = vld [vmem:[#allocation74 + $0x54] sm:$0xf]
    %v10868 = vld [vmem:[#allocation74 + $0x58] sm:$0xf]
    %v10869 = vld [vmem:[#allocation74 + $0x5c] sm:$0xf]
    %v10870 = vld [vmem:[#allocation74 + $0x60] sm:$0xf]
    %v10871 = vld [vmem:[#allocation74 + $0x64] sm:$0xf]
    %v10872 = vld [vmem:[#allocation74 + $0x68] sm:$0xf]
    %v10873 = vld [vmem:[#allocation74 + $0x6c] sm:$0xf]
    %v10874 = vld [vmem:[#allocation74 + $0x70] sm:$0xf]
    %v10875 = vld [vmem:[#allocation74 + $0x74] sm:$0xf]
    %v10876 = vld [vmem:[#allocation74 + $0x78] sm:$0xf]
    %v10877 = vld [vmem:[#allocation74 + $0x7c] sm:$0xf]
    %v10878 = vld [vmem:[#allocation74 + $0x80] sm:$0xf]
    %v10879 = vld [vmem:[#allocation74 + $0x84] sm:$0xf]
    %v10880 = vld [vmem:[#allocation74 + $0x88] sm:$0xf]
    %v10881 = vld [vmem:[#allocation74 + $0x8c] sm:$0xf]
    %v10882 = vld [vmem:[#allocation74 + $0x90] sm:$0xf]
    %v10883 = vld [vmem:[#allocation74 + $0x94] sm:$0xf]
    %v10884 = vld [vmem:[#allocation74 + $0x98] sm:$0xf]
    %v10885 = vld [vmem:[#allocation74 + $0x9c] sm:$0xf]
    %v10886 = vld [vmem:[#allocation74 + $0xa0] sm:$0xf]
    %v10887 = vld [vmem:[#allocation74 + $0xa4] sm:$0xf]
    %v10888 = vld [vmem:[#allocation74 + $0xa8] sm:$0xf]
    %v10889 = vld [vmem:[#allocation74 + $0xac] sm:$0xf]
    %v10890 = vld [vmem:[#allocation74 + $0xb0] sm:$0xf]
    %v10891 = vld [vmem:[#allocation74 + $0xb4] sm:$0xf]
    %v10892 = vld [vmem:[#allocation74 + $0xb8] sm:$0xf]
    %v10893 = vld [vmem:[#allocation74 + $0xbc] sm:$0xf]
    %v10894 = vld [vmem:[#allocation74 + $0xc0] sm:$0xf]
    %v10895 = vld [vmem:[#allocation74 + $0xc4] sm:$0xf]
    %v10896 = vld [vmem:[#allocation74 + $0xc8] sm:$0xf]
    %v10897 = vld [vmem:[#allocation74 + $0xcc] sm:$0xf]
    %v10898 = vld [vmem:[#allocation74 + $0xd0] sm:$0xf]
    %v10899 = vld [vmem:[#allocation74 + $0xd4] sm:$0xf]
    %v10900 = vld [vmem:[#allocation74 + $0xd8] sm:$0xf]
    %v10901 = vld [vmem:[#allocation74 + $0xdc] sm:$0xf]
    %v10902 = vld [vmem:[#allocation74 + $0xe0] sm:$0xf]
    %v10903 = vld [vmem:[#allocation74 + $0xe4] sm:$0xf]
    %v10904 = vld [vmem:[#allocation74 + $0xe8] sm:$0xf]
    %v10905 = vld [vmem:[#allocation74 + $0xec] sm:$0xf]
    %v10906 = vld [vmem:[#allocation74 + $0xf0] sm:$0xf]
    %v10907 = vld [vmem:[#allocation74 + $0xf4] sm:$0xf]
    %v10908 = vld [vmem:[#allocation74 + $0xf8] sm:$0xf]
    %v10909 = vld [vmem:[#allocation74 + $0xfc] sm:$0xf]
    %v10910 = vld [vmem:[#allocation74 + $0x100] sm:$0xf]
    %v10911 = vld [vmem:[#allocation74 + $0x104] sm:$0xf]
    %v10912 = vld [vmem:[#allocation74 + $0x108] sm:$0xf]
    %v10913 = vld [vmem:[#allocation74 + $0x10c] sm:$0xf]
    %v10914 = vld [vmem:[#allocation74 + $0x110] sm:$0xf]
    %v10915 = vld [vmem:[#allocation74 + $0x114] sm:$0xf]
    %v10916 = vld [vmem:[#allocation74 + $0x118] sm:$0xf]
    %v10917 = vld [vmem:[#allocation74 + $0x11c] sm:$0xf]
    %v10918 = vld [vmem:[#allocation74 + $0x120] sm:$0xf]
    %v10919 = vld [vmem:[#allocation74 + $0x124] sm:$0xf]
    %v10920 = vld [vmem:[#allocation74 + $0x128] sm:$0xf]
    %v10921 = vld [vmem:[#allocation74 + $0x12c] sm:$0xf]
    %v10922 = vld [vmem:[#allocation74 + $0x130] sm:$0xf]
    %v10923 = vld [vmem:[#allocation74 + $0x134] sm:$0xf]
    %v10924 = vld [vmem:[#allocation74 + $0x138] sm:$0xf]
    %v10925 = vld [vmem:[#allocation74 + $0x13c] sm:$0xf]
    %v10926 = vld [vmem:[#allocation74 + $0x140] sm:$0xf]
    %v10927 = vld [vmem:[#allocation74 + $0x144] sm:$0xf]
    %v10928 = vld [vmem:[#allocation74 + $0x148] sm:$0xf]
    %v10929 = vld [vmem:[#allocation74 + $0x14c] sm:$0xf]
    %v10930 = vld [vmem:[#allocation74 + $0x150] sm:$0xf]
    %v10931 = vld [vmem:[#allocation74 + $0x154] sm:$0xf]
    %v10932 = vld [vmem:[#allocation74 + $0x158] sm:$0xf]
    %v10933 = vld [vmem:[#allocation74 + $0x15c] sm:$0xf]
    %v10934 = vld [vmem:[#allocation74 + $0x160] sm:$0xf]
    %v10935 = vld [vmem:[#allocation74 + $0x164] sm:$0xf]
    %v10936 = vld [vmem:[#allocation74 + $0x168] sm:$0xf]
    %v10937 = vld [vmem:[#allocation74 + $0x16c] sm:$0xf]
    %v10938 = vld [vmem:[#allocation74 + $0x170] sm:$0xf]
    %v10939 = vld [vmem:[#allocation74 + $0x174] sm:$0xf]
    %v10940 = vld [vmem:[#allocation74 + $0x178] sm:$0xf]
    %v10941 = vld [vmem:[#allocation74 + $0x17c] sm:$0xf]
    %v10942 = vld [vmem:[#allocation74 + $0x180] sm:$0xf]
    %v10943 = vld [vmem:[#allocation74 + $0x184] sm:$0xf]
    %v10944 = vld [vmem:[#allocation74 + $0x188] sm:$0xf]
    %v10945 = vld [vmem:[#allocation74 + $0x18c] sm:$0xf]
    %v10946 = vld [vmem:[#allocation74 + $0x190] sm:$0xf]
    %v10947 = vld [vmem:[#allocation74 + $0x194] sm:$0xf]
    %v10948 = vld [vmem:[#allocation74 + $0x198] sm:$0xf]
    %v10949 = vld [vmem:[#allocation74 + $0x19c] sm:$0xf]
    %v10950 = vld [vmem:[#allocation74 + $0x1a0] sm:$0xf]
    %v10951 = vld [vmem:[#allocation74 + $0x1a4] sm:$0xf]
    %v10952 = vld [vmem:[#allocation74 + $0x1a8] sm:$0xf]
    %v10953 = vld [vmem:[#allocation74 + $0x1ac] sm:$0xf]
    %v10954 = vld [vmem:[#allocation74 + $0x1b0] sm:$0xf]
    %v10955 = vld [vmem:[#allocation74 + $0x1b4] sm:$0xf]
    %v10956 = vld [vmem:[#allocation74 + $0x1b8] sm:$0xf]
    %v10957 = vld [vmem:[#allocation74 + $0x1bc] sm:$0xf]
    %v10958 = vld [vmem:[#allocation74 + $0x1c0] sm:$0xf]
    %v10959 = vld [vmem:[#allocation74 + $0x1c4] sm:$0xf]
    %v10960 = vld [vmem:[#allocation74 + $0x1c8] sm:$0xf]
    %v10961 = vld [vmem:[#allocation74 + $0x1cc] sm:$0xf]
    %v10962 = vld [vmem:[#allocation74 + $0x1d0] sm:$0xf]
    %v10963 = vld [vmem:[#allocation74 + $0x1d4] sm:$0xf]
    %v10964 = vld [vmem:[#allocation74 + $0x1d8] sm:$0xf]
    %v10965 = vld [vmem:[#allocation74 + $0x1dc] sm:$0xf]
    %v10966 = vld [vmem:[#allocation74 + $0x1e0] sm:$0xf]
    %v10967 = vld [vmem:[#allocation74 + $0x1e4] sm:$0xf]
    %v10968 = vld [vmem:[#allocation74 + $0x1e8] sm:$0xf]
    %v10969 = vld [vmem:[#allocation74 + $0x1ec] sm:$0xf]
    %v10970 = vld [vmem:[#allocation74 + $0x1f0] sm:$0xf]
    %v10971 = vld [vmem:[#allocation74 + $0x1f4] sm:$0xf]
    %v10972 = vld [vmem:[#allocation74 + $0x1f8] sm:$0xf]
    %v10973 = vld [vmem:[#allocation74 + $0x1fc] sm:$0xf]
    %v10974 = vld [vmem:[#allocation76] sm:$0x1]
    %v10976 = vlaneseq
    %v10977 = vshrl.u32 %v10976, 7
    %v10978 = vsub.s32 0, %v10977
    %v10979 = vrot.slane %v10974, %v10978
    %v11109 = vunpack.c.l.b16 %v10846
    %v11110 = vunpack.c.l.b16 %v10847
    %v11111 = vunpack.c.l.b16 %v10848
    %v11112 = vunpack.c.l.b16 %v10849
    %v11113 = vunpack.c.l.b16 %v10850
    %v11114 = vunpack.c.l.b16 %v10851
    %v11115 = vunpack.c.l.b16 %v10852
    %v11116 = vunpack.c.l.b16 %v10853
    %v11117 = vunpack.c.l.b16 %v10854
    %v11118 = vunpack.c.l.b16 %v10855
    %v11119 = vunpack.c.l.b16 %v10856
    %v11120 = vunpack.c.l.b16 %v10857
    %v11121 = vunpack.c.l.b16 %v10858
    %v11122 = vunpack.c.l.b16 %v10859
    %v11123 = vunpack.c.l.b16 %v10860
    %v11124 = vunpack.c.l.b16 %v10861
    %v11125 = vunpack.c.l.b16 %v10862
    %v11126 = vunpack.c.l.b16 %v10863
    %v11127 = vunpack.c.l.b16 %v10864
    %v11128 = vunpack.c.l.b16 %v10865
    %v11129 = vunpack.c.l.b16 %v10866
    %v11130 = vunpack.c.l.b16 %v10867
    %v11131 = vunpack.c.l.b16 %v10868
    %v11132 = vunpack.c.l.b16 %v10869
    %v11133 = vunpack.c.l.b16 %v10870
    %v11134 = vunpack.c.l.b16 %v10871
    %v11135 = vunpack.c.l.b16 %v10872
    %v11136 = vunpack.c.l.b16 %v10873
    %v11137 = vunpack.c.l.b16 %v10874
    %v11138 = vunpack.c.l.b16 %v10875
    %v11139 = vunpack.c.l.b16 %v10876
    %v11140 = vunpack.c.l.b16 %v10877
    %v11141 = vunpack.c.l.b16 %v10878
    %v11142 = vunpack.c.l.b16 %v10879
    %v11143 = vunpack.c.l.b16 %v10880
    %v11144 = vunpack.c.l.b16 %v10881
    %v11145 = vunpack.c.l.b16 %v10882
    %v11146 = vunpack.c.l.b16 %v10883
    %v11147 = vunpack.c.l.b16 %v10884
    %v11148 = vunpack.c.l.b16 %v10885
    %v11149 = vunpack.c.l.b16 %v10886
    %v11150 = vunpack.c.l.b16 %v10887
    %v11151 = vunpack.c.l.b16 %v10888
    %v11152 = vunpack.c.l.b16 %v10889
    %v11153 = vunpack.c.l.b16 %v10890
    %v11154 = vunpack.c.l.b16 %v10891
    %v11155 = vunpack.c.l.b16 %v10892
    %v11156 = vunpack.c.l.b16 %v10893
    %v11157 = vunpack.c.l.b16 %v10894
    %v11158 = vunpack.c.l.b16 %v10895
    %v11159 = vunpack.c.l.b16 %v10896
    %v11160 = vunpack.c.l.b16 %v10897
    %v11161 = vunpack.c.l.b16 %v10898
    %v11162 = vunpack.c.l.b16 %v10899
    %v11163 = vunpack.c.l.b16 %v10900
    %v11164 = vunpack.c.l.b16 %v10901
    %v11165 = vunpack.c.l.b16 %v10902
    %v11166 = vunpack.c.l.b16 %v10903
    %v11167 = vunpack.c.l.b16 %v10904
    %v11168 = vunpack.c.l.b16 %v10905
    %v11169 = vunpack.c.l.b16 %v10906
    %v11170 = vunpack.c.l.b16 %v10907
    %v11171 = vunpack.c.l.b16 %v10908
    %v11172 = vunpack.c.l.b16 %v10909
    %v11173 = vunpack.c.l.b16 %v10910
    %v11174 = vunpack.c.l.b16 %v10911
    %v11175 = vunpack.c.l.b16 %v10912
    %v11176 = vunpack.c.l.b16 %v10913
    %v11177 = vunpack.c.l.b16 %v10914
    %v11178 = vunpack.c.l.b16 %v10915
    %v11179 = vunpack.c.l.b16 %v10916
    %v11180 = vunpack.c.l.b16 %v10917
    %v11181 = vunpack.c.l.b16 %v10918
    %v11182 = vunpack.c.l.b16 %v10919
    %v11183 = vunpack.c.l.b16 %v10920
    %v11184 = vunpack.c.l.b16 %v10921
    %v11185 = vunpack.c.l.b16 %v10922
    %v11186 = vunpack.c.l.b16 %v10923
    %v11187 = vunpack.c.l.b16 %v10924
    %v11188 = vunpack.c.l.b16 %v10925
    %v11189 = vunpack.c.l.b16 %v10926
    %v11190 = vunpack.c.l.b16 %v10927
    %v11191 = vunpack.c.l.b16 %v10928
    %v11192 = vunpack.c.l.b16 %v10929
    %v11193 = vunpack.c.l.b16 %v10930
    %v11194 = vunpack.c.l.b16 %v10931
    %v11195 = vunpack.c.l.b16 %v10932
    %v11196 = vunpack.c.l.b16 %v10933
    %v11197 = vunpack.c.l.b16 %v10934
    %v11198 = vunpack.c.l.b16 %v10935
    %v11199 = vunpack.c.l.b16 %v10936
    %v11200 = vunpack.c.l.b16 %v10937
    %v11201 = vunpack.c.l.b16 %v10938
    %v11202 = vunpack.c.l.b16 %v10939
    %v11203 = vunpack.c.l.b16 %v10940
    %v11204 = vunpack.c.l.b16 %v10941
    %v11205 = vunpack.c.l.b16 %v10942
    %v11206 = vunpack.c.l.b16 %v10943
    %v11207 = vunpack.c.l.b16 %v10944
    %v11208 = vunpack.c.l.b16 %v10945
    %v11209 = vunpack.c.l.b16 %v10946
    %v11210 = vunpack.c.l.b16 %v10947
    %v11211 = vunpack.c.l.b16 %v10948
    %v11212 = vunpack.c.l.b16 %v10949
    %v11213 = vunpack.c.l.b16 %v10950
    %v11214 = vunpack.c.l.b16 %v10951
    %v11215 = vunpack.c.l.b16 %v10952
    %v11216 = vunpack.c.l.b16 %v10953
    %v11217 = vunpack.c.l.b16 %v10954
    %v11218 = vunpack.c.l.b16 %v10955
    %v11219 = vunpack.c.l.b16 %v10956
    %v11220 = vunpack.c.l.b16 %v10957
    %v11221 = vunpack.c.l.b16 %v10958
    %v11222 = vunpack.c.l.b16 %v10959
    %v11223 = vunpack.c.l.b16 %v10960
    %v11224 = vunpack.c.l.b16 %v10961
    %v11225 = vunpack.c.l.b16 %v10962
    %v11226 = vunpack.c.l.b16 %v10963
    %v11227 = vunpack.c.l.b16 %v10964
    %v11228 = vunpack.c.l.b16 %v10965
    %v11229 = vunpack.c.l.b16 %v10966
    %v11230 = vunpack.c.l.b16 %v10967
    %v11231 = vunpack.c.l.b16 %v10968
    %v11232 = vunpack.c.l.b16 %v10969
    %v11233 = vunpack.c.l.b16 %v10970
    %v11234 = vunpack.c.l.b16 %v10971
    %v11235 = vunpack.c.l.b16 %v10972
    %v11236 = vunpack.c.l.b16 %v10973
    %v11237 = vpack.c.b16 %v11110, %v11109
    %v11238 = vpack.c.b16 %v11112, %v11111
    %v11239 = vpack.c.b16 %v11114, %v11113
    %v11240 = vpack.c.b16 %v11116, %v11115
    %v11241 = vpack.c.b16 %v11118, %v11117
    %v11242 = vpack.c.b16 %v11120, %v11119
    %v11243 = vpack.c.b16 %v11122, %v11121
    %v11244 = vpack.c.b16 %v11124, %v11123
    %v11245 = vpack.c.b16 %v11126, %v11125
    %v11246 = vpack.c.b16 %v11128, %v11127
    %v11247 = vpack.c.b16 %v11130, %v11129
    %v11248 = vpack.c.b16 %v11132, %v11131
    %v11249 = vpack.c.b16 %v11134, %v11133
    %v11250 = vpack.c.b16 %v11136, %v11135
    %v11251 = vpack.c.b16 %v11138, %v11137
    %v11252 = vpack.c.b16 %v11140, %v11139
    %v11253 = vpack.c.b16 %v11142, %v11141
    %v11254 = vpack.c.b16 %v11144, %v11143
    %v11255 = vpack.c.b16 %v11146, %v11145
    %v11256 = vpack.c.b16 %v11148, %v11147
    %v11257 = vpack.c.b16 %v11150, %v11149
    %v11258 = vpack.c.b16 %v11152, %v11151
    %v11259 = vpack.c.b16 %v11154, %v11153
    %v11260 = vpack.c.b16 %v11156, %v11155
    %v11261 = vpack.c.b16 %v11158, %v11157
    %v11262 = vpack.c.b16 %v11160, %v11159
    %v11263 = vpack.c.b16 %v11162, %v11161
    %v11264 = vpack.c.b16 %v11164, %v11163
    %v11265 = vpack.c.b16 %v11166, %v11165
    %v11266 = vpack.c.b16 %v11168, %v11167
    %v11267 = vpack.c.b16 %v11170, %v11169
    %v11268 = vpack.c.b16 %v11172, %v11171
    %v11269 = vpack.c.b16 %v11174, %v11173
    %v11270 = vpack.c.b16 %v11176, %v11175
    %v11271 = vpack.c.b16 %v11178, %v11177
    %v11272 = vpack.c.b16 %v11180, %v11179
    %v11273 = vpack.c.b16 %v11182, %v11181
    %v11274 = vpack.c.b16 %v11184, %v11183
    %v11275 = vpack.c.b16 %v11186, %v11185
    %v11276 = vpack.c.b16 %v11188, %v11187
    %v11277 = vpack.c.b16 %v11190, %v11189
    %v11278 = vpack.c.b16 %v11192, %v11191
    %v11279 = vpack.c.b16 %v11194, %v11193
    %v11280 = vpack.c.b16 %v11196, %v11195
    %v11281 = vpack.c.b16 %v11198, %v11197
    %v11282 = vpack.c.b16 %v11200, %v11199
    %v11283 = vpack.c.b16 %v11202, %v11201
    %v11284 = vpack.c.b16 %v11204, %v11203
    %v11285 = vpack.c.b16 %v11206, %v11205
    %v11286 = vpack.c.b16 %v11208, %v11207
    %v11287 = vpack.c.b16 %v11210, %v11209
    %v11288 = vpack.c.b16 %v11212, %v11211
    %v11289 = vpack.c.b16 %v11214, %v11213
    %v11290 = vpack.c.b16 %v11216, %v11215
    %v11291 = vpack.c.b16 %v11218, %v11217
    %v11292 = vpack.c.b16 %v11220, %v11219
    %v11293 = vpack.c.b16 %v11222, %v11221
    %v11294 = vpack.c.b16 %v11224, %v11223
    %v11295 = vpack.c.b16 %v11226, %v11225
    %v11296 = vpack.c.b16 %v11228, %v11227
    %v11297 = vpack.c.b16 %v11230, %v11229
    %v11298 = vpack.c.b16 %v11232, %v11231
    %v11299 = vpack.c.b16 %v11234, %v11233
    %v11300 = vpack.c.b16 %v11236, %v11235
    %11365 = vmatprep.subr.bf16.mxu0 0
    %11366 = vmatpush1.bf16.msra.mxu0 %v11237
    %11367 = vmatprep.subr.bf16.mxu0 0
    %11368 = vmatpush1.bf16.msra.mxu0 %v11238
    %11369 = vmatprep.subr.bf16.mxu0 0
    %11370 = vmatpush1.bf16.msra.mxu0 %v11239
    %11371 = vmatprep.subr.bf16.mxu0 0
    %11372 = vmatpush1.bf16.msra.mxu0 %v11240
    %11373 = vmatprep.subr.bf16.mxu0 0
    %11374 = vmatpush1.bf16.msra.mxu0 %v11241
    %11375 = vmatprep.subr.bf16.mxu0 0
    %11376 = vmatpush1.bf16.msra.mxu0 %v11242
    %11377 = vmatprep.subr.bf16.mxu0 0
    %11378 = vmatpush1.bf16.msra.mxu0 %v11243
    %11379 = vmatprep.subr.bf16.mxu0 0
    %11380 = vmatpush1.bf16.msra.mxu0 %v11244
    %11381 = vmatprep.subr.bf16.mxu0 0
    %11382 = vmatpush1.bf16.msra.mxu0 %v11245
    %11383 = vmatprep.subr.bf16.mxu0 0
    %11384 = vmatpush1.bf16.msra.mxu0 %v11246
    %11385 = vmatprep.subr.bf16.mxu0 0
    %11386 = vmatpush1.bf16.msra.mxu0 %v11247
    %11387 = vmatprep.subr.bf16.mxu0 0
    %11388 = vmatpush1.bf16.msra.mxu0 %v11248
    %11389 = vmatprep.subr.bf16.mxu0 0
    %11390 = vmatpush1.bf16.msra.mxu0 %v11249
    %11391 = vmatprep.subr.bf16.mxu0 0
    %11392 = vmatpush1.bf16.msra.mxu0 %v11250
    %11393 = vmatprep.subr.bf16.mxu0 0
    %11394 = vmatpush1.bf16.msra.mxu0 %v11251
    %11395 = vmatprep.subr.bf16.mxu0 0
    %11396 = vmatpush1.bf16.msra.mxu0 %v11252
    %11397 = vmatprep.mubr.bf16.mxu0 %v10839
    %11398 = vmatmul.mubr.bf16.gmra.mrb[0].mxu0 %v10838
    %v11399 = vpop.f32.mrb[0].mxu0
    %v11400 = vadd.f32 %v10979, %v11399
    %v11401 = vpop.f32.mrb[0].mxu0
    %v11402 = vpop.f32.mrb[0].mxu0
    %v11403 = vpop.f32.mrb[0].mxu0
    %11404 = vdwg.mxu0
    %11405 = vmatprep.subr.bf16.mxu0 0
    %11406 = vmatpush1.bf16.msra.mxu0 %v11253
    %11407 = vmatprep.subr.bf16.mxu0 0
    %11408 = vmatpush1.bf16.msra.mxu0 %v11254
    %11409 = vmatprep.subr.bf16.mxu0 0
    %11410 = vmatpush1.bf16.msra.mxu0 %v11255
    %11411 = vmatprep.subr.bf16.mxu0 0
    %11412 = vmatpush1.bf16.msra.mxu0 %v11256
    %11413 = vmatprep.subr.bf16.mxu0 0
    %11414 = vmatpush1.bf16.msra.mxu0 %v11257
    %11415 = vmatprep.subr.bf16.mxu0 0
    %11416 = vmatpush1.bf16.msra.mxu0 %v11258
    %11417 = vmatprep.subr.bf16.mxu0 0
    %11418 = vmatpush1.bf16.msra.mxu0 %v11259
    %11419 = vmatprep.subr.bf16.mxu0 0
    %11420 = vmatpush1.bf16.msra.mxu0 %v11260
    %11421 = vmatprep.subr.bf16.mxu0 0
    %11422 = vmatpush1.bf16.msra.mxu0 %v11261
    %11423 = vmatprep.subr.bf16.mxu0 0
    %11424 = vmatpush1.bf16.msra.mxu0 %v11262
    %11425 = vmatprep.subr.bf16.mxu0 0
    %11426 = vmatpush1.bf16.msra.mxu0 %v11263
    %11427 = vmatprep.subr.bf16.mxu0 0
    %11428 = vmatpush1.bf16.msra.mxu0 %v11264
    %11429 = vmatprep.subr.bf16.mxu0 0
    %11430 = vmatpush1.bf16.msra.mxu0 %v11265
    %11431 = vmatprep.subr.bf16.mxu0 0
    %11432 = vmatpush1.bf16.msra.mxu0 %v11266
    %11433 = vmatprep.subr.bf16.mxu0 0
    %11434 = vmatpush1.bf16.msra.mxu0 %v11267
    %11435 = vmatprep.subr.bf16.mxu0 0
    %11436 = vmatpush1.bf16.msra.mxu0 %v11268
    %11437 = vmatprep.mubr.bf16.mxu0 %v10841
    %11438 = vmatmul.mubr.bf16.gmra.mrb[0].mxu0 %v10840
    %v11439 = vpop.f32.mrb[0].mxu0
    %v11440 = vadd.f32 %v11400, %v11439
    %v11441 = vpop.f32.mrb[0].mxu0
    %v11442 = vpop.f32.mrb[0].mxu0
    %v11443 = vpop.f32.mrb[0].mxu0
    %11444 = vdwg.mxu0
    %11445 = vmatprep.subr.bf16.mxu0 0
    %11446 = vmatpush1.bf16.msra.mxu0 %v11269
    %11447 = vmatprep.subr.bf16.mxu0 0
    %11448 = vmatpush1.bf16.msra.mxu0 %v11270
    %11449 = vmatprep.subr.bf16.mxu0 0
    %11450 = vmatpush1.bf16.msra.mxu0 %v11271
    %11451 = vmatprep.subr.bf16.mxu0 0
    %11452 = vmatpush1.bf16.msra.mxu0 %v11272
    %11453 = vmatprep.subr.bf16.mxu0 0
    %11454 = vmatpush1.bf16.msra.mxu0 %v11273
    %11455 = vmatprep.subr.bf16.mxu0 0
    %11456 = vmatpush1.bf16.msra.mxu0 %v11274
    %11457 = vmatprep.subr.bf16.mxu0 0
    %11458 = vmatpush1.bf16.msra.mxu0 %v11275
    %11459 = vmatprep.subr.bf16.mxu0 0
    %11460 = vmatpush1.bf16.msra.mxu0 %v11276
    %11461 = vmatprep.subr.bf16.mxu0 0
    %11462 = vmatpush1.bf16.msra.mxu0 %v11277
    %11463 = vmatprep.subr.bf16.mxu0 0
    %11464 = vmatpush1.bf16.msra.mxu0 %v11278
    %11465 = vmatprep.subr.bf16.mxu0 0
    %11466 = vmatpush1.bf16.msra.mxu0 %v11279
    %11467 = vmatprep.subr.bf16.mxu0 0
    %11468 = vmatpush1.bf16.msra.mxu0 %v11280
    %11469 = vmatprep.subr.bf16.mxu0 0
    %11470 = vmatpush1.bf16.msra.mxu0 %v11281
    %11471 = vmatprep.subr.bf16.mxu0 0
    %11472 = vmatpush1.bf16.msra.mxu0 %v11282
    %11473 = vmatprep.subr.bf16.mxu0 0
    %11474 = vmatpush1.bf16.msra.mxu0 %v11283
    %11475 = vmatprep.subr.bf16.mxu0 0
    %11476 = vmatpush1.bf16.msra.mxu0 %v11284
    %11477 = vmatprep.mubr.bf16.mxu0 %v10843
    %11478 = vmatmul.mubr.bf16.gmra.mrb[0].mxu0 %v10842
    %v11479 = vpop.f32.mrb[0].mxu0
    %v11480 = vadd.f32 %v11440, %v11479
    %v11481 = vpop.f32.mrb[0].mxu0
    %v11482 = vpop.f32.mrb[0].mxu0
    %v11483 = vpop.f32.mrb[0].mxu0
    %11484 = vdwg.mxu0
    %11485 = vmatprep.subr.bf16.mxu0 0
    %11486 = vmatpush1.bf16.msra.mxu0 %v11285
    %11487 = vmatprep.subr.bf16.mxu0 0
    %11488 = vmatpush1.bf16.msra.mxu0 %v11286
    %11489 = vmatprep.subr.bf16.mxu0 0
    %11490 = vmatpush1.bf16.msra.mxu0 %v11287
    %11491 = vmatprep.subr.bf16.mxu0 0
    %11492 = vmatpush1.bf16.msra.mxu0 %v11288
    %11493 = vmatprep.subr.bf16.mxu0 0
    %11494 = vmatpush1.bf16.msra.mxu0 %v11289
    %11495 = vmatprep.subr.bf16.mxu0 0
    %11496 = vmatpush1.bf16.msra.mxu0 %v11290
    %11497 = vmatprep.subr.bf16.mxu0 0
    %11498 = vmatpush1.bf16.msra.mxu0 %v11291
    %11499 = vmatprep.subr.bf16.mxu0 0
    %11500 = vmatpush1.bf16.msra.mxu0 %v11292
    %11501 = vmatprep.subr.bf16.mxu0 0
    %11502 = vmatpush1.bf16.msra.mxu0 %v11293
    %11503 = vmatprep.subr.bf16.mxu0 0
    %11504 = vmatpush1.bf16.msra.mxu0 %v11294
    %11505 = vmatprep.subr.bf16.mxu0 0
    %11506 = vmatpush1.bf16.msra.mxu0 %v11295
    %11507 = vmatprep.subr.bf16.mxu0 0
    %11508 = vmatpush1.bf16.msra.mxu0 %v11296
    %11509 = vmatprep.subr.bf16.mxu0 0
    %11510 = vmatpush1.bf16.msra.mxu0 %v11297
    %11511 = vmatprep.subr.bf16.mxu0 0
    %11512 = vmatpush1.bf16.msra.mxu0 %v11298
    %11513 = vmatprep.subr.bf16.mxu0 0
    %11514 = vmatpush1.bf16.msra.mxu0 %v11299
    %11515 = vmatprep.subr.bf16.mxu0 0
    %11516 = vmatpush1.bf16.msra.mxu0 %v11300
    %11517 = vmatprep.mubr.bf16.mxu0 %v10845
    %11518 = vmatmul.mubr.bf16.gmra.mrb[0].mxu0 %v10844
    %v11519 = vpop.f32.mrb[0].mxu0
    %v11520 = vadd.f32 %v11480, %v11519
    %v11521 = vpop.f32.mrb[0].mxu0
    %v11522 = vpop.f32.mrb[0].mxu0
    %v11523 = vpop.f32.mrb[0].mxu0
    %11524 = vdwg.mxu0
    %11525 = vst [vmem:[#allocation83] sm:$0xff] %v11520
    // Predicated region
    $region394: #{tpu_custom_call.1} parent=1 // pred_check
      _
    $region395: #{tpu_custom_call.1} parent=1 // pred_check_branch
      %11527 = sbr.rel (0) target = $region397
    $region396: #{tpu_custom_call.1} parent=1 // pred_region
      %s11529 = ssub.s32 128, 128
      %11530 = vsyncadd [#allocation4], %s11529
      %s11532 = sshll.u32 [#allocation77], 4
      %s11533 = int_to_ptr.vmem [resolvable:$true] %s11532
      %11535 = dma.vmem_to_hbm [thread:$0]  %s11533, 128, %s99, [#allocation4]
    $region397: #{tpu_custom_call.1} parent=1 // pred_fallthru
      _
    // Predicated region
    $region398: #{tpu_custom_call.1} parent=1 // pred_check
      _
    $region399: #{tpu_custom_call.1} parent=1 // pred_check_branch
      %11537 = sbr.rel (0) target = $region401
    $region400: #{tpu_custom_call.1} parent=1 // pred_region
      %s11539 = ssub.s32 128, 128
      %11540 = vsyncadd [#allocation79], %s11539
      %s11542 = sshll.u32 [#allocation78], 4
      %s11543 = int_to_ptr.vmem [resolvable:$true] %s11542
      %11545 = dma.vmem_to_hbm [thread:$0]  %s11543, 128, %s101, [#allocation79]
    $region401: #{tpu_custom_call.1} parent=1 // pred_fallthru
      _
    // Predicated region
    $region402: #{tpu_custom_call.1} parent=1 // pred_check
      _
    $region403: #{tpu_custom_call.1} parent=1 // pred_check_branch
      %11547 = sbr.rel (0) target = $region405
    $region404: #{tpu_custom_call.1} parent=1 // pred_region
      %s11549 = ssub.s32 128, 128
      %11550 = vsyncadd [#allocation79], %s11549
      %s11552 = sshll.u32 [#allocation80], 4
      %s11553 = int_to_ptr.vmem [resolvable:$true] %s11552
      %11555 = dma.vmem_to_hbm [thread:$0]  %s11553, 128, %s103, [#allocation79]
    $region405: #{tpu_custom_call.1} parent=1 // pred_fallthru
      _
    // Predicated region
    $region406: #{tpu_custom_call.1} parent=1 // pred_check
      _
    $region407: #{tpu_custom_call.1} parent=1 // pred_check_branch
      %11557 = sbr.rel (0) target = $region409
    $region408: #{tpu_custom_call.1} parent=1 // pred_region
      %s11559 = ssub.s32 128, 128
      %11560 = vsyncadd [#allocation82], %s11559
      %s11562 = sshll.u32 [#allocation81], 4
      %s11563 = int_to_ptr.vmem [resolvable:$true] %s11562
      %11565 = dma.vmem_to_hbm [thread:$0]  %s11563, 128, %s105, [#allocation82]
    $region409: #{tpu_custom_call.1} parent=1 // pred_fallthru
      _
    // Predicated region
    $region410: #{tpu_custom_call.1} parent=1 // pred_check
      _
    $region411: #{tpu_custom_call.1} parent=1 // pred_check_branch
      %11567 = sbr.rel (0) target = $region413
    $region412: #{tpu_custom_call.1} parent=1 // pred_region
      %s11569 = ssub.s32 128, 128
      %11570 = vsyncadd [#allocation82], %s11569
      %s11572 = sshll.u32 [#allocation83], 4
      %s11573 = int_to_ptr.vmem [resolvable:$true] %s11572
      %11575 = dma.vmem_to_hbm [thread:$0]  %s11573, 128, %s107, [#allocation82]
    $region413: #{tpu_custom_call.1} parent=1 // pred_fallthru
      _
    // Predicated region
    $region414: #{tpu_custom_call.1} parent=1 // pred_check
      _
    $region415: #{tpu_custom_call.1} parent=1 // pred_check_branch
      %11577 = sbr.rel (0) target = $region417
    $region416: #{tpu_custom_call.1} parent=1 // pred_region
      %11578 = dma.done [#allocation4], 128
    $region417: #{tpu_custom_call.1} parent=1 // pred_fallthru
      _
    // Predicated region
    $region418: #{tpu_custom_call.1} parent=1 // pred_check
      _
    $region419: #{tpu_custom_call.1} parent=1 // pred_check_branch
      %11580 = sbr.rel (0) target = $region421
    $region420: #{tpu_custom_call.1} parent=1 // pred_region
      %11581 = dma.done [#allocation79], 128
    $region421: #{tpu_custom_call.1} parent=1 // pred_fallthru
      _
    // Predicated region
    $region422: #{tpu_custom_call.1} parent=1 // pred_check
      _
    $region423: #{tpu_custom_call.1} parent=1 // pred_check_branch
      %11583 = sbr.rel (0) target = $region425
    $region424: #{tpu_custom_call.1} parent=1 // pred_region
      %11584 = dma.done [#allocation79], 128
    $region425: #{tpu_custom_call.1} parent=1 // pred_fallthru
      _
    // Predicated region
    $region426: #{tpu_custom_call.1} parent=1 // pred_check
      _
    $region427: #{tpu_custom_call.1} parent=1 // pred_check_branch
      %11586 = sbr.rel (0) target = $region429
    $region428: #{tpu_custom_call.1} parent=1 // pred_region
      %11587 = dma.done [#allocation82], 128
    $region429: #{tpu_custom_call.1} parent=1 // pred_fallthru
      _
    // Predicated region
    $region430: #{tpu_custom_call.1} parent=1 // pred_check
      _
    $region431: #{tpu_custom_call.1} parent=1 // pred_check_branch
      %11589 = sbr.rel (0) target = $region433
    $region432: #{tpu_custom_call.1} parent=1 // pred_region
      %11590 = dma.done [#allocation82], 128
    $region433: #{tpu_custom_call.1} parent=1 // pred_fallthru
      _
    %11591 = vsyncpa [#allocation3], 1
    %11592 = vsyncpa [#allocation6], 1
    %11593 = vsyncpa [#allocation9], 1
    %11594 = vsyncpa [#allocation12], 1
    %11595 = vsyncpa [#allocation15], 1
    %11596 = vsyncpa [#allocation18], 1
    %11597 = vsyncpa [#allocation21], 1
    %11598 = vsyncpa [#allocation24], 1
    %11599 = vsyncpa [#allocation27], 1
    %11600 = vsyncpa [#allocation30], 1
    %11601 = vsyncpa [#allocation33], 1
    %11602 = vsyncpa [#allocation36], 1
    %11603 = vsyncpa [#allocation39], 1
    %11604 = vsyncpa [#allocation42], 1
    %11605 = vsyncpa [#allocation45], 1
    %11606 = vsyncpa [#allocation48], 1
    %11607 = vsyncpa [#allocation51], 1
    %11608 = vsyncpa [#allocation54], 1
    %11609 = vsyncpa [#allocation57], 1
    %11610 = vsyncpa [#allocation60], 1
    %11611 = vsyncpa [#allocation63], 1
    %11612 = vsyncpa [#allocation66], 1
    %11613 = vsyncpa [#allocation69], 1
    %11614 = vsyncpa [#allocation72], 1
    %11615 = vsyncpa [#allocation75], 1
    %11616 = vsyncpa [#allocation4], 1
    %11617 = vsyncpa [#allocation79], 1
    %11618 = vsyncpa [#allocation82], 1

</llo_original>
